<compile_context>
chip_gen: v5e
topology: v5e:2x2
jax: 0.10.0
libtpu: 0.0.40
codegen_flags: <defaults>
</compile_context>

<pallas_src>
import functools

import numpy as np
import jax
import jax.numpy as jnp
from jax.experimental import pallas as pl
from jax.experimental.pallas import tpu as pltpu

SCALE = 2          # args.scale = [2], scaleIdx = 0
NFEAT = 8
NCHAN = 3
NRESBLOCK = 2
KPRE = 5           # preProcess ResBlock kernel size
KSTD = 3           # every other conv


# --------------------------------------------------------------------------- kernel
def _mdsr_kernel(x_ref, c_ref, o_ref, pad_ref, *, cfg):
    f32, bf16 = jnp.float32, jnp.bfloat16
    W, P, lpad = cfg['W'], cfg['P'], cfg['lpad']
    nfeat, r, hw = cfg['nfeat'], cfg['scale'], cfg['hw']
    lay = cfg['layout']
    mask0 = cfg['mask_off']

    # Zero the persistent padded-activation scratch; only the centre columns
    # [lpad : lpad+P] are written afterwards, so the halo stays zero for every layer.
    pad_ref[...] = jnp.zeros(pad_ref.shape, f32)

    def tap(row0, oy, ox):
        # (nfeat, P) slice of the zero-haloed flattened image shifted by (oy, ox).
        # Vertical out-of-bounds taps land in the zero halo; horizontal ones read a
        # neighbouring row and are masked with a precomputed 0/1 row from the pack.
        off = lpad + oy * W + ox
        s = pad_ref[row0:row0 + nfeat, off:off + P]
        if ox != 0:
            s = s * c_ref[mask0 + ox + hw:mask0 + ox + hw + 1, 0:P]
        return s

    def conv(act, name, *, cout=nfeat, relu=False, res=None):
        """K-stacked conv: one (cout, k*k*nfeat) @ (k*k*nfeat, P) MXU dot."""
        w_off, b_off, k = lay[name]
        half, K = k // 2, k * k * nfeat
        pad_ref[0:nfeat, lpad:lpad + P] = act
        rhs = jnp.concatenate(
            [tap(0, dy - half, dx - half) for dy in range(k) for dx in range(k)],
            axis=0).astype(bf16)                                   # (K, P) bf16
        w = c_ref[w_off:w_off + cout, 0:K].astype(bf16)            # (cout, K) bf16
        acc = (jnp.dot(w, rhs, preferred_element_type=f32)
               + c_ref[b_off:b_off + cout, 0:P])                   # f32 bias rows
        if res is not None:
            acc = acc + res
        if relu:
            acc = jnp.maximum(acc, 0.0)
        return acc

    # subMean folded into a per-channel f32 bias, then headConv.
    x = x_ref[0] + c_ref[cfg['sub_off']:cfg['sub_off'] + nfeat, 0:P]
    x = conv(x, 'head')

    # preProcess[scaleIdx]: ResBlocks with kernel_size=5.
    for i in range(cfg['n_pre']):
        h = conv(x, 'pre%da' % i, relu=True)
        x = conv(h, 'pre%db' % i, res=x)

    # body: nResBlock ResBlocks (k=3) + conv3x3, residual back to x.
    res = x
    for i in range(cfg['n_body']):
        h = conv(res, 'body%da' % i, relu=True)
        res = conv(h, 'body%db' % i, res=res)
    res = conv(res, 'btail', res=x)

    # upsample conv3x3 with all r*r PixelShuffle phases stacked on M -> one dot.
    u = conv(res, 'up', cout=nfeat * r * r)                        # (r*r*nfeat, P)

    # fused PixelShuffle + tailConv + addMean (bias already folded): polyphase tail,
    # all r*r output phases stacked on M, all shifted phase taps stacked on K ->
    # one dot and ONE dense (m_out, P) store.
    pad_ref[0:nfeat * r * r, lpad:lpad + P] = u
    tw_off, tb_off, _ = lay['tail']
    Mout = cfg['m_out']
    Kt = len(cfg['tail_taps']) * nfeat
    rhs = jnp.concatenate(
        [tap(g * nfeat, sy, sx) for (g, sy, sx) in cfg['tail_taps']],
        axis=0).astype(bf16)                                       # (Kt, P) bf16
    wt = c_ref[tw_off:tw_off + Mout, 0:Kt].astype(bf16)
    out = (jnp.dot(wt, rhs, preferred_element_type=f32)
           + c_ref[tb_off:tb_off + Mout, 0:P])
    o_ref[0] = out.astype(o_ref.dtype)


# --------------------------------------------------------------------------- packing
def _tail_taps(r, k):
    """For each PixelShuffle input phase, the (row, col) shifts the fused tail needs."""
    need = [set() for _ in range(r)]
    for i in range(r):
        for d in range(k):
            a = i + d - k // 2
            need[a % r].add(a // r)
    taps = []
    for g in range(r * r):
        ip, jp = g // r, g % r
        for sy in sorted(need[ip]):
            for sx in sorted(need[jp]):
                taps.append((g, sy, sx))
    return taps


def _pack_constants(p, H, W, *, nchan, nfeat, r, kpre, kstd):
    """Pack every weight / bias / mask into ONE lane-dense (8,128)-aligned f32 buffer."""
    assert nchan <= nfeat
    P = H * W
    hw = max(kpre, kstd) // 2
    # Halo derived from the max kernel size (not hard-coded), rounded to a lane tile.
    lpad = -(-(hw * (W + 1)) // 128) * 128
    assert lpad >= hw * (W + 1)
    taps = _tail_taps(r, kstd)
    lanes = -(-max(P, nfeat * kpre * kpre, len(taps) * nfeat) // 128) * 128

    blocks, layout, cursor = [], {}, [0]

    def add(arr):
        arr = np.asarray(arr, np.float32)
        rr, cc = arr.shape
        rp = -(-rr // 8) * 8
        buf = np.zeros((rp, lanes), np.float32)
        buf[:rr, :cc] = arr
        blocks.append(buf)
        off = cursor[0]
        cursor[0] += rp
        return off

    def fuse_w(w):
        # HWIO (k,k,cin,cout) -> lane-dense (cout, k*k*nfeat), cin zero-padded to nfeat.
        w = np.asarray(w, np.float32)
        k, _, cin, cout = w.shape
        if cin < nfeat:
            w = np.pad(w, ((0, 0), (0, 0), (0, nfeat - cin), (0, 0)))
        return np.transpose(w, (3, 0, 1, 2)).reshape(cout, k * k * nfeat)

    def bias_rows(b):
        b = np.asarray(b, np.float32)
        return np.broadcast_to(b[:, None], (b.shape[0], P))

    def add_conv(name, w, b, k):
        layout[name] = (add(fuse_w(w)), add(bias_rows(b)), k)

    # subMean as a per-channel f32 bias (channels padded to nfeat).
    sub = np.zeros((nfeat,), np.float32)
    sub[:nchan] = np.asarray(p['sub_b'], np.float32)
    sub_off = add(np.broadcast_to(sub[:, None], (nfeat, P)))

    add_conv('head', p['head'][0], p['head'][1], kstd)
    for i, ((w1, b1), (w2, b2)) in enumerate(p['pre']):
        add_conv('pre%da' % i, w1, b1, kpre)
        add_conv('pre%db' % i, w2, b2, kpre)
    for i, ((w1, b1), (w2, b2)) in enumerate(p['body_res']):
        add_conv('body%da' % i, w1, b1, kstd)
        add_conv('body%db' % i, w2, b2, kstd)
    add_conv('btail', p['body_tail'][0], p['body_tail'][1], kstd)

    # Upsample conv: output channels reordered PixelShuffle-phase-major.
    up_w, up_b = p['up']
    perm = (np.arange(nfeat)[None, :] * (r * r) + np.arange(r * r)[:, None]).reshape(-1)
    layout['up'] = (add(fuse_w(up_w)[perm]),
                    add(bias_rows(np.asarray(up_b, np.float32)[perm])), kstd)

    # Fused polyphase tail conv (PixelShuffle + tailConv + addMean folded into bias).
    pos = {t: i for i, t in enumerate(taps)}
    wt = np.asarray(p['tail'][0], np.float32)
    bt = np.asarray(p['tail'][1], np.float32) + np.asarray(p['add_b'], np.float32)
    Kt, Mt = len(taps) * nfeat, r * r * nchan
    Wf = np.zeros((Mt, Kt), np.float32)
    for i in range(r):
        for j in range(r):
            g_out = i * r + j
            for dy in range(kstd):
                a = i + dy - kstd // 2
                for dx in range(kstd):
                    b = j + dx - kstd // 2
                    t = pos[((a % r) * r + (b % r), a // r, b // r)]
                    Wf[g_out * nchan:(g_out + 1) * nchan,
                       t * nfeat:(t + 1) * nfeat] = wt[dy, dx].T
    layout['tail'] = (add(Wf), add(bias_rows(np.tile(bt, r * r))), kstd)

    # Horizontal-offset validity masks for every |ox| <= hw (host-precomputed; no
    # in-kernel modulo, works for non-power-of-two W).
    colw = np.arange(P) % W
    masks = np.stack([((colw + ox >= 0) & (colw + ox < W)).astype(np.float32)
                      for ox in range(-hw, hw + 1)], axis=0)
    mask_off = add(masks)

    cpack = np.concatenate(blocks, axis=0)
    cfg = dict(W=W, P=P, lpad=lpad, hw=hw, nfeat=nfeat, nchan=nchan, scale=r,
               layout=layout, sub_off=sub_off, mask_off=mask_off,
               tail_taps=tuple(taps), m_out=-(-Mt // 8) * 8,
               n_pre=len(p['pre']), n_body=len(p['body_res']))
    return jnp.asarray(cpack), cfg


# --------------------------------------------------------------------------- wrapper
def build_mdsr(params, N, H, W, *, nchan=NCHAN, nfeat=NFEAT, scale=SCALE,
               kpre=KPRE, kstd=KSTD):
    cpack, cfg = _pack_constants(params, H, W, nchan=nchan, nfeat=nfeat, r=scale,
                                 kpre=kpre, kstd=kstd)
    P, lpad, Mout = cfg['P'], cfg['lpad'], cfg['m_out']
    kernel = functools.partial(_mdsr_kernel, cfg=cfg)

    # Whole image (+ halo) lives in VMEM: fine for small tiles on v5e/v6e/v7x.
    # TODO(synk): add a row-band tiled grid axis (halo = max(k)//2 rows) so large
    # images also fit v7x's 64 MiB VMEM.
    assert nfeat * scale * scale * (P + 2 * lpad) * 4 < 8 * 2 ** 20

    grid_spec = pltpu.PrefetchScalarGridSpec(
        num_scalar_prefetch=0,
        grid=(N,),                                            # batch axis: 'parallel'
        in_specs=[
            pl.BlockSpec((1, nfeat, P), lambda n: (n, 0, 0)),
            pl.BlockSpec(cpack.shape, lambda n: (0, 0)),      # one packed const buffer
        ],
        out_specs=pl.BlockSpec((1, Mout, P), lambda n: (n, 0, 0)),
        scratch_shapes=[
            pltpu.VMEM((nfeat * scale * scale, P + 2 * lpad), jnp.float32),
        ])

    call = pl.pallas_call(
        kernel,
        out_shape=jax.ShapeDtypeStruct((N, Mout, P), jnp.float32),
        grid_spec=grid_spec,
        compiler_params=pltpu.CompilerParams(dimension_semantics=("parallel",)),
    )

    @jax.jit
    def forward(x_nchw):
        x = x_nchw.astype(jnp.float32)
        x = jnp.pad(x, ((0, 0), (0, nfeat - nchan), (0, 0), (0, 0)))
        x = x.reshape(N, nfeat, P)                            # pixels on lanes
        out = call(x, cpack)
        # Phase-major (N, 16, H*W) slab -> NCHW at (2H, 2W): tiny host reshape.
        r = scale
        out = out[:, :r * r * nchan, :].reshape(N, r, r, nchan, H, W)
        out = out.transpose(0, 3, 4, 1, 5, 2).reshape(N, nchan, H * r, W * r)
        return out

    return forward


# --------------------------------------------------------------------------- params
def init_params(key, nChannel=NCHAN, nFeat=NFEAT, nResBlock=NRESBLOCK, kPre=KPRE,
                scale=SCALE, rgbRange=1.0, rgbMean=(0.4488, 0.4371, 0.404)):
    def conv_init(k, kh, kw, cin, cout):
        k1, k2 = jax.random.split(k)
        fan_in = kh * kw * cin
        w = jax.random.normal(k1, (kh, kw, cin, cout), jnp.float32) / np.sqrt(fan_in)
        b = 0.01 * jax.random.normal(k2, (cout,), jnp.float32)
        return w, b

    keys = iter(jax.random.split(key, 64))
    p = {}
    mean = jnp.asarray(rgbMean, jnp.float32) * rgbRange
    eye = jnp.eye(nChannel, dtype=jnp.float32).reshape(1, 1, nChannel, nChannel)
    p['sub_w'], p['sub_b'] = eye, -mean               # common.meanShift(..., -1)
    p['add_w'], p['add_b'] = eye, mean                # common.meanShift(..., +1)
    p['head'] = conv_init(next(keys), 3, 3, nChannel, nFeat)
    p['pre'] = [(conv_init(next(keys), kPre, kPre, nFeat, nFeat),
                 conv_init(next(keys), kPre, kPre, nFeat, nFeat)) for _ in range(2)]
    p['body_res'] = [(conv_init(next(keys), 3, 3, nFeat, nFeat),
                      conv_init(next(keys), 3, 3, nFeat, nFeat)) for _ in range(nResBlock)]
    p['body_tail'] = conv_init(next(keys), 3, 3, nFeat, nFeat)
    p['up'] = conv_init(next(keys), 3, 3, nFeat, nFeat * scale * scale)
    p['tail'] = conv_init(next(keys), 3, 3, nFeat, nChannel)
    return p


# --------------------------------------------------------------------------- references
def _pixel_shuffle(x, r):
    N, H, W, C = x.shape
    c = C // (r * r)
    x = x.reshape(N, H, W, c, r, r)
    x = x.transpose(0, 1, 4, 2, 5, 3)
    return x.reshape(N, H * r, W * r, c)


def _conv_ref(x, w, b, *, relu=False, residual=None):
    y = jax.lax.conv_general_dilated(
        x, w, (1, 1), 'SAME', dimension_numbers=('NHWC', 'HWIO', 'NHWC')) + b
    if residual is not None:
        y = y + residual
    if relu:
        y = jnp.maximum(y, 0.0)
    return y


def _resblock_ref(x, rb):
    (w1, b1), (w2, b2) = rb
    h = _conv_ref(x, w1, b1, relu=True)
    return _conv_ref(h, w2, b2, residual=x)


def mdsr_forward_ref(x_nchw, p):
    """Pure-XLA f32 reference of the MDSR forward pass (scaleIdx=0)."""
    x = jnp.transpose(x_nchw, (0, 2, 3, 1))
    x = _conv_ref(x, p['sub_w'], p['sub_b'])
    x = _conv_ref(x, *p['head'])
    for rb in p['pre']:
        x = _resblock_ref(x, rb)
    res = x
    for rb in p['body_res']:
        res = _resblock_ref(res, rb)
    res = _conv_ref(res, *p['body_tail'], residual=x)
    us = _conv_ref(res, *p['up'])
    us = _pixel_shuffle(us, SCALE)
    out = _conv_ref(us, *p['tail'])
    out = _conv_ref(out, p['add_w'], p['add_b'])
    return jnp.transpose(out, (0, 3, 1, 2))


def _conv_ref_q(x, w, b, *, relu=False, residual=None):
    # Matches the kernel's numerics: bf16 dot operands, f32 accumulation + f32 bias.
    y = jax.lax.conv_general_dilated(
        x.astype(jnp.bfloat16), w.astype(jnp.bfloat16), (1, 1), 'SAME',
        dimension_numbers=('NHWC', 'HWIO', 'NHWC'),
        preferred_element_type=jnp.float32) + b
    if residual is not None:
        y = y + residual
    if relu:
        y = jnp.maximum(y, 0.0)
    return y


def mdsr_forward_ref_q(x_nchw, p):
    """Independent XLA reference with the kernel's bf16 operand quantization points."""
    x = jnp.transpose(x_nchw, (0, 2, 3, 1)).astype(jnp.float32)
    x = x + p['sub_b']
    x = _conv_ref_q(x, *p['head'])
    for (w1, b1), (w2, b2) in p['pre']:
        h = _conv_ref_q(x, w1, b1, relu=True)
        x = _conv_ref_q(h, w2, b2, residual=x)
    res = x
    for (w1, b1), (w2, b2) in p['body_res']:
        h = _conv_ref_q(res, w1, b1, relu=True)
        res = _conv_ref_q(h, w2, b2, residual=res)
    res = _conv_ref_q(res, *p['body_tail'], residual=x)
    us = _conv_ref_q(res, *p['up'])
    us = _pixel_shuffle(us, SCALE)
    out = _conv_ref_q(us, *p['tail'])
    out = out + p['add_b']
    return jnp.transpose(out, (0, 3, 1, 2))


# --------------------------------------------------------------------------- main
if __name__ == "__main__":
    key = jax.random.PRNGKey(0)
    kx, kp = jax.random.split(key)

    N, H, W = 2, 16, 16
    x = jax.random.uniform(kx, (N, NCHAN, H, W), jnp.float32)
    params = init_params(kp)

    forward = build_mdsr(params, N, H, W)
    out = jax.block_until_ready(forward(x))
    assert out.shape == (N, NCHAN, H * SCALE, W * SCALE), out.shape

    # Tight structural check against an independent matched-precision XLA reference
    # (same bf16 operand quantization points, f32 accumulation).
    ref_q = mdsr_forward_ref_q(x, params)
    err_q = float(jnp.max(jnp.abs(out - ref_q)))
    if not np.allclose(np.asarray(out), np.asarray(ref_q), rtol=2e-3, atol=2e-3):
        raise AssertionError(
            f"Pallas MDSR mismatch vs matched-precision reference (max|err|={err_q:.3e})")

    # Loose sanity check of total bf16-operand drift against the full-f32 reference.
    ref = mdsr_forward_ref(x, params)
    err = float(jnp.max(jnp.abs(out - ref)))
    if not np.allclose(np.asarray(out), np.asarray(ref), rtol=5e-2, atol=5e-2):
        raise AssertionError(
            f"Pallas MDSR drift vs f32 reference too large (max|err|={err:.3e})")

    print("KERNEL_OK")
</pallas_src>

<mosaic_0001>
module attributes {stable_mosaic.version = 11 : i64} {
  func.func @_mdsr_kernel(%arg0: i32, %arg1: memref<1x8x256xf32, #tpu.memory_space<vmem>>, %arg2: memref<272x256xf32, #tpu.memory_space<vmem>>, %arg3: memref<1x16x256xf32, #tpu.memory_space<vmem>>, %arg4: memref<32x512xf32, #tpu.memory_space<vmem>>) attributes {dimension_semantics = [#tpu.dimension_semantics<parallel>], iteration_bounds = array<i64: 2>, scalar_prefetch = 0 : i64, scratch_operands = 1 : i64, tpu.core_type = #tpu.core_type<tc>, window_params = [{transform_indices = @transform_0, window_bounds = array<i64: 1, 8, 256>}, {pipeline_mode = #tpu.pipeline_mode<synchronous>, transform_indices = @transform_1, window_bounds = array<i64: 272, 256>}, {transform_indices = @transform_2, window_bounds = array<i64: 1, 16, 256>}]} {
    %cst = arith.constant 0.000000e+00 : f32
    %0 = vector.broadcast %cst : f32 to vector<32x512xf32>
    %c0 = arith.constant 0 : index
    %c0_0 = arith.constant 0 : index
    %1 = vector.load %arg4[%c0, %c0_0] : memref<32x512xf32, #tpu.memory_space<vmem>>, vector<32x512xf32>
    tpu.vector_store %arg4[%c0, %c0_0], %0 {strides = array<i32>} : memref<32x512xf32, #tpu.memory_space<vmem>>, vector<32x512xf32>,
    %c0_1 = arith.constant 0 : index
    %c0_2 = arith.constant 0 : index
    %c0_3 = arith.constant 0 : index
    %2 = vector.load %arg1[%c0_1, %c0_2, %c0_3] : memref<1x8x256xf32, #tpu.memory_space<vmem>>, vector<1x8x256xf32>
    %3 = vector.shape_cast %2 : vector<1x8x256xf32> to vector<8x256xf32>
    %c0_4 = arith.constant 0 : index
    %c0_5 = arith.constant 0 : index
    %4 = vector.load %arg2[%c0_4, %c0_5] : memref<272x256xf32, #tpu.memory_space<vmem>>, vector<8x256xf32>
    %5 = arith.addf %3, %4 : vector<8x256xf32>
    %c0_6 = arith.constant 0 : index
    %c128 = arith.constant 128 : index
    %6 = vector.load %arg4[%c0_6, %c128] : memref<32x512xf32, #tpu.memory_space<vmem>>, vector<8x256xf32>
    tpu.vector_store %arg4[%c0_6, %c128], %5 {strides = array<i32>} : memref<32x512xf32, #tpu.memory_space<vmem>>, vector<8x256xf32>,
    %c0_7 = arith.constant 0 : index
    %c111 = arith.constant 111 : index
    %7 = vector.load %arg4[%c0_7, %c111] : memref<32x512xf32, #tpu.memory_space<vmem>>, vector<8x256xf32>
    %c265 = arith.constant 265 : index
    %c0_8 = arith.constant 0 : index
    %8 = vector.load %arg2[%c265, %c0_8] : memref<272x256xf32, #tpu.memory_space<vmem>>, vector<1x256xf32>
    %9 = vector.broadcast %8 : vector<1x256xf32> to vector<8x256xf32>
    %10 = arith.mulf %7, %9 : vector<8x256xf32>
    %c0_9 = arith.constant 0 : index
    %c112 = arith.constant 112 : index
    %11 = vector.load %arg4[%c0_9, %c112] : memref<32x512xf32, #tpu.memory_space<vmem>>, vector<8x256xf32>
    %c0_10 = arith.constant 0 : index
    %c113 = arith.constant 113 : index
    %12 = vector.load %arg4[%c0_10, %c113] : memref<32x512xf32, #tpu.memory_space<vmem>>, vector<8x256xf32>
    %c267 = arith.constant 267 : index
    %c0_11 = arith.constant 0 : index
    %13 = vector.load %arg2[%c267, %c0_11] : memref<272x256xf32, #tpu.memory_space<vmem>>, vector<1x256xf32>
    %14 = vector.broadcast %13 : vector<1x256xf32> to vector<8x256xf32>
    %15 = arith.mulf %12, %14 : vector<8x256xf32>
    %c0_12 = arith.constant 0 : index
    %c127 = arith.constant 127 : index
    %16 = vector.load %arg4[%c0_12, %c127] : memref<32x512xf32, #tpu.memory_space<vmem>>, vector<8x256xf32>
    %c265_13 = arith.constant 265 : index
    %c0_14 = arith.constant 0 : index
    %17 = vector.load %arg2[%c265_13, %c0_14] : memref<272x256xf32, #tpu.memory_space<vmem>>, vector<1x256xf32>
    %18 = vector.broadcast %17 : vector<1x256xf32> to vector<8x256xf32>
    %19 = arith.mulf %16, %18 : vector<8x256xf32>
    %c0_15 = arith.constant 0 : index
    %c128_16 = arith.constant 128 : index
    %20 = vector.load %arg4[%c0_15, %c128_16] : memref<32x512xf32, #tpu.memory_space<vmem>>, vector<8x256xf32>
    %c0_17 = arith.constant 0 : index
    %c129 = arith.constant 129 : index
    %21 = vector.load %arg4[%c0_17, %c129] : memref<32x512xf32, #tpu.memory_space<vmem>>, vector<8x256xf32>
    %c267_18 = arith.constant 267 : index
    %c0_19 = arith.constant 0 : index
    %22 = vector.load %arg2[%c267_18, %c0_19] : memref<272x256xf32, #tpu.memory_space<vmem>>, vector<1x256xf32>
    %23 = vector.broadcast %22 : vector<1x256xf32> to vector<8x256xf32>
    %24 = arith.mulf %21, %23 : vector<8x256xf32>
    %c0_20 = arith.constant 0 : index
    %c143 = arith.constant 143 : index
    %25 = vector.load %arg4[%c0_20, %c143] : memref<32x512xf32, #tpu.memory_space<vmem>>, vector<8x256xf32>
    %c265_21 = arith.constant 265 : index
    %c0_22 = arith.constant 0 : index
    %26 = vector.load %arg2[%c265_21, %c0_22] : memref<272x256xf32, #tpu.memory_space<vmem>>, vector<1x256xf32>
    %27 = vector.broadcast %26 : vector<1x256xf32> to vector<8x256xf32>
    %28 = arith.mulf %25, %27 : vector<8x256xf32>
    %c0_23 = arith.constant 0 : index
    %c144 = arith.constant 144 : index
    %29 = vector.load %arg4[%c0_23, %c144] : memref<32x512xf32, #tpu.memory_space<vmem>>, vector<8x256xf32>
    %c0_24 = arith.constant 0 : index
    %c145 = arith.constant 145 : index
    %30 = vector.load %arg4[%c0_24, %c145] : memref<32x512xf32, #tpu.memory_space<vmem>>, vector<8x256xf32>
    %c267_25 = arith.constant 267 : index
    %c0_26 = arith.constant 0 : index
    %31 = vector.load %arg2[%c267_25, %c0_26] : memref<272x256xf32, #tpu.memory_space<vmem>>, vector<1x256xf32>
    %32 = vector.broadcast %31 : vector<1x256xf32> to vector<8x256xf32>
    %33 = arith.mulf %30, %32 : vector<8x256xf32>
    %34 = tpu.concatenate %10, %11, %15, %19, %20, %24, %28, %29, %33 in 0 : vector<8x256xf32>, vector<8x256xf32>, vector<8x256xf32>, vector<8x256xf32>, vector<8x256xf32>, vector<8x256xf32>, vector<8x256xf32>, vector<8x256xf32>, vector<8x256xf32> -> vector<72x256xf32>
    %35 = arith.truncf %34 : vector<72x256xf32> to vector<72x256xbf16>
    %c8 = arith.constant 8 : index
    %c0_27 = arith.constant 0 : index
    %36 = vector.load %arg2[%c8, %c0_27] : memref<272x256xf32, #tpu.memory_space<vmem>>, vector<8x72xf32>
    %37 = arith.truncf %36 : vector<8x72xf32> to vector<8x72xbf16>
    %cst_28 = arith.constant dense<0.000000e+00> : vector<8x256xf32>
    %38 = tpu.matmul %37, %35, %cst_28 {dimension_numbers = #tpu.dot_dimension_numbers<[1], [0], [0], [1], [0, 0, 1, 1], [], []>} : vector<8x72xbf16>, vector<72x256xbf16>, vector<8x256xf32> -> vector<8x256xf32>
    %c16 = arith.constant 16 : index
    %c0_29 = arith.constant 0 : index
    %39 = vector.load %arg2[%c16, %c0_29] : memref<272x256xf32, #tpu.memory_space<vmem>>, vector<8x256xf32>
    %40 = arith.addf %38, %39 : vector<8x256xf32>
    %c0_30 = arith.constant 0 : index
    %c128_31 = arith.constant 128 : index
    %41 = vector.load %arg4[%c0_30, %c128_31] : memref<32x512xf32, #tpu.memory_space<vmem>>, vector<8x256xf32>
    tpu.vector_store %arg4[%c0_30, %c128_31], %40 {strides = array<i32>} : memref<32x512xf32, #tpu.memory_space<vmem>>, vector<8x256xf32>,
    %c0_32 = arith.constant 0 : index
    %c94 = arith.constant 94 : index
    %42 = vector.load %arg4[%c0_32, %c94] : memref<32x512xf32, #tpu.memory_space<vmem>>, vector<8x256xf32>
    %c264 = arith.constant 264 : index
    %c0_33 = arith.constant 0 : index
    %43 = vector.load %arg2[%c264, %c0_33] : memref<272x256xf32, #tpu.memory_space<vmem>>, vector<1x256xf32>
    %44 = vector.broadcast %43 : vector<1x256xf32> to vector<8x256xf32>
    %45 = arith.mulf %42, %44 : vector<8x256xf32>
    %c0_34 = arith.constant 0 : index
    %c95 = arith.constant 95 : index
    %46 = vector.load %arg4[%c0_34, %c95] : memref<32x512xf32, #tpu.memory_space<vmem>>, vector<8x256xf32>
    %c265_35 = arith.constant 265 : index
    %c0_36 = arith.constant 0 : index
    %47 = vector.load %arg2[%c265_35, %c0_36] : memref<272x256xf32, #tpu.memory_space<vmem>>, vector<1x256xf32>
    %48 = vector.broadcast %47 : vector<1x256xf32> to vector<8x256xf32>
    %49 = arith.mulf %46, %48 : vector<8x256xf32>
    %c0_37 = arith.constant 0 : index
    %c96 = arith.constant 96 : index
    %50 = vector.load %arg4[%c0_37, %c96] : memref<32x512xf32, #tpu.memory_space<vmem>>, vector<8x256xf32>
    %c0_38 = arith.constant 0 : index
    %c97 = arith.constant 97 : index
    %51 = vector.load %arg4[%c0_38, %c97] : memref<32x512xf32, #tpu.memory_space<vmem>>, vector<8x256xf32>
    %c267_39 = arith.constant 267 : index
    %c0_40 = arith.constant 0 : index
    %52 = vector.load %arg2[%c267_39, %c0_40] : memref<272x256xf32, #tpu.memory_space<vmem>>, vector<1x256xf32>
    %53 = vector.broadcast %52 : vector<1x256xf32> to vector<8x256xf32>
    %54 = arith.mulf %51, %53 : vector<8x256xf32>
    %c0_41 = arith.constant 0 : index
    %c98 = arith.constant 98 : index
    %55 = vector.load %arg4[%c0_41, %c98] : memref<32x512xf32, #tpu.memory_space<vmem>>, vector<8x256xf32>
    %c268 = arith.constant 268 : index
    %c0_42 = arith.constant 0 : index
    %56 = vector.load %arg2[%c268, %c0_42] : memref<272x256xf32, #tpu.memory_space<vmem>>, vector<1x256xf32>
    %57 = vector.broadcast %56 : vector<1x256xf32> to vector<8x256xf32>
    %58 = arith.mulf %55, %57 : vector<8x256xf32>
    %c0_43 = arith.constant 0 : index
    %c110 = arith.constant 110 : index
    %59 = vector.load %arg4[%c0_43, %c110] : memref<32x512xf32, #tpu.memory_space<vmem>>, vector<8x256xf32>
    %c264_44 = arith.constant 264 : index
    %c0_45 = arith.constant 0 : index
    %60 = vector.load %arg2[%c264_44, %c0_45] : memref<272x256xf32, #tpu.memory_space<vmem>>, vector<1x256xf32>
    %61 = vector.broadcast %60 : vector<1x256xf32> to vector<8x256xf32>
    %62 = arith.mulf %59, %61 : vector<8x256xf32>
    %c0_46 = arith.constant 0 : index
    %c111_47 = arith.constant 111 : index
    %63 = vector.load %arg4[%c0_46, %c111_47] : memref<32x512xf32, #tpu.memory_space<vmem>>, vector<8x256xf32>
    %c265_48 = arith.constant 265 : index
    %c0_49 = arith.constant 0 : index
    %64 = vector.load %arg2[%c265_48, %c0_49] : memref<272x256xf32, #tpu.memory_space<vmem>>, vector<1x256xf32>
    %65 = vector.broadcast %64 : vector<1x256xf32> to vector<8x256xf32>
    %66 = arith.mulf %63, %65 : vector<8x256xf32>
    %c0_50 = arith.constant 0 : index
    %c112_51 = arith.constant 112 : index
    %67 = vector.load %arg4[%c0_50, %c112_51] : memref<32x512xf32, #tpu.memory_space<vmem>>, vector<8x256xf32>
    %c0_52 = arith.constant 0 : index
    %c113_53 = arith.constant 113 : index
    %68 = vector.load %arg4[%c0_52, %c113_53] : memref<32x512xf32, #tpu.memory_space<vmem>>, vector<8x256xf32>
    %c267_54 = arith.constant 267 : index
    %c0_55 = arith.constant 0 : index
    %69 = vector.load %arg2[%c267_54, %c0_55] : memref<272x256xf32, #tpu.memory_space<vmem>>, vector<1x256xf32>
    %70 = vector.broadcast %69 : vector<1x256xf32> to vector<8x256xf32>
    %71 = arith.mulf %68, %70 : vector<8x256xf32>
    %c0_56 = arith.constant 0 : index
    %c114 = arith.constant 114 : index
    %72 = vector.load %arg4[%c0_56, %c114] : memref<32x512xf32, #tpu.memory_space<vmem>>, vector<8x256xf32>
    %c268_57 = arith.constant 268 : index
    %c0_58 = arith.constant 0 : index
    %73 = vector.load %arg2[%c268_57, %c0_58] : memref<272x256xf32, #tpu.memory_space<vmem>>, vector<1x256xf32>
    %74 = vector.broadcast %73 : vector<1x256xf32> to vector<8x256xf32>
    %75 = arith.mulf %72, %74 : vector<8x256xf32>
    %c0_59 = arith.constant 0 : index
    %c126 = arith.constant 126 : index
    %76 = vector.load %arg4[%c0_59, %c126] : memref<32x512xf32, #tpu.memory_space<vmem>>, vector<8x256xf32>
    %c264_60 = arith.constant 264 : index
    %c0_61 = arith.constant 0 : index
    %77 = vector.load %arg2[%c264_60, %c0_61] : memref<272x256xf32, #tpu.memory_space<vmem>>, vector<1x256xf32>
    %78 = vector.broadcast %77 : vector<1x256xf32> to vector<8x256xf32>
    %79 = arith.mulf %76, %78 : vector<8x256xf32>
    %c0_62 = arith.constant 0 : index
    %c127_63 = arith.constant 127 : index
    %80 = vector.load %arg4[%c0_62, %c127_63] : memref<32x512xf32, #tpu.memory_space<vmem>>, vector<8x256xf32>
    %c265_64 = arith.constant 265 : index
    %c0_65 = arith.constant 0 : index
    %81 = vector.load %arg2[%c265_64, %c0_65] : memref<272x256xf32, #tpu.memory_space<vmem>>, vector<1x256xf32>
    %82 = vector.broadcast %81 : vector<1x256xf32> to vector<8x256xf32>
    %83 = arith.mulf %80, %82 : vector<8x256xf32>
    %c0_66 = arith.constant 0 : index
    %c128_67 = arith.constant 128 : index
    %84 = vector.load %arg4[%c0_66, %c128_67] : memref<32x512xf32, #tpu.memory_space<vmem>>, vector<8x256xf32>
    %c0_68 = arith.constant 0 : index
    %c129_69 = arith.constant 129 : index
    %85 = vector.load %arg4[%c0_68, %c129_69] : memref<32x512xf32, #tpu.memory_space<vmem>>, vector<8x256xf32>
    %c267_70 = arith.constant 267 : index
    %c0_71 = arith.constant 0 : index
    %86 = vector.load %arg2[%c267_70, %c0_71] : memref<272x256xf32, #tpu.memory_space<vmem>>, vector<1x256xf32>
    %87 = vector.broadcast %86 : vector<1x256xf32> to vector<8x256xf32>
    %88 = arith.mulf %85, %87 : vector<8x256xf32>
    %c0_72 = arith.constant 0 : index
    %c130 = arith.constant 130 : index
    %89 = vector.load %arg4[%c0_72, %c130] : memref<32x512xf32, #tpu.memory_space<vmem>>, vector<8x256xf32>
    %c268_73 = arith.constant 268 : index
    %c0_74 = arith.constant 0 : index
    %90 = vector.load %arg2[%c268_73, %c0_74] : memref<272x256xf32, #tpu.memory_space<vmem>>, vector<1x256xf32>
    %91 = vector.broadcast %90 : vector<1x256xf32> to vector<8x256xf32>
    %92 = arith.mulf %89, %91 : vector<8x256xf32>
    %c0_75 = arith.constant 0 : index
    %c142 = arith.constant 142 : index
    %93 = vector.load %arg4[%c0_75, %c142] : memref<32x512xf32, #tpu.memory_space<vmem>>, vector<8x256xf32>
    %c264_76 = arith.constant 264 : index
    %c0_77 = arith.constant 0 : index
    %94 = vector.load %arg2[%c264_76, %c0_77] : memref<272x256xf32, #tpu.memory_space<vmem>>, vector<1x256xf32>
    %95 = vector.broadcast %94 : vector<1x256xf32> to vector<8x256xf32>
    %96 = arith.mulf %93, %95 : vector<8x256xf32>
    %c0_78 = arith.constant 0 : index
    %c143_79 = arith.constant 143 : index
    %97 = vector.load %arg4[%c0_78, %c143_79] : memref<32x512xf32, #tpu.memory_space<vmem>>, vector<8x256xf32>
    %c265_80 = arith.constant 265 : index
    %c0_81 = arith.constant 0 : index
    %98 = vector.load %arg2[%c265_80, %c0_81] : memref<272x256xf32, #tpu.memory_space<vmem>>, vector<1x256xf32>
    %99 = vector.broadcast %98 : vector<1x256xf32> to vector<8x256xf32>
    %100 = arith.mulf %97, %99 : vector<8x256xf32>
    %c0_82 = arith.constant 0 : index
    %c144_83 = arith.constant 144 : index
    %101 = vector.load %arg4[%c0_82, %c144_83] : memref<32x512xf32, #tpu.memory_space<vmem>>, vector<8x256xf32>
    %c0_84 = arith.constant 0 : index
    %c145_85 = arith.constant 145 : index
    %102 = vector.load %arg4[%c0_84, %c145_85] : memref<32x512xf32, #tpu.memory_space<vmem>>, vector<8x256xf32>
    %c267_86 = arith.constant 267 : index
    %c0_87 = arith.constant 0 : index
    %103 = vector.load %arg2[%c267_86, %c0_87] : memref<272x256xf32, #tpu.memory_space<vmem>>, vector<1x256xf32>
    %104 = vector.broadcast %103 : vector<1x256xf32> to vector<8x256xf32>
    %105 = arith.mulf %102, %104 : vector<8x256xf32>
    %c0_88 = arith.constant 0 : index
    %c146 = arith.constant 146 : index
    %106 = vector.load %arg4[%c0_88, %c146] : memref<32x512xf32, #tpu.memory_space<vmem>>, vector<8x256xf32>
    %c268_89 = arith.constant 268 : index
    %c0_90 = arith.constant 0 : index
    %107 = vector.load %arg2[%c268_89, %c0_90] : memref<272x256xf32, #tpu.memory_space<vmem>>, vector<1x256xf32>
    %108 = vector.broadcast %107 : vector<1x256xf32> to vector<8x256xf32>
    %109 = arith.mulf %106, %108 : vector<8x256xf32>
    %c0_91 = arith.constant 0 : index
    %c158 = arith.constant 158 : index
    %110 = vector.load %arg4[%c0_91, %c158] : memref<32x512xf32, #tpu.memory_space<vmem>>, vector<8x256xf32>
    %c264_92 = arith.constant 264 : index
    %c0_93 = arith.constant 0 : index
    %111 = vector.load %arg2[%c264_92, %c0_93] : memref<272x256xf32, #tpu.memory_space<vmem>>, vector<1x256xf32>
    %112 = vector.broadcast %111 : vector<1x256xf32> to vector<8x256xf32>
    %113 = arith.mulf %110, %112 : vector<8x256xf32>
    %c0_94 = arith.constant 0 : index
    %c159 = arith.constant 159 : index
    %114 = vector.load %arg4[%c0_94, %c159] : memref<32x512xf32, #tpu.memory_space<vmem>>, vector<8x256xf32>
    %c265_95 = arith.constant 265 : index
    %c0_96 = arith.constant 0 : index
    %115 = vector.load %arg2[%c265_95, %c0_96] : memref<272x256xf32, #tpu.memory_space<vmem>>, vector<1x256xf32>
    %116 = vector.broadcast %115 : vector<1x256xf32> to vector<8x256xf32>
    %117 = arith.mulf %114, %116 : vector<8x256xf32>
    %c0_97 = arith.constant 0 : index
    %c160 = arith.constant 160 : index
    %118 = vector.load %arg4[%c0_97, %c160] : memref<32x512xf32, #tpu.memory_space<vmem>>, vector<8x256xf32>
    %c0_98 = arith.constant 0 : index
    %c161 = arith.constant 161 : index
    %119 = vector.load %arg4[%c0_98, %c161] : memref<32x512xf32, #tpu.memory_space<vmem>>, vector<8x256xf32>
    %c267_99 = arith.constant 267 : index
    %c0_100 = arith.constant 0 : index
    %120 = vector.load %arg2[%c267_99, %c0_100] : memref<272x256xf32, #tpu.memory_space<vmem>>, vector<1x256xf32>
    %121 = vector.broadcast %120 : vector<1x256xf32> to vector<8x256xf32>
    %122 = arith.mulf %119, %121 : vector<8x256xf32>
    %c0_101 = arith.constant 0 : index
    %c162 = arith.constant 162 : index
    %123 = vector.load %arg4[%c0_101, %c162] : memref<32x512xf32, #tpu.memory_space<vmem>>, vector<8x256xf32>
    %c268_102 = arith.constant 268 : index
    %c0_103 = arith.constant 0 : index
    %124 = vector.load %arg2[%c268_102, %c0_103] : memref<272x256xf32, #tpu.memory_space<vmem>>, vector<1x256xf32>
    %125 = vector.broadcast %124 : vector<1x256xf32> to vector<8x256xf32>
    %126 = arith.mulf %123, %125 : vector<8x256xf32>
    %127 = tpu.concatenate %45, %49, %50, %54, %58, %62, %66, %67, %71, %75, %79, %83, %84, %88, %92, %96 in 0 : vector<8x256xf32>, vector<8x256xf32>, vector<8x256xf32>, vector<8x256xf32>, vector<8x256xf32>, vector<8x256xf32>, vector<8x256xf32>, vector<8x256xf32>, vector<8x256xf32>, vector<8x256xf32>, vector<8x256xf32>, vector<8x256xf32>, vector<8x256xf32>, vector<8x256xf32>, vector<8x256xf32>, vector<8x256xf32> -> vector<128x256xf32>
    %128 = tpu.concatenate %100, %101, %105, %109, %113, %117, %118, %122, %126 in 0 : vector<8x256xf32>, vector<8x256xf32>, vector<8x256xf32>, vector<8x256xf32>, vector<8x256xf32>, vector<8x256xf32>, vector<8x256xf32>, vector<8x256xf32>, vector<8x256xf32> -> vector<72x256xf32>
    %129 = tpu.concatenate %127, %128 in 0 : vector<128x256xf32>, vector<72x256xf32> -> vector<200x256xf32>
    %130 = arith.truncf %129 : vector<200x256xf32> to vector<200x256xbf16>
    %c24 = arith.constant 24 : index
    %c0_104 = arith.constant 0 : index
    %131 = vector.load %arg2[%c24, %c0_104] : memref<272x256xf32, #tpu.memory_space<vmem>>, vector<8x200xf32>
    %132 = arith.truncf %131 : vector<8x200xf32> to vector<8x200xbf16>
    %cst_105 = arith.constant dense<0.000000e+00> : vector<8x256xf32>
    %133 = tpu.matmul %132, %130, %cst_105 {dimension_numbers = #tpu.dot_dimension_numbers<[1], [0], [0], [1], [0, 0, 1, 1], [], []>} : vector<8x200xbf16>, vector<200x256xbf16>, vector<8x256xf32> -> vector<8x256xf32>
    %c32 = arith.constant 32 : index
    %c0_106 = arith.constant 0 : index
    %134 = vector.load %arg2[%c32, %c0_106] : memref<272x256xf32, #tpu.memory_space<vmem>>, vector<8x256xf32>
    %135 = arith.addf %133, %134 : vector<8x256xf32>
    %cst_107 = arith.constant 0.000000e+00 : f32
    %136 = vector.broadcast %cst_107 : f32 to vector<8x256xf32>
    %137 = arith.maximumf %135, %136 : vector<8x256xf32>
    %c0_108 = arith.constant 0 : index
    %c128_109 = arith.constant 128 : index
    %138 = vector.load %arg4[%c0_108, %c128_109] : memref<32x512xf32, #tpu.memory_space<vmem>>, vector<8x256xf32>
    tpu.vector_store %arg4[%c0_108, %c128_109], %137 {strides = array<i32>} : memref<32x512xf32, #tpu.memory_space<vmem>>, vector<8x256xf32>,
    %c0_110 = arith.constant 0 : index
    %c94_111 = arith.constant 94 : index
    %139 = vector.load %arg4[%c0_110, %c94_111] : memref<32x512xf32, #tpu.memory_space<vmem>>, vector<8x256xf32>
    %c264_112 = arith.constant 264 : index
    %c0_113 = arith.constant 0 : index
    %140 = vector.load %arg2[%c264_112, %c0_113] : memref<272x256xf32, #tpu.memory_space<vmem>>, vector<1x256xf32>
    %141 = vector.broadcast %140 : vector<1x256xf32> to vector<8x256xf32>
    %142 = arith.mulf %139, %141 : vector<8x256xf32>
    %c0_114 = arith.constant 0 : index
    %c95_115 = arith.constant 95 : index
    %143 = vector.load %arg4[%c0_114, %c95_115] : memref<32x512xf32, #tpu.memory_space<vmem>>, vector<8x256xf32>
    %c265_116 = arith.constant 265 : index
    %c0_117 = arith.constant 0 : index
    %144 = vector.load %arg2[%c265_116, %c0_117] : memref<272x256xf32, #tpu.memory_space<vmem>>, vector<1x256xf32>
    %145 = vector.broadcast %144 : vector<1x256xf32> to vector<8x256xf32>
    %146 = arith.mulf %143, %145 : vector<8x256xf32>
    %c0_118 = arith.constant 0 : index
    %c96_119 = arith.constant 96 : index
    %147 = vector.load %arg4[%c0_118, %c96_119] : memref<32x512xf32, #tpu.memory_space<vmem>>, vector<8x256xf32>
    %c0_120 = arith.constant 0 : index
    %c97_121 = arith.constant 97 : index
    %148 = vector.load %arg4[%c0_120, %c97_121] : memref<32x512xf32, #tpu.memory_space<vmem>>, vector<8x256xf32>
    %c267_122 = arith.constant 267 : index
    %c0_123 = arith.constant 0 : index
    %149 = vector.load %arg2[%c267_122, %c0_123] : memref<272x256xf32, #tpu.memory_space<vmem>>, vector<1x256xf32>
    %150 = vector.broadcast %149 : vector<1x256xf32> to vector<8x256xf32>
    %151 = arith.mulf %148, %150 : vector<8x256xf32>
    %c0_124 = arith.constant 0 : index
    %c98_125 = arith.constant 98 : index
    %152 = vector.load %arg4[%c0_124, %c98_125] : memref<32x512xf32, #tpu.memory_space<vmem>>, vector<8x256xf32>
    %c268_126 = arith.constant 268 : index
    %c0_127 = arith.constant 0 : index
    %153 = vector.load %arg2[%c268_126, %c0_127] : memref<272x256xf32, #tpu.memory_space<vmem>>, vector<1x256xf32>
    %154 = vector.broadcast %153 : vector<1x256xf32> to vector<8x256xf32>
    %155 = arith.mulf %152, %154 : vector<8x256xf32>
    %c0_128 = arith.constant 0 : index
    %c110_129 = arith.constant 110 : index
    %156 = vector.load %arg4[%c0_128, %c110_129] : memref<32x512xf32, #tpu.memory_space<vmem>>, vector<8x256xf32>
    %c264_130 = arith.constant 264 : index
    %c0_131 = arith.constant 0 : index
    %157 = vector.load %arg2[%c264_130, %c0_131] : memref<272x256xf32, #tpu.memory_space<vmem>>, vector<1x256xf32>
    %158 = vector.broadcast %157 : vector<1x256xf32> to vector<8x256xf32>
    %159 = arith.mulf %156, %158 : vector<8x256xf32>
    %c0_132 = arith.constant 0 : index
    %c111_133 = arith.constant 111 : index
    %160 = vector.load %arg4[%c0_132, %c111_133] : memref<32x512xf32, #tpu.memory_space<vmem>>, vector<8x256xf32>
    %c265_134 = arith.constant 265 : index
    %c0_135 = arith.constant 0 : index
    %161 = vector.load %arg2[%c265_134, %c0_135] : memref<272x256xf32, #tpu.memory_space<vmem>>, vector<1x256xf32>
    %162 = vector.broadcast %161 : vector<1x256xf32> to vector<8x256xf32>
    %163 = arith.mulf %160, %162 : vector<8x256xf32>
    %c0_136 = arith.constant 0 : index
    %c112_137 = arith.constant 112 : index
    %164 = vector.load %arg4[%c0_136, %c112_137] : memref<32x512xf32, #tpu.memory_space<vmem>>, vector<8x256xf32>
    %c0_138 = arith.constant 0 : index
    %c113_139 = arith.constant 113 : index
    %165 = vector.load %arg4[%c0_138, %c113_139] : memref<32x512xf32, #tpu.memory_space<vmem>>, vector<8x256xf32>
    %c267_140 = arith.constant 267 : index
    %c0_141 = arith.constant 0 : index
    %166 = vector.load %arg2[%c267_140, %c0_141] : memref<272x256xf32, #tpu.memory_space<vmem>>, vector<1x256xf32>
    %167 = vector.broadcast %166 : vector<1x256xf32> to vector<8x256xf32>
    %168 = arith.mulf %165, %167 : vector<8x256xf32>
    %c0_142 = arith.constant 0 : index
    %c114_143 = arith.constant 114 : index
    %169 = vector.load %arg4[%c0_142, %c114_143] : memref<32x512xf32, #tpu.memory_space<vmem>>, vector<8x256xf32>
    %c268_144 = arith.constant 268 : index
    %c0_145 = arith.constant 0 : index
    %170 = vector.load %arg2[%c268_144, %c0_145] : memref<272x256xf32, #tpu.memory_space<vmem>>, vector<1x256xf32>
    %171 = vector.broadcast %170 : vector<1x256xf32> to vector<8x256xf32>
    %172 = arith.mulf %169, %171 : vector<8x256xf32>
    %c0_146 = arith.constant 0 : index
    %c126_147 = arith.constant 126 : index
    %173 = vector.load %arg4[%c0_146, %c126_147] : memref<32x512xf32, #tpu.memory_space<vmem>>, vector<8x256xf32>
    %c264_148 = arith.constant 264 : index
    %c0_149 = arith.constant 0 : index
    %174 = vector.load %arg2[%c264_148, %c0_149] : memref<272x256xf32, #tpu.memory_space<vmem>>, vector<1x256xf32>
    %175 = vector.broadcast %174 : vector<1x256xf32> to vector<8x256xf32>
    %176 = arith.mulf %173, %175 : vector<8x256xf32>
    %c0_150 = arith.constant 0 : index
    %c127_151 = arith.constant 127 : index
    %177 = vector.load %arg4[%c0_150, %c127_151] : memref<32x512xf32, #tpu.memory_space<vmem>>, vector<8x256xf32>
    %c265_152 = arith.constant 265 : index
    %c0_153 = arith.constant 0 : index
    %178 = vector.load %arg2[%c265_152, %c0_153] : memref<272x256xf32, #tpu.memory_space<vmem>>, vector<1x256xf32>
    %179 = vector.broadcast %178 : vector<1x256xf32> to vector<8x256xf32>
    %180 = arith.mulf %177, %179 : vector<8x256xf32>
    %c0_154 = arith.constant 0 : index
    %c128_155 = arith.constant 128 : index
    %181 = vector.load %arg4[%c0_154, %c128_155] : memref<32x512xf32, #tpu.memory_space<vmem>>, vector<8x256xf32>
    %c0_156 = arith.constant 0 : index
    %c129_157 = arith.constant 129 : index
    %182 = vector.load %arg4[%c0_156, %c129_157] : memref<32x512xf32, #tpu.memory_space<vmem>>, vector<8x256xf32>
    %c267_158 = arith.constant 267 : index
    %c0_159 = arith.constant 0 : index
    %183 = vector.load %arg2[%c267_158, %c0_159] : memref<272x256xf32, #tpu.memory_space<vmem>>, vector<1x256xf32>
    %184 = vector.broadcast %183 : vector<1x256xf32> to vector<8x256xf32>
    %185 = arith.mulf %182, %184 : vector<8x256xf32>
    %c0_160 = arith.constant 0 : index
    %c130_161 = arith.constant 130 : index
    %186 = vector.load %arg4[%c0_160, %c130_161] : memref<32x512xf32, #tpu.memory_space<vmem>>, vector<8x256xf32>
    %c268_162 = arith.constant 268 : index
    %c0_163 = arith.constant 0 : index
    %187 = vector.load %arg2[%c268_162, %c0_163] : memref<272x256xf32, #tpu.memory_space<vmem>>, vector<1x256xf32>
    %188 = vector.broadcast %187 : vector<1x256xf32> to vector<8x256xf32>
    %189 = arith.mulf %186, %188 : vector<8x256xf32>
    %c0_164 = arith.constant 0 : index
    %c142_165 = arith.constant 142 : index
    %190 = vector.load %arg4[%c0_164, %c142_165] : memref<32x512xf32, #tpu.memory_space<vmem>>, vector<8x256xf32>
    %c264_166 = arith.constant 264 : index
    %c0_167 = arith.constant 0 : index
    %191 = vector.load %arg2[%c264_166, %c0_167] : memref<272x256xf32, #tpu.memory_space<vmem>>, vector<1x256xf32>
    %192 = vector.broadcast %191 : vector<1x256xf32> to vector<8x256xf32>
    %193 = arith.mulf %190, %192 : vector<8x256xf32>
    %c0_168 = arith.constant 0 : index
    %c143_169 = arith.constant 143 : index
    %194 = vector.load %arg4[%c0_168, %c143_169] : memref<32x512xf32, #tpu.memory_space<vmem>>, vector<8x256xf32>
    %c265_170 = arith.constant 265 : index
    %c0_171 = arith.constant 0 : index
    %195 = vector.load %arg2[%c265_170, %c0_171] : memref<272x256xf32, #tpu.memory_space<vmem>>, vector<1x256xf32>
    %196 = vector.broadcast %195 : vector<1x256xf32> to vector<8x256xf32>
    %197 = arith.mulf %194, %196 : vector<8x256xf32>
    %c0_172 = arith.constant 0 : index
    %c144_173 = arith.constant 144 : index
    %198 = vector.load %arg4[%c0_172, %c144_173] : memref<32x512xf32, #tpu.memory_space<vmem>>, vector<8x256xf32>
    %c0_174 = arith.constant 0 : index
    %c145_175 = arith.constant 145 : index
    %199 = vector.load %arg4[%c0_174, %c145_175] : memref<32x512xf32, #tpu.memory_space<vmem>>, vector<8x256xf32>
    %c267_176 = arith.constant 267 : index
    %c0_177 = arith.constant 0 : index
    %200 = vector.load %arg2[%c267_176, %c0_177] : memref<272x256xf32, #tpu.memory_space<vmem>>, vector<1x256xf32>
    %201 = vector.broadcast %200 : vector<1x256xf32> to vector<8x256xf32>
    %202 = arith.mulf %199, %201 : vector<8x256xf32>
    %c0_178 = arith.constant 0 : index
    %c146_179 = arith.constant 146 : index
    %203 = vector.load %arg4[%c0_178, %c146_179] : memref<32x512xf32, #tpu.memory_space<vmem>>, vector<8x256xf32>
    %c268_180 = arith.constant 268 : index
    %c0_181 = arith.constant 0 : index
    %204 = vector.load %arg2[%c268_180, %c0_181] : memref<272x256xf32, #tpu.memory_space<vmem>>, vector<1x256xf32>
    %205 = vector.broadcast %204 : vector<1x256xf32> to vector<8x256xf32>
    %206 = arith.mulf %203, %205 : vector<8x256xf32>
    %c0_182 = arith.constant 0 : index
    %c158_183 = arith.constant 158 : index
    %207 = vector.load %arg4[%c0_182, %c158_183] : memref<32x512xf32, #tpu.memory_space<vmem>>, vector<8x256xf32>
    %c264_184 = arith.constant 264 : index
    %c0_185 = arith.constant 0 : index
    %208 = vector.load %arg2[%c264_184, %c0_185] : memref<272x256xf32, #tpu.memory_space<vmem>>, vector<1x256xf32>
    %209 = vector.broadcast %208 : vector<1x256xf32> to vector<8x256xf32>
    %210 = arith.mulf %207, %209 : vector<8x256xf32>
    %c0_186 = arith.constant 0 : index
    %c159_187 = arith.constant 159 : index
    %211 = vector.load %arg4[%c0_186, %c159_187] : memref<32x512xf32, #tpu.memory_space<vmem>>, vector<8x256xf32>
    %c265_188 = arith.constant 265 : index
    %c0_189 = arith.constant 0 : index
    %212 = vector.load %arg2[%c265_188, %c0_189] : memref<272x256xf32, #tpu.memory_space<vmem>>, vector<1x256xf32>
    %213 = vector.broadcast %212 : vector<1x256xf32> to vector<8x256xf32>
    %214 = arith.mulf %211, %213 : vector<8x256xf32>
    %c0_190 = arith.constant 0 : index
    %c160_191 = arith.constant 160 : index
    %215 = vector.load %arg4[%c0_190, %c160_191] : memref<32x512xf32, #tpu.memory_space<vmem>>, vector<8x256xf32>
    %c0_192 = arith.constant 0 : index
    %c161_193 = arith.constant 161 : index
    %216 = vector.load %arg4[%c0_192, %c161_193] : memref<32x512xf32, #tpu.memory_space<vmem>>, vector<8x256xf32>
    %c267_194 = arith.constant 267 : index
    %c0_195 = arith.constant 0 : index
    %217 = vector.load %arg2[%c267_194, %c0_195] : memref<272x256xf32, #tpu.memory_space<vmem>>, vector<1x256xf32>
    %218 = vector.broadcast %217 : vector<1x256xf32> to vector<8x256xf32>
    %219 = arith.mulf %216, %218 : vector<8x256xf32>
    %c0_196 = arith.constant 0 : index
    %c162_197 = arith.constant 162 : index
    %220 = vector.load %arg4[%c0_196, %c162_197] : memref<32x512xf32, #tpu.memory_space<vmem>>, vector<8x256xf32>
    %c268_198 = arith.constant 268 : index
    %c0_199 = arith.constant 0 : index
    %221 = vector.load %arg2[%c268_198, %c0_199] : memref<272x256xf32, #tpu.memory_space<vmem>>, vector<1x256xf32>
    %222 = vector.broadcast %221 : vector<1x256xf32> to vector<8x256xf32>
    %223 = arith.mulf %220, %222 : vector<8x256xf32>
    %224 = tpu.concatenate %142, %146, %147, %151, %155, %159, %163, %164, %168, %172, %176, %180, %181, %185, %189, %193 in 0 : vector<8x256xf32>, vector<8x256xf32>, vector<8x256xf32>, vector<8x256xf32>, vector<8x256xf32>, vector<8x256xf32>, vector<8x256xf32>, vector<8x256xf32>, vector<8x256xf32>, vector<8x256xf32>, vector<8x256xf32>, vector<8x256xf32>, vector<8x256xf32>, vector<8x256xf32>, vector<8x256xf32>, vector<8x256xf32> -> vector<128x256xf32>
    %225 = tpu.concatenate %197, %198, %202, %206, %210, %214, %215, %219, %223 in 0 : vector<8x256xf32>, vector<8x256xf32>, vector<8x256xf32>, vector<8x256xf32>, vector<8x256xf32>, vector<8x256xf32>, vector<8x256xf32>, vector<8x256xf32>, vector<8x256xf32> -> vector<72x256xf32>
    %226 = tpu.concatenate %224, %225 in 0 : vector<128x256xf32>, vector<72x256xf32> -> vector<200x256xf32>
    %227 = arith.truncf %226 : vector<200x256xf32> to vector<200x256xbf16>
    %c40 = arith.constant 40 : index
    %c0_200 = arith.constant 0 : index
    %228 = vector.load %arg2[%c40, %c0_200] : memref<272x256xf32, #tpu.memory_space<vmem>>, vector<8x200xf32>
    %229 = arith.truncf %228 : vector<8x200xf32> to vector<8x200xbf16>
    %cst_201 = arith.constant dense<0.000000e+00> : vector<8x256xf32>
    %230 = tpu.matmul %229, %227, %cst_201 {dimension_numbers = #tpu.dot_dimension_numbers<[1], [0], [0], [1], [0, 0, 1, 1], [], []>} : vector<8x200xbf16>, vector<200x256xbf16>, vector<8x256xf32> -> vector<8x256xf32>
    %c48 = arith.constant 48 : index
    %c0_202 = arith.constant 0 : index
    %231 = vector.load %arg2[%c48, %c0_202] : memref<272x256xf32, #tpu.memory_space<vmem>>, vector<8x256xf32>
    %232 = arith.addf %230, %231 : vector<8x256xf32>
    %233 = arith.addf %232, %40 : vector<8x256xf32>
    %c0_203 = arith.constant 0 : index
    %c128_204 = arith.constant 128 : index
    %234 = vector.load %arg4[%c0_203, %c128_204] : memref<32x512xf32, #tpu.memory_space<vmem>>, vector<8x256xf32>
    tpu.vector_store %arg4[%c0_203, %c128_204], %233 {strides = array<i32>} : memref<32x512xf32, #tpu.memory_space<vmem>>, vector<8x256xf32>,
    %c0_205 = arith.constant 0 : index
    %c94_206 = arith.constant 94 : index
    %235 = vector.load %arg4[%c0_205, %c94_206] : memref<32x512xf32, #tpu.memory_space<vmem>>, vector<8x256xf32>
    %c264_207 = arith.constant 264 : index
    %c0_208 = arith.constant 0 : index
    %236 = vector.load %arg2[%c264_207, %c0_208] : memref<272x256xf32, #tpu.memory_space<vmem>>, vector<1x256xf32>
    %237 = vector.broadcast %236 : vector<1x256xf32> to vector<8x256xf32>
    %238 = arith.mulf %235, %237 : vector<8x256xf32>
    %c0_209 = arith.constant 0 : index
    %c95_210 = arith.constant 95 : index
    %239 = vector.load %arg4[%c0_209, %c95_210] : memref<32x512xf32, #tpu.memory_space<vmem>>, vector<8x256xf32>
    %c265_211 = arith.constant 265 : index
    %c0_212 = arith.constant 0 : index
    %240 = vector.load %arg2[%c265_211, %c0_212] : memref<272x256xf32, #tpu.memory_space<vmem>>, vector<1x256xf32>
    %241 = vector.broadcast %240 : vector<1x256xf32> to vector<8x256xf32>
    %242 = arith.mulf %239, %241 : vector<8x256xf32>
    %c0_213 = arith.constant 0 : index
    %c96_214 = arith.constant 96 : index
    %243 = vector.load %arg4[%c0_213, %c96_214] : memref<32x512xf32, #tpu.memory_space<vmem>>, vector<8x256xf32>
    %c0_215 = arith.constant 0 : index
    %c97_216 = arith.constant 97 : index
    %244 = vector.load %arg4[%c0_215, %c97_216] : memref<32x512xf32, #tpu.memory_space<vmem>>, vector<8x256xf32>
    %c267_217 = arith.constant 267 : index
    %c0_218 = arith.constant 0 : index
    %245 = vector.load %arg2[%c267_217, %c0_218] : memref<272x256xf32, #tpu.memory_space<vmem>>, vector<1x256xf32>
    %246 = vector.broadcast %245 : vector<1x256xf32> to vector<8x256xf32>
    %247 = arith.mulf %244, %246 : vector<8x256xf32>
    %c0_219 = arith.constant 0 : index
    %c98_220 = arith.constant 98 : index
    %248 = vector.load %arg4[%c0_219, %c98_220] : memref<32x512xf32, #tpu.memory_space<vmem>>, vector<8x256xf32>
    %c268_221 = arith.constant 268 : index
    %c0_222 = arith.constant 0 : index
    %249 = vector.load %arg2[%c268_221, %c0_222] : memref<272x256xf32, #tpu.memory_space<vmem>>, vector<1x256xf32>
    %250 = vector.broadcast %249 : vector<1x256xf32> to vector<8x256xf32>
    %251 = arith.mulf %248, %250 : vector<8x256xf32>
    %c0_223 = arith.constant 0 : index
    %c110_224 = arith.constant 110 : index
    %252 = vector.load %arg4[%c0_223, %c110_224] : memref<32x512xf32, #tpu.memory_space<vmem>>, vector<8x256xf32>
    %c264_225 = arith.constant 264 : index
    %c0_226 = arith.constant 0 : index
    %253 = vector.load %arg2[%c264_225, %c0_226] : memref<272x256xf32, #tpu.memory_space<vmem>>, vector<1x256xf32>
    %254 = vector.broadcast %253 : vector<1x256xf32> to vector<8x256xf32>
    %255 = arith.mulf %252, %254 : vector<8x256xf32>
    %c0_227 = arith.constant 0 : index
    %c111_228 = arith.constant 111 : index
    %256 = vector.load %arg4[%c0_227, %c111_228] : memref<32x512xf32, #tpu.memory_space<vmem>>, vector<8x256xf32>
    %c265_229 = arith.constant 265 : index
    %c0_230 = arith.constant 0 : index
    %257 = vector.load %arg2[%c265_229, %c0_230] : memref<272x256xf32, #tpu.memory_space<vmem>>, vector<1x256xf32>
    %258 = vector.broadcast %257 : vector<1x256xf32> to vector<8x256xf32>
    %259 = arith.mulf %256, %258 : vector<8x256xf32>
    %c0_231 = arith.constant 0 : index
    %c112_232 = arith.constant 112 : index
    %260 = vector.load %arg4[%c0_231, %c112_232] : memref<32x512xf32, #tpu.memory_space<vmem>>, vector<8x256xf32>
    %c0_233 = arith.constant 0 : index
    %c113_234 = arith.constant 113 : index
    %261 = vector.load %arg4[%c0_233, %c113_234] : memref<32x512xf32, #tpu.memory_space<vmem>>, vector<8x256xf32>
    %c267_235 = arith.constant 267 : index
    %c0_236 = arith.constant 0 : index
    %262 = vector.load %arg2[%c267_235, %c0_236] : memref<272x256xf32, #tpu.memory_space<vmem>>, vector<1x256xf32>
    %263 = vector.broadcast %262 : vector<1x256xf32> to vector<8x256xf32>
    %264 = arith.mulf %261, %263 : vector<8x256xf32>
    %c0_237 = arith.constant 0 : index
    %c114_238 = arith.constant 114 : index
    %265 = vector.load %arg4[%c0_237, %c114_238] : memref<32x512xf32, #tpu.memory_space<vmem>>, vector<8x256xf32>
    %c268_239 = arith.constant 268 : index
    %c0_240 = arith.constant 0 : index
    %266 = vector.load %arg2[%c268_239, %c0_240] : memref<272x256xf32, #tpu.memory_space<vmem>>, vector<1x256xf32>
    %267 = vector.broadcast %266 : vector<1x256xf32> to vector<8x256xf32>
    %268 = arith.mulf %265, %267 : vector<8x256xf32>
    %c0_241 = arith.constant 0 : index
    %c126_242 = arith.constant 126 : index
    %269 = vector.load %arg4[%c0_241, %c126_242] : memref<32x512xf32, #tpu.memory_space<vmem>>, vector<8x256xf32>
    %c264_243 = arith.constant 264 : index
    %c0_244 = arith.constant 0 : index
    %270 = vector.load %arg2[%c264_243, %c0_244] : memref<272x256xf32, #tpu.memory_space<vmem>>, vector<1x256xf32>
    %271 = vector.broadcast %270 : vector<1x256xf32> to vector<8x256xf32>
    %272 = arith.mulf %269, %271 : vector<8x256xf32>
    %c0_245 = arith.constant 0 : index
    %c127_246 = arith.constant 127 : index
    %273 = vector.load %arg4[%c0_245, %c127_246] : memref<32x512xf32, #tpu.memory_space<vmem>>, vector<8x256xf32>
    %c265_247 = arith.constant 265 : index
    %c0_248 = arith.constant 0 : index
    %274 = vector.load %arg2[%c265_247, %c0_248] : memref<272x256xf32, #tpu.memory_space<vmem>>, vector<1x256xf32>
    %275 = vector.broadcast %274 : vector<1x256xf32> to vector<8x256xf32>
    %276 = arith.mulf %273, %275 : vector<8x256xf32>
    %c0_249 = arith.constant 0 : index
    %c128_250 = arith.constant 128 : index
    %277 = vector.load %arg4[%c0_249, %c128_250] : memref<32x512xf32, #tpu.memory_space<vmem>>, vector<8x256xf32>
    %c0_251 = arith.constant 0 : index
    %c129_252 = arith.constant 129 : index
    %278 = vector.load %arg4[%c0_251, %c129_252] : memref<32x512xf32, #tpu.memory_space<vmem>>, vector<8x256xf32>
    %c267_253 = arith.constant 267 : index
    %c0_254 = arith.constant 0 : index
    %279 = vector.load %arg2[%c267_253, %c0_254] : memref<272x256xf32, #tpu.memory_space<vmem>>, vector<1x256xf32>
    %280 = vector.broadcast %279 : vector<1x256xf32> to vector<8x256xf32>
    %281 = arith.mulf %278, %280 : vector<8x256xf32>
    %c0_255 = arith.constant 0 : index
    %c130_256 = arith.constant 130 : index
    %282 = vector.load %arg4[%c0_255, %c130_256] : memref<32x512xf32, #tpu.memory_space<vmem>>, vector<8x256xf32>
    %c268_257 = arith.constant 268 : index
    %c0_258 = arith.constant 0 : index
    %283 = vector.load %arg2[%c268_257, %c0_258] : memref<272x256xf32, #tpu.memory_space<vmem>>, vector<1x256xf32>
    %284 = vector.broadcast %283 : vector<1x256xf32> to vector<8x256xf32>
    %285 = arith.mulf %282, %284 : vector<8x256xf32>
    %c0_259 = arith.constant 0 : index
    %c142_260 = arith.constant 142 : index
    %286 = vector.load %arg4[%c0_259, %c142_260] : memref<32x512xf32, #tpu.memory_space<vmem>>, vector<8x256xf32>
    %c264_261 = arith.constant 264 : index
    %c0_262 = arith.constant 0 : index
    %287 = vector.load %arg2[%c264_261, %c0_262] : memref<272x256xf32, #tpu.memory_space<vmem>>, vector<1x256xf32>
    %288 = vector.broadcast %287 : vector<1x256xf32> to vector<8x256xf32>
    %289 = arith.mulf %286, %288 : vector<8x256xf32>
    %c0_263 = arith.constant 0 : index
    %c143_264 = arith.constant 143 : index
    %290 = vector.load %arg4[%c0_263, %c143_264] : memref<32x512xf32, #tpu.memory_space<vmem>>, vector<8x256xf32>
    %c265_265 = arith.constant 265 : index
    %c0_266 = arith.constant 0 : index
    %291 = vector.load %arg2[%c265_265, %c0_266] : memref<272x256xf32, #tpu.memory_space<vmem>>, vector<1x256xf32>
    %292 = vector.broadcast %291 : vector<1x256xf32> to vector<8x256xf32>
    %293 = arith.mulf %290, %292 : vector<8x256xf32>
    %c0_267 = arith.constant 0 : index
    %c144_268 = arith.constant 144 : index
    %294 = vector.load %arg4[%c0_267, %c144_268] : memref<32x512xf32, #tpu.memory_space<vmem>>, vector<8x256xf32>
    %c0_269 = arith.constant 0 : index
    %c145_270 = arith.constant 145 : index
    %295 = vector.load %arg4[%c0_269, %c145_270] : memref<32x512xf32, #tpu.memory_space<vmem>>, vector<8x256xf32>
    %c267_271 = arith.constant 267 : index
    %c0_272 = arith.constant 0 : index
    %296 = vector.load %arg2[%c267_271, %c0_272] : memref<272x256xf32, #tpu.memory_space<vmem>>, vector<1x256xf32>
    %297 = vector.broadcast %296 : vector<1x256xf32> to vector<8x256xf32>
    %298 = arith.mulf %295, %297 : vector<8x256xf32>
    %c0_273 = arith.constant 0 : index
    %c146_274 = arith.constant 146 : index
    %299 = vector.load %arg4[%c0_273, %c146_274] : memref<32x512xf32, #tpu.memory_space<vmem>>, vector<8x256xf32>
    %c268_275 = arith.constant 268 : index
    %c0_276 = arith.constant 0 : index
    %300 = vector.load %arg2[%c268_275, %c0_276] : memref<272x256xf32, #tpu.memory_space<vmem>>, vector<1x256xf32>
    %301 = vector.broadcast %300 : vector<1x256xf32> to vector<8x256xf32>
    %302 = arith.mulf %299, %301 : vector<8x256xf32>
    %c0_277 = arith.constant 0 : index
    %c158_278 = arith.constant 158 : index
    %303 = vector.load %arg4[%c0_277, %c158_278] : memref<32x512xf32, #tpu.memory_space<vmem>>, vector<8x256xf32>
    %c264_279 = arith.constant 264 : index
    %c0_280 = arith.constant 0 : index
    %304 = vector.load %arg2[%c264_279, %c0_280] : memref<272x256xf32, #tpu.memory_space<vmem>>, vector<1x256xf32>
    %305 = vector.broadcast %304 : vector<1x256xf32> to vector<8x256xf32>
    %306 = arith.mulf %303, %305 : vector<8x256xf32>
    %c0_281 = arith.constant 0 : index
    %c159_282 = arith.constant 159 : index
    %307 = vector.load %arg4[%c0_281, %c159_282] : memref<32x512xf32, #tpu.memory_space<vmem>>, vector<8x256xf32>
    %c265_283 = arith.constant 265 : index
    %c0_284 = arith.constant 0 : index
    %308 = vector.load %arg2[%c265_283, %c0_284] : memref<272x256xf32, #tpu.memory_space<vmem>>, vector<1x256xf32>
    %309 = vector.broadcast %308 : vector<1x256xf32> to vector<8x256xf32>
    %310 = arith.mulf %307, %309 : vector<8x256xf32>
    %c0_285 = arith.constant 0 : index
    %c160_286 = arith.constant 160 : index
    %311 = vector.load %arg4[%c0_285, %c160_286] : memref<32x512xf32, #tpu.memory_space<vmem>>, vector<8x256xf32>
    %c0_287 = arith.constant 0 : index
    %c161_288 = arith.constant 161 : index
    %312 = vector.load %arg4[%c0_287, %c161_288] : memref<32x512xf32, #tpu.memory_space<vmem>>, vector<8x256xf32>
    %c267_289 = arith.constant 267 : index
    %c0_290 = arith.constant 0 : index
    %313 = vector.load %arg2[%c267_289, %c0_290] : memref<272x256xf32, #tpu.memory_space<vmem>>, vector<1x256xf32>
    %314 = vector.broadcast %313 : vector<1x256xf32> to vector<8x256xf32>
    %315 = arith.mulf %312, %314 : vector<8x256xf32>
    %c0_291 = arith.constant 0 : index
    %c162_292 = arith.constant 162 : index
    %316 = vector.load %arg4[%c0_291, %c162_292] : memref<32x512xf32, #tpu.memory_space<vmem>>, vector<8x256xf32>
    %c268_293 = arith.constant 268 : index
    %c0_294 = arith.constant 0 : index
    %317 = vector.load %arg2[%c268_293, %c0_294] : memref<272x256xf32, #tpu.memory_space<vmem>>, vector<1x256xf32>
    %318 = vector.broadcast %317 : vector<1x256xf32> to vector<8x256xf32>
    %319 = arith.mulf %316, %318 : vector<8x256xf32>
    %320 = tpu.concatenate %238, %242, %243, %247, %251, %255, %259, %260, %264, %268, %272, %276, %277, %281, %285, %289 in 0 : vector<8x256xf32>, vector<8x256xf32>, vector<8x256xf32>, vector<8x256xf32>, vector<8x256xf32>, vector<8x256xf32>, vector<8x256xf32>, vector<8x256xf32>, vector<8x256xf32>, vector<8x256xf32>, vector<8x256xf32>, vector<8x256xf32>, vector<8x256xf32>, vector<8x256xf32>, vector<8x256xf32>, vector<8x256xf32> -> vector<128x256xf32>
    %321 = tpu.concatenate %293, %294, %298, %302, %306, %310, %311, %315, %319 in 0 : vector<8x256xf32>, vector<8x256xf32>, vector<8x256xf32>, vector<8x256xf32>, vector<8x256xf32>, vector<8x256xf32>, vector<8x256xf32>, vector<8x256xf32>, vector<8x256xf32> -> vector<72x256xf32>
    %322 = tpu.concatenate %320, %321 in 0 : vector<128x256xf32>, vector<72x256xf32> -> vector<200x256xf32>
    %323 = arith.truncf %322 : vector<200x256xf32> to vector<200x256xbf16>
    %c56 = arith.constant 56 : index
    %c0_295 = arith.constant 0 : index
    %324 = vector.load %arg2[%c56, %c0_295] : memref<272x256xf32, #tpu.memory_space<vmem>>, vector<8x200xf32>
    %325 = arith.truncf %324 : vector<8x200xf32> to vector<8x200xbf16>
    %cst_296 = arith.constant dense<0.000000e+00> : vector<8x256xf32>
    %326 = tpu.matmul %325, %323, %cst_296 {dimension_numbers = #tpu.dot_dimension_numbers<[1], [0], [0], [1], [0, 0, 1, 1], [], []>} : vector<8x200xbf16>, vector<200x256xbf16>, vector<8x256xf32> -> vector<8x256xf32>
    %c64 = arith.constant 64 : index
    %c0_297 = arith.constant 0 : index
    %327 = vector.load %arg2[%c64, %c0_297] : memref<272x256xf32, #tpu.memory_space<vmem>>, vector<8x256xf32>
    %328 = arith.addf %326, %327 : vector<8x256xf32>
    %cst_298 = arith.constant 0.000000e+00 : f32
    %329 = vector.broadcast %cst_298 : f32 to vector<8x256xf32>
    %330 = arith.maximumf %328, %329 : vector<8x256xf32>
    %c0_299 = arith.constant 0 : index
    %c128_300 = arith.constant 128 : index
    %331 = vector.load %arg4[%c0_299, %c128_300] : memref<32x512xf32, #tpu.memory_space<vmem>>, vector<8x256xf32>
    tpu.vector_store %arg4[%c0_299, %c128_300], %330 {strides = array<i32>} : memref<32x512xf32, #tpu.memory_space<vmem>>, vector<8x256xf32>,
    %c0_301 = arith.constant 0 : index
    %c94_302 = arith.constant 94 : index
    %332 = vector.load %arg4[%c0_301, %c94_302] : memref<32x512xf32, #tpu.memory_space<vmem>>, vector<8x256xf32>
    %c264_303 = arith.constant 264 : index
    %c0_304 = arith.constant 0 : index
    %333 = vector.load %arg2[%c264_303, %c0_304] : memref<272x256xf32, #tpu.memory_space<vmem>>, vector<1x256xf32>
    %334 = vector.broadcast %333 : vector<1x256xf32> to vector<8x256xf32>
    %335 = arith.mulf %332, %334 : vector<8x256xf32>
    %c0_305 = arith.constant 0 : index
    %c95_306 = arith.constant 95 : index
    %336 = vector.load %arg4[%c0_305, %c95_306] : memref<32x512xf32, #tpu.memory_space<vmem>>, vector<8x256xf32>
    %c265_307 = arith.constant 265 : index
    %c0_308 = arith.constant 0 : index
    %337 = vector.load %arg2[%c265_307, %c0_308] : memref<272x256xf32, #tpu.memory_space<vmem>>, vector<1x256xf32>
    %338 = vector.broadcast %337 : vector<1x256xf32> to vector<8x256xf32>
    %339 = arith.mulf %336, %338 : vector<8x256xf32>
    %c0_309 = arith.constant 0 : index
    %c96_310 = arith.constant 96 : index
    %340 = vector.load %arg4[%c0_309, %c96_310] : memref<32x512xf32, #tpu.memory_space<vmem>>, vector<8x256xf32>
    %c0_311 = arith.constant 0 : index
    %c97_312 = arith.constant 97 : index
    %341 = vector.load %arg4[%c0_311, %c97_312] : memref<32x512xf32, #tpu.memory_space<vmem>>, vector<8x256xf32>
    %c267_313 = arith.constant 267 : index
    %c0_314 = arith.constant 0 : index
    %342 = vector.load %arg2[%c267_313, %c0_314] : memref<272x256xf32, #tpu.memory_space<vmem>>, vector<1x256xf32>
    %343 = vector.broadcast %342 : vector<1x256xf32> to vector<8x256xf32>
    %344 = arith.mulf %341, %343 : vector<8x256xf32>
    %c0_315 = arith.constant 0 : index
    %c98_316 = arith.constant 98 : index
    %345 = vector.load %arg4[%c0_315, %c98_316] : memref<32x512xf32, #tpu.memory_space<vmem>>, vector<8x256xf32>
    %c268_317 = arith.constant 268 : index
    %c0_318 = arith.constant 0 : index
    %346 = vector.load %arg2[%c268_317, %c0_318] : memref<272x256xf32, #tpu.memory_space<vmem>>, vector<1x256xf32>
    %347 = vector.broadcast %346 : vector<1x256xf32> to vector<8x256xf32>
    %348 = arith.mulf %345, %347 : vector<8x256xf32>
    %c0_319 = arith.constant 0 : index
    %c110_320 = arith.constant 110 : index
    %349 = vector.load %arg4[%c0_319, %c110_320] : memref<32x512xf32, #tpu.memory_space<vmem>>, vector<8x256xf32>
    %c264_321 = arith.constant 264 : index
    %c0_322 = arith.constant 0 : index
    %350 = vector.load %arg2[%c264_321, %c0_322] : memref<272x256xf32, #tpu.memory_space<vmem>>, vector<1x256xf32>
    %351 = vector.broadcast %350 : vector<1x256xf32> to vector<8x256xf32>
    %352 = arith.mulf %349, %351 : vector<8x256xf32>
    %c0_323 = arith.constant 0 : index
    %c111_324 = arith.constant 111 : index
    %353 = vector.load %arg4[%c0_323, %c111_324] : memref<32x512xf32, #tpu.memory_space<vmem>>, vector<8x256xf32>
    %c265_325 = arith.constant 265 : index
    %c0_326 = arith.constant 0 : index
    %354 = vector.load %arg2[%c265_325, %c0_326] : memref<272x256xf32, #tpu.memory_space<vmem>>, vector<1x256xf32>
    %355 = vector.broadcast %354 : vector<1x256xf32> to vector<8x256xf32>
    %356 = arith.mulf %353, %355 : vector<8x256xf32>
    %c0_327 = arith.constant 0 : index
    %c112_328 = arith.constant 112 : index
    %357 = vector.load %arg4[%c0_327, %c112_328] : memref<32x512xf32, #tpu.memory_space<vmem>>, vector<8x256xf32>
    %c0_329 = arith.constant 0 : index
    %c113_330 = arith.constant 113 : index
    %358 = vector.load %arg4[%c0_329, %c113_330] : memref<32x512xf32, #tpu.memory_space<vmem>>, vector<8x256xf32>
    %c267_331 = arith.constant 267 : index
    %c0_332 = arith.constant 0 : index
    %359 = vector.load %arg2[%c267_331, %c0_332] : memref<272x256xf32, #tpu.memory_space<vmem>>, vector<1x256xf32>
    %360 = vector.broadcast %359 : vector<1x256xf32> to vector<8x256xf32>
    %361 = arith.mulf %358, %360 : vector<8x256xf32>
    %c0_333 = arith.constant 0 : index
    %c114_334 = arith.constant 114 : index
    %362 = vector.load %arg4[%c0_333, %c114_334] : memref<32x512xf32, #tpu.memory_space<vmem>>, vector<8x256xf32>
    %c268_335 = arith.constant 268 : index
    %c0_336 = arith.constant 0 : index
    %363 = vector.load %arg2[%c268_335, %c0_336] : memref<272x256xf32, #tpu.memory_space<vmem>>, vector<1x256xf32>
    %364 = vector.broadcast %363 : vector<1x256xf32> to vector<8x256xf32>
    %365 = arith.mulf %362, %364 : vector<8x256xf32>
    %c0_337 = arith.constant 0 : index
    %c126_338 = arith.constant 126 : index
    %366 = vector.load %arg4[%c0_337, %c126_338] : memref<32x512xf32, #tpu.memory_space<vmem>>, vector<8x256xf32>
    %c264_339 = arith.constant 264 : index
    %c0_340 = arith.constant 0 : index
    %367 = vector.load %arg2[%c264_339, %c0_340] : memref<272x256xf32, #tpu.memory_space<vmem>>, vector<1x256xf32>
    %368 = vector.broadcast %367 : vector<1x256xf32> to vector<8x256xf32>
    %369 = arith.mulf %366, %368 : vector<8x256xf32>
    %c0_341 = arith.constant 0 : index
    %c127_342 = arith.constant 127 : index
    %370 = vector.load %arg4[%c0_341, %c127_342] : memref<32x512xf32, #tpu.memory_space<vmem>>, vector<8x256xf32>
    %c265_343 = arith.constant 265 : index
    %c0_344 = arith.constant 0 : index
    %371 = vector.load %arg2[%c265_343, %c0_344] : memref<272x256xf32, #tpu.memory_space<vmem>>, vector<1x256xf32>
    %372 = vector.broadcast %371 : vector<1x256xf32> to vector<8x256xf32>
    %373 = arith.mulf %370, %372 : vector<8x256xf32>
    %c0_345 = arith.constant 0 : index
    %c128_346 = arith.constant 128 : index
    %374 = vector.load %arg4[%c0_345, %c128_346] : memref<32x512xf32, #tpu.memory_space<vmem>>, vector<8x256xf32>
    %c0_347 = arith.constant 0 : index
    %c129_348 = arith.constant 129 : index
    %375 = vector.load %arg4[%c0_347, %c129_348] : memref<32x512xf32, #tpu.memory_space<vmem>>, vector<8x256xf32>
    %c267_349 = arith.constant 267 : index
    %c0_350 = arith.constant 0 : index
    %376 = vector.load %arg2[%c267_349, %c0_350] : memref<272x256xf32, #tpu.memory_space<vmem>>, vector<1x256xf32>
    %377 = vector.broadcast %376 : vector<1x256xf32> to vector<8x256xf32>
    %378 = arith.mulf %375, %377 : vector<8x256xf32>
    %c0_351 = arith.constant 0 : index
    %c130_352 = arith.constant 130 : index
    %379 = vector.load %arg4[%c0_351, %c130_352] : memref<32x512xf32, #tpu.memory_space<vmem>>, vector<8x256xf32>
    %c268_353 = arith.constant 268 : index
    %c0_354 = arith.constant 0 : index
    %380 = vector.load %arg2[%c268_353, %c0_354] : memref<272x256xf32, #tpu.memory_space<vmem>>, vector<1x256xf32>
    %381 = vector.broadcast %380 : vector<1x256xf32> to vector<8x256xf32>
    %382 = arith.mulf %379, %381 : vector<8x256xf32>
    %c0_355 = arith.constant 0 : index
    %c142_356 = arith.constant 142 : index
    %383 = vector.load %arg4[%c0_355, %c142_356] : memref<32x512xf32, #tpu.memory_space<vmem>>, vector<8x256xf32>
    %c264_357 = arith.constant 264 : index
    %c0_358 = arith.constant 0 : index
    %384 = vector.load %arg2[%c264_357, %c0_358] : memref<272x256xf32, #tpu.memory_space<vmem>>, vector<1x256xf32>
    %385 = vector.broadcast %384 : vector<1x256xf32> to vector<8x256xf32>
    %386 = arith.mulf %383, %385 : vector<8x256xf32>
    %c0_359 = arith.constant 0 : index
    %c143_360 = arith.constant 143 : index
    %387 = vector.load %arg4[%c0_359, %c143_360] : memref<32x512xf32, #tpu.memory_space<vmem>>, vector<8x256xf32>
    %c265_361 = arith.constant 265 : index
    %c0_362 = arith.constant 0 : index
    %388 = vector.load %arg2[%c265_361, %c0_362] : memref<272x256xf32, #tpu.memory_space<vmem>>, vector<1x256xf32>
    %389 = vector.broadcast %388 : vector<1x256xf32> to vector<8x256xf32>
    %390 = arith.mulf %387, %389 : vector<8x256xf32>
    %c0_363 = arith.constant 0 : index
    %c144_364 = arith.constant 144 : index
    %391 = vector.load %arg4[%c0_363, %c144_364] : memref<32x512xf32, #tpu.memory_space<vmem>>, vector<8x256xf32>
    %c0_365 = arith.constant 0 : index
    %c145_366 = arith.constant 145 : index
    %392 = vector.load %arg4[%c0_365, %c145_366] : memref<32x512xf32, #tpu.memory_space<vmem>>, vector<8x256xf32>
    %c267_367 = arith.constant 267 : index
    %c0_368 = arith.constant 0 : index
    %393 = vector.load %arg2[%c267_367, %c0_368] : memref<272x256xf32, #tpu.memory_space<vmem>>, vector<1x256xf32>
    %394 = vector.broadcast %393 : vector<1x256xf32> to vector<8x256xf32>
    %395 = arith.mulf %392, %394 : vector<8x256xf32>
    %c0_369 = arith.constant 0 : index
    %c146_370 = arith.constant 146 : index
    %396 = vector.load %arg4[%c0_369, %c146_370] : memref<32x512xf32, #tpu.memory_space<vmem>>, vector<8x256xf32>
    %c268_371 = arith.constant 268 : index
    %c0_372 = arith.constant 0 : index
    %397 = vector.load %arg2[%c268_371, %c0_372] : memref<272x256xf32, #tpu.memory_space<vmem>>, vector<1x256xf32>
    %398 = vector.broadcast %397 : vector<1x256xf32> to vector<8x256xf32>
    %399 = arith.mulf %396, %398 : vector<8x256xf32>
    %c0_373 = arith.constant 0 : index
    %c158_374 = arith.constant 158 : index
    %400 = vector.load %arg4[%c0_373, %c158_374] : memref<32x512xf32, #tpu.memory_space<vmem>>, vector<8x256xf32>
    %c264_375 = arith.constant 264 : index
    %c0_376 = arith.constant 0 : index
    %401 = vector.load %arg2[%c264_375, %c0_376] : memref<272x256xf32, #tpu.memory_space<vmem>>, vector<1x256xf32>
    %402 = vector.broadcast %401 : vector<1x256xf32> to vector<8x256xf32>
    %403 = arith.mulf %400, %402 : vector<8x256xf32>
    %c0_377 = arith.constant 0 : index
    %c159_378 = arith.constant 159 : index
    %404 = vector.load %arg4[%c0_377, %c159_378] : memref<32x512xf32, #tpu.memory_space<vmem>>, vector<8x256xf32>
    %c265_379 = arith.constant 265 : index
    %c0_380 = arith.constant 0 : index
    %405 = vector.load %arg2[%c265_379, %c0_380] : memref<272x256xf32, #tpu.memory_space<vmem>>, vector<1x256xf32>
    %406 = vector.broadcast %405 : vector<1x256xf32> to vector<8x256xf32>
    %407 = arith.mulf %404, %406 : vector<8x256xf32>
    %c0_381 = arith.constant 0 : index
    %c160_382 = arith.constant 160 : index
    %408 = vector.load %arg4[%c0_381, %c160_382] : memref<32x512xf32, #tpu.memory_space<vmem>>, vector<8x256xf32>
    %c0_383 = arith.constant 0 : index
    %c161_384 = arith.constant 161 : index
    %409 = vector.load %arg4[%c0_383, %c161_384] : memref<32x512xf32, #tpu.memory_space<vmem>>, vector<8x256xf32>
    %c267_385 = arith.constant 267 : index
    %c0_386 = arith.constant 0 : index
    %410 = vector.load %arg2[%c267_385, %c0_386] : memref<272x256xf32, #tpu.memory_space<vmem>>, vector<1x256xf32>
    %411 = vector.broadcast %410 : vector<1x256xf32> to vector<8x256xf32>
    %412 = arith.mulf %409, %411 : vector<8x256xf32>
    %c0_387 = arith.constant 0 : index
    %c162_388 = arith.constant 162 : index
    %413 = vector.load %arg4[%c0_387, %c162_388] : memref<32x512xf32, #tpu.memory_space<vmem>>, vector<8x256xf32>
    %c268_389 = arith.constant 268 : index
    %c0_390 = arith.constant 0 : index
    %414 = vector.load %arg2[%c268_389, %c0_390] : memref<272x256xf32, #tpu.memory_space<vmem>>, vector<1x256xf32>
    %415 = vector.broadcast %414 : vector<1x256xf32> to vector<8x256xf32>
    %416 = arith.mulf %413, %415 : vector<8x256xf32>
    %417 = tpu.concatenate %335, %339, %340, %344, %348, %352, %356, %357, %361, %365, %369, %373, %374, %378, %382, %386 in 0 : vector<8x256xf32>, vector<8x256xf32>, vector<8x256xf32>, vector<8x256xf32>, vector<8x256xf32>, vector<8x256xf32>, vector<8x256xf32>, vector<8x256xf32>, vector<8x256xf32>, vector<8x256xf32>, vector<8x256xf32>, vector<8x256xf32>, vector<8x256xf32>, vector<8x256xf32>, vector<8x256xf32>, vector<8x256xf32> -> vector<128x256xf32>
    %418 = tpu.concatenate %390, %391, %395, %399, %403, %407, %408, %412, %416 in 0 : vector<8x256xf32>, vector<8x256xf32>, vector<8x256xf32>, vector<8x256xf32>, vector<8x256xf32>, vector<8x256xf32>, vector<8x256xf32>, vector<8x256xf32>, vector<8x256xf32> -> vector<72x256xf32>
    %419 = tpu.concatenate %417, %418 in 0 : vector<128x256xf32>, vector<72x256xf32> -> vector<200x256xf32>
    %420 = arith.truncf %419 : vector<200x256xf32> to vector<200x256xbf16>
    %c72 = arith.constant 72 : index
    %c0_391 = arith.constant 0 : index
    %421 = vector.load %arg2[%c72, %c0_391] : memref<272x256xf32, #tpu.memory_space<vmem>>, vector<8x200xf32>
    %422 = arith.truncf %421 : vector<8x200xf32> to vector<8x200xbf16>
    %cst_392 = arith.constant dense<0.000000e+00> : vector<8x256xf32>
    %423 = tpu.matmul %422, %420, %cst_392 {dimension_numbers = #tpu.dot_dimension_numbers<[1], [0], [0], [1], [0, 0, 1, 1], [], []>} : vector<8x200xbf16>, vector<200x256xbf16>, vector<8x256xf32> -> vector<8x256xf32>
    %c80 = arith.constant 80 : index
    %c0_393 = arith.constant 0 : index
    %424 = vector.load %arg2[%c80, %c0_393] : memref<272x256xf32, #tpu.memory_space<vmem>>, vector<8x256xf32>
    %425 = arith.addf %423, %424 : vector<8x256xf32>
    %426 = arith.addf %425, %233 : vector<8x256xf32>
    %c0_394 = arith.constant 0 : index
    %c128_395 = arith.constant 128 : index
    %427 = vector.load %arg4[%c0_394, %c128_395] : memref<32x512xf32, #tpu.memory_space<vmem>>, vector<8x256xf32>
    tpu.vector_store %arg4[%c0_394, %c128_395], %426 {strides = array<i32>} : memref<32x512xf32, #tpu.memory_space<vmem>>, vector<8x256xf32>,
    %c0_396 = arith.constant 0 : index
    %c111_397 = arith.constant 111 : index
    %428 = vector.load %arg4[%c0_396, %c111_397] : memref<32x512xf32, #tpu.memory_space<vmem>>, vector<8x256xf32>
    %c265_398 = arith.constant 265 : index
    %c0_399 = arith.constant 0 : index
    %429 = vector.load %arg2[%c265_398, %c0_399] : memref<272x256xf32, #tpu.memory_space<vmem>>, vector<1x256xf32>
    %430 = vector.broadcast %429 : vector<1x256xf32> to vector<8x256xf32>
    %431 = arith.mulf %428, %430 : vector<8x256xf32>
    %c0_400 = arith.constant 0 : index
    %c112_401 = arith.constant 112 : index
    %432 = vector.load %arg4[%c0_400, %c112_401] : memref<32x512xf32, #tpu.memory_space<vmem>>, vector<8x256xf32>
    %c0_402 = arith.constant 0 : index
    %c113_403 = arith.constant 113 : index
    %433 = vector.load %arg4[%c0_402, %c113_403] : memref<32x512xf32, #tpu.memory_space<vmem>>, vector<8x256xf32>
    %c267_404 = arith.constant 267 : index
    %c0_405 = arith.constant 0 : index
    %434 = vector.load %arg2[%c267_404, %c0_405] : memref<272x256xf32, #tpu.memory_space<vmem>>, vector<1x256xf32>
    %435 = vector.broadcast %434 : vector<1x256xf32> to vector<8x256xf32>
    %436 = arith.mulf %433, %435 : vector<8x256xf32>
    %c0_406 = arith.constant 0 : index
    %c127_407 = arith.constant 127 : index
    %437 = vector.load %arg4[%c0_406, %c127_407] : memref<32x512xf32, #tpu.memory_space<vmem>>, vector<8x256xf32>
    %c265_408 = arith.constant 265 : index
    %c0_409 = arith.constant 0 : index
    %438 = vector.load %arg2[%c265_408, %c0_409] : memref<272x256xf32, #tpu.memory_space<vmem>>, vector<1x256xf32>
    %439 = vector.broadcast %438 : vector<1x256xf32> to vector<8x256xf32>
    %440 = arith.mulf %437, %439 : vector<8x256xf32>
    %c0_410 = arith.constant 0 : index
    %c128_411 = arith.constant 128 : index
    %441 = vector.load %arg4[%c0_410, %c128_411] : memref<32x512xf32, #tpu.memory_space<vmem>>, vector<8x256xf32>
    %c0_412 = arith.constant 0 : index
    %c129_413 = arith.constant 129 : index
    %442 = vector.load %arg4[%c0_412, %c129_413] : memref<32x512xf32, #tpu.memory_space<vmem>>, vector<8x256xf32>
    %c267_414 = arith.constant 267 : index
    %c0_415 = arith.constant 0 : index
    %443 = vector.load %arg2[%c267_414, %c0_415] : memref<272x256xf32, #tpu.memory_space<vmem>>, vector<1x256xf32>
    %444 = vector.broadcast %443 : vector<1x256xf32> to vector<8x256xf32>
    %445 = arith.mulf %442, %444 : vector<8x256xf32>
    %c0_416 = arith.constant 0 : index
    %c143_417 = arith.constant 143 : index
    %446 = vector.load %arg4[%c0_416, %c143_417] : memref<32x512xf32, #tpu.memory_space<vmem>>, vector<8x256xf32>
    %c265_418 = arith.constant 265 : index
    %c0_419 = arith.constant 0 : index
    %447 = vector.load %arg2[%c265_418, %c0_419] : memref<272x256xf32, #tpu.memory_space<vmem>>, vector<1x256xf32>
    %448 = vector.broadcast %447 : vector<1x256xf32> to vector<8x256xf32>
    %449 = arith.mulf %446, %448 : vector<8x256xf32>
    %c0_420 = arith.constant 0 : index
    %c144_421 = arith.constant 144 : index
    %450 = vector.load %arg4[%c0_420, %c144_421] : memref<32x512xf32, #tpu.memory_space<vmem>>, vector<8x256xf32>
    %c0_422 = arith.constant 0 : index
    %c145_423 = arith.constant 145 : index
    %451 = vector.load %arg4[%c0_422, %c145_423] : memref<32x512xf32, #tpu.memory_space<vmem>>, vector<8x256xf32>
    %c267_424 = arith.constant 267 : index
    %c0_425 = arith.constant 0 : index
    %452 = vector.load %arg2[%c267_424, %c0_425] : memref<272x256xf32, #tpu.memory_space<vmem>>, vector<1x256xf32>
    %453 = vector.broadcast %452 : vector<1x256xf32> to vector<8x256xf32>
    %454 = arith.mulf %451, %453 : vector<8x256xf32>
    %455 = tpu.concatenate %431, %432, %436, %440, %441, %445, %449, %450, %454 in 0 : vector<8x256xf32>, vector<8x256xf32>, vector<8x256xf32>, vector<8x256xf32>, vector<8x256xf32>, vector<8x256xf32>, vector<8x256xf32>, vector<8x256xf32>, vector<8x256xf32> -> vector<72x256xf32>
    %456 = arith.truncf %455 : vector<72x256xf32> to vector<72x256xbf16>
    %c88 = arith.constant 88 : index
    %c0_426 = arith.constant 0 : index
    %457 = vector.load %arg2[%c88, %c0_426] : memref<272x256xf32, #tpu.memory_space<vmem>>, vector<8x72xf32>
    %458 = arith.truncf %457 : vector<8x72xf32> to vector<8x72xbf16>
    %cst_427 = arith.constant dense<0.000000e+00> : vector<8x256xf32>
    %459 = tpu.matmul %458, %456, %cst_427 {dimension_numbers = #tpu.dot_dimension_numbers<[1], [0], [0], [1], [0, 0, 1, 1], [], []>} : vector<8x72xbf16>, vector<72x256xbf16>, vector<8x256xf32> -> vector<8x256xf32>
    %c96_428 = arith.constant 96 : index
    %c0_429 = arith.constant 0 : index
    %460 = vector.load %arg2[%c96_428, %c0_429] : memref<272x256xf32, #tpu.memory_space<vmem>>, vector<8x256xf32>
    %461 = arith.addf %459, %460 : vector<8x256xf32>
    %cst_430 = arith.constant 0.000000e+00 : f32
    %462 = vector.broadcast %cst_430 : f32 to vector<8x256xf32>
    %463 = arith.maximumf %461, %462 : vector<8x256xf32>
    %c0_431 = arith.constant 0 : index
    %c128_432 = arith.constant 128 : index
    %464 = vector.load %arg4[%c0_431, %c128_432] : memref<32x512xf32, #tpu.memory_space<vmem>>, vector<8x256xf32>
    tpu.vector_store %arg4[%c0_431, %c128_432], %463 {strides = array<i32>} : memref<32x512xf32, #tpu.memory_space<vmem>>, vector<8x256xf32>,
    %c0_433 = arith.constant 0 : index
    %c111_434 = arith.constant 111 : index
    %465 = vector.load %arg4[%c0_433, %c111_434] : memref<32x512xf32, #tpu.memory_space<vmem>>, vector<8x256xf32>
    %c265_435 = arith.constant 265 : index
    %c0_436 = arith.constant 0 : index
    %466 = vector.load %arg2[%c265_435, %c0_436] : memref<272x256xf32, #tpu.memory_space<vmem>>, vector<1x256xf32>
    %467 = vector.broadcast %466 : vector<1x256xf32> to vector<8x256xf32>
    %468 = arith.mulf %465, %467 : vector<8x256xf32>
    %c0_437 = arith.constant 0 : index
    %c112_438 = arith.constant 112 : index
    %469 = vector.load %arg4[%c0_437, %c112_438] : memref<32x512xf32, #tpu.memory_space<vmem>>, vector<8x256xf32>
    %c0_439 = arith.constant 0 : index
    %c113_440 = arith.constant 113 : index
    %470 = vector.load %arg4[%c0_439, %c113_440] : memref<32x512xf32, #tpu.memory_space<vmem>>, vector<8x256xf32>
    %c267_441 = arith.constant 267 : index
    %c0_442 = arith.constant 0 : index
    %471 = vector.load %arg2[%c267_441, %c0_442] : memref<272x256xf32, #tpu.memory_space<vmem>>, vector<1x256xf32>
    %472 = vector.broadcast %471 : vector<1x256xf32> to vector<8x256xf32>
    %473 = arith.mulf %470, %472 : vector<8x256xf32>
    %c0_443 = arith.constant 0 : index
    %c127_444 = arith.constant 127 : index
    %474 = vector.load %arg4[%c0_443, %c127_444] : memref<32x512xf32, #tpu.memory_space<vmem>>, vector<8x256xf32>
    %c265_445 = arith.constant 265 : index
    %c0_446 = arith.constant 0 : index
    %475 = vector.load %arg2[%c265_445, %c0_446] : memref<272x256xf32, #tpu.memory_space<vmem>>, vector<1x256xf32>
    %476 = vector.broadcast %475 : vector<1x256xf32> to vector<8x256xf32>
    %477 = arith.mulf %474, %476 : vector<8x256xf32>
    %c0_447 = arith.constant 0 : index
    %c128_448 = arith.constant 128 : index
    %478 = vector.load %arg4[%c0_447, %c128_448] : memref<32x512xf32, #tpu.memory_space<vmem>>, vector<8x256xf32>
    %c0_449 = arith.constant 0 : index
    %c129_450 = arith.constant 129 : index
    %479 = vector.load %arg4[%c0_449, %c129_450] : memref<32x512xf32, #tpu.memory_space<vmem>>, vector<8x256xf32>
    %c267_451 = arith.constant 267 : index
    %c0_452 = arith.constant 0 : index
    %480 = vector.load %arg2[%c267_451, %c0_452] : memref<272x256xf32, #tpu.memory_space<vmem>>, vector<1x256xf32>
    %481 = vector.broadcast %480 : vector<1x256xf32> to vector<8x256xf32>
    %482 = arith.mulf %479, %481 : vector<8x256xf32>
    %c0_453 = arith.constant 0 : index
    %c143_454 = arith.constant 143 : index
    %483 = vector.load %arg4[%c0_453, %c143_454] : memref<32x512xf32, #tpu.memory_space<vmem>>, vector<8x256xf32>
    %c265_455 = arith.constant 265 : index
    %c0_456 = arith.constant 0 : index
    %484 = vector.load %arg2[%c265_455, %c0_456] : memref<272x256xf32, #tpu.memory_space<vmem>>, vector<1x256xf32>
    %485 = vector.broadcast %484 : vector<1x256xf32> to vector<8x256xf32>
    %486 = arith.mulf %483, %485 : vector<8x256xf32>
    %c0_457 = arith.constant 0 : index
    %c144_458 = arith.constant 144 : index
    %487 = vector.load %arg4[%c0_457, %c144_458] : memref<32x512xf32, #tpu.memory_space<vmem>>, vector<8x256xf32>
    %c0_459 = arith.constant 0 : index
    %c145_460 = arith.constant 145 : index
    %488 = vector.load %arg4[%c0_459, %c145_460] : memref<32x512xf32, #tpu.memory_space<vmem>>, vector<8x256xf32>
    %c267_461 = arith.constant 267 : index
    %c0_462 = arith.constant 0 : index
    %489 = vector.load %arg2[%c267_461, %c0_462] : memref<272x256xf32, #tpu.memory_space<vmem>>, vector<1x256xf32>
    %490 = vector.broadcast %489 : vector<1x256xf32> to vector<8x256xf32>
    %491 = arith.mulf %488, %490 : vector<8x256xf32>
    %492 = tpu.concatenate %468, %469, %473, %477, %478, %482, %486, %487, %491 in 0 : vector<8x256xf32>, vector<8x256xf32>, vector<8x256xf32>, vector<8x256xf32>, vector<8x256xf32>, vector<8x256xf32>, vector<8x256xf32>, vector<8x256xf32>, vector<8x256xf32> -> vector<72x256xf32>
    %493 = arith.truncf %492 : vector<72x256xf32> to vector<72x256xbf16>
    %c104 = arith.constant 104 : index
    %c0_463 = arith.constant 0 : index
    %494 = vector.load %arg2[%c104, %c0_463] : memref<272x256xf32, #tpu.memory_space<vmem>>, vector<8x72xf32>
    %495 = arith.truncf %494 : vector<8x72xf32> to vector<8x72xbf16>
    %cst_464 = arith.constant dense<0.000000e+00> : vector<8x256xf32>
    %496 = tpu.matmul %495, %493, %cst_464 {dimension_numbers = #tpu.dot_dimension_numbers<[1], [0], [0], [1], [0, 0, 1, 1], [], []>} : vector<8x72xbf16>, vector<72x256xbf16>, vector<8x256xf32> -> vector<8x256xf32>
    %c112_465 = arith.constant 112 : index
    %c0_466 = arith.constant 0 : index
    %497 = vector.load %arg2[%c112_465, %c0_466] : memref<272x256xf32, #tpu.memory_space<vmem>>, vector<8x256xf32>
    %498 = arith.addf %496, %497 : vector<8x256xf32>
    %499 = arith.addf %498, %426 : vector<8x256xf32>
    %c0_467 = arith.constant 0 : index
    %c128_468 = arith.constant 128 : index
    %500 = vector.load %arg4[%c0_467, %c128_468] : memref<32x512xf32, #tpu.memory_space<vmem>>, vector<8x256xf32>
    tpu.vector_store %arg4[%c0_467, %c128_468], %499 {strides = array<i32>} : memref<32x512xf32, #tpu.memory_space<vmem>>, vector<8x256xf32>,
    %c0_469 = arith.constant 0 : index
    %c111_470 = arith.constant 111 : index
    %501 = vector.load %arg4[%c0_469, %c111_470] : memref<32x512xf32, #tpu.memory_space<vmem>>, vector<8x256xf32>
    %c265_471 = arith.constant 265 : index
    %c0_472 = arith.constant 0 : index
    %502 = vector.load %arg2[%c265_471, %c0_472] : memref<272x256xf32, #tpu.memory_space<vmem>>, vector<1x256xf32>
    %503 = vector.broadcast %502 : vector<1x256xf32> to vector<8x256xf32>
    %504 = arith.mulf %501, %503 : vector<8x256xf32>
    %c0_473 = arith.constant 0 : index
    %c112_474 = arith.constant 112 : index
    %505 = vector.load %arg4[%c0_473, %c112_474] : memref<32x512xf32, #tpu.memory_space<vmem>>, vector<8x256xf32>
    %c0_475 = arith.constant 0 : index
    %c113_476 = arith.constant 113 : index
    %506 = vector.load %arg4[%c0_475, %c113_476] : memref<32x512xf32, #tpu.memory_space<vmem>>, vector<8x256xf32>
    %c267_477 = arith.constant 267 : index
    %c0_478 = arith.constant 0 : index
    %507 = vector.load %arg2[%c267_477, %c0_478] : memref<272x256xf32, #tpu.memory_space<vmem>>, vector<1x256xf32>
    %508 = vector.broadcast %507 : vector<1x256xf32> to vector<8x256xf32>
    %509 = arith.mulf %506, %508 : vector<8x256xf32>
    %c0_479 = arith.constant 0 : index
    %c127_480 = arith.constant 127 : index
    %510 = vector.load %arg4[%c0_479, %c127_480] : memref<32x512xf32, #tpu.memory_space<vmem>>, vector<8x256xf32>
    %c265_481 = arith.constant 265 : index
    %c0_482 = arith.constant 0 : index
    %511 = vector.load %arg2[%c265_481, %c0_482] : memref<272x256xf32, #tpu.memory_space<vmem>>, vector<1x256xf32>
    %512 = vector.broadcast %511 : vector<1x256xf32> to vector<8x256xf32>
    %513 = arith.mulf %510, %512 : vector<8x256xf32>
    %c0_483 = arith.constant 0 : index
    %c128_484 = arith.constant 128 : index
    %514 = vector.load %arg4[%c0_483, %c128_484] : memref<32x512xf32, #tpu.memory_space<vmem>>, vector<8x256xf32>
    %c0_485 = arith.constant 0 : index
    %c129_486 = arith.constant 129 : index
    %515 = vector.load %arg4[%c0_485, %c129_486] : memref<32x512xf32, #tpu.memory_space<vmem>>, vector<8x256xf32>
    %c267_487 = arith.constant 267 : index
    %c0_488 = arith.constant 0 : index
    %516 = vector.load %arg2[%c267_487, %c0_488] : memref<272x256xf32, #tpu.memory_space<vmem>>, vector<1x256xf32>
    %517 = vector.broadcast %516 : vector<1x256xf32> to vector<8x256xf32>
    %518 = arith.mulf %515, %517 : vector<8x256xf32>
    %c0_489 = arith.constant 0 : index
    %c143_490 = arith.constant 143 : index
    %519 = vector.load %arg4[%c0_489, %c143_490] : memref<32x512xf32, #tpu.memory_space<vmem>>, vector<8x256xf32>
    %c265_491 = arith.constant 265 : index
    %c0_492 = arith.constant 0 : index
    %520 = vector.load %arg2[%c265_491, %c0_492] : memref<272x256xf32, #tpu.memory_space<vmem>>, vector<1x256xf32>
    %521 = vector.broadcast %520 : vector<1x256xf32> to vector<8x256xf32>
    %522 = arith.mulf %519, %521 : vector<8x256xf32>
    %c0_493 = arith.constant 0 : index
    %c144_494 = arith.constant 144 : index
    %523 = vector.load %arg4[%c0_493, %c144_494] : memref<32x512xf32, #tpu.memory_space<vmem>>, vector<8x256xf32>
    %c0_495 = arith.constant 0 : index
    %c145_496 = arith.constant 145 : index
    %524 = vector.load %arg4[%c0_495, %c145_496] : memref<32x512xf32, #tpu.memory_space<vmem>>, vector<8x256xf32>
    %c267_497 = arith.constant 267 : index
    %c0_498 = arith.constant 0 : index
    %525 = vector.load %arg2[%c267_497, %c0_498] : memref<272x256xf32, #tpu.memory_space<vmem>>, vector<1x256xf32>
    %526 = vector.broadcast %525 : vector<1x256xf32> to vector<8x256xf32>
    %527 = arith.mulf %524, %526 : vector<8x256xf32>
    %528 = tpu.concatenate %504, %505, %509, %513, %514, %518, %522, %523, %527 in 0 : vector<8x256xf32>, vector<8x256xf32>, vector<8x256xf32>, vector<8x256xf32>, vector<8x256xf32>, vector<8x256xf32>, vector<8x256xf32>, vector<8x256xf32>, vector<8x256xf32> -> vector<72x256xf32>
    %529 = arith.truncf %528 : vector<72x256xf32> to vector<72x256xbf16>
    %c120 = arith.constant 120 : index
    %c0_499 = arith.constant 0 : index
    %530 = vector.load %arg2[%c120, %c0_499] : memref<272x256xf32, #tpu.memory_space<vmem>>, vector<8x72xf32>
    %531 = arith.truncf %530 : vector<8x72xf32> to vector<8x72xbf16>
    %cst_500 = arith.constant dense<0.000000e+00> : vector<8x256xf32>
    %532 = tpu.matmul %531, %529, %cst_500 {dimension_numbers = #tpu.dot_dimension_numbers<[1], [0], [0], [1], [0, 0, 1, 1], [], []>} : vector<8x72xbf16>, vector<72x256xbf16>, vector<8x256xf32> -> vector<8x256xf32>
    %c128_501 = arith.constant 128 : index
    %c0_502 = arith.constant 0 : index
    %533 = vector.load %arg2[%c128_501, %c0_502] : memref<272x256xf32, #tpu.memory_space<vmem>>, vector<8x256xf32>
    %534 = arith.addf %532, %533 : vector<8x256xf32>
    %cst_503 = arith.constant 0.000000e+00 : f32
    %535 = vector.broadcast %cst_503 : f32 to vector<8x256xf32>
    %536 = arith.maximumf %534, %535 : vector<8x256xf32>
    %c0_504 = arith.constant 0 : index
    %c128_505 = arith.constant 128 : index
    %537 = vector.load %arg4[%c0_504, %c128_505] : memref<32x512xf32, #tpu.memory_space<vmem>>, vector<8x256xf32>
    tpu.vector_store %arg4[%c0_504, %c128_505], %536 {strides = array<i32>} : memref<32x512xf32, #tpu.memory_space<vmem>>, vector<8x256xf32>,
    %c0_506 = arith.constant 0 : index
    %c111_507 = arith.constant 111 : index
    %538 = vector.load %arg4[%c0_506, %c111_507] : memref<32x512xf32, #tpu.memory_space<vmem>>, vector<8x256xf32>
    %c265_508 = arith.constant 265 : index
    %c0_509 = arith.constant 0 : index
    %539 = vector.load %arg2[%c265_508, %c0_509] : memref<272x256xf32, #tpu.memory_space<vmem>>, vector<1x256xf32>
    %540 = vector.broadcast %539 : vector<1x256xf32> to vector<8x256xf32>
    %541 = arith.mulf %538, %540 : vector<8x256xf32>
    %c0_510 = arith.constant 0 : index
    %c112_511 = arith.constant 112 : index
    %542 = vector.load %arg4[%c0_510, %c112_511] : memref<32x512xf32, #tpu.memory_space<vmem>>, vector<8x256xf32>
    %c0_512 = arith.constant 0 : index
    %c113_513 = arith.constant 113 : index
    %543 = vector.load %arg4[%c0_512, %c113_513] : memref<32x512xf32, #tpu.memory_space<vmem>>, vector<8x256xf32>
    %c267_514 = arith.constant 267 : index
    %c0_515 = arith.constant 0 : index
    %544 = vector.load %arg2[%c267_514, %c0_515] : memref<272x256xf32, #tpu.memory_space<vmem>>, vector<1x256xf32>
    %545 = vector.broadcast %544 : vector<1x256xf32> to vector<8x256xf32>
    %546 = arith.mulf %543, %545 : vector<8x256xf32>
    %c0_516 = arith.constant 0 : index
    %c127_517 = arith.constant 127 : index
    %547 = vector.load %arg4[%c0_516, %c127_517] : memref<32x512xf32, #tpu.memory_space<vmem>>, vector<8x256xf32>
    %c265_518 = arith.constant 265 : index
    %c0_519 = arith.constant 0 : index
    %548 = vector.load %arg2[%c265_518, %c0_519] : memref<272x256xf32, #tpu.memory_space<vmem>>, vector<1x256xf32>
    %549 = vector.broadcast %548 : vector<1x256xf32> to vector<8x256xf32>
    %550 = arith.mulf %547, %549 : vector<8x256xf32>
    %c0_520 = arith.constant 0 : index
    %c128_521 = arith.constant 128 : index
    %551 = vector.load %arg4[%c0_520, %c128_521] : memref<32x512xf32, #tpu.memory_space<vmem>>, vector<8x256xf32>
    %c0_522 = arith.constant 0 : index
    %c129_523 = arith.constant 129 : index
    %552 = vector.load %arg4[%c0_522, %c129_523] : memref<32x512xf32, #tpu.memory_space<vmem>>, vector<8x256xf32>
    %c267_524 = arith.constant 267 : index
    %c0_525 = arith.constant 0 : index
    %553 = vector.load %arg2[%c267_524, %c0_525] : memref<272x256xf32, #tpu.memory_space<vmem>>, vector<1x256xf32>
    %554 = vector.broadcast %553 : vector<1x256xf32> to vector<8x256xf32>
    %555 = arith.mulf %552, %554 : vector<8x256xf32>
    %c0_526 = arith.constant 0 : index
    %c143_527 = arith.constant 143 : index
    %556 = vector.load %arg4[%c0_526, %c143_527] : memref<32x512xf32, #tpu.memory_space<vmem>>, vector<8x256xf32>
    %c265_528 = arith.constant 265 : index
    %c0_529 = arith.constant 0 : index
    %557 = vector.load %arg2[%c265_528, %c0_529] : memref<272x256xf32, #tpu.memory_space<vmem>>, vector<1x256xf32>
    %558 = vector.broadcast %557 : vector<1x256xf32> to vector<8x256xf32>
    %559 = arith.mulf %556, %558 : vector<8x256xf32>
    %c0_530 = arith.constant 0 : index
    %c144_531 = arith.constant 144 : index
    %560 = vector.load %arg4[%c0_530, %c144_531] : memref<32x512xf32, #tpu.memory_space<vmem>>, vector<8x256xf32>
    %c0_532 = arith.constant 0 : index
    %c145_533 = arith.constant 145 : index
    %561 = vector.load %arg4[%c0_532, %c145_533] : memref<32x512xf32, #tpu.memory_space<vmem>>, vector<8x256xf32>
    %c267_534 = arith.constant 267 : index
    %c0_535 = arith.constant 0 : index
    %562 = vector.load %arg2[%c267_534, %c0_535] : memref<272x256xf32, #tpu.memory_space<vmem>>, vector<1x256xf32>
    %563 = vector.broadcast %562 : vector<1x256xf32> to vector<8x256xf32>
    %564 = arith.mulf %561, %563 : vector<8x256xf32>
    %565 = tpu.concatenate %541, %542, %546, %550, %551, %555, %559, %560, %564 in 0 : vector<8x256xf32>, vector<8x256xf32>, vector<8x256xf32>, vector<8x256xf32>, vector<8x256xf32>, vector<8x256xf32>, vector<8x256xf32>, vector<8x256xf32>, vector<8x256xf32> -> vector<72x256xf32>
    %566 = arith.truncf %565 : vector<72x256xf32> to vector<72x256xbf16>
    %c136 = arith.constant 136 : index
    %c0_536 = arith.constant 0 : index
    %567 = vector.load %arg2[%c136, %c0_536] : memref<272x256xf32, #tpu.memory_space<vmem>>, vector<8x72xf32>
    %568 = arith.truncf %567 : vector<8x72xf32> to vector<8x72xbf16>
    %cst_537 = arith.constant dense<0.000000e+00> : vector<8x256xf32>
    %569 = tpu.matmul %568, %566, %cst_537 {dimension_numbers = #tpu.dot_dimension_numbers<[1], [0], [0], [1], [0, 0, 1, 1], [], []>} : vector<8x72xbf16>, vector<72x256xbf16>, vector<8x256xf32> -> vector<8x256xf32>
    %c144_538 = arith.constant 144 : index
    %c0_539 = arith.constant 0 : index
    %570 = vector.load %arg2[%c144_538, %c0_539] : memref<272x256xf32, #tpu.memory_space<vmem>>, vector<8x256xf32>
    %571 = arith.addf %569, %570 : vector<8x256xf32>
    %572 = arith.addf %571, %499 : vector<8x256xf32>
    %c0_540 = arith.constant 0 : index
    %c128_541 = arith.constant 128 : index
    %573 = vector.load %arg4[%c0_540, %c128_541] : memref<32x512xf32, #tpu.memory_space<vmem>>, vector<8x256xf32>
    tpu.vector_store %arg4[%c0_540, %c128_541], %572 {strides = array<i32>} : memref<32x512xf32, #tpu.memory_space<vmem>>, vector<8x256xf32>,
    %c0_542 = arith.constant 0 : index
    %c111_543 = arith.constant 111 : index
    %574 = vector.load %arg4[%c0_542, %c111_543] : memref<32x512xf32, #tpu.memory_space<vmem>>, vector<8x256xf32>
    %c265_544 = arith.constant 265 : index
    %c0_545 = arith.constant 0 : index
    %575 = vector.load %arg2[%c265_544, %c0_545] : memref<272x256xf32, #tpu.memory_space<vmem>>, vector<1x256xf32>
    %576 = vector.broadcast %575 : vector<1x256xf32> to vector<8x256xf32>
    %577 = arith.mulf %574, %576 : vector<8x256xf32>
    %c0_546 = arith.constant 0 : index
    %c112_547 = arith.constant 112 : index
    %578 = vector.load %arg4[%c0_546, %c112_547] : memref<32x512xf32, #tpu.memory_space<vmem>>, vector<8x256xf32>
    %c0_548 = arith.constant 0 : index
    %c113_549 = arith.constant 113 : index
    %579 = vector.load %arg4[%c0_548, %c113_549] : memref<32x512xf32, #tpu.memory_space<vmem>>, vector<8x256xf32>
    %c267_550 = arith.constant 267 : index
    %c0_551 = arith.constant 0 : index
    %580 = vector.load %arg2[%c267_550, %c0_551] : memref<272x256xf32, #tpu.memory_space<vmem>>, vector<1x256xf32>
    %581 = vector.broadcast %580 : vector<1x256xf32> to vector<8x256xf32>
    %582 = arith.mulf %579, %581 : vector<8x256xf32>
    %c0_552 = arith.constant 0 : index
    %c127_553 = arith.constant 127 : index
    %583 = vector.load %arg4[%c0_552, %c127_553] : memref<32x512xf32, #tpu.memory_space<vmem>>, vector<8x256xf32>
    %c265_554 = arith.constant 265 : index
    %c0_555 = arith.constant 0 : index
    %584 = vector.load %arg2[%c265_554, %c0_555] : memref<272x256xf32, #tpu.memory_space<vmem>>, vector<1x256xf32>
    %585 = vector.broadcast %584 : vector<1x256xf32> to vector<8x256xf32>
    %586 = arith.mulf %583, %585 : vector<8x256xf32>
    %c0_556 = arith.constant 0 : index
    %c128_557 = arith.constant 128 : index
    %587 = vector.load %arg4[%c0_556, %c128_557] : memref<32x512xf32, #tpu.memory_space<vmem>>, vector<8x256xf32>
    %c0_558 = arith.constant 0 : index
    %c129_559 = arith.constant 129 : index
    %588 = vector.load %arg4[%c0_558, %c129_559] : memref<32x512xf32, #tpu.memory_space<vmem>>, vector<8x256xf32>
    %c267_560 = arith.constant 267 : index
    %c0_561 = arith.constant 0 : index
    %589 = vector.load %arg2[%c267_560, %c0_561] : memref<272x256xf32, #tpu.memory_space<vmem>>, vector<1x256xf32>
    %590 = vector.broadcast %589 : vector<1x256xf32> to vector<8x256xf32>
    %591 = arith.mulf %588, %590 : vector<8x256xf32>
    %c0_562 = arith.constant 0 : index
    %c143_563 = arith.constant 143 : index
    %592 = vector.load %arg4[%c0_562, %c143_563] : memref<32x512xf32, #tpu.memory_space<vmem>>, vector<8x256xf32>
    %c265_564 = arith.constant 265 : index
    %c0_565 = arith.constant 0 : index
    %593 = vector.load %arg2[%c265_564, %c0_565] : memref<272x256xf32, #tpu.memory_space<vmem>>, vector<1x256xf32>
    %594 = vector.broadcast %593 : vector<1x256xf32> to vector<8x256xf32>
    %595 = arith.mulf %592, %594 : vector<8x256xf32>
    %c0_566 = arith.constant 0 : index
    %c144_567 = arith.constant 144 : index
    %596 = vector.load %arg4[%c0_566, %c144_567] : memref<32x512xf32, #tpu.memory_space<vmem>>, vector<8x256xf32>
    %c0_568 = arith.constant 0 : index
    %c145_569 = arith.constant 145 : index
    %597 = vector.load %arg4[%c0_568, %c145_569] : memref<32x512xf32, #tpu.memory_space<vmem>>, vector<8x256xf32>
    %c267_570 = arith.constant 267 : index
    %c0_571 = arith.constant 0 : index
    %598 = vector.load %arg2[%c267_570, %c0_571] : memref<272x256xf32, #tpu.memory_space<vmem>>, vector<1x256xf32>
    %599 = vector.broadcast %598 : vector<1x256xf32> to vector<8x256xf32>
    %600 = arith.mulf %597, %599 : vector<8x256xf32>
    %601 = tpu.concatenate %577, %578, %582, %586, %587, %591, %595, %596, %600 in 0 : vector<8x256xf32>, vector<8x256xf32>, vector<8x256xf32>, vector<8x256xf32>, vector<8x256xf32>, vector<8x256xf32>, vector<8x256xf32>, vector<8x256xf32>, vector<8x256xf32> -> vector<72x256xf32>
    %602 = arith.truncf %601 : vector<72x256xf32> to vector<72x256xbf16>
    %c152 = arith.constant 152 : index
    %c0_572 = arith.constant 0 : index
    %603 = vector.load %arg2[%c152, %c0_572] : memref<272x256xf32, #tpu.memory_space<vmem>>, vector<8x72xf32>
    %604 = arith.truncf %603 : vector<8x72xf32> to vector<8x72xbf16>
    %cst_573 = arith.constant dense<0.000000e+00> : vector<8x256xf32>
    %605 = tpu.matmul %604, %602, %cst_573 {dimension_numbers = #tpu.dot_dimension_numbers<[1], [0], [0], [1], [0, 0, 1, 1], [], []>} : vector<8x72xbf16>, vector<72x256xbf16>, vector<8x256xf32> -> vector<8x256xf32>
    %c160_574 = arith.constant 160 : index
    %c0_575 = arith.constant 0 : index
    %606 = vector.load %arg2[%c160_574, %c0_575] : memref<272x256xf32, #tpu.memory_space<vmem>>, vector<8x256xf32>
    %607 = arith.addf %605, %606 : vector<8x256xf32>
    %608 = arith.addf %607, %426 : vector<8x256xf32>
    %c0_576 = arith.constant 0 : index
    %c128_577 = arith.constant 128 : index
    %609 = vector.load %arg4[%c0_576, %c128_577] : memref<32x512xf32, #tpu.memory_space<vmem>>, vector<8x256xf32>
    tpu.vector_store %arg4[%c0_576, %c128_577], %608 {strides = array<i32>} : memref<32x512xf32, #tpu.memory_space<vmem>>, vector<8x256xf32>,
    %c0_578 = arith.constant 0 : index
    %c111_579 = arith.constant 111 : index
    %610 = vector.load %arg4[%c0_578, %c111_579] : memref<32x512xf32, #tpu.memory_space<vmem>>, vector<8x256xf32>
    %c265_580 = arith.constant 265 : index
    %c0_581 = arith.constant 0 : index
    %611 = vector.load %arg2[%c265_580, %c0_581] : memref<272x256xf32, #tpu.memory_space<vmem>>, vector<1x256xf32>
    %612 = vector.broadcast %611 : vector<1x256xf32> to vector<8x256xf32>
    %613 = arith.mulf %610, %612 : vector<8x256xf32>
    %c0_582 = arith.constant 0 : index
    %c112_583 = arith.constant 112 : index
    %614 = vector.load %arg4[%c0_582, %c112_583] : memref<32x512xf32, #tpu.memory_space<vmem>>, vector<8x256xf32>
    %c0_584 = arith.constant 0 : index
    %c113_585 = arith.constant 113 : index
    %615 = vector.load %arg4[%c0_584, %c113_585] : memref<32x512xf32, #tpu.memory_space<vmem>>, vector<8x256xf32>
    %c267_586 = arith.constant 267 : index
    %c0_587 = arith.constant 0 : index
    %616 = vector.load %arg2[%c267_586, %c0_587] : memref<272x256xf32, #tpu.memory_space<vmem>>, vector<1x256xf32>
    %617 = vector.broadcast %616 : vector<1x256xf32> to vector<8x256xf32>
    %618 = arith.mulf %615, %617 : vector<8x256xf32>
    %c0_588 = arith.constant 0 : index
    %c127_589 = arith.constant 127 : index
    %619 = vector.load %arg4[%c0_588, %c127_589] : memref<32x512xf32, #tpu.memory_space<vmem>>, vector<8x256xf32>
    %c265_590 = arith.constant 265 : index
    %c0_591 = arith.constant 0 : index
    %620 = vector.load %arg2[%c265_590, %c0_591] : memref<272x256xf32, #tpu.memory_space<vmem>>, vector<1x256xf32>
    %621 = vector.broadcast %620 : vector<1x256xf32> to vector<8x256xf32>
    %622 = arith.mulf %619, %621 : vector<8x256xf32>
    %c0_592 = arith.constant 0 : index
    %c128_593 = arith.constant 128 : index
    %623 = vector.load %arg4[%c0_592, %c128_593] : memref<32x512xf32, #tpu.memory_space<vmem>>, vector<8x256xf32>
    %c0_594 = arith.constant 0 : index
    %c129_595 = arith.constant 129 : index
    %624 = vector.load %arg4[%c0_594, %c129_595] : memref<32x512xf32, #tpu.memory_space<vmem>>, vector<8x256xf32>
    %c267_596 = arith.constant 267 : index
    %c0_597 = arith.constant 0 : index
    %625 = vector.load %arg2[%c267_596, %c0_597] : memref<272x256xf32, #tpu.memory_space<vmem>>, vector<1x256xf32>
    %626 = vector.broadcast %625 : vector<1x256xf32> to vector<8x256xf32>
    %627 = arith.mulf %624, %626 : vector<8x256xf32>
    %c0_598 = arith.constant 0 : index
    %c143_599 = arith.constant 143 : index
    %628 = vector.load %arg4[%c0_598, %c143_599] : memref<32x512xf32, #tpu.memory_space<vmem>>, vector<8x256xf32>
    %c265_600 = arith.constant 265 : index
    %c0_601 = arith.constant 0 : index
    %629 = vector.load %arg2[%c265_600, %c0_601] : memref<272x256xf32, #tpu.memory_space<vmem>>, vector<1x256xf32>
    %630 = vector.broadcast %629 : vector<1x256xf32> to vector<8x256xf32>
    %631 = arith.mulf %628, %630 : vector<8x256xf32>
    %c0_602 = arith.constant 0 : index
    %c144_603 = arith.constant 144 : index
    %632 = vector.load %arg4[%c0_602, %c144_603] : memref<32x512xf32, #tpu.memory_space<vmem>>, vector<8x256xf32>
    %c0_604 = arith.constant 0 : index
    %c145_605 = arith.constant 145 : index
    %633 = vector.load %arg4[%c0_604, %c145_605] : memref<32x512xf32, #tpu.memory_space<vmem>>, vector<8x256xf32>
    %c267_606 = arith.constant 267 : index
    %c0_607 = arith.constant 0 : index
    %634 = vector.load %arg2[%c267_606, %c0_607] : memref<272x256xf32, #tpu.memory_space<vmem>>, vector<1x256xf32>
    %635 = vector.broadcast %634 : vector<1x256xf32> to vector<8x256xf32>
    %636 = arith.mulf %633, %635 : vector<8x256xf32>
    %637 = tpu.concatenate %613, %614, %618, %622, %623, %627, %631, %632, %636 in 0 : vector<8x256xf32>, vector<8x256xf32>, vector<8x256xf32>, vector<8x256xf32>, vector<8x256xf32>, vector<8x256xf32>, vector<8x256xf32>, vector<8x256xf32>, vector<8x256xf32> -> vector<72x256xf32>
    %638 = arith.truncf %637 : vector<72x256xf32> to vector<72x256xbf16>
    %c168 = arith.constant 168 : index
    %c0_608 = arith.constant 0 : index
    %639 = vector.load %arg2[%c168, %c0_608] : memref<272x256xf32, #tpu.memory_space<vmem>>, vector<32x72xf32>
    %640 = arith.truncf %639 : vector<32x72xf32> to vector<32x72xbf16>
    %cst_609 = arith.constant dense<0.000000e+00> : vector<32x256xf32>
    %641 = tpu.matmul %640, %638, %cst_609 {dimension_numbers = #tpu.dot_dimension_numbers<[1], [0], [0], [1], [0, 0, 1, 1], [], []>} : vector<32x72xbf16>, vector<72x256xbf16>, vector<32x256xf32> -> vector<32x256xf32>
    %c200 = arith.constant 200 : index
    %c0_610 = arith.constant 0 : index
    %642 = vector.load %arg2[%c200, %c0_610] : memref<272x256xf32, #tpu.memory_space<vmem>>, vector<32x256xf32>
    %643 = arith.addf %641, %642 : vector<32x256xf32>
    %c0_611 = arith.constant 0 : index
    %c128_612 = arith.constant 128 : index
    %644 = vector.load %arg4[%c0_611, %c128_612] : memref<32x512xf32, #tpu.memory_space<vmem>>, vector<32x256xf32>
    tpu.vector_store %arg4[%c0_611, %c128_612], %643 {strides = array<i32>} : memref<32x512xf32, #tpu.memory_space<vmem>>, vector<32x256xf32>,
    %c0_613 = arith.constant 0 : index
    %c128_614 = arith.constant 128 : index
    %645 = vector.load %arg4[%c0_613, %c128_614] : memref<32x512xf32, #tpu.memory_space<vmem>>, vector<8x256xf32>
    %c0_615 = arith.constant 0 : index
    %c129_616 = arith.constant 129 : index
    %646 = vector.load %arg4[%c0_615, %c129_616] : memref<32x512xf32, #tpu.memory_space<vmem>>, vector<8x256xf32>
    %c267_617 = arith.constant 267 : index
    %c0_618 = arith.constant 0 : index
    %647 = vector.load %arg2[%c267_617, %c0_618] : memref<272x256xf32, #tpu.memory_space<vmem>>, vector<1x256xf32>
    %648 = vector.broadcast %647 : vector<1x256xf32> to vector<8x256xf32>
    %649 = arith.mulf %646, %648 : vector<8x256xf32>
    %c0_619 = arith.constant 0 : index
    %c144_620 = arith.constant 144 : index
    %650 = vector.load %arg4[%c0_619, %c144_620] : memref<32x512xf32, #tpu.memory_space<vmem>>, vector<8x256xf32>
    %c0_621 = arith.constant 0 : index
    %c145_622 = arith.constant 145 : index
    %651 = vector.load %arg4[%c0_621, %c145_622] : memref<32x512xf32, #tpu.memory_space<vmem>>, vector<8x256xf32>
    %c267_623 = arith.constant 267 : index
    %c0_624 = arith.constant 0 : index
    %652 = vector.load %arg2[%c267_623, %c0_624] : memref<272x256xf32, #tpu.memory_space<vmem>>, vector<1x256xf32>
    %653 = vector.broadcast %652 : vector<1x256xf32> to vector<8x256xf32>
    %654 = arith.mulf %651, %653 : vector<8x256xf32>
    %c8_625 = arith.constant 8 : index
    %c127_626 = arith.constant 127 : index
    %655 = vector.load %arg4[%c8_625, %c127_626] : memref<32x512xf32, #tpu.memory_space<vmem>>, vector<8x256xf32>
    %c265_627 = arith.constant 265 : index
    %c0_628 = arith.constant 0 : index
    %656 = vector.load %arg2[%c265_627, %c0_628] : memref<272x256xf32, #tpu.memory_space<vmem>>, vector<1x256xf32>
    %657 = vector.broadcast %656 : vector<1x256xf32> to vector<8x256xf32>
    %658 = arith.mulf %655, %657 : vector<8x256xf32>
    %c8_629 = arith.constant 8 : index
    %c128_630 = arith.constant 128 : index
    %659 = vector.load %arg4[%c8_629, %c128_630] : memref<32x512xf32, #tpu.memory_space<vmem>>, vector<8x256xf32>
    %c8_631 = arith.constant 8 : index
    %c143_632 = arith.constant 143 : index
    %660 = vector.load %arg4[%c8_631, %c143_632] : memref<32x512xf32, #tpu.memory_space<vmem>>, vector<8x256xf32>
    %c265_633 = arith.constant 265 : index
    %c0_634 = arith.constant 0 : index
    %661 = vector.load %arg2[%c265_633, %c0_634] : memref<272x256xf32, #tpu.memory_space<vmem>>, vector<1x256xf32>
    %662 = vector.broadcast %661 : vector<1x256xf32> to vector<8x256xf32>
    %663 = arith.mulf %660, %662 : vector<8x256xf32>
    %c8_635 = arith.constant 8 : index
    %c144_636 = arith.constant 144 : index
    %664 = vector.load %arg4[%c8_635, %c144_636] : memref<32x512xf32, #tpu.memory_space<vmem>>, vector<8x256xf32>
    %c16_637 = arith.constant 16 : index
    %c112_638 = arith.constant 112 : index
    %665 = vector.load %arg4[%c16_637, %c112_638] : memref<32x512xf32, #tpu.memory_space<vmem>>, vector<8x256xf32>
    %c16_639 = arith.constant 16 : index
    %c113_640 = arith.constant 113 : index
    %666 = vector.load %arg4[%c16_639, %c113_640] : memref<32x512xf32, #tpu.memory_space<vmem>>, vector<8x256xf32>
    %c267_641 = arith.constant 267 : index
    %c0_642 = arith.constant 0 : index
    %667 = vector.load %arg2[%c267_641, %c0_642] : memref<272x256xf32, #tpu.memory_space<vmem>>, vector<1x256xf32>
    %668 = vector.broadcast %667 : vector<1x256xf32> to vector<8x256xf32>
    %669 = arith.mulf %666, %668 : vector<8x256xf32>
    %c16_643 = arith.constant 16 : index
    %c128_644 = arith.constant 128 : index
    %670 = vector.load %arg4[%c16_643, %c128_644] : memref<32x512xf32, #tpu.memory_space<vmem>>, vector<8x256xf32>
    %c16_645 = arith.constant 16 : index
    %c129_646 = arith.constant 129 : index
    %671 = vector.load %arg4[%c16_645, %c129_646] : memref<32x512xf32, #tpu.memory_space<vmem>>, vector<8x256xf32>
    %c267_647 = arith.constant 267 : index
    %c0_648 = arith.constant 0 : index
    %672 = vector.load %arg2[%c267_647, %c0_648] : memref<272x256xf32, #tpu.memory_space<vmem>>, vector<1x256xf32>
    %673 = vector.broadcast %672 : vector<1x256xf32> to vector<8x256xf32>
    %674 = arith.mulf %671, %673 : vector<8x256xf32>
    %c24_649 = arith.constant 24 : index
    %c111_650 = arith.constant 111 : index
    %675 = vector.load %arg4[%c24_649, %c111_650] : memref<32x512xf32, #tpu.memory_space<vmem>>, vector<8x256xf32>
    %c265_651 = arith.constant 265 : index
    %c0_652 = arith.constant 0 : index
    %676 = vector.load %arg2[%c265_651, %c0_652] : memref<272x256xf32, #tpu.memory_space<vmem>>, vector<1x256xf32>
    %677 = vector.broadcast %676 : vector<1x256xf32> to vector<8x256xf32>
    %678 = arith.mulf %675, %677 : vector<8x256xf32>
    %c24_653 = arith.constant 24 : index
    %c112_654 = arith.constant 112 : index
    %679 = vector.load %arg4[%c24_653, %c112_654] : memref<32x512xf32, #tpu.memory_space<vmem>>, vector<8x256xf32>
    %c24_655 = arith.constant 24 : index
    %c127_656 = arith.constant 127 : index
    %680 = vector.load %arg4[%c24_655, %c127_656] : memref<32x512xf32, #tpu.memory_space<vmem>>, vector<8x256xf32>
    %c265_657 = arith.constant 265 : index
    %c0_658 = arith.constant 0 : index
    %681 = vector.load %arg2[%c265_657, %c0_658] : memref<272x256xf32, #tpu.memory_space<vmem>>, vector<1x256xf32>
    %682 = vector.broadcast %681 : vector<1x256xf32> to vector<8x256xf32>
    %683 = arith.mulf %680, %682 : vector<8x256xf32>
    %c24_659 = arith.constant 24 : index
    %c128_660 = arith.constant 128 : index
    %684 = vector.load %arg4[%c24_659, %c128_660] : memref<32x512xf32, #tpu.memory_space<vmem>>, vector<8x256xf32>
    %685 = tpu.concatenate %645, %649, %650, %654, %658, %659, %663, %664, %665, %669, %670, %674, %678, %679, %683, %684 in 0 : vector<8x256xf32>, vector<8x256xf32>, vector<8x256xf32>, vector<8x256xf32>, vector<8x256xf32>, vector<8x256xf32>, vector<8x256xf32>, vector<8x256xf32>, vector<8x256xf32>, vector<8x256xf32>, vector<8x256xf32>, vector<8x256xf32>, vector<8x256xf32>, vector<8x256xf32>, vector<8x256xf32>, vector<8x256xf32> -> vector<128x256xf32>
    %686 = arith.truncf %685 : vector<128x256xf32> to vector<128x256xbf16>
    %c232 = arith.constant 232 : index
    %c0_661 = arith.constant 0 : index
    %687 = vector.load %arg2[%c232, %c0_661] : memref<272x256xf32, #tpu.memory_space<vmem>>, vector<16x128xf32>
    %688 = arith.truncf %687 : vector<16x128xf32> to vector<16x128xbf16>
    %cst_662 = arith.constant dense<0.000000e+00> : vector<16x256xf32>
    %689 = tpu.matmul %688, %686, %cst_662 {dimension_numbers = #tpu.dot_dimension_numbers<[1], [0], [0], [1], [0, 0, 1, 1], [], []>} : vector<16x128xbf16>, vector<128x256xbf16>, vector<16x256xf32> -> vector<16x256xf32>
    %c248 = arith.constant 248 : index
    %c0_663 = arith.constant 0 : index
    %690 = vector.load %arg2[%c248, %c0_663] : memref<272x256xf32, #tpu.memory_space<vmem>>, vector<16x256xf32>
    %691 = arith.addf %689, %690 : vector<16x256xf32>
    %c0_664 = arith.constant 0 : index
    %c0_665 = arith.constant 0 : index
    %c0_666 = arith.constant 0 : index
    %692 = vector.load %arg3[%c0_664, %c0_665, %c0_666] : memref<1x16x256xf32, #tpu.memory_space<vmem>>, vector<1x16x256xf32>
    %693 = vector.shape_cast %692 : vector<1x16x256xf32> to vector<16x256xf32>
    %694 = vector.shape_cast %691 : vector<16x256xf32> to vector<1x16x256xf32>
    tpu.vector_store %arg3[%c0_664, %c0_665, %c0_666], %694 {strides = array<i32>} : memref<1x16x256xf32, #tpu.memory_space<vmem>>, vector<1x16x256xf32>,
    return
  }
  func.func @transform_0(%arg0: i32) -> (i32, i32, i32) {
    %c0_i32 = arith.constant 0 : i32
    %c0_i32_0 = arith.constant 0 : i32
    %c0_i32_1 = arith.constant 0 : i32
    return %arg0, %c0_i32, %c0_i32_0 : i32, i32, i32
  }
  func.func @transform_1(%arg0: i32) -> (i32, i32) {
    %c0_i32 = arith.constant 0 : i32
    %c0_i32_0 = arith.constant 0 : i32
    %c0_i32_1 = arith.constant 0 : i32
    return %c0_i32, %c0_i32_0 : i32, i32
  }
  func.func @transform_2(%arg0: i32) -> (i32, i32, i32) {
    %c0_i32 = arith.constant 0 : i32
    %c0_i32_0 = arith.constant 0 : i32
    %c0_i32_1 = arith.constant 0 : i32
    return %arg0, %c0_i32, %c0_i32_0 : i32, i32, i32
  }
}

</mosaic_0001>

<llo_original>
// kernel: forward.1
$region0: #{forward.1}
  #allocation0 [shape = 'u32[]', space=smem, size = 0x4, offset = 0x4, fixed_abs, tag = 'smem constant byte address 0x4 - core index']
  #allocation1 [shape = 'u32[72,128]{1,0:T(1,128)}', space=vmem, size = 0x9000, scoped, tag = 'internal scratch']
  #allocation2 [shape = 'f32[32,512]{1,0:T(8,128)}', space=vmem, size = 0x10000, scoped, tag = 'scratch operand']
  %s0 = inlined_call_operand.vmem [shape: f32[2,8,256], index: 0, kind: input, shape index: {}]
  %s1 = inlined_call_operand.hbm [shape: f32[272,256], index: 1, kind: input, shape index: {}]
  %s2 = inlined_call_operand.vmem [shape: f32[2,16,256], index: 2, kind: output, shape index: {}]
  %s3 = sld [smem:[#allocation0]]
  $region45: #{forward.1} parent=0
    _
  %s5 = ssub.s32 1, %s3
  %s6 = scalar_select 0, %s5, %s3
  $region1: #{forward.1} parent=0
    #allocation3 [shape = 'u8[278528]{0}', space=vmem, size = 0x44000, scoped, tag = 'input window, operand 1, single buffered']
    #allocation4 [shape = 's32[2]{0}', space=sflag, size = 0x8, scoped, tag = 'scoped memory for forward.1']
    %7 = vsyncpa [#allocation4], 0
    loop: start=0, step=1, limit=4
    $region2: #{forward.1} parent=1 // loop_pre_header
      _
    $region3: #{forward.1} parent=1 // loop_header
      %s9 = sphi 0, %s13
      %p10 = scmp.ge.s32.totalorder %s9, 4
      %s19 = sphi 0, %s21
      %s22 = sphi 0, %s19
      %s23 = sphi 0, %s22
      %s39 = sphi 0, %s23
      %s43 = sphi 0, %s43
      %s45 = sphi 0, %s43
      %s46 = sphi 0, %s45
      %s60 = sphi 0, %s46
      %s66 = sphi 0, %s68
      %s69 = sphi 0, %s66
      %s70 = sphi 0, %s69
      %s86 = sphi 0, %s70
    $region4: #{forward.1} parent=1 // loop_header_branch
      %12 = sbr.rel (%p10) target = $region8
    $region5: #{forward.1} parent=1 // loop_body
      %s14 = ssub.s32 %s9, 1
      %s15 = ssub.s32 %s9, 2
      %s16 = sadd.s32 %s9, 1
      %s17 = ssub.s32 %s9, %s16
      %p18 = scmp.eq.s32.totalorder %s17, 0
      %s20 = sadd.s32 %s19, 1
      %s21 = scalar_select %p18, %s19, %s20
      %p24 = pneg %p18
      %p25 = scmp.eq.s32.totalorder %s9, 1
      %p26 = por %p24, %p25
      %p27 = scmp.ne.s32.totalorder %s19, %s22
      %p28 = scmp.eq.s32.totalorder %s9, 0
      %p29 = por %p27, %p28
      %p30 = scmp.ne.s32.totalorder %s19, %s22
      %p31 = scmp.eq.s32.totalorder %s14, 1
      %p32 = por %p30, %p31
      %p33 = scmp.ne.s32.totalorder %s22, %s23
      %p34 = scmp.eq.s32.totalorder %s14, 0
      %p35 = por %p33, %p34
      %p36 = scmp.ne.s32.totalorder %s22, %s23
      %p37 = scmp.eq.s32.totalorder %s15, 1
      %p38 = por %p36, %p37
      %p40 = scmp.ne.s32.totalorder %s23, %s39
      %p41 = scmp.eq.s32.totalorder %s15, 0
      %p42 = por %p40, %p41
      %s44 = sadd.s32 %s43, 1
      %p47 = scmp.eq.s32.totalorder %s9, 1
      %p48 = scmp.ne.s32.totalorder %s43, %s45
      %p49 = scmp.eq.s32.totalorder %s9, 0
      %p50 = por %p48, %p49
      %p51 = scmp.ne.s32.totalorder %s43, %s45
      %p52 = scmp.eq.s32.totalorder %s14, 1
      %p53 = por %p51, %p52
      %p54 = scmp.ne.s32.totalorder %s45, %s46
      %p55 = scmp.eq.s32.totalorder %s14, 0
      %p56 = por %p54, %p55
      %p57 = scmp.ne.s32.totalorder %s45, %s46
      %p58 = scmp.eq.s32.totalorder %s15, 1
      %p59 = por %p57, %p58
      %p61 = scmp.ne.s32.totalorder %s46, %s60
      %p62 = scmp.eq.s32.totalorder %s15, 0
      %p63 = por %p61, %p62
      %s64 = ssub.s32 %s9, %s16
      %p65 = scmp.eq.s32.totalorder %s64, 0
      %s67 = sadd.s32 %s66, 1
      %s68 = scalar_select %p65, %s66, %s67
      %p71 = pneg %p65
      %p72 = scmp.eq.s32.totalorder %s9, 1
      %p73 = por %p71, %p72
      %p74 = scmp.ne.s32.totalorder %s66, %s69
      %p75 = scmp.eq.s32.totalorder %s9, 0
      %p76 = por %p74, %p75
      %p77 = scmp.ne.s32.totalorder %s66, %s69
      %p78 = scmp.eq.s32.totalorder %s14, 1
      %p79 = por %p77, %p78
      %p80 = scmp.ne.s32.totalorder %s69, %s70
      %p81 = scmp.eq.s32.totalorder %s14, 0
      %p82 = por %p80, %p81
      %p83 = scmp.ne.s32.totalorder %s69, %s70
      %p84 = scmp.eq.s32.totalorder %s15, 1
      %p85 = por %p83, %p84
      %p87 = scmp.ne.s32.totalorder %s70, %s86
      %p88 = scmp.eq.s32.totalorder %s15, 0
      %p89 = por %p87, %p88
      %p90 = scmp.le.s32.totalorder 1, %s9
      %p91 = scmp.lt.s32.totalorder %s9, 3
      %p92 = pnand %p90, %p91
      %p93 = pneg %p92
      // Predicated region
      $region9: #{forward.1} parent=5 // pred_check
        _
      $region10: #{forward.1} parent=5 // pred_check_branch
        %95 = sbr.rel (%p92) target = $region12
      $region11: #{forward.1} parent=5 // pred_region
        %s96 = ssub.s32 %s9, 1
        // Predicated region
        $region13: #{forward.1} parent=11 // pred_check
          %p97 = pneg %p56
        $region14: #{forward.1} parent=11 // pred_check_branch
          %99 = sbr.rel (%p97) target = $region16
        $region15: #{forward.1} parent=11 // pred_region
          %101 = vsyncadd [#allocation4], 0
          %s102 = sshll.u32 %s1, 4
          %s103 = int_to_ptr.hbm [resolvable:$true] %s102
          %s104 = sshll.u32 [#allocation3], 4
          %s105 = int_to_ptr.vmem [resolvable:$true] %s104
          %110 = dma.hbm_to_vmem [thread:$0]  %s103, 8704, %s105, [#allocation4], 256, 256, 16
        $region16: #{forward.1} parent=11 // pred_fallthru
          _
      $region12: #{forward.1} parent=5 // pred_fallthru
        _
      %p111 = scmp.lt.s32.totalorder %s9, 2
      // Predicated region
      $region17: #{forward.1} parent=5 // pred_check
        %p112 = pneg %p111
      $region18: #{forward.1} parent=5 // pred_check_branch
        %114 = sbr.rel (%p112) target = $region20
      $region19: #{forward.1} parent=5 // pred_region
        // Predicated region
        $region21: #{forward.1} parent=19 // pred_check
          %p115 = pneg %p29
        $region22: #{forward.1} parent=19 // pred_check_branch
          %117 = sbr.rel (%p115) target = $region24
        $region23: #{forward.1} parent=19 // pred_region
          %p118 = scmp.lt.s32.totalorder %s9, 1
          %s119 = scalar_select %p118, %s9, 1
          %s120 = smul.addr %s119, 2
          %s121 = smul.addr %s120, 8
          %s122 = scalar_lea.vmem %s0, %s121
        $region24: #{forward.1} parent=19 // pred_fallthru
          _
      $region20: #{forward.1} parent=5 // pred_fallthru
        _
      %p123 = scmp.le.s32.totalorder 1, %s9
      %p124 = scmp.lt.s32.totalorder %s9, 3
      %p125 = pnand %p123, %p124
      %p126 = pneg %p125
      // Predicated region
      $region25: #{forward.1} parent=5 // pred_check
        _
      $region26: #{forward.1} parent=5 // pred_check_branch
        %128 = sbr.rel (%p125) target = $region28
      $region27: #{forward.1} parent=5 // pred_region
        %s129 = ssub.s32 %s9, 1
        // Predicated region
        $region29: #{forward.1} parent=27 // pred_check
          %p130 = pneg %p56
        $region30: #{forward.1} parent=27 // pred_check_branch
          %132 = sbr.rel (%p130) target = $region32
        $region31: #{forward.1} parent=27 // pred_region
          %134 = dma.done [#allocation4], 8704
        $region32: #{forward.1} parent=27 // pred_fallthru
          _
        %p135 = scmp.lt.s32.totalorder %s14, 1
        %s136 = scalar_select %p135, %s14, 1
        %s137 = smul.addr %s136, 2
        %s138 = smul.addr %s137, 8
        %s139 = scalar_lea.vmem %s0, %s138
        %p140 = pneg %p35
        %p141 = pneg %p32
        %p142 = pneg %p56
        %p143 = pneg %p53
        %p144 = pneg %p82
        %p145 = pneg %p79
        %p146 = scmp.lt.s32.totalorder %s14, 1
        %s147 = scalar_select %p146, %s14, 1
        %s148 = smul.addr %s147, 4
        %s149 = smul.addr %s148, 8
        %s150 = scalar_lea.vmem %s2, %s149
        %p151 = scmp.lt.s32.totalorder %s14, 1
        %s152 = scalar_select %p151, %s14, 1
        %s153 = smul.addr %s152, 2
        %s154 = smul.addr %s153, 8
        %s155 = scalar_lea.vmem %s0, %s154
        %p156 = scmp.lt.s32.totalorder %s14, 1
        %s157 = scalar_select %p156, %s14, 1
        %s158 = smul.addr %s157, 4
        %s159 = smul.addr %s158, 8
        %s160 = scalar_lea.vmem %s2, %s159
        %162 = vst [vmem:[#allocation2] sm:$0xff] 0.0
        %163 = vst [vmem:[#allocation2 + $0x8] sm:$0xff] 0.0
        %164 = vst [vmem:[#allocation2 + $0x10] sm:$0xff] 0.0
        %165 = vst [vmem:[#allocation2 + $0x18] sm:$0xff] 0.0
        %166 = vst [vmem:[#allocation2 + $0x20] sm:$0xff] 0.0
        %167 = vst [vmem:[#allocation2 + $0x28] sm:$0xff] 0.0
        %168 = vst [vmem:[#allocation2 + $0x30] sm:$0xff] 0.0
        %169 = vst [vmem:[#allocation2 + $0x38] sm:$0xff] 0.0
        %170 = vst [vmem:[#allocation2 + $0x40] sm:$0xff] 0.0
        %171 = vst [vmem:[#allocation2 + $0x48] sm:$0xff] 0.0
        %172 = vst [vmem:[#allocation2 + $0x50] sm:$0xff] 0.0
        %173 = vst [vmem:[#allocation2 + $0x58] sm:$0xff] 0.0
        %174 = vst [vmem:[#allocation2 + $0x60] sm:$0xff] 0.0
        %175 = vst [vmem:[#allocation2 + $0x68] sm:$0xff] 0.0
        %176 = vst [vmem:[#allocation2 + $0x70] sm:$0xff] 0.0
        %177 = vst [vmem:[#allocation2 + $0x78] sm:$0xff] 0.0
        %v178 = vld [vmem:[%s155] sm:$0xff]
        %v179 = vld [vmem:[%s155 + $0x8] sm:$0xff]
        %v180 = vld [vmem:[#allocation3] sm:$0xff]
        %v181 = vld [vmem:[#allocation3 + $0x8] sm:$0xff]
        %v182 = vadd.f32 %v178, %v180
        %v183 = vadd.f32 %v179, %v181
        %184 = vst [vmem:[#allocation2 + $0x8] sm:$0xff] %v182
        %185 = vst [vmem:[#allocation2 + $0x10] sm:$0xff] %v183
        %v186 = vld [vmem:[#allocation2] sm:$0xff]
        %v187 = vld [vmem:[#allocation2 + $0x8] sm:$0xff]
        %v188 = vld [vmem:[#allocation2 + $0x10] sm:$0xff]
        %s189 = scalar_lea.vmem [#allocation3], 529
        %v190 = vld [vmem:[%s189] ss:$8 sm:$0x3]
        %v192 = vperm.slane %v190, 0
        %v193 = vperm.slane %v190, 1
        %194 = vrot.lane.b32.xlu0 %v192, 111
        %v195 = vpop.permute.xlu0 %194
        %196 = vrot.lane.b32.xlu0 %v193, 111
        %v197 = vpop.permute.xlu0 %196
        %vm198 = vcmask 908288
        %v199 = vsel %vm198, %v195, %v197
        %v203 = vmul.f32 %v186, %v195
        %v204 = vmul.f32 %v187, %v199
        %v205 = vmul.f32 %v188, %v197
        %s206 = scalar_lea.vmem [#allocation3], 531
        %v207 = vld [vmem:[%s206] ss:$8 sm:$0x3]
        %v209 = vperm.slane %v207, 0
        %v210 = vperm.slane %v207, 1
        %211 = vrot.lane.b32.xlu0 %v209, 113
        %v212 = vpop.permute.xlu0 %211
        %213 = vrot.lane.b32.xlu0 %v210, 113
        %v214 = vpop.permute.xlu0 %213
        %vm215 = vcmask 924672
        %v216 = vsel %vm215, %v212, %v214
        %v220 = vmul.f32 %v186, %v212
        %v221 = vmul.f32 %v187, %v216
        %v222 = vmul.f32 %v188, %v214
        %223 = vrot.lane.b32.xlu0 %v192, 127
        %v224 = vpop.permute.xlu0 %223
        %225 = vrot.lane.b32.xlu0 %v193, 127
        %v226 = vpop.permute.xlu0 %225
        %vm227 = vcmask 1039360
        %v228 = vsel %vm227, %v224, %v226
        %v232 = vmul.f32 %v186, %v224
        %v233 = vmul.f32 %v187, %v228
        %v234 = vmul.f32 %v188, %v226
        %v235 = vld [vmem:[#allocation2 + $0x18] sm:$0xff]
        %236 = vrot.lane.b32.xlu0 %v209, 1
        %v237 = vpop.permute.xlu0 %236
        %238 = vrot.lane.b32.xlu0 %v210, 1
        %v239 = vpop.permute.xlu0 %238
        %vm240 = vcmask 7168
        %v241 = vsel %vm240, %v237, %v239
        %v245 = vmul.f32 %v187, %v237
        %v246 = vmul.f32 %v188, %v241
        %v247 = vmul.f32 %v235, %v239
        %248 = vrot.lane.b32.xlu0 %v192, 15
        %v249 = vpop.permute.xlu0 %248
        %250 = vrot.lane.b32.xlu0 %v193, 15
        %v251 = vpop.permute.xlu0 %250
        %vm252 = vcmask 121856
        %v253 = vsel %vm252, %v249, %v251
        %v257 = vmul.f32 %v187, %v249
        %v258 = vmul.f32 %v188, %v253
        %v259 = vmul.f32 %v235, %v251
        %260 = vrot.lane.b32.xlu0 %v209, 17
        %v261 = vpop.permute.xlu0 %260
        %262 = vrot.lane.b32.xlu0 %v210, 17
        %v263 = vpop.permute.xlu0 %262
        %vm264 = vcmask 138240
        %v265 = vsel %vm264, %v261, %v263
        %v269 = vmul.f32 %v187, %v261
        %v270 = vmul.f32 %v188, %v265
        %v271 = vmul.f32 %v235, %v263
        %275 = vrot.lane.b32.xlu0 %v186, 127
        %v276 = vpop.permute.xlu0 %275
        %277 = vrot.lane.b32.xlu0 %v187, 127
        %v278 = vpop.permute.xlu0 %277
        %279 = vrot.lane.b32.xlu0 %v188, 127
        %v280 = vpop.permute.xlu0 %279
        %v281 = vsel %vm227, %v276, %v278
        %v282 = vsel %vm227, %v278, %v280
        %289 = vrot.lane.b32.xlu0 %v220, 126
        %v290 = vpop.permute.xlu0 %289
        %291 = vrot.lane.b32.xlu0 %v221, 126
        %v292 = vpop.permute.xlu0 %291
        %293 = vrot.lane.b32.xlu0 %v222, 126
        %v294 = vpop.permute.xlu0 %293
        %vm295 = vcmask 1031168
        %v296 = vsel %vm295, %v290, %v292
        %v297 = vsel %vm295, %v292, %v294
        %304 = vrot.lane.b32.xlu0 %v232, 112
        %v305 = vpop.permute.xlu0 %304
        %306 = vrot.lane.b32.xlu0 %v233, 112
        %v307 = vpop.permute.xlu0 %306
        %308 = vrot.lane.b32.xlu0 %v234, 112
        %v309 = vpop.permute.xlu0 %308
        %vm310 = vcmask 916480
        %v311 = vsel %vm310, %v305, %v307
        %v312 = vsel %vm310, %v307, %v309
        %316 = vrot.lane.b32.xlu0 %v187, 111
        %v317 = vpop.permute.xlu0 %316
        %318 = vrot.lane.b32.xlu0 %v188, 111
        %v319 = vpop.permute.xlu0 %318
        %v320 = vsel %vm198, %v317, %v319
        %327 = vrot.lane.b32.xlu0 %v245, 110
        %v328 = vpop.permute.xlu0 %327
        %329 = vrot.lane.b32.xlu0 %v246, 110
        %v330 = vpop.permute.xlu0 %329
        %331 = vrot.lane.b32.xlu0 %v247, 110
        %v332 = vpop.permute.xlu0 %331
        %vm333 = vcmask 900096
        %v334 = vsel %vm333, %v328, %v330
        %v335 = vsel %vm333, %v330, %v332
        %342 = vrot.lane.b32.xlu0 %v257, 96
        %v343 = vpop.permute.xlu0 %342
        %344 = vrot.lane.b32.xlu0 %v258, 96
        %v345 = vpop.permute.xlu0 %344
        %346 = vrot.lane.b32.xlu0 %v259, 96
        %v347 = vpop.permute.xlu0 %346
        %vm348 = vcmask 785408
        %v349 = vsel %vm348, %v343, %v345
        %v350 = vsel %vm348, %v345, %v347
        %355 = vrot.lane.b32.xlu0 %v187, 95
        %v356 = vpop.permute.xlu0 %355
        %357 = vrot.lane.b32.xlu0 %v188, 95
        %v358 = vpop.permute.xlu0 %357
        %359 = vrot.lane.b32.xlu0 %v235, 95
        %v360 = vpop.permute.xlu0 %359
        %vm361 = vcmask 777216
        %v362 = vsel %vm361, %v356, %v358
        %v363 = vsel %vm361, %v358, %v360
        %370 = vrot.lane.b32.xlu0 %v269, 94
        %v371 = vpop.permute.xlu0 %370
        %372 = vrot.lane.b32.xlu0 %v270, 94
        %v373 = vpop.permute.xlu0 %372
        %374 = vrot.lane.b32.xlu0 %v271, 94
        %v375 = vpop.permute.xlu0 %374
        %vm376 = vcmask 769024
        %v377 = vsel %vm376, %v371, %v373
        %v378 = vsel %vm376, %v373, %v375
        %v382 = vpack.c.bf16 %v281, %v203
        %v383 = vpack.c.bf16 %v282, %v204
        %v384 = vpack.c.bf16 %v280, %v205
        %v385 = vpack.c.bf16 %v311, %v296
        %v386 = vpack.c.bf16 %v312, %v297
        %v387 = vpack.c.bf16 %v309, %v294
        %v388 = vpack.c.bf16 %v328, %v317
        %v389 = vpack.c.bf16 %v334, %v320
        %v390 = vpack.c.bf16 %v335, %v319
        %v391 = vpack.c.bf16 %v356, %v343
        %v392 = vpack.c.bf16 %v362, %v349
        %v393 = vpack.c.bf16 %v363, %v350
        %v394 = vpack.c.bf16 %v371, %v371
        %v395 = vpack.c.bf16 %v377, %v377
        %v396 = vpack.c.bf16 %v378, %v378
        %v397 = vld [vmem:[#allocation3 + $0x10] sm:$0xff]
        %v398 = vpack.c.bf16 %v397, %v397
        %v399 = vld [vmem:[#allocation3 + $0x20] sm:$0xff]
        %v400 = vld [vmem:[#allocation3 + $0x28] sm:$0xff]
        %416 = vrot.lane.b32.xlu0 %v382, 17
        %v417 = vpop.permute.xlu0 %416
        %418 = vrot.lane.b32.xlu0 %v383, 17
        %v419 = vpop.permute.xlu0 %418
        %420 = vrot.lane.b32.xlu0 %v384, 17
        %v421 = vpop.permute.xlu0 %420
        %422 = vrot.lane.b32.xlu0 %v385, 17
        %v423 = vpop.permute.xlu0 %422
        %424 = vrot.lane.b32.xlu0 %v386, 17
        %v425 = vpop.permute.xlu0 %424
        %426 = vrot.lane.b32.xlu0 %v387, 17
        %v427 = vpop.permute.xlu0 %426
        %428 = vrot.lane.b32.xlu0 %v388, 17
        %v429 = vpop.permute.xlu0 %428
        %430 = vrot.lane.b32.xlu0 %v389, 17
        %v431 = vpop.permute.xlu0 %430
        %432 = vrot.lane.b32.xlu0 %v390, 17
        %v433 = vpop.permute.xlu0 %432
        %434 = vrot.lane.b32.xlu0 %v391, 17
        %v435 = vpop.permute.xlu0 %434
        %436 = vrot.lane.b32.xlu0 %v392, 17
        %v437 = vpop.permute.xlu0 %436
        %438 = vrot.lane.b32.xlu0 %v393, 17
        %v439 = vpop.permute.xlu0 %438
        %440 = vrot.lane.b32.xlu0 %v394, 17
        %v441 = vpop.permute.xlu0 %440
        %442 = vrot.lane.b32.xlu0 %v395, 17
        %v443 = vpop.permute.xlu0 %442
        %444 = vrot.lane.b32.xlu0 %v396, 17
        %v445 = vpop.permute.xlu0 %444
        %vm446 = vcmask 138240
        %v447 = vsel %vm446, %v417, %v419
        %v448 = vsel %vm446, %v419, %v421
        %v449 = vsel %vm446, %v423, %v425
        %v450 = vsel %vm446, %v425, %v427
        %v451 = vsel %vm446, %v429, %v431
        %v452 = vsel %vm446, %v431, %v433
        %v453 = vsel %vm446, %v435, %v437
        %v454 = vsel %vm446, %v437, %v439
        %v455 = vsel %vm446, %v441, %v443
        %v456 = vsel %vm446, %v443, %v445
        %vm465 = vcmask 588800
        %v467 = vsel %vm465, %v398, 0
        %vm469 = vcmask 1043456
        %v471 = vsel %vm469, %v455, 0
        %v474 = vsel %vm469, %v456, 0
        %476 = vmatpush.bf16.msra.mxu0 0
        %477 = vmatpush.bf16.msra.mxu0 0
        %478 = vmatpush.bf16.msra.mxu0 0
        %479 = vmatpush.bf16.msra.mxu0 %v471
        %480 = vmatpush.bf16.msra.mxu0 %v453
        %481 = vmatpush.bf16.msra.mxu0 %v451
        %482 = vmatpush.bf16.msra.mxu0 %v449
        %483 = vmatpush.bf16.msra.mxu0 %v447
        %484 = vmatmul.bf16.gmra.mxu0 %v467
        %v485 = vpop.f32.mrf.mxu0
        %v486 = vadd.f32 %v399, %v485
        %v487 = vpop.f32.mrf.mxu0
        %488 = vdwg.mxu0
        %489 = vmatpush.bf16.msra.mxu0 0
        %490 = vmatpush.bf16.msra.mxu0 0
        %491 = vmatpush.bf16.msra.mxu0 0
        %492 = vmatpush.bf16.msra.mxu0 %v474
        %493 = vmatpush.bf16.msra.mxu0 %v454
        %494 = vmatpush.bf16.msra.mxu0 %v452
        %495 = vmatpush.bf16.msra.mxu0 %v450
        %496 = vmatpush.bf16.msra.mxu0 %v448
        %497 = vmatmul.bf16.gmra.mxu0 %v467
        %v498 = vpop.f32.mrf.mxu0
        %v499 = vadd.f32 %v400, %v498
        %v500 = vpop.f32.mrf.mxu0
        %501 = vdwg.mxu0
        %502 = vst [vmem:[#allocation2 + $0x8] sm:$0xff] %v486
        %503 = vst [vmem:[#allocation2 + $0x10] sm:$0xff] %v499
        %v504 = vld [vmem:[#allocation2] sm:$0xff]
        %v505 = vld [vmem:[#allocation2 + $0x8] sm:$0xff]
        %v506 = vld [vmem:[#allocation2 + $0x10] sm:$0xff]
        %s507 = scalar_lea.vmem [#allocation3], 528
        %v508 = vld [vmem:[%s507] ss:$8 sm:$0x3]
        %v510 = vperm.slane %v508, 0
        %v511 = vperm.slane %v508, 1
        %512 = vrot.lane.b32.xlu0 %v510, 94
        %v513 = vpop.permute.xlu0 %512
        %514 = vrot.lane.b32.xlu0 %v511, 94
        %v515 = vpop.permute.xlu0 %514
        %v516 = vsel %vm376, %v513, %v515
        %v520 = vmul.f32 %v504, %v513
        %v521 = vmul.f32 %v505, %v516
        %v522 = vmul.f32 %v506, %v515
        %v523 = vld [vmem:[%s189] ss:$8 sm:$0x3]
        %v525 = vperm.slane %v523, 0
        %v526 = vperm.slane %v523, 1
        %527 = vrot.lane.b32.xlu0 %v525, 95
        %v528 = vpop.permute.xlu0 %527
        %529 = vrot.lane.b32.xlu0 %v526, 95
        %v530 = vpop.permute.xlu0 %529
        %v531 = vsel %vm361, %v528, %v530
        %v535 = vmul.f32 %v504, %v528
        %v536 = vmul.f32 %v505, %v531
        %v537 = vmul.f32 %v506, %v530
        %v538 = vld [vmem:[%s206] ss:$8 sm:$0x3]
        %v540 = vperm.slane %v538, 0
        %v541 = vperm.slane %v538, 1
        %542 = vrot.lane.b32.xlu0 %v540, 97
        %v543 = vpop.permute.xlu0 %542
        %544 = vrot.lane.b32.xlu0 %v541, 97
        %v545 = vpop.permute.xlu0 %544
        %vm546 = vcmask 793600
        %v547 = vsel %vm546, %v543, %v545
        %v551 = vmul.f32 %v504, %v543
        %v552 = vmul.f32 %v505, %v547
        %v553 = vmul.f32 %v506, %v545
        %s554 = scalar_lea.vmem [#allocation3], 532
        %v555 = vld [vmem:[%s554] ss:$8 sm:$0x3]
        %v557 = vperm.slane %v555, 0
        %v558 = vperm.slane %v555, 1
        %559 = vrot.lane.b32.xlu0 %v557, 98
        %v560 = vpop.permute.xlu0 %559
        %561 = vrot.lane.b32.xlu0 %v558, 98
        %v562 = vpop.permute.xlu0 %561
        %vm563 = vcmask 801792
        %v564 = vsel %vm563, %v560, %v562
        %v568 = vmul.f32 %v504, %v560
        %v569 = vmul.f32 %v505, %v564
        %v570 = vmul.f32 %v506, %v562
        %571 = vrot.lane.b32.xlu0 %v510, 110
        %v572 = vpop.permute.xlu0 %571
        %573 = vrot.lane.b32.xlu0 %v511, 110
        %v574 = vpop.permute.xlu0 %573
        %v575 = vsel %vm333, %v572, %v574
        %v579 = vmul.f32 %v504, %v572
        %v580 = vmul.f32 %v505, %v575
        %v581 = vmul.f32 %v506, %v574
        %582 = vrot.lane.b32.xlu0 %v525, 111
        %v583 = vpop.permute.xlu0 %582
        %584 = vrot.lane.b32.xlu0 %v526, 111
        %v585 = vpop.permute.xlu0 %584
        %v586 = vsel %vm198, %v583, %v585
        %v590 = vmul.f32 %v504, %v583
        %v591 = vmul.f32 %v505, %v586
        %v592 = vmul.f32 %v506, %v585
        %593 = vrot.lane.b32.xlu0 %v540, 113
        %v594 = vpop.permute.xlu0 %593
        %595 = vrot.lane.b32.xlu0 %v541, 113
        %v596 = vpop.permute.xlu0 %595
        %v597 = vsel %vm215, %v594, %v596
        %v601 = vmul.f32 %v504, %v594
        %v602 = vmul.f32 %v505, %v597
        %v603 = vmul.f32 %v506, %v596
        %604 = vrot.lane.b32.xlu0 %v557, 114
        %v605 = vpop.permute.xlu0 %604
        %606 = vrot.lane.b32.xlu0 %v558, 114
        %v607 = vpop.permute.xlu0 %606
        %vm608 = vcmask 932864
        %v609 = vsel %vm608, %v605, %v607
        %v613 = vmul.f32 %v504, %v605
        %v614 = vmul.f32 %v505, %v609
        %v615 = vmul.f32 %v506, %v607
        %616 = vrot.lane.b32.xlu0 %v510, 126
        %v617 = vpop.permute.xlu0 %616
        %618 = vrot.lane.b32.xlu0 %v511, 126
        %v619 = vpop.permute.xlu0 %618
        %v620 = vsel %vm295, %v617, %v619
        %v624 = vmul.f32 %v504, %v617
        %v625 = vmul.f32 %v505, %v620
        %v626 = vmul.f32 %v506, %v619
        %627 = vrot.lane.b32.xlu0 %v525, 127
        %v628 = vpop.permute.xlu0 %627
        %629 = vrot.lane.b32.xlu0 %v526, 127
        %v630 = vpop.permute.xlu0 %629
        %v631 = vsel %vm227, %v628, %v630
        %v635 = vmul.f32 %v504, %v628
        %v636 = vmul.f32 %v505, %v631
        %v637 = vmul.f32 %v506, %v630
        %v638 = vld [vmem:[#allocation2 + $0x18] sm:$0xff]
        %639 = vrot.lane.b32.xlu0 %v540, 1
        %v640 = vpop.permute.xlu0 %639
        %641 = vrot.lane.b32.xlu0 %v541, 1
        %v642 = vpop.permute.xlu0 %641
        %v643 = vsel %vm240, %v640, %v642
        %v647 = vmul.f32 %v505, %v640
        %v648 = vmul.f32 %v506, %v643
        %v649 = vmul.f32 %v638, %v642
        %650 = vrot.lane.b32.xlu0 %v557, 2
        %v651 = vpop.permute.xlu0 %650
        %652 = vrot.lane.b32.xlu0 %v558, 2
        %v653 = vpop.permute.xlu0 %652
        %vm654 = vcmask 15360
        %v655 = vsel %vm654, %v651, %v653
        %v659 = vmul.f32 %v505, %v651
        %v660 = vmul.f32 %v506, %v655
        %v661 = vmul.f32 %v638, %v653
        %662 = vrot.lane.b32.xlu0 %v510, 14
        %v663 = vpop.permute.xlu0 %662
        %664 = vrot.lane.b32.xlu0 %v511, 14
        %v665 = vpop.permute.xlu0 %664
        %vm666 = vcmask 113664
        %v667 = vsel %vm666, %v663, %v665
        %v671 = vmul.f32 %v505, %v663
        %v672 = vmul.f32 %v506, %v667
        %v673 = vmul.f32 %v638, %v665
        %674 = vrot.lane.b32.xlu0 %v525, 15
        %v675 = vpop.permute.xlu0 %674
        %676 = vrot.lane.b32.xlu0 %v526, 15
        %v677 = vpop.permute.xlu0 %676
        %v678 = vsel %vm252, %v675, %v677
        %v682 = vmul.f32 %v505, %v675
        %v683 = vmul.f32 %v506, %v678
        %v684 = vmul.f32 %v638, %v677
        %685 = vrot.lane.b32.xlu0 %v540, 17
        %v686 = vpop.permute.xlu0 %685
        %687 = vrot.lane.b32.xlu0 %v541, 17
        %v688 = vpop.permute.xlu0 %687
        %v689 = vsel %vm264, %v686, %v688
        %v693 = vmul.f32 %v505, %v686
        %v694 = vmul.f32 %v506, %v689
        %v695 = vmul.f32 %v638, %v688
        %696 = vrot.lane.b32.xlu0 %v557, 18
        %v697 = vpop.permute.xlu0 %696
        %698 = vrot.lane.b32.xlu0 %v558, 18
        %v699 = vpop.permute.xlu0 %698
        %vm700 = vcmask 146432
        %v701 = vsel %vm700, %v697, %v699
        %v705 = vmul.f32 %v505, %v697
        %v706 = vmul.f32 %v506, %v701
        %v707 = vmul.f32 %v638, %v699
        %708 = vrot.lane.b32.xlu0 %v510, 30
        %v709 = vpop.permute.xlu0 %708
        %710 = vrot.lane.b32.xlu0 %v511, 30
        %v711 = vpop.permute.xlu0 %710
        %vm712 = vcmask 244736
        %v713 = vsel %vm712, %v709, %v711
        %v717 = vmul.f32 %v505, %v709
        %v718 = vmul.f32 %v506, %v713
        %v719 = vmul.f32 %v638, %v711
        %720 = vrot.lane.b32.xlu0 %v525, 31
        %v721 = vpop.permute.xlu0 %720
        %722 = vrot.lane.b32.xlu0 %v526, 31
        %v723 = vpop.permute.xlu0 %722
        %vm724 = vcmask 252928
        %v725 = vsel %vm724, %v721, %v723
        %v729 = vmul.f32 %v505, %v721
        %v730 = vmul.f32 %v506, %v725
        %v731 = vmul.f32 %v638, %v723
        %732 = vrot.lane.b32.xlu0 %v540, 33
        %v733 = vpop.permute.xlu0 %732
        %734 = vrot.lane.b32.xlu0 %v541, 33
        %v735 = vpop.permute.xlu0 %734
        %vm736 = vcmask 269312
        %v737 = vsel %vm736, %v733, %v735
        %v741 = vmul.f32 %v505, %v733
        %v742 = vmul.f32 %v506, %v737
        %v743 = vmul.f32 %v638, %v735
        %744 = vrot.lane.b32.xlu0 %v557, 34
        %v745 = vpop.permute.xlu0 %744
        %746 = vrot.lane.b32.xlu0 %v558, 34
        %v747 = vpop.permute.xlu0 %746
        %vm748 = vcmask 277504
        %v749 = vsel %vm748, %v745, %v747
        %v753 = vmul.f32 %v505, %v745
        %v754 = vmul.f32 %v506, %v749
        %v755 = vmul.f32 %v638, %v747
        %759 = vrot.lane.b32.xlu0 %v535, 127
        %v760 = vpop.permute.xlu0 %759
        %761 = vrot.lane.b32.xlu0 %v536, 127
        %v762 = vpop.permute.xlu0 %761
        %763 = vrot.lane.b32.xlu0 %v537, 127
        %v764 = vpop.permute.xlu0 %763
        %v765 = vsel %vm227, %v760, %v762
        %v766 = vsel %vm227, %v762, %v764
        %773 = vrot.lane.b32.xlu0 %v504, 126
        %v774 = vpop.permute.xlu0 %773
        %775 = vrot.lane.b32.xlu0 %v505, 126
        %v776 = vpop.permute.xlu0 %775
        %777 = vrot.lane.b32.xlu0 %v506, 126
        %v778 = vpop.permute.xlu0 %777
        %v779 = vsel %vm295, %v774, %v776
        %v780 = vsel %vm295, %v776, %v778
        %787 = vrot.lane.b32.xlu0 %v551, 125
        %v788 = vpop.permute.xlu0 %787
        %789 = vrot.lane.b32.xlu0 %v552, 125
        %v790 = vpop.permute.xlu0 %789
        %791 = vrot.lane.b32.xlu0 %v553, 125
        %v792 = vpop.permute.xlu0 %791
        %vm793 = vcmask 1022976
        %v794 = vsel %vm793, %v788, %v790
        %v795 = vsel %vm793, %v790, %v792
        %802 = vrot.lane.b32.xlu0 %v568, 124
        %v803 = vpop.permute.xlu0 %802
        %804 = vrot.lane.b32.xlu0 %v569, 124
        %v805 = vpop.permute.xlu0 %804
        %806 = vrot.lane.b32.xlu0 %v570, 124
        %v807 = vpop.permute.xlu0 %806
        %vm808 = vcmask 1014784
        %v809 = vsel %vm808, %v803, %v805
        %v810 = vsel %vm808, %v805, %v807
        %817 = vrot.lane.b32.xlu0 %v579, 112
        %v818 = vpop.permute.xlu0 %817
        %819 = vrot.lane.b32.xlu0 %v580, 112
        %v820 = vpop.permute.xlu0 %819
        %821 = vrot.lane.b32.xlu0 %v581, 112
        %v822 = vpop.permute.xlu0 %821
        %v823 = vsel %vm310, %v818, %v820
        %v824 = vsel %vm310, %v820, %v822
        %831 = vrot.lane.b32.xlu0 %v590, 111
        %v832 = vpop.permute.xlu0 %831
        %833 = vrot.lane.b32.xlu0 %v591, 111
        %v834 = vpop.permute.xlu0 %833
        %835 = vrot.lane.b32.xlu0 %v592, 111
        %v836 = vpop.permute.xlu0 %835
        %v837 = vsel %vm198, %v832, %v834
        %v838 = vsel %vm198, %v834, %v836
        %842 = vrot.lane.b32.xlu0 %v504, 110
        %v843 = vpop.permute.xlu0 %842
        %844 = vrot.lane.b32.xlu0 %v505, 110
        %v845 = vpop.permute.xlu0 %844
        %846 = vrot.lane.b32.xlu0 %v506, 110
        %v847 = vpop.permute.xlu0 %846
        %v848 = vsel %vm333, %v843, %v845
        %v849 = vsel %vm333, %v845, %v847
        %856 = vrot.lane.b32.xlu0 %v601, 109
        %v857 = vpop.permute.xlu0 %856
        %858 = vrot.lane.b32.xlu0 %v602, 109
        %v859 = vpop.permute.xlu0 %858
        %860 = vrot.lane.b32.xlu0 %v603, 109
        %v861 = vpop.permute.xlu0 %860
        %vm862 = vcmask 891904
        %v863 = vsel %vm862, %v857, %v859
        %v864 = vsel %vm862, %v859, %v861
        %871 = vrot.lane.b32.xlu0 %v613, 108
        %v872 = vpop.permute.xlu0 %871
        %873 = vrot.lane.b32.xlu0 %v614, 108
        %v874 = vpop.permute.xlu0 %873
        %875 = vrot.lane.b32.xlu0 %v615, 108
        %v876 = vpop.permute.xlu0 %875
        %vm877 = vcmask 883712
        %v878 = vsel %vm877, %v872, %v874
        %v879 = vsel %vm877, %v874, %v876
        %886 = vrot.lane.b32.xlu0 %v624, 96
        %v887 = vpop.permute.xlu0 %886
        %888 = vrot.lane.b32.xlu0 %v625, 96
        %v889 = vpop.permute.xlu0 %888
        %890 = vrot.lane.b32.xlu0 %v626, 96
        %v891 = vpop.permute.xlu0 %890
        %v892 = vsel %vm348, %v887, %v889
        %v893 = vsel %vm348, %v889, %v891
        %900 = vrot.lane.b32.xlu0 %v635, 95
        %v901 = vpop.permute.xlu0 %900
        %902 = vrot.lane.b32.xlu0 %v636, 95
        %v903 = vpop.permute.xlu0 %902
        %904 = vrot.lane.b32.xlu0 %v637, 95
        %v905 = vpop.permute.xlu0 %904
        %v906 = vsel %vm361, %v901, %v903
        %v907 = vsel %vm361, %v903, %v905
        %911 = vrot.lane.b32.xlu0 %v505, 94
        %v912 = vpop.permute.xlu0 %911
        %913 = vrot.lane.b32.xlu0 %v506, 94
        %v914 = vpop.permute.xlu0 %913
        %v915 = vsel %vm376, %v912, %v914
        %922 = vrot.lane.b32.xlu0 %v647, 93
        %v923 = vpop.permute.xlu0 %922
        %924 = vrot.lane.b32.xlu0 %v648, 93
        %v925 = vpop.permute.xlu0 %924
        %926 = vrot.lane.b32.xlu0 %v649, 93
        %v927 = vpop.permute.xlu0 %926
        %vm928 = vcmask 760832
        %v929 = vsel %vm928, %v923, %v925
        %v930 = vsel %vm928, %v925, %v927
        %937 = vrot.lane.b32.xlu0 %v659, 92
        %v938 = vpop.permute.xlu0 %937
        %939 = vrot.lane.b32.xlu0 %v660, 92
        %v940 = vpop.permute.xlu0 %939
        %941 = vrot.lane.b32.xlu0 %v661, 92
        %v942 = vpop.permute.xlu0 %941
        %vm943 = vcmask 752640
        %v944 = vsel %vm943, %v938, %v940
        %v945 = vsel %vm943, %v940, %v942
        %952 = vrot.lane.b32.xlu0 %v671, 80
        %v953 = vpop.permute.xlu0 %952
        %954 = vrot.lane.b32.xlu0 %v672, 80
        %v955 = vpop.permute.xlu0 %954
        %956 = vrot.lane.b32.xlu0 %v673, 80
        %v957 = vpop.permute.xlu0 %956
        %vm958 = vcmask 654336
        %v959 = vsel %vm958, %v953, %v955
        %v960 = vsel %vm958, %v955, %v957
        %965 = vrot.lane.b32.xlu0 %v505, 127
        %v966 = vpop.permute.xlu0 %965
        %967 = vrot.lane.b32.xlu0 %v506, 127
        %v968 = vpop.permute.xlu0 %967
        %969 = vrot.lane.b32.xlu0 %v638, 127
        %v970 = vpop.permute.xlu0 %969
        %v971 = vsel %vm227, %v966, %v968
        %v972 = vsel %vm227, %v968, %v970
        %976 = vrot.lane.b32.xlu0 %v693, 126
        %v977 = vpop.permute.xlu0 %976
        %978 = vrot.lane.b32.xlu0 %v694, 126
        %v979 = vpop.permute.xlu0 %978
        %980 = vrot.lane.b32.xlu0 %v695, 126
        %v981 = vpop.permute.xlu0 %980
        %v982 = vsel %vm295, %v977, %v979
        %v983 = vsel %vm295, %v979, %v981
        %987 = vrot.lane.b32.xlu0 %v705, 125
        %v988 = vpop.permute.xlu0 %987
        %989 = vrot.lane.b32.xlu0 %v706, 125
        %v990 = vpop.permute.xlu0 %989
        %991 = vrot.lane.b32.xlu0 %v707, 125
        %v992 = vpop.permute.xlu0 %991
        %v993 = vsel %vm793, %v988, %v990
        %v994 = vsel %vm793, %v990, %v992
        %998 = vrot.lane.b32.xlu0 %v717, 113
        %v999 = vpop.permute.xlu0 %998
        %1000 = vrot.lane.b32.xlu0 %v718, 113
        %v1001 = vpop.permute.xlu0 %1000
        %1002 = vrot.lane.b32.xlu0 %v719, 113
        %v1003 = vpop.permute.xlu0 %1002
        %v1004 = vsel %vm215, %v999, %v1001
        %v1005 = vsel %vm215, %v1001, %v1003
        %1009 = vrot.lane.b32.xlu0 %v729, 112
        %v1010 = vpop.permute.xlu0 %1009
        %1011 = vrot.lane.b32.xlu0 %v730, 112
        %v1012 = vpop.permute.xlu0 %1011
        %1013 = vrot.lane.b32.xlu0 %v731, 112
        %v1014 = vpop.permute.xlu0 %1013
        %v1015 = vsel %vm310, %v1010, %v1012
        %v1016 = vsel %vm310, %v1012, %v1014
        %1017 = vrot.lane.b32.xlu0 %v505, 111
        %v1018 = vpop.permute.xlu0 %1017
        %1019 = vrot.lane.b32.xlu0 %v506, 111
        %v1020 = vpop.permute.xlu0 %1019
        %1021 = vrot.lane.b32.xlu0 %v638, 111
        %v1022 = vpop.permute.xlu0 %1021
        %v1023 = vsel %vm198, %v1018, %v1020
        %v1024 = vsel %vm198, %v1020, %v1022
        %1028 = vrot.lane.b32.xlu0 %v741, 110
        %v1029 = vpop.permute.xlu0 %1028
        %1030 = vrot.lane.b32.xlu0 %v742, 110
        %v1031 = vpop.permute.xlu0 %1030
        %1032 = vrot.lane.b32.xlu0 %v743, 110
        %v1033 = vpop.permute.xlu0 %1032
        %v1034 = vsel %vm333, %v1029, %v1031
        %v1035 = vsel %vm333, %v1031, %v1033
        %1039 = vrot.lane.b32.xlu0 %v753, 109
        %v1040 = vpop.permute.xlu0 %1039
        %1041 = vrot.lane.b32.xlu0 %v754, 109
        %v1042 = vpop.permute.xlu0 %1041
        %1043 = vrot.lane.b32.xlu0 %v755, 109
        %v1044 = vpop.permute.xlu0 %1043
        %v1045 = vsel %vm862, %v1040, %v1042
        %v1046 = vsel %vm862, %v1042, %v1044
        %1050 = vrot.lane.b32.xlu0 %v682, 79
        %v1051 = vpop.permute.xlu0 %1050
        %1052 = vrot.lane.b32.xlu0 %v683, 79
        %v1053 = vpop.permute.xlu0 %1052
        %1054 = vrot.lane.b32.xlu0 %v684, 79
        %v1055 = vpop.permute.xlu0 %1054
        %1056 = vrot.lane.b32.xlu0 %v971, 79
        %v1057 = vpop.permute.xlu0 %1056
        %1058 = vrot.lane.b32.xlu0 %v972, 79
        %v1059 = vpop.permute.xlu0 %1058
        %1060 = vrot.lane.b32.xlu0 %v970, 79
        %v1061 = vpop.permute.xlu0 %1060
        %1062 = vrot.lane.b32.xlu0 %v982, 79
        %v1063 = vpop.permute.xlu0 %1062
        %1064 = vrot.lane.b32.xlu0 %v983, 79
        %v1065 = vpop.permute.xlu0 %1064
        %1066 = vrot.lane.b32.xlu0 %v981, 79
        %v1067 = vpop.permute.xlu0 %1066
        %1068 = vrot.lane.b32.xlu0 %v993, 79
        %v1069 = vpop.permute.xlu0 %1068
        %1070 = vrot.lane.b32.xlu0 %v994, 79
        %v1071 = vpop.permute.xlu0 %1070
        %1072 = vrot.lane.b32.xlu0 %v992, 79
        %v1073 = vpop.permute.xlu0 %1072
        %1074 = vrot.lane.b32.xlu0 %v1004, 79
        %v1075 = vpop.permute.xlu0 %1074
        %1076 = vrot.lane.b32.xlu0 %v1005, 79
        %v1077 = vpop.permute.xlu0 %1076
        %1078 = vrot.lane.b32.xlu0 %v1003, 79
        %v1079 = vpop.permute.xlu0 %1078
        %1080 = vrot.lane.b32.xlu0 %v1015, 79
        %v1081 = vpop.permute.xlu0 %1080
        %1082 = vrot.lane.b32.xlu0 %v1016, 79
        %v1083 = vpop.permute.xlu0 %1082
        %1084 = vrot.lane.b32.xlu0 %v1014, 79
        %v1085 = vpop.permute.xlu0 %1084
        %1086 = vrot.lane.b32.xlu0 %v1023, 79
        %v1087 = vpop.permute.xlu0 %1086
        %1088 = vrot.lane.b32.xlu0 %v1024, 79
        %v1089 = vpop.permute.xlu0 %1088
        %1090 = vrot.lane.b32.xlu0 %v1022, 79
        %v1091 = vpop.permute.xlu0 %1090
        %1092 = vrot.lane.b32.xlu0 %v1034, 79
        %v1093 = vpop.permute.xlu0 %1092
        %1094 = vrot.lane.b32.xlu0 %v1035, 79
        %v1095 = vpop.permute.xlu0 %1094
        %1096 = vrot.lane.b32.xlu0 %v1033, 79
        %v1097 = vpop.permute.xlu0 %1096
        %1098 = vrot.lane.b32.xlu0 %v1045, 79
        %v1099 = vpop.permute.xlu0 %1098
        %1100 = vrot.lane.b32.xlu0 %v1046, 79
        %v1101 = vpop.permute.xlu0 %1100
        %1102 = vrot.lane.b32.xlu0 %v1044, 79
        %v1103 = vpop.permute.xlu0 %1102
        %vm1104 = vcmask 646144
        %v1105 = vsel %vm1104, %v1051, %v1053
        %v1106 = vsel %vm1104, %v1053, %v1055
        %v1107 = vsel %vm1104, %v1057, %v1059
        %v1108 = vsel %vm1104, %v1059, %v1061
        %v1109 = vsel %vm1104, %v1063, %v1065
        %v1110 = vsel %vm1104, %v1065, %v1067
        %v1111 = vsel %vm1104, %v1069, %v1071
        %v1112 = vsel %vm1104, %v1071, %v1073
        %v1113 = vsel %vm1104, %v1075, %v1077
        %v1114 = vsel %vm1104, %v1077, %v1079
        %v1115 = vsel %vm1104, %v1081, %v1083
        %v1116 = vsel %vm1104, %v1083, %v1085
        %v1117 = vsel %vm1104, %v1087, %v1089
        %v1118 = vsel %vm1104, %v1089, %v1091
        %v1119 = vsel %vm1104, %v1093, %v1095
        %v1120 = vsel %vm1104, %v1095, %v1097
        %v1121 = vsel %vm1104, %v1099, %v1101
        %v1122 = vsel %vm1104, %v1101, %v1103
        %v1150 = vpack.c.bf16 %v765, %v520
        %v1151 = vpack.c.bf16 %v766, %v521
        %v1152 = vpack.c.bf16 %v764, %v522
        %v1153 = vpack.c.bf16 %v794, %v779
        %v1154 = vpack.c.bf16 %v795, %v780
        %v1155 = vpack.c.bf16 %v792, %v778
        %v1156 = vpack.c.bf16 %v823, %v809
        %v1157 = vpack.c.bf16 %v824, %v810
        %v1158 = vpack.c.bf16 %v822, %v807
        %v1159 = vpack.c.bf16 %v848, %v837
        %v1160 = vpack.c.bf16 %v849, %v838
        %v1161 = vpack.c.bf16 %v847, %v836
        %v1162 = vpack.c.bf16 %v878, %v863
        %v1163 = vpack.c.bf16 %v879, %v864
        %v1164 = vpack.c.bf16 %v876, %v861
        %v1165 = vpack.c.bf16 %v906, %v892
        %v1166 = vpack.c.bf16 %v907, %v893
        %v1167 = vpack.c.bf16 %v905, %v891
        %v1168 = vpack.c.bf16 %v923, %v912
        %v1169 = vpack.c.bf16 %v929, %v915
        %v1170 = vpack.c.bf16 %v930, %v914
        %v1171 = vpack.c.bf16 %v953, %v938
        %v1172 = vpack.c.bf16 %v959, %v944
        %v1173 = vpack.c.bf16 %v960, %v945
        %v1174 = vpack.c.bf16 %v1057, %v1051
        %v1175 = vpack.c.bf16 %v1107, %v1105
        %v1176 = vpack.c.bf16 %v1108, %v1106
        %v1177 = vpack.c.bf16 %v1069, %v1063
        %v1178 = vpack.c.bf16 %v1111, %v1109
        %v1179 = vpack.c.bf16 %v1112, %v1110
        %v1180 = vpack.c.bf16 %v1081, %v1075
        %v1181 = vpack.c.bf16 %v1115, %v1113
        %v1182 = vpack.c.bf16 %v1116, %v1114
        %v1183 = vpack.c.bf16 %v1093, %v1087
        %v1184 = vpack.c.bf16 %v1119, %v1117
        %v1185 = vpack.c.bf16 %v1120, %v1118
        %v1186 = vpack.c.bf16 %v1099, %v1099
        %v1187 = vpack.c.bf16 %v1121, %v1121
        %v1188 = vpack.c.bf16 %v1122, %v1122
        %v1189 = vld [vmem:[#allocation3 + $0x30] sm:$0xff]
        %v1190 = vld [vmem:[#allocation3 + $0x38] sm:$0xff]
        %v1191 = vpack.c.bf16 %v1189, %v1189
        %v1192 = vpack.c.bf16 %v1190, %v1190
        %v1193 = vld [vmem:[#allocation3 + $0x40] sm:$0xff]
        %v1194 = vld [vmem:[#allocation3 + $0x48] sm:$0xff]
        %1234 = vrot.lane.b32.xlu0 %v1150, 34
        %v1235 = vpop.permute.xlu0 %1234
        %1236 = vrot.lane.b32.xlu0 %v1151, 34
        %v1237 = vpop.permute.xlu0 %1236
        %1238 = vrot.lane.b32.xlu0 %v1152, 34
        %v1239 = vpop.permute.xlu0 %1238
        %1240 = vrot.lane.b32.xlu0 %v1153, 34
        %v1241 = vpop.permute.xlu0 %1240
        %1242 = vrot.lane.b32.xlu0 %v1154, 34
        %v1243 = vpop.permute.xlu0 %1242
        %1244 = vrot.lane.b32.xlu0 %v1155, 34
        %v1245 = vpop.permute.xlu0 %1244
        %1246 = vrot.lane.b32.xlu0 %v1156, 34
        %v1247 = vpop.permute.xlu0 %1246
        %1248 = vrot.lane.b32.xlu0 %v1157, 34
        %v1249 = vpop.permute.xlu0 %1248
        %1250 = vrot.lane.b32.xlu0 %v1158, 34
        %v1251 = vpop.permute.xlu0 %1250
        %1252 = vrot.lane.b32.xlu0 %v1159, 34
        %v1253 = vpop.permute.xlu0 %1252
        %1254 = vrot.lane.b32.xlu0 %v1160, 34
        %v1255 = vpop.permute.xlu0 %1254
        %1256 = vrot.lane.b32.xlu0 %v1161, 34
        %v1257 = vpop.permute.xlu0 %1256
        %1258 = vrot.lane.b32.xlu0 %v1162, 34
        %v1259 = vpop.permute.xlu0 %1258
        %1260 = vrot.lane.b32.xlu0 %v1163, 34
        %v1261 = vpop.permute.xlu0 %1260
        %1262 = vrot.lane.b32.xlu0 %v1164, 34
        %v1263 = vpop.permute.xlu0 %1262
        %1264 = vrot.lane.b32.xlu0 %v1165, 34
        %v1265 = vpop.permute.xlu0 %1264
        %1266 = vrot.lane.b32.xlu0 %v1166, 34
        %v1267 = vpop.permute.xlu0 %1266
        %1268 = vrot.lane.b32.xlu0 %v1167, 34
        %v1269 = vpop.permute.xlu0 %1268
        %1270 = vrot.lane.b32.xlu0 %v1168, 34
        %v1271 = vpop.permute.xlu0 %1270
        %1272 = vrot.lane.b32.xlu0 %v1169, 34
        %v1273 = vpop.permute.xlu0 %1272
        %1274 = vrot.lane.b32.xlu0 %v1170, 34
        %v1275 = vpop.permute.xlu0 %1274
        %1276 = vrot.lane.b32.xlu0 %v1171, 34
        %v1277 = vpop.permute.xlu0 %1276
        %1278 = vrot.lane.b32.xlu0 %v1172, 34
        %v1279 = vpop.permute.xlu0 %1278
        %1280 = vrot.lane.b32.xlu0 %v1173, 34
        %v1281 = vpop.permute.xlu0 %1280
        %1282 = vrot.lane.b32.xlu0 %v1174, 34
        %v1283 = vpop.permute.xlu0 %1282
        %1284 = vrot.lane.b32.xlu0 %v1175, 34
        %v1285 = vpop.permute.xlu0 %1284
        %1286 = vrot.lane.b32.xlu0 %v1176, 34
        %v1287 = vpop.permute.xlu0 %1286
        %1288 = vrot.lane.b32.xlu0 %v1177, 34
        %v1289 = vpop.permute.xlu0 %1288
        %1290 = vrot.lane.b32.xlu0 %v1178, 34
        %v1291 = vpop.permute.xlu0 %1290
        %1292 = vrot.lane.b32.xlu0 %v1179, 34
        %v1293 = vpop.permute.xlu0 %1292
        %1294 = vrot.lane.b32.xlu0 %v1180, 34
        %v1295 = vpop.permute.xlu0 %1294
        %1296 = vrot.lane.b32.xlu0 %v1181, 34
        %v1297 = vpop.permute.xlu0 %1296
        %1298 = vrot.lane.b32.xlu0 %v1182, 34
        %v1299 = vpop.permute.xlu0 %1298
        %1300 = vrot.lane.b32.xlu0 %v1183, 34
        %v1301 = vpop.permute.xlu0 %1300
        %1302 = vrot.lane.b32.xlu0 %v1184, 34
        %v1303 = vpop.permute.xlu0 %1302
        %1304 = vrot.lane.b32.xlu0 %v1185, 34
        %v1305 = vpop.permute.xlu0 %1304
        %1306 = vrot.lane.b32.xlu0 %v1186, 34
        %v1307 = vpop.permute.xlu0 %1306
        %1308 = vrot.lane.b32.xlu0 %v1187, 34
        %v1309 = vpop.permute.xlu0 %1308
        %1310 = vrot.lane.b32.xlu0 %v1188, 34
        %v1311 = vpop.permute.xlu0 %1310
        %vm1312 = vcmask 277504
        %v1313 = vsel %vm1312, %v1235, %v1237
        %v1314 = vsel %vm1312, %v1237, %v1239
        %v1315 = vsel %vm1312, %v1241, %v1243
        %v1316 = vsel %vm1312, %v1243, %v1245
        %v1317 = vsel %vm1312, %v1247, %v1249
        %v1318 = vsel %vm1312, %v1249, %v1251
        %v1319 = vsel %vm1312, %v1253, %v1255
        %v1320 = vsel %vm1312, %v1255, %v1257
        %v1321 = vsel %vm1312, %v1259, %v1261
        %v1322 = vsel %vm1312, %v1261, %v1263
        %v1323 = vsel %vm1312, %v1265, %v1267
        %v1324 = vsel %vm1312, %v1267, %v1269
        %v1325 = vsel %vm1312, %v1271, %v1273
        %v1326 = vsel %vm1312, %v1273, %v1275
        %v1327 = vsel %vm1312, %v1277, %v1279
        %v1328 = vsel %vm1312, %v1279, %v1281
        %v1329 = vsel %vm1312, %v1283, %v1285
        %v1330 = vsel %vm1312, %v1285, %v1287
        %v1331 = vsel %vm1312, %v1289, %v1291
        %v1332 = vsel %vm1312, %v1291, %v1293
        %v1333 = vsel %vm1312, %v1295, %v1297
        %v1334 = vsel %vm1312, %v1297, %v1299
        %v1335 = vsel %vm1312, %v1301, %v1303
        %v1336 = vsel %vm1312, %v1303, %v1305
        %v1337 = vsel %vm1312, %v1307, %v1309
        %v1338 = vsel %vm1312, %v1309, %v1311
        %v1364 = vsel %vm465, %v1192, 0
        %v1367 = vsel %vm469, %v1337, 0
        %v1370 = vsel %vm469, %v1338, 0
        %1372 = vmatpush.bf16.msra.mxu0 %v1327
        %1373 = vmatpush.bf16.msra.mxu0 %v1325
        %1374 = vmatpush.bf16.msra.mxu0 %v1323
        %1375 = vmatpush.bf16.msra.mxu0 %v1321
        %1376 = vmatpush.bf16.msra.mxu0 %v1319
        %1377 = vmatpush.bf16.msra.mxu0 %v1317
        %1378 = vmatpush.bf16.msra.mxu0 %v1315
        %1379 = vmatpush.bf16.msra.mxu0 %v1313
        %1380 = vmatmul.bf16.gmra.mxu0 %v1191
        %v1381 = vpop.f32.mrf.mxu0
        %v1382 = vadd.f32 %v1193, %v1381
        %v1383 = vpop.f32.mrf.mxu0
        %1384 = vdwg.mxu0
        %1385 = vmatpush.bf16.msra.mxu0 0
        %1386 = vmatpush.bf16.msra.mxu0 0
        %1387 = vmatpush.bf16.msra.mxu0 0
        %1388 = vmatpush.bf16.msra.mxu0 %v1367
        %1389 = vmatpush.bf16.msra.mxu0 %v1335
        %1390 = vmatpush.bf16.msra.mxu0 %v1333
        %1391 = vmatpush.bf16.msra.mxu0 %v1331
        %1392 = vmatpush.bf16.msra.mxu0 %v1329
        %1393 = vmatmul.bf16.gmra.mxu0 %v1364
        %v1394 = vpop.f32.mrf.mxu0
        %v1395 = vadd.f32 %v1382, %v1394
        %v1396 = vpop.f32.mrf.mxu0
        %1397 = vdwg.mxu0
        %1398 = vmatpush.bf16.msra.mxu0 %v1328
        %1399 = vmatpush.bf16.msra.mxu0 %v1326
        %1400 = vmatpush.bf16.msra.mxu0 %v1324
        %1401 = vmatpush.bf16.msra.mxu0 %v1322
        %1402 = vmatpush.bf16.msra.mxu0 %v1320
        %1403 = vmatpush.bf16.msra.mxu0 %v1318
        %1404 = vmatpush.bf16.msra.mxu0 %v1316
        %1405 = vmatpush.bf16.msra.mxu0 %v1314
        %1406 = vmatmul.bf16.gmra.mxu0 %v1191
        %v1407 = vpop.f32.mrf.mxu0
        %v1408 = vadd.f32 %v1194, %v1407
        %v1409 = vpop.f32.mrf.mxu0
        %1410 = vdwg.mxu0
        %1411 = vmatpush.bf16.msra.mxu0 0
        %1412 = vmatpush.bf16.msra.mxu0 0
        %1413 = vmatpush.bf16.msra.mxu0 0
        %1414 = vmatpush.bf16.msra.mxu0 %v1370
        %1415 = vmatpush.bf16.msra.mxu0 %v1336
        %1416 = vmatpush.bf16.msra.mxu0 %v1334
        %1417 = vmatpush.bf16.msra.mxu0 %v1332
        %1418 = vmatpush.bf16.msra.mxu0 %v1330
        %1419 = vmatmul.bf16.gmra.mxu0 %v1364
        %v1420 = vpop.f32.mrf.mxu0
        %v1421 = vadd.f32 %v1408, %v1420
        %v1422 = vpop.f32.mrf.mxu0
        %1423 = vdwg.mxu0
        %v1424 = vmax.f32 %v1395, 0.0
        %v1425 = vmax.f32 %v1421, 0.0
        %1426 = vst [vmem:[#allocation2 + $0x8] sm:$0xff] %v1424
        %1427 = vst [vmem:[#allocation2 + $0x10] sm:$0xff] %v1425
        %v1428 = vld [vmem:[#allocation2] sm:$0xff]
        %v1429 = vld [vmem:[#allocation2 + $0x8] sm:$0xff]
        %v1430 = vld [vmem:[#allocation2 + $0x10] sm:$0xff]
        %v1431 = vld [vmem:[%s507] ss:$8 sm:$0x3]
        %v1433 = vperm.slane %v1431, 0
        %v1434 = vperm.slane %v1431, 1
        %1435 = vrot.lane.b32.xlu0 %v1433, 94
        %v1436 = vpop.permute.xlu0 %1435
        %1437 = vrot.lane.b32.xlu0 %v1434, 94
        %v1438 = vpop.permute.xlu0 %1437
        %v1439 = vsel %vm376, %v1436, %v1438
        %v1443 = vmul.f32 %v1428, %v1436
        %v1444 = vmul.f32 %v1429, %v1439
        %v1445 = vmul.f32 %v1430, %v1438
        %v1446 = vld [vmem:[%s189] ss:$8 sm:$0x3]
        %v1448 = vperm.slane %v1446, 0
        %v1449 = vperm.slane %v1446, 1
        %1450 = vrot.lane.b32.xlu0 %v1448, 95
        %v1451 = vpop.permute.xlu0 %1450
        %1452 = vrot.lane.b32.xlu0 %v1449, 95
        %v1453 = vpop.permute.xlu0 %1452
        %v1454 = vsel %vm361, %v1451, %v1453
        %v1458 = vmul.f32 %v1428, %v1451
        %v1459 = vmul.f32 %v1429, %v1454
        %v1460 = vmul.f32 %v1430, %v1453
        %v1461 = vld [vmem:[%s206] ss:$8 sm:$0x3]
        %v1463 = vperm.slane %v1461, 0
        %v1464 = vperm.slane %v1461, 1
        %1465 = vrot.lane.b32.xlu0 %v1463, 97
        %v1466 = vpop.permute.xlu0 %1465
        %1467 = vrot.lane.b32.xlu0 %v1464, 97
        %v1468 = vpop.permute.xlu0 %1467
        %v1469 = vsel %vm546, %v1466, %v1468
        %v1473 = vmul.f32 %v1428, %v1466
        %v1474 = vmul.f32 %v1429, %v1469
        %v1475 = vmul.f32 %v1430, %v1468
        %v1476 = vld [vmem:[%s554] ss:$8 sm:$0x3]
        %v1478 = vperm.slane %v1476, 0
        %v1479 = vperm.slane %v1476, 1
        %1480 = vrot.lane.b32.xlu0 %v1478, 98
        %v1481 = vpop.permute.xlu0 %1480
        %1482 = vrot.lane.b32.xlu0 %v1479, 98
        %v1483 = vpop.permute.xlu0 %1482
        %v1484 = vsel %vm563, %v1481, %v1483
        %v1488 = vmul.f32 %v1428, %v1481
        %v1489 = vmul.f32 %v1429, %v1484
        %v1490 = vmul.f32 %v1430, %v1483
        %1491 = vrot.lane.b32.xlu0 %v1433, 110
        %v1492 = vpop.permute.xlu0 %1491
        %1493 = vrot.lane.b32.xlu0 %v1434, 110
        %v1494 = vpop.permute.xlu0 %1493
        %v1495 = vsel %vm333, %v1492, %v1494
        %v1499 = vmul.f32 %v1428, %v1492
        %v1500 = vmul.f32 %v1429, %v1495
        %v1501 = vmul.f32 %v1430, %v1494
        %1502 = vrot.lane.b32.xlu0 %v1448, 111
        %v1503 = vpop.permute.xlu0 %1502
        %1504 = vrot.lane.b32.xlu0 %v1449, 111
        %v1505 = vpop.permute.xlu0 %1504
        %v1506 = vsel %vm198, %v1503, %v1505
        %v1510 = vmul.f32 %v1428, %v1503
        %v1511 = vmul.f32 %v1429, %v1506
        %v1512 = vmul.f32 %v1430, %v1505
        %1513 = vrot.lane.b32.xlu0 %v1463, 113
        %v1514 = vpop.permute.xlu0 %1513
        %1515 = vrot.lane.b32.xlu0 %v1464, 113
        %v1516 = vpop.permute.xlu0 %1515
        %v1517 = vsel %vm215, %v1514, %v1516
        %v1521 = vmul.f32 %v1428, %v1514
        %v1522 = vmul.f32 %v1429, %v1517
        %v1523 = vmul.f32 %v1430, %v1516
        %1524 = vrot.lane.b32.xlu0 %v1478, 114
        %v1525 = vpop.permute.xlu0 %1524
        %1526 = vrot.lane.b32.xlu0 %v1479, 114
        %v1527 = vpop.permute.xlu0 %1526
        %v1528 = vsel %vm608, %v1525, %v1527
        %v1532 = vmul.f32 %v1428, %v1525
        %v1533 = vmul.f32 %v1429, %v1528
        %v1534 = vmul.f32 %v1430, %v1527
        %1535 = vrot.lane.b32.xlu0 %v1433, 126
        %v1536 = vpop.permute.xlu0 %1535
        %1537 = vrot.lane.b32.xlu0 %v1434, 126
        %v1538 = vpop.permute.xlu0 %1537
        %v1539 = vsel %vm295, %v1536, %v1538
        %v1543 = vmul.f32 %v1428, %v1536
        %v1544 = vmul.f32 %v1429, %v1539
        %v1545 = vmul.f32 %v1430, %v1538
        %1546 = vrot.lane.b32.xlu0 %v1448, 127
        %v1547 = vpop.permute.xlu0 %1546
        %1548 = vrot.lane.b32.xlu0 %v1449, 127
        %v1549 = vpop.permute.xlu0 %1548
        %v1550 = vsel %vm227, %v1547, %v1549
        %v1554 = vmul.f32 %v1428, %v1547
        %v1555 = vmul.f32 %v1429, %v1550
        %v1556 = vmul.f32 %v1430, %v1549
        %v1557 = vld [vmem:[#allocation2 + $0x18] sm:$0xff]
        %1558 = vrot.lane.b32.xlu0 %v1463, 1
        %v1559 = vpop.permute.xlu0 %1558
        %1560 = vrot.lane.b32.xlu0 %v1464, 1
        %v1561 = vpop.permute.xlu0 %1560
        %v1562 = vsel %vm240, %v1559, %v1561
        %v1566 = vmul.f32 %v1429, %v1559
        %v1567 = vmul.f32 %v1430, %v1562
        %v1568 = vmul.f32 %v1557, %v1561
        %1569 = vrot.lane.b32.xlu0 %v1478, 2
        %v1570 = vpop.permute.xlu0 %1569
        %1571 = vrot.lane.b32.xlu0 %v1479, 2
        %v1572 = vpop.permute.xlu0 %1571
        %v1573 = vsel %vm654, %v1570, %v1572
        %v1577 = vmul.f32 %v1429, %v1570
        %v1578 = vmul.f32 %v1430, %v1573
        %v1579 = vmul.f32 %v1557, %v1572
        %1580 = vrot.lane.b32.xlu0 %v1433, 14
        %v1581 = vpop.permute.xlu0 %1580
        %1582 = vrot.lane.b32.xlu0 %v1434, 14
        %v1583 = vpop.permute.xlu0 %1582
        %v1584 = vsel %vm666, %v1581, %v1583
        %v1588 = vmul.f32 %v1429, %v1581
        %v1589 = vmul.f32 %v1430, %v1584
        %v1590 = vmul.f32 %v1557, %v1583
        %1591 = vrot.lane.b32.xlu0 %v1448, 15
        %v1592 = vpop.permute.xlu0 %1591
        %1593 = vrot.lane.b32.xlu0 %v1449, 15
        %v1594 = vpop.permute.xlu0 %1593
        %v1595 = vsel %vm252, %v1592, %v1594
        %v1599 = vmul.f32 %v1429, %v1592
        %v1600 = vmul.f32 %v1430, %v1595
        %v1601 = vmul.f32 %v1557, %v1594
        %1602 = vrot.lane.b32.xlu0 %v1463, 17
        %v1603 = vpop.permute.xlu0 %1602
        %1604 = vrot.lane.b32.xlu0 %v1464, 17
        %v1605 = vpop.permute.xlu0 %1604
        %v1606 = vsel %vm264, %v1603, %v1605
        %v1610 = vmul.f32 %v1429, %v1603
        %v1611 = vmul.f32 %v1430, %v1606
        %v1612 = vmul.f32 %v1557, %v1605
        %1613 = vrot.lane.b32.xlu0 %v1478, 18
        %v1614 = vpop.permute.xlu0 %1613
        %1615 = vrot.lane.b32.xlu0 %v1479, 18
        %v1616 = vpop.permute.xlu0 %1615
        %v1617 = vsel %vm700, %v1614, %v1616
        %v1621 = vmul.f32 %v1429, %v1614
        %v1622 = vmul.f32 %v1430, %v1617
        %v1623 = vmul.f32 %v1557, %v1616
        %1624 = vrot.lane.b32.xlu0 %v1433, 30
        %v1625 = vpop.permute.xlu0 %1624
        %1626 = vrot.lane.b32.xlu0 %v1434, 30
        %v1627 = vpop.permute.xlu0 %1626
        %v1628 = vsel %vm712, %v1625, %v1627
        %v1632 = vmul.f32 %v1429, %v1625
        %v1633 = vmul.f32 %v1430, %v1628
        %v1634 = vmul.f32 %v1557, %v1627
        %1635 = vrot.lane.b32.xlu0 %v1448, 31
        %v1636 = vpop.permute.xlu0 %1635
        %1637 = vrot.lane.b32.xlu0 %v1449, 31
        %v1638 = vpop.permute.xlu0 %1637
        %v1639 = vsel %vm724, %v1636, %v1638
        %v1643 = vmul.f32 %v1429, %v1636
        %v1644 = vmul.f32 %v1430, %v1639
        %v1645 = vmul.f32 %v1557, %v1638
        %1646 = vrot.lane.b32.xlu0 %v1463, 33
        %v1647 = vpop.permute.xlu0 %1646
        %1648 = vrot.lane.b32.xlu0 %v1464, 33
        %v1649 = vpop.permute.xlu0 %1648
        %v1650 = vsel %vm736, %v1647, %v1649
        %v1654 = vmul.f32 %v1429, %v1647
        %v1655 = vmul.f32 %v1430, %v1650
        %v1656 = vmul.f32 %v1557, %v1649
        %1657 = vrot.lane.b32.xlu0 %v1478, 34
        %v1658 = vpop.permute.xlu0 %1657
        %1659 = vrot.lane.b32.xlu0 %v1479, 34
        %v1660 = vpop.permute.xlu0 %1659
        %v1661 = vsel %vm748, %v1658, %v1660
        %v1665 = vmul.f32 %v1429, %v1658
        %v1666 = vmul.f32 %v1430, %v1661
        %v1667 = vmul.f32 %v1557, %v1660
        %1671 = vrot.lane.b32.xlu0 %v1458, 127
        %v1672 = vpop.permute.xlu0 %1671
        %1673 = vrot.lane.b32.xlu0 %v1459, 127
        %v1674 = vpop.permute.xlu0 %1673
        %1675 = vrot.lane.b32.xlu0 %v1460, 127
        %v1676 = vpop.permute.xlu0 %1675
        %v1677 = vsel %vm227, %v1672, %v1674
        %v1678 = vsel %vm227, %v1674, %v1676
        %1685 = vrot.lane.b32.xlu0 %v1428, 126
        %v1686 = vpop.permute.xlu0 %1685
        %1687 = vrot.lane.b32.xlu0 %v1429, 126
        %v1688 = vpop.permute.xlu0 %1687
        %1689 = vrot.lane.b32.xlu0 %v1430, 126
        %v1690 = vpop.permute.xlu0 %1689
        %v1691 = vsel %vm295, %v1686, %v1688
        %v1692 = vsel %vm295, %v1688, %v1690
        %1699 = vrot.lane.b32.xlu0 %v1473, 125
        %v1700 = vpop.permute.xlu0 %1699
        %1701 = vrot.lane.b32.xlu0 %v1474, 125
        %v1702 = vpop.permute.xlu0 %1701
        %1703 = vrot.lane.b32.xlu0 %v1475, 125
        %v1704 = vpop.permute.xlu0 %1703
        %v1705 = vsel %vm793, %v1700, %v1702
        %v1706 = vsel %vm793, %v1702, %v1704
        %1713 = vrot.lane.b32.xlu0 %v1488, 124
        %v1714 = vpop.permute.xlu0 %1713
        %1715 = vrot.lane.b32.xlu0 %v1489, 124
        %v1716 = vpop.permute.xlu0 %1715
        %1717 = vrot.lane.b32.xlu0 %v1490, 124
        %v1718 = vpop.permute.xlu0 %1717
        %v1719 = vsel %vm808, %v1714, %v1716
        %v1720 = vsel %vm808, %v1716, %v1718
        %1727 = vrot.lane.b32.xlu0 %v1499, 112
        %v1728 = vpop.permute.xlu0 %1727
        %1729 = vrot.lane.b32.xlu0 %v1500, 112
        %v1730 = vpop.permute.xlu0 %1729
        %1731 = vrot.lane.b32.xlu0 %v1501, 112
        %v1732 = vpop.permute.xlu0 %1731
        %v1733 = vsel %vm310, %v1728, %v1730
        %v1734 = vsel %vm310, %v1730, %v1732
        %1741 = vrot.lane.b32.xlu0 %v1510, 111
        %v1742 = vpop.permute.xlu0 %1741
        %1743 = vrot.lane.b32.xlu0 %v1511, 111
        %v1744 = vpop.permute.xlu0 %1743
        %1745 = vrot.lane.b32.xlu0 %v1512, 111
        %v1746 = vpop.permute.xlu0 %1745
        %v1747 = vsel %vm198, %v1742, %v1744
        %v1748 = vsel %vm198, %v1744, %v1746
        %1752 = vrot.lane.b32.xlu0 %v1428, 110
        %v1753 = vpop.permute.xlu0 %1752
        %1754 = vrot.lane.b32.xlu0 %v1429, 110
        %v1755 = vpop.permute.xlu0 %1754
        %1756 = vrot.lane.b32.xlu0 %v1430, 110
        %v1757 = vpop.permute.xlu0 %1756
        %v1758 = vsel %vm333, %v1753, %v1755
        %v1759 = vsel %vm333, %v1755, %v1757
        %1766 = vrot.lane.b32.xlu0 %v1521, 109
        %v1767 = vpop.permute.xlu0 %1766
        %1768 = vrot.lane.b32.xlu0 %v1522, 109
        %v1769 = vpop.permute.xlu0 %1768
        %1770 = vrot.lane.b32.xlu0 %v1523, 109
        %v1771 = vpop.permute.xlu0 %1770
        %v1772 = vsel %vm862, %v1767, %v1769
        %v1773 = vsel %vm862, %v1769, %v1771
        %1780 = vrot.lane.b32.xlu0 %v1532, 108
        %v1781 = vpop.permute.xlu0 %1780
        %1782 = vrot.lane.b32.xlu0 %v1533, 108
        %v1783 = vpop.permute.xlu0 %1782
        %1784 = vrot.lane.b32.xlu0 %v1534, 108
        %v1785 = vpop.permute.xlu0 %1784
        %v1786 = vsel %vm877, %v1781, %v1783
        %v1787 = vsel %vm877, %v1783, %v1785
        %1794 = vrot.lane.b32.xlu0 %v1543, 96
        %v1795 = vpop.permute.xlu0 %1794
        %1796 = vrot.lane.b32.xlu0 %v1544, 96
        %v1797 = vpop.permute.xlu0 %1796
        %1798 = vrot.lane.b32.xlu0 %v1545, 96
        %v1799 = vpop.permute.xlu0 %1798
        %v1800 = vsel %vm348, %v1795, %v1797
        %v1801 = vsel %vm348, %v1797, %v1799
        %1808 = vrot.lane.b32.xlu0 %v1554, 95
        %v1809 = vpop.permute.xlu0 %1808
        %1810 = vrot.lane.b32.xlu0 %v1555, 95
        %v1811 = vpop.permute.xlu0 %1810
        %1812 = vrot.lane.b32.xlu0 %v1556, 95
        %v1813 = vpop.permute.xlu0 %1812
        %v1814 = vsel %vm361, %v1809, %v1811
        %v1815 = vsel %vm361, %v1811, %v1813
        %1819 = vrot.lane.b32.xlu0 %v1429, 94
        %v1820 = vpop.permute.xlu0 %1819
        %1821 = vrot.lane.b32.xlu0 %v1430, 94
        %v1822 = vpop.permute.xlu0 %1821
        %v1823 = vsel %vm376, %v1820, %v1822
        %1830 = vrot.lane.b32.xlu0 %v1566, 93
        %v1831 = vpop.permute.xlu0 %1830
        %1832 = vrot.lane.b32.xlu0 %v1567, 93
        %v1833 = vpop.permute.xlu0 %1832
        %1834 = vrot.lane.b32.xlu0 %v1568, 93
        %v1835 = vpop.permute.xlu0 %1834
        %v1836 = vsel %vm928, %v1831, %v1833
        %v1837 = vsel %vm928, %v1833, %v1835
        %1844 = vrot.lane.b32.xlu0 %v1577, 92
        %v1845 = vpop.permute.xlu0 %1844
        %1846 = vrot.lane.b32.xlu0 %v1578, 92
        %v1847 = vpop.permute.xlu0 %1846
        %1848 = vrot.lane.b32.xlu0 %v1579, 92
        %v1849 = vpop.permute.xlu0 %1848
        %v1850 = vsel %vm943, %v1845, %v1847
        %v1851 = vsel %vm943, %v1847, %v1849
        %1858 = vrot.lane.b32.xlu0 %v1588, 80
        %v1859 = vpop.permute.xlu0 %1858
        %1860 = vrot.lane.b32.xlu0 %v1589, 80
        %v1861 = vpop.permute.xlu0 %1860
        %1862 = vrot.lane.b32.xlu0 %v1590, 80
        %v1863 = vpop.permute.xlu0 %1862
        %v1864 = vsel %vm958, %v1859, %v1861
        %v1865 = vsel %vm958, %v1861, %v1863
        %1870 = vrot.lane.b32.xlu0 %v1429, 127
        %v1871 = vpop.permute.xlu0 %1870
        %1872 = vrot.lane.b32.xlu0 %v1430, 127
        %v1873 = vpop.permute.xlu0 %1872
        %1874 = vrot.lane.b32.xlu0 %v1557, 127
        %v1875 = vpop.permute.xlu0 %1874
        %v1876 = vsel %vm227, %v1871, %v1873
        %v1877 = vsel %vm227, %v1873, %v1875
        %1881 = vrot.lane.b32.xlu0 %v1610, 126
        %v1882 = vpop.permute.xlu0 %1881
        %1883 = vrot.lane.b32.xlu0 %v1611, 126
        %v1884 = vpop.permute.xlu0 %1883
        %1885 = vrot.lane.b32.xlu0 %v1612, 126
        %v1886 = vpop.permute.xlu0 %1885
        %v1887 = vsel %vm295, %v1882, %v1884
        %v1888 = vsel %vm295, %v1884, %v1886
        %1892 = vrot.lane.b32.xlu0 %v1621, 125
        %v1893 = vpop.permute.xlu0 %1892
        %1894 = vrot.lane.b32.xlu0 %v1622, 125
        %v1895 = vpop.permute.xlu0 %1894
        %1896 = vrot.lane.b32.xlu0 %v1623, 125
        %v1897 = vpop.permute.xlu0 %1896
        %v1898 = vsel %vm793, %v1893, %v1895
        %v1899 = vsel %vm793, %v1895, %v1897
        %1903 = vrot.lane.b32.xlu0 %v1632, 113
        %v1904 = vpop.permute.xlu0 %1903
        %1905 = vrot.lane.b32.xlu0 %v1633, 113
        %v1906 = vpop.permute.xlu0 %1905
        %1907 = vrot.lane.b32.xlu0 %v1634, 113
        %v1908 = vpop.permute.xlu0 %1907
        %v1909 = vsel %vm215, %v1904, %v1906
        %v1910 = vsel %vm215, %v1906, %v1908
        %1914 = vrot.lane.b32.xlu0 %v1643, 112
        %v1915 = vpop.permute.xlu0 %1914
        %1916 = vrot.lane.b32.xlu0 %v1644, 112
        %v1917 = vpop.permute.xlu0 %1916
        %1918 = vrot.lane.b32.xlu0 %v1645, 112
        %v1919 = vpop.permute.xlu0 %1918
        %v1920 = vsel %vm310, %v1915, %v1917
        %v1921 = vsel %vm310, %v1917, %v1919
        %1922 = vrot.lane.b32.xlu0 %v1429, 111
        %v1923 = vpop.permute.xlu0 %1922
        %1924 = vrot.lane.b32.xlu0 %v1430, 111
        %v1925 = vpop.permute.xlu0 %1924
        %1926 = vrot.lane.b32.xlu0 %v1557, 111
        %v1927 = vpop.permute.xlu0 %1926
        %v1928 = vsel %vm198, %v1923, %v1925
        %v1929 = vsel %vm198, %v1925, %v1927
        %1933 = vrot.lane.b32.xlu0 %v1654, 110
        %v1934 = vpop.permute.xlu0 %1933
        %1935 = vrot.lane.b32.xlu0 %v1655, 110
        %v1936 = vpop.permute.xlu0 %1935
        %1937 = vrot.lane.b32.xlu0 %v1656, 110
        %v1938 = vpop.permute.xlu0 %1937
        %v1939 = vsel %vm333, %v1934, %v1936
        %v1940 = vsel %vm333, %v1936, %v1938
        %1944 = vrot.lane.b32.xlu0 %v1665, 109
        %v1945 = vpop.permute.xlu0 %1944
        %1946 = vrot.lane.b32.xlu0 %v1666, 109
        %v1947 = vpop.permute.xlu0 %1946
        %1948 = vrot.lane.b32.xlu0 %v1667, 109
        %v1949 = vpop.permute.xlu0 %1948
        %v1950 = vsel %vm862, %v1945, %v1947
        %v1951 = vsel %vm862, %v1947, %v1949
        %1955 = vrot.lane.b32.xlu0 %v1599, 79
        %v1956 = vpop.permute.xlu0 %1955
        %1957 = vrot.lane.b32.xlu0 %v1600, 79
        %v1958 = vpop.permute.xlu0 %1957
        %1959 = vrot.lane.b32.xlu0 %v1601, 79
        %v1960 = vpop.permute.xlu0 %1959
        %1961 = vrot.lane.b32.xlu0 %v1876, 79
        %v1962 = vpop.permute.xlu0 %1961
        %1963 = vrot.lane.b32.xlu0 %v1877, 79
        %v1964 = vpop.permute.xlu0 %1963
        %1965 = vrot.lane.b32.xlu0 %v1875, 79
        %v1966 = vpop.permute.xlu0 %1965
        %1967 = vrot.lane.b32.xlu0 %v1887, 79
        %v1968 = vpop.permute.xlu0 %1967
        %1969 = vrot.lane.b32.xlu0 %v1888, 79
        %v1970 = vpop.permute.xlu0 %1969
        %1971 = vrot.lane.b32.xlu0 %v1886, 79
        %v1972 = vpop.permute.xlu0 %1971
        %1973 = vrot.lane.b32.xlu0 %v1898, 79
        %v1974 = vpop.permute.xlu0 %1973
        %1975 = vrot.lane.b32.xlu0 %v1899, 79
        %v1976 = vpop.permute.xlu0 %1975
        %1977 = vrot.lane.b32.xlu0 %v1897, 79
        %v1978 = vpop.permute.xlu0 %1977
        %1979 = vrot.lane.b32.xlu0 %v1909, 79
        %v1980 = vpop.permute.xlu0 %1979
        %1981 = vrot.lane.b32.xlu0 %v1910, 79
        %v1982 = vpop.permute.xlu0 %1981
        %1983 = vrot.lane.b32.xlu0 %v1908, 79
        %v1984 = vpop.permute.xlu0 %1983
        %1985 = vrot.lane.b32.xlu0 %v1920, 79
        %v1986 = vpop.permute.xlu0 %1985
        %1987 = vrot.lane.b32.xlu0 %v1921, 79
        %v1988 = vpop.permute.xlu0 %1987
        %1989 = vrot.lane.b32.xlu0 %v1919, 79
        %v1990 = vpop.permute.xlu0 %1989
        %1991 = vrot.lane.b32.xlu0 %v1928, 79
        %v1992 = vpop.permute.xlu0 %1991
        %1993 = vrot.lane.b32.xlu0 %v1929, 79
        %v1994 = vpop.permute.xlu0 %1993
        %1995 = vrot.lane.b32.xlu0 %v1927, 79
        %v1996 = vpop.permute.xlu0 %1995
        %1997 = vrot.lane.b32.xlu0 %v1939, 79
        %v1998 = vpop.permute.xlu0 %1997
        %1999 = vrot.lane.b32.xlu0 %v1940, 79
        %v2000 = vpop.permute.xlu0 %1999
        %2001 = vrot.lane.b32.xlu0 %v1938, 79
        %v2002 = vpop.permute.xlu0 %2001
        %2003 = vrot.lane.b32.xlu0 %v1950, 79
        %v2004 = vpop.permute.xlu0 %2003
        %2005 = vrot.lane.b32.xlu0 %v1951, 79
        %v2006 = vpop.permute.xlu0 %2005
        %2007 = vrot.lane.b32.xlu0 %v1949, 79
        %v2008 = vpop.permute.xlu0 %2007
        %v2009 = vsel %vm1104, %v1956, %v1958
        %v2010 = vsel %vm1104, %v1958, %v1960
        %v2011 = vsel %vm1104, %v1962, %v1964
        %v2012 = vsel %vm1104, %v1964, %v1966
        %v2013 = vsel %vm1104, %v1968, %v1970
        %v2014 = vsel %vm1104, %v1970, %v1972
        %v2015 = vsel %vm1104, %v1974, %v1976
        %v2016 = vsel %vm1104, %v1976, %v1978
        %v2017 = vsel %vm1104, %v1980, %v1982
        %v2018 = vsel %vm1104, %v1982, %v1984
        %v2019 = vsel %vm1104, %v1986, %v1988
        %v2020 = vsel %vm1104, %v1988, %v1990
        %v2021 = vsel %vm1104, %v1992, %v1994
        %v2022 = vsel %vm1104, %v1994, %v1996
        %v2023 = vsel %vm1104, %v1998, %v2000
        %v2024 = vsel %vm1104, %v2000, %v2002
        %v2025 = vsel %vm1104, %v2004, %v2006
        %v2026 = vsel %vm1104, %v2006, %v2008
        %v2054 = vpack.c.bf16 %v1677, %v1443
        %v2055 = vpack.c.bf16 %v1678, %v1444
        %v2056 = vpack.c.bf16 %v1676, %v1445
        %v2057 = vpack.c.bf16 %v1705, %v1691
        %v2058 = vpack.c.bf16 %v1706, %v1692
        %v2059 = vpack.c.bf16 %v1704, %v1690
        %v2060 = vpack.c.bf16 %v1733, %v1719
        %v2061 = vpack.c.bf16 %v1734, %v1720
        %v2062 = vpack.c.bf16 %v1732, %v1718
        %v2063 = vpack.c.bf16 %v1758, %v1747
        %v2064 = vpack.c.bf16 %v1759, %v1748
        %v2065 = vpack.c.bf16 %v1757, %v1746
        %v2066 = vpack.c.bf16 %v1786, %v1772
        %v2067 = vpack.c.bf16 %v1787, %v1773
        %v2068 = vpack.c.bf16 %v1785, %v1771
        %v2069 = vpack.c.bf16 %v1814, %v1800
        %v2070 = vpack.c.bf16 %v1815, %v1801
        %v2071 = vpack.c.bf16 %v1813, %v1799
        %v2072 = vpack.c.bf16 %v1831, %v1820
        %v2073 = vpack.c.bf16 %v1836, %v1823
        %v2074 = vpack.c.bf16 %v1837, %v1822
        %v2075 = vpack.c.bf16 %v1859, %v1845
        %v2076 = vpack.c.bf16 %v1864, %v1850
        %v2077 = vpack.c.bf16 %v1865, %v1851
        %v2078 = vpack.c.bf16 %v1962, %v1956
        %v2079 = vpack.c.bf16 %v2011, %v2009
        %v2080 = vpack.c.bf16 %v2012, %v2010
        %v2081 = vpack.c.bf16 %v1974, %v1968
        %v2082 = vpack.c.bf16 %v2015, %v2013
        %v2083 = vpack.c.bf16 %v2016, %v2014
        %v2084 = vpack.c.bf16 %v1986, %v1980
        %v2085 = vpack.c.bf16 %v2019, %v2017
        %v2086 = vpack.c.bf16 %v2020, %v2018
        %v2087 = vpack.c.bf16 %v1998, %v1992
        %v2088 = vpack.c.bf16 %v2023, %v2021
        %v2089 = vpack.c.bf16 %v2024, %v2022
        %v2090 = vpack.c.bf16 %v2004, %v2004
        %v2091 = vpack.c.bf16 %v2025, %v2025
        %v2092 = vpack.c.bf16 %v2026, %v2026
        %v2093 = vld [vmem:[#allocation3 + $0x50] sm:$0xff]
        %v2094 = vld [vmem:[#allocation3 + $0x58] sm:$0xff]
        %v2095 = vpack.c.bf16 %v2093, %v2093
        %v2096 = vpack.c.bf16 %v2094, %v2094
        %v2097 = vld [vmem:[#allocation3 + $0x60] sm:$0xff]
        %v2098 = vld [vmem:[#allocation3 + $0x68] sm:$0xff]
        %2138 = vrot.lane.b32.xlu0 %v2054, 34
        %v2139 = vpop.permute.xlu0 %2138
        %2140 = vrot.lane.b32.xlu0 %v2055, 34
        %v2141 = vpop.permute.xlu0 %2140
        %2142 = vrot.lane.b32.xlu0 %v2056, 34
        %v2143 = vpop.permute.xlu0 %2142
        %2144 = vrot.lane.b32.xlu0 %v2057, 34
        %v2145 = vpop.permute.xlu0 %2144
        %2146 = vrot.lane.b32.xlu0 %v2058, 34
        %v2147 = vpop.permute.xlu0 %2146
        %2148 = vrot.lane.b32.xlu0 %v2059, 34
        %v2149 = vpop.permute.xlu0 %2148
        %2150 = vrot.lane.b32.xlu0 %v2060, 34
        %v2151 = vpop.permute.xlu0 %2150
        %2152 = vrot.lane.b32.xlu0 %v2061, 34
        %v2153 = vpop.permute.xlu0 %2152
        %2154 = vrot.lane.b32.xlu0 %v2062, 34
        %v2155 = vpop.permute.xlu0 %2154
        %2156 = vrot.lane.b32.xlu0 %v2063, 34
        %v2157 = vpop.permute.xlu0 %2156
        %2158 = vrot.lane.b32.xlu0 %v2064, 34
        %v2159 = vpop.permute.xlu0 %2158
        %2160 = vrot.lane.b32.xlu0 %v2065, 34
        %v2161 = vpop.permute.xlu0 %2160
        %2162 = vrot.lane.b32.xlu0 %v2066, 34
        %v2163 = vpop.permute.xlu0 %2162
        %2164 = vrot.lane.b32.xlu0 %v2067, 34
        %v2165 = vpop.permute.xlu0 %2164
        %2166 = vrot.lane.b32.xlu0 %v2068, 34
        %v2167 = vpop.permute.xlu0 %2166
        %2168 = vrot.lane.b32.xlu0 %v2069, 34
        %v2169 = vpop.permute.xlu0 %2168
        %2170 = vrot.lane.b32.xlu0 %v2070, 34
        %v2171 = vpop.permute.xlu0 %2170
        %2172 = vrot.lane.b32.xlu0 %v2071, 34
        %v2173 = vpop.permute.xlu0 %2172
        %2174 = vrot.lane.b32.xlu0 %v2072, 34
        %v2175 = vpop.permute.xlu0 %2174
        %2176 = vrot.lane.b32.xlu0 %v2073, 34
        %v2177 = vpop.permute.xlu0 %2176
        %2178 = vrot.lane.b32.xlu0 %v2074, 34
        %v2179 = vpop.permute.xlu0 %2178
        %2180 = vrot.lane.b32.xlu0 %v2075, 34
        %v2181 = vpop.permute.xlu0 %2180
        %2182 = vrot.lane.b32.xlu0 %v2076, 34
        %v2183 = vpop.permute.xlu0 %2182
        %2184 = vrot.lane.b32.xlu0 %v2077, 34
        %v2185 = vpop.permute.xlu0 %2184
        %2186 = vrot.lane.b32.xlu0 %v2078, 34
        %v2187 = vpop.permute.xlu0 %2186
        %2188 = vrot.lane.b32.xlu0 %v2079, 34
        %v2189 = vpop.permute.xlu0 %2188
        %2190 = vrot.lane.b32.xlu0 %v2080, 34
        %v2191 = vpop.permute.xlu0 %2190
        %2192 = vrot.lane.b32.xlu0 %v2081, 34
        %v2193 = vpop.permute.xlu0 %2192
        %2194 = vrot.lane.b32.xlu0 %v2082, 34
        %v2195 = vpop.permute.xlu0 %2194
        %2196 = vrot.lane.b32.xlu0 %v2083, 34
        %v2197 = vpop.permute.xlu0 %2196
        %2198 = vrot.lane.b32.xlu0 %v2084, 34
        %v2199 = vpop.permute.xlu0 %2198
        %2200 = vrot.lane.b32.xlu0 %v2085, 34
        %v2201 = vpop.permute.xlu0 %2200
        %2202 = vrot.lane.b32.xlu0 %v2086, 34
        %v2203 = vpop.permute.xlu0 %2202
        %2204 = vrot.lane.b32.xlu0 %v2087, 34
        %v2205 = vpop.permute.xlu0 %2204
        %2206 = vrot.lane.b32.xlu0 %v2088, 34
        %v2207 = vpop.permute.xlu0 %2206
        %2208 = vrot.lane.b32.xlu0 %v2089, 34
        %v2209 = vpop.permute.xlu0 %2208
        %2210 = vrot.lane.b32.xlu0 %v2090, 34
        %v2211 = vpop.permute.xlu0 %2210
        %2212 = vrot.lane.b32.xlu0 %v2091, 34
        %v2213 = vpop.permute.xlu0 %2212
        %2214 = vrot.lane.b32.xlu0 %v2092, 34
        %v2215 = vpop.permute.xlu0 %2214
        %v2216 = vsel %vm1312, %v2139, %v2141
        %v2217 = vsel %vm1312, %v2141, %v2143
        %v2218 = vsel %vm1312, %v2145, %v2147
        %v2219 = vsel %vm1312, %v2147, %v2149
        %v2220 = vsel %vm1312, %v2151, %v2153
        %v2221 = vsel %vm1312, %v2153, %v2155
        %v2222 = vsel %vm1312, %v2157, %v2159
        %v2223 = vsel %vm1312, %v2159, %v2161
        %v2224 = vsel %vm1312, %v2163, %v2165
        %v2225 = vsel %vm1312, %v2165, %v2167
        %v2226 = vsel %vm1312, %v2169, %v2171
        %v2227 = vsel %vm1312, %v2171, %v2173
        %v2228 = vsel %vm1312, %v2175, %v2177
        %v2229 = vsel %vm1312, %v2177, %v2179
        %v2230 = vsel %vm1312, %v2181, %v2183
        %v2231 = vsel %vm1312, %v2183, %v2185
        %v2232 = vsel %vm1312, %v2187, %v2189
        %v2233 = vsel %vm1312, %v2189, %v2191
        %v2234 = vsel %vm1312, %v2193, %v2195
        %v2235 = vsel %vm1312, %v2195, %v2197
        %v2236 = vsel %vm1312, %v2199, %v2201
        %v2237 = vsel %vm1312, %v2201, %v2203
        %v2238 = vsel %vm1312, %v2205, %v2207
        %v2239 = vsel %vm1312, %v2207, %v2209
        %v2240 = vsel %vm1312, %v2211, %v2213
        %v2241 = vsel %vm1312, %v2213, %v2215
        %v2267 = vsel %vm465, %v2096, 0
        %v2270 = vsel %vm469, %v2240, 0
        %v2273 = vsel %vm469, %v2241, 0
        %2275 = vmatpush.bf16.msra.mxu0 %v2230
        %2276 = vmatpush.bf16.msra.mxu0 %v2228
        %2277 = vmatpush.bf16.msra.mxu0 %v2226
        %2278 = vmatpush.bf16.msra.mxu0 %v2224
        %2279 = vmatpush.bf16.msra.mxu0 %v2222
        %2280 = vmatpush.bf16.msra.mxu0 %v2220
        %2281 = vmatpush.bf16.msra.mxu0 %v2218
        %2282 = vmatpush.bf16.msra.mxu0 %v2216
        %2283 = vmatmul.bf16.gmra.mxu0 %v2095
        %v2284 = vpop.f32.mrf.mxu0
        %v2285 = vadd.f32 %v2097, %v2284
        %v2286 = vpop.f32.mrf.mxu0
        %2287 = vdwg.mxu0
        %2288 = vmatpush.bf16.msra.mxu0 0
        %2289 = vmatpush.bf16.msra.mxu0 0
        %2290 = vmatpush.bf16.msra.mxu0 0
        %2291 = vmatpush.bf16.msra.mxu0 %v2270
        %2292 = vmatpush.bf16.msra.mxu0 %v2238
        %2293 = vmatpush.bf16.msra.mxu0 %v2236
        %2294 = vmatpush.bf16.msra.mxu0 %v2234
        %2295 = vmatpush.bf16.msra.mxu0 %v2232
        %2296 = vmatmul.bf16.gmra.mxu0 %v2267
        %v2297 = vpop.f32.mrf.mxu0
        %v2298 = vadd.f32 %v2285, %v2297
        %v2299 = vpop.f32.mrf.mxu0
        %2300 = vdwg.mxu0
        %2301 = vmatpush.bf16.msra.mxu0 %v2231
        %2302 = vmatpush.bf16.msra.mxu0 %v2229
        %2303 = vmatpush.bf16.msra.mxu0 %v2227
        %2304 = vmatpush.bf16.msra.mxu0 %v2225
        %2305 = vmatpush.bf16.msra.mxu0 %v2223
        %2306 = vmatpush.bf16.msra.mxu0 %v2221
        %2307 = vmatpush.bf16.msra.mxu0 %v2219
        %2308 = vmatpush.bf16.msra.mxu0 %v2217
        %2309 = vmatmul.bf16.gmra.mxu0 %v2095
        %v2310 = vpop.f32.mrf.mxu0
        %v2311 = vadd.f32 %v2098, %v2310
        %v2312 = vpop.f32.mrf.mxu0
        %2313 = vdwg.mxu0
        %2314 = vmatpush.bf16.msra.mxu0 0
        %2315 = vmatpush.bf16.msra.mxu0 0
        %2316 = vmatpush.bf16.msra.mxu0 0
        %2317 = vmatpush.bf16.msra.mxu0 %v2273
        %2318 = vmatpush.bf16.msra.mxu0 %v2239
        %2319 = vmatpush.bf16.msra.mxu0 %v2237
        %2320 = vmatpush.bf16.msra.mxu0 %v2235
        %2321 = vmatpush.bf16.msra.mxu0 %v2233
        %2322 = vmatmul.bf16.gmra.mxu0 %v2267
        %v2323 = vpop.f32.mrf.mxu0
        %v2324 = vadd.f32 %v2311, %v2323
        %v2325 = vpop.f32.mrf.mxu0
        %2326 = vdwg.mxu0
        %v2327 = vadd.f32 %v2298, %v486
        %v2328 = vadd.f32 %v2324, %v499
        %2329 = vst [vmem:[#allocation2 + $0x8] sm:$0xff] %v2327
        %2330 = vst [vmem:[#allocation2 + $0x10] sm:$0xff] %v2328
        %v2331 = vld [vmem:[#allocation2] sm:$0xff]
        %v2332 = vld [vmem:[#allocation2 + $0x8] sm:$0xff]
        %v2333 = vld [vmem:[#allocation2 + $0x10] sm:$0xff]
        %v2334 = vld [vmem:[%s507] ss:$8 sm:$0x3]
        %v2336 = vperm.slane %v2334, 0
        %v2337 = vperm.slane %v2334, 1
        %2338 = vrot.lane.b32.xlu0 %v2336, 94
        %v2339 = vpop.permute.xlu0 %2338
        %2340 = vrot.lane.b32.xlu0 %v2337, 94
        %v2341 = vpop.permute.xlu0 %2340
        %v2342 = vsel %vm376, %v2339, %v2341
        %v2346 = vmul.f32 %v2331, %v2339
        %v2347 = vmul.f32 %v2332, %v2342
        %v2348 = vmul.f32 %v2333, %v2341
        %v2349 = vld [vmem:[%s189] ss:$8 sm:$0x3]
        %v2351 = vperm.slane %v2349, 0
        %v2352 = vperm.slane %v2349, 1
        %2353 = vrot.lane.b32.xlu0 %v2351, 95
        %v2354 = vpop.permute.xlu0 %2353
        %2355 = vrot.lane.b32.xlu0 %v2352, 95
        %v2356 = vpop.permute.xlu0 %2355
        %v2357 = vsel %vm361, %v2354, %v2356
        %v2361 = vmul.f32 %v2331, %v2354
        %v2362 = vmul.f32 %v2332, %v2357
        %v2363 = vmul.f32 %v2333, %v2356
        %v2364 = vld [vmem:[%s206] ss:$8 sm:$0x3]
        %v2366 = vperm.slane %v2364, 0
        %v2367 = vperm.slane %v2364, 1
        %2368 = vrot.lane.b32.xlu0 %v2366, 97
        %v2369 = vpop.permute.xlu0 %2368
        %2370 = vrot.lane.b32.xlu0 %v2367, 97
        %v2371 = vpop.permute.xlu0 %2370
        %v2372 = vsel %vm546, %v2369, %v2371
        %v2376 = vmul.f32 %v2331, %v2369
        %v2377 = vmul.f32 %v2332, %v2372
        %v2378 = vmul.f32 %v2333, %v2371
        %v2379 = vld [vmem:[%s554] ss:$8 sm:$0x3]
        %v2381 = vperm.slane %v2379, 0
        %v2382 = vperm.slane %v2379, 1
        %2383 = vrot.lane.b32.xlu0 %v2381, 98
        %v2384 = vpop.permute.xlu0 %2383
        %2385 = vrot.lane.b32.xlu0 %v2382, 98
        %v2386 = vpop.permute.xlu0 %2385
        %v2387 = vsel %vm563, %v2384, %v2386
        %v2391 = vmul.f32 %v2331, %v2384
        %v2392 = vmul.f32 %v2332, %v2387
        %v2393 = vmul.f32 %v2333, %v2386
        %2394 = vrot.lane.b32.xlu0 %v2336, 110
        %v2395 = vpop.permute.xlu0 %2394
        %2396 = vrot.lane.b32.xlu0 %v2337, 110
        %v2397 = vpop.permute.xlu0 %2396
        %v2398 = vsel %vm333, %v2395, %v2397
        %v2402 = vmul.f32 %v2331, %v2395
        %v2403 = vmul.f32 %v2332, %v2398
        %v2404 = vmul.f32 %v2333, %v2397
        %2405 = vrot.lane.b32.xlu0 %v2351, 111
        %v2406 = vpop.permute.xlu0 %2405
        %2407 = vrot.lane.b32.xlu0 %v2352, 111
        %v2408 = vpop.permute.xlu0 %2407
        %v2409 = vsel %vm198, %v2406, %v2408
        %v2413 = vmul.f32 %v2331, %v2406
        %v2414 = vmul.f32 %v2332, %v2409
        %v2415 = vmul.f32 %v2333, %v2408
        %2416 = vrot.lane.b32.xlu0 %v2366, 113
        %v2417 = vpop.permute.xlu0 %2416
        %2418 = vrot.lane.b32.xlu0 %v2367, 113
        %v2419 = vpop.permute.xlu0 %2418
        %v2420 = vsel %vm215, %v2417, %v2419
        %v2424 = vmul.f32 %v2331, %v2417
        %v2425 = vmul.f32 %v2332, %v2420
        %v2426 = vmul.f32 %v2333, %v2419
        %2427 = vrot.lane.b32.xlu0 %v2381, 114
        %v2428 = vpop.permute.xlu0 %2427
        %2429 = vrot.lane.b32.xlu0 %v2382, 114
        %v2430 = vpop.permute.xlu0 %2429
        %v2431 = vsel %vm608, %v2428, %v2430
        %v2435 = vmul.f32 %v2331, %v2428
        %v2436 = vmul.f32 %v2332, %v2431
        %v2437 = vmul.f32 %v2333, %v2430
        %2438 = vrot.lane.b32.xlu0 %v2336, 126
        %v2439 = vpop.permute.xlu0 %2438
        %2440 = vrot.lane.b32.xlu0 %v2337, 126
        %v2441 = vpop.permute.xlu0 %2440
        %v2442 = vsel %vm295, %v2439, %v2441
        %v2446 = vmul.f32 %v2331, %v2439
        %v2447 = vmul.f32 %v2332, %v2442
        %v2448 = vmul.f32 %v2333, %v2441
        %2449 = vrot.lane.b32.xlu0 %v2351, 127
        %v2450 = vpop.permute.xlu0 %2449
        %2451 = vrot.lane.b32.xlu0 %v2352, 127
        %v2452 = vpop.permute.xlu0 %2451
        %v2453 = vsel %vm227, %v2450, %v2452
        %v2457 = vmul.f32 %v2331, %v2450
        %v2458 = vmul.f32 %v2332, %v2453
        %v2459 = vmul.f32 %v2333, %v2452
        %v2460 = vld [vmem:[#allocation2 + $0x18] sm:$0xff]
        %2461 = vrot.lane.b32.xlu0 %v2366, 1
        %v2462 = vpop.permute.xlu0 %2461
        %2463 = vrot.lane.b32.xlu0 %v2367, 1
        %v2464 = vpop.permute.xlu0 %2463
        %v2465 = vsel %vm240, %v2462, %v2464
        %v2469 = vmul.f32 %v2332, %v2462
        %v2470 = vmul.f32 %v2333, %v2465
        %v2471 = vmul.f32 %v2460, %v2464
        %2472 = vrot.lane.b32.xlu0 %v2381, 2
        %v2473 = vpop.permute.xlu0 %2472
        %2474 = vrot.lane.b32.xlu0 %v2382, 2
        %v2475 = vpop.permute.xlu0 %2474
        %v2476 = vsel %vm654, %v2473, %v2475
        %v2480 = vmul.f32 %v2332, %v2473
        %v2481 = vmul.f32 %v2333, %v2476
        %v2482 = vmul.f32 %v2460, %v2475
        %2483 = vrot.lane.b32.xlu0 %v2336, 14
        %v2484 = vpop.permute.xlu0 %2483
        %2485 = vrot.lane.b32.xlu0 %v2337, 14
        %v2486 = vpop.permute.xlu0 %2485
        %v2487 = vsel %vm666, %v2484, %v2486
        %v2491 = vmul.f32 %v2332, %v2484
        %v2492 = vmul.f32 %v2333, %v2487
        %v2493 = vmul.f32 %v2460, %v2486
        %2494 = vrot.lane.b32.xlu0 %v2351, 15
        %v2495 = vpop.permute.xlu0 %2494
        %2496 = vrot.lane.b32.xlu0 %v2352, 15
        %v2497 = vpop.permute.xlu0 %2496
        %v2498 = vsel %vm252, %v2495, %v2497
        %v2502 = vmul.f32 %v2332, %v2495
        %v2503 = vmul.f32 %v2333, %v2498
        %v2504 = vmul.f32 %v2460, %v2497
        %2505 = vrot.lane.b32.xlu0 %v2366, 17
        %v2506 = vpop.permute.xlu0 %2505
        %2507 = vrot.lane.b32.xlu0 %v2367, 17
        %v2508 = vpop.permute.xlu0 %2507
        %v2509 = vsel %vm264, %v2506, %v2508
        %v2513 = vmul.f32 %v2332, %v2506
        %v2514 = vmul.f32 %v2333, %v2509
        %v2515 = vmul.f32 %v2460, %v2508
        %2516 = vrot.lane.b32.xlu0 %v2381, 18
        %v2517 = vpop.permute.xlu0 %2516
        %2518 = vrot.lane.b32.xlu0 %v2382, 18
        %v2519 = vpop.permute.xlu0 %2518
        %v2520 = vsel %vm700, %v2517, %v2519
        %v2524 = vmul.f32 %v2332, %v2517
        %v2525 = vmul.f32 %v2333, %v2520
        %v2526 = vmul.f32 %v2460, %v2519
        %2527 = vrot.lane.b32.xlu0 %v2336, 30
        %v2528 = vpop.permute.xlu0 %2527
        %2529 = vrot.lane.b32.xlu0 %v2337, 30
        %v2530 = vpop.permute.xlu0 %2529
        %v2531 = vsel %vm712, %v2528, %v2530
        %v2535 = vmul.f32 %v2332, %v2528
        %v2536 = vmul.f32 %v2333, %v2531
        %v2537 = vmul.f32 %v2460, %v2530
        %2538 = vrot.lane.b32.xlu0 %v2351, 31
        %v2539 = vpop.permute.xlu0 %2538
        %2540 = vrot.lane.b32.xlu0 %v2352, 31
        %v2541 = vpop.permute.xlu0 %2540
        %v2542 = vsel %vm724, %v2539, %v2541
        %v2546 = vmul.f32 %v2332, %v2539
        %v2547 = vmul.f32 %v2333, %v2542
        %v2548 = vmul.f32 %v2460, %v2541
        %2549 = vrot.lane.b32.xlu0 %v2366, 33
        %v2550 = vpop.permute.xlu0 %2549
        %2551 = vrot.lane.b32.xlu0 %v2367, 33
        %v2552 = vpop.permute.xlu0 %2551
        %v2553 = vsel %vm736, %v2550, %v2552
        %v2557 = vmul.f32 %v2332, %v2550
        %v2558 = vmul.f32 %v2333, %v2553
        %v2559 = vmul.f32 %v2460, %v2552
        %2560 = vrot.lane.b32.xlu0 %v2381, 34
        %v2561 = vpop.permute.xlu0 %2560
        %2562 = vrot.lane.b32.xlu0 %v2382, 34
        %v2563 = vpop.permute.xlu0 %2562
        %v2564 = vsel %vm748, %v2561, %v2563
        %v2568 = vmul.f32 %v2332, %v2561
        %v2569 = vmul.f32 %v2333, %v2564
        %v2570 = vmul.f32 %v2460, %v2563
        %2574 = vrot.lane.b32.xlu0 %v2361, 127
        %v2575 = vpop.permute.xlu0 %2574
        %2576 = vrot.lane.b32.xlu0 %v2362, 127
        %v2577 = vpop.permute.xlu0 %2576
        %2578 = vrot.lane.b32.xlu0 %v2363, 127
        %v2579 = vpop.permute.xlu0 %2578
        %v2580 = vsel %vm227, %v2575, %v2577
        %v2581 = vsel %vm227, %v2577, %v2579
        %2588 = vrot.lane.b32.xlu0 %v2331, 126
        %v2589 = vpop.permute.xlu0 %2588
        %2590 = vrot.lane.b32.xlu0 %v2332, 126
        %v2591 = vpop.permute.xlu0 %2590
        %2592 = vrot.lane.b32.xlu0 %v2333, 126
        %v2593 = vpop.permute.xlu0 %2592
        %v2594 = vsel %vm295, %v2589, %v2591
        %v2595 = vsel %vm295, %v2591, %v2593
        %2602 = vrot.lane.b32.xlu0 %v2376, 125
        %v2603 = vpop.permute.xlu0 %2602
        %2604 = vrot.lane.b32.xlu0 %v2377, 125
        %v2605 = vpop.permute.xlu0 %2604
        %2606 = vrot.lane.b32.xlu0 %v2378, 125
        %v2607 = vpop.permute.xlu0 %2606
        %v2608 = vsel %vm793, %v2603, %v2605
        %v2609 = vsel %vm793, %v2605, %v2607
        %2616 = vrot.lane.b32.xlu0 %v2391, 124
        %v2617 = vpop.permute.xlu0 %2616
        %2618 = vrot.lane.b32.xlu0 %v2392, 124
        %v2619 = vpop.permute.xlu0 %2618
        %2620 = vrot.lane.b32.xlu0 %v2393, 124
        %v2621 = vpop.permute.xlu0 %2620
        %v2622 = vsel %vm808, %v2617, %v2619
        %v2623 = vsel %vm808, %v2619, %v2621
        %2630 = vrot.lane.b32.xlu0 %v2402, 112
        %v2631 = vpop.permute.xlu0 %2630
        %2632 = vrot.lane.b32.xlu0 %v2403, 112
        %v2633 = vpop.permute.xlu0 %2632
        %2634 = vrot.lane.b32.xlu0 %v2404, 112
        %v2635 = vpop.permute.xlu0 %2634
        %v2636 = vsel %vm310, %v2631, %v2633
        %v2637 = vsel %vm310, %v2633, %v2635
        %2644 = vrot.lane.b32.xlu0 %v2413, 111
        %v2645 = vpop.permute.xlu0 %2644
        %2646 = vrot.lane.b32.xlu0 %v2414, 111
        %v2647 = vpop.permute.xlu0 %2646
        %2648 = vrot.lane.b32.xlu0 %v2415, 111
        %v2649 = vpop.permute.xlu0 %2648
        %v2650 = vsel %vm198, %v2645, %v2647
        %v2651 = vsel %vm198, %v2647, %v2649
        %2655 = vrot.lane.b32.xlu0 %v2331, 110
        %v2656 = vpop.permute.xlu0 %2655
        %2657 = vrot.lane.b32.xlu0 %v2332, 110
        %v2658 = vpop.permute.xlu0 %2657
        %2659 = vrot.lane.b32.xlu0 %v2333, 110
        %v2660 = vpop.permute.xlu0 %2659
        %v2661 = vsel %vm333, %v2656, %v2658
        %v2662 = vsel %vm333, %v2658, %v2660
        %2669 = vrot.lane.b32.xlu0 %v2424, 109
        %v2670 = vpop.permute.xlu0 %2669
        %2671 = vrot.lane.b32.xlu0 %v2425, 109
        %v2672 = vpop.permute.xlu0 %2671
        %2673 = vrot.lane.b32.xlu0 %v2426, 109
        %v2674 = vpop.permute.xlu0 %2673
        %v2675 = vsel %vm862, %v2670, %v2672
        %v2676 = vsel %vm862, %v2672, %v2674
        %2683 = vrot.lane.b32.xlu0 %v2435, 108
        %v2684 = vpop.permute.xlu0 %2683
        %2685 = vrot.lane.b32.xlu0 %v2436, 108
        %v2686 = vpop.permute.xlu0 %2685
        %2687 = vrot.lane.b32.xlu0 %v2437, 108
        %v2688 = vpop.permute.xlu0 %2687
        %v2689 = vsel %vm877, %v2684, %v2686
        %v2690 = vsel %vm877, %v2686, %v2688
        %2697 = vrot.lane.b32.xlu0 %v2446, 96
        %v2698 = vpop.permute.xlu0 %2697
        %2699 = vrot.lane.b32.xlu0 %v2447, 96
        %v2700 = vpop.permute.xlu0 %2699
        %2701 = vrot.lane.b32.xlu0 %v2448, 96
        %v2702 = vpop.permute.xlu0 %2701
        %v2703 = vsel %vm348, %v2698, %v2700
        %v2704 = vsel %vm348, %v2700, %v2702
        %2711 = vrot.lane.b32.xlu0 %v2457, 95
        %v2712 = vpop.permute.xlu0 %2711
        %2713 = vrot.lane.b32.xlu0 %v2458, 95
        %v2714 = vpop.permute.xlu0 %2713
        %2715 = vrot.lane.b32.xlu0 %v2459, 95
        %v2716 = vpop.permute.xlu0 %2715
        %v2717 = vsel %vm361, %v2712, %v2714
        %v2718 = vsel %vm361, %v2714, %v2716
        %2722 = vrot.lane.b32.xlu0 %v2332, 94
        %v2723 = vpop.permute.xlu0 %2722
        %2724 = vrot.lane.b32.xlu0 %v2333, 94
        %v2725 = vpop.permute.xlu0 %2724
        %v2726 = vsel %vm376, %v2723, %v2725
        %2733 = vrot.lane.b32.xlu0 %v2469, 93
        %v2734 = vpop.permute.xlu0 %2733
        %2735 = vrot.lane.b32.xlu0 %v2470, 93
        %v2736 = vpop.permute.xlu0 %2735
        %2737 = vrot.lane.b32.xlu0 %v2471, 93
        %v2738 = vpop.permute.xlu0 %2737
        %v2739 = vsel %vm928, %v2734, %v2736
        %v2740 = vsel %vm928, %v2736, %v2738
        %2747 = vrot.lane.b32.xlu0 %v2480, 92
        %v2748 = vpop.permute.xlu0 %2747
        %2749 = vrot.lane.b32.xlu0 %v2481, 92
        %v2750 = vpop.permute.xlu0 %2749
        %2751 = vrot.lane.b32.xlu0 %v2482, 92
        %v2752 = vpop.permute.xlu0 %2751
        %v2753 = vsel %vm943, %v2748, %v2750
        %v2754 = vsel %vm943, %v2750, %v2752
        %2761 = vrot.lane.b32.xlu0 %v2491, 80
        %v2762 = vpop.permute.xlu0 %2761
        %2763 = vrot.lane.b32.xlu0 %v2492, 80
        %v2764 = vpop.permute.xlu0 %2763
        %2765 = vrot.lane.b32.xlu0 %v2493, 80
        %v2766 = vpop.permute.xlu0 %2765
        %v2767 = vsel %vm958, %v2762, %v2764
        %v2768 = vsel %vm958, %v2764, %v2766
        %2773 = vrot.lane.b32.xlu0 %v2332, 127
        %v2774 = vpop.permute.xlu0 %2773
        %2775 = vrot.lane.b32.xlu0 %v2333, 127
        %v2776 = vpop.permute.xlu0 %2775
        %2777 = vrot.lane.b32.xlu0 %v2460, 127
        %v2778 = vpop.permute.xlu0 %2777
        %v2779 = vsel %vm227, %v2774, %v2776
        %v2780 = vsel %vm227, %v2776, %v2778
        %2784 = vrot.lane.b32.xlu0 %v2513, 126
        %v2785 = vpop.permute.xlu0 %2784
        %2786 = vrot.lane.b32.xlu0 %v2514, 126
        %v2787 = vpop.permute.xlu0 %2786
        %2788 = vrot.lane.b32.xlu0 %v2515, 126
        %v2789 = vpop.permute.xlu0 %2788
        %v2790 = vsel %vm295, %v2785, %v2787
        %v2791 = vsel %vm295, %v2787, %v2789
        %2795 = vrot.lane.b32.xlu0 %v2524, 125
        %v2796 = vpop.permute.xlu0 %2795
        %2797 = vrot.lane.b32.xlu0 %v2525, 125
        %v2798 = vpop.permute.xlu0 %2797
        %2799 = vrot.lane.b32.xlu0 %v2526, 125
        %v2800 = vpop.permute.xlu0 %2799
        %v2801 = vsel %vm793, %v2796, %v2798
        %v2802 = vsel %vm793, %v2798, %v2800
        %2806 = vrot.lane.b32.xlu0 %v2535, 113
        %v2807 = vpop.permute.xlu0 %2806
        %2808 = vrot.lane.b32.xlu0 %v2536, 113
        %v2809 = vpop.permute.xlu0 %2808
        %2810 = vrot.lane.b32.xlu0 %v2537, 113
        %v2811 = vpop.permute.xlu0 %2810
        %v2812 = vsel %vm215, %v2807, %v2809
        %v2813 = vsel %vm215, %v2809, %v2811
        %2817 = vrot.lane.b32.xlu0 %v2546, 112
        %v2818 = vpop.permute.xlu0 %2817
        %2819 = vrot.lane.b32.xlu0 %v2547, 112
        %v2820 = vpop.permute.xlu0 %2819
        %2821 = vrot.lane.b32.xlu0 %v2548, 112
        %v2822 = vpop.permute.xlu0 %2821
        %v2823 = vsel %vm310, %v2818, %v2820
        %v2824 = vsel %vm310, %v2820, %v2822
        %2825 = vrot.lane.b32.xlu0 %v2332, 111
        %v2826 = vpop.permute.xlu0 %2825
        %2827 = vrot.lane.b32.xlu0 %v2333, 111
        %v2828 = vpop.permute.xlu0 %2827
        %2829 = vrot.lane.b32.xlu0 %v2460, 111
        %v2830 = vpop.permute.xlu0 %2829
        %v2831 = vsel %vm198, %v2826, %v2828
        %v2832 = vsel %vm198, %v2828, %v2830
        %2836 = vrot.lane.b32.xlu0 %v2557, 110
        %v2837 = vpop.permute.xlu0 %2836
        %2838 = vrot.lane.b32.xlu0 %v2558, 110
        %v2839 = vpop.permute.xlu0 %2838
        %2840 = vrot.lane.b32.xlu0 %v2559, 110
        %v2841 = vpop.permute.xlu0 %2840
        %v2842 = vsel %vm333, %v2837, %v2839
        %v2843 = vsel %vm333, %v2839, %v2841
        %2847 = vrot.lane.b32.xlu0 %v2568, 109
        %v2848 = vpop.permute.xlu0 %2847
        %2849 = vrot.lane.b32.xlu0 %v2569, 109
        %v2850 = vpop.permute.xlu0 %2849
        %2851 = vrot.lane.b32.xlu0 %v2570, 109
        %v2852 = vpop.permute.xlu0 %2851
        %v2853 = vsel %vm862, %v2848, %v2850
        %v2854 = vsel %vm862, %v2850, %v2852
        %2858 = vrot.lane.b32.xlu0 %v2502, 79
        %v2859 = vpop.permute.xlu0 %2858
        %2860 = vrot.lane.b32.xlu0 %v2503, 79
        %v2861 = vpop.permute.xlu0 %2860
        %2862 = vrot.lane.b32.xlu0 %v2504, 79
        %v2863 = vpop.permute.xlu0 %2862
        %2864 = vrot.lane.b32.xlu0 %v2779, 79
        %v2865 = vpop.permute.xlu0 %2864
        %2866 = vrot.lane.b32.xlu0 %v2780, 79
        %v2867 = vpop.permute.xlu0 %2866
        %2868 = vrot.lane.b32.xlu0 %v2778, 79
        %v2869 = vpop.permute.xlu0 %2868
        %2870 = vrot.lane.b32.xlu0 %v2790, 79
        %v2871 = vpop.permute.xlu0 %2870
        %2872 = vrot.lane.b32.xlu0 %v2791, 79
        %v2873 = vpop.permute.xlu0 %2872
        %2874 = vrot.lane.b32.xlu0 %v2789, 79
        %v2875 = vpop.permute.xlu0 %2874
        %2876 = vrot.lane.b32.xlu0 %v2801, 79
        %v2877 = vpop.permute.xlu0 %2876
        %2878 = vrot.lane.b32.xlu0 %v2802, 79
        %v2879 = vpop.permute.xlu0 %2878
        %2880 = vrot.lane.b32.xlu0 %v2800, 79
        %v2881 = vpop.permute.xlu0 %2880
        %2882 = vrot.lane.b32.xlu0 %v2812, 79
        %v2883 = vpop.permute.xlu0 %2882
        %2884 = vrot.lane.b32.xlu0 %v2813, 79
        %v2885 = vpop.permute.xlu0 %2884
        %2886 = vrot.lane.b32.xlu0 %v2811, 79
        %v2887 = vpop.permute.xlu0 %2886
        %2888 = vrot.lane.b32.xlu0 %v2823, 79
        %v2889 = vpop.permute.xlu0 %2888
        %2890 = vrot.lane.b32.xlu0 %v2824, 79
        %v2891 = vpop.permute.xlu0 %2890
        %2892 = vrot.lane.b32.xlu0 %v2822, 79
        %v2893 = vpop.permute.xlu0 %2892
        %2894 = vrot.lane.b32.xlu0 %v2831, 79
        %v2895 = vpop.permute.xlu0 %2894
        %2896 = vrot.lane.b32.xlu0 %v2832, 79
        %v2897 = vpop.permute.xlu0 %2896
        %2898 = vrot.lane.b32.xlu0 %v2830, 79
        %v2899 = vpop.permute.xlu0 %2898
        %2900 = vrot.lane.b32.xlu0 %v2842, 79
        %v2901 = vpop.permute.xlu0 %2900
        %2902 = vrot.lane.b32.xlu0 %v2843, 79
        %v2903 = vpop.permute.xlu0 %2902
        %2904 = vrot.lane.b32.xlu0 %v2841, 79
        %v2905 = vpop.permute.xlu0 %2904
        %2906 = vrot.lane.b32.xlu0 %v2853, 79
        %v2907 = vpop.permute.xlu0 %2906
        %2908 = vrot.lane.b32.xlu0 %v2854, 79
        %v2909 = vpop.permute.xlu0 %2908
        %2910 = vrot.lane.b32.xlu0 %v2852, 79
        %v2911 = vpop.permute.xlu0 %2910
        %v2912 = vsel %vm1104, %v2859, %v2861
        %v2913 = vsel %vm1104, %v2861, %v2863
        %v2914 = vsel %vm1104, %v2865, %v2867
        %v2915 = vsel %vm1104, %v2867, %v2869
        %v2916 = vsel %vm1104, %v2871, %v2873
        %v2917 = vsel %vm1104, %v2873, %v2875
        %v2918 = vsel %vm1104, %v2877, %v2879
        %v2919 = vsel %vm1104, %v2879, %v2881
        %v2920 = vsel %vm1104, %v2883, %v2885
        %v2921 = vsel %vm1104, %v2885, %v2887
        %v2922 = vsel %vm1104, %v2889, %v2891
        %v2923 = vsel %vm1104, %v2891, %v2893
        %v2924 = vsel %vm1104, %v2895, %v2897
        %v2925 = vsel %vm1104, %v2897, %v2899
        %v2926 = vsel %vm1104, %v2901, %v2903
        %v2927 = vsel %vm1104, %v2903, %v2905
        %v2928 = vsel %vm1104, %v2907, %v2909
        %v2929 = vsel %vm1104, %v2909, %v2911
        %v2957 = vpack.c.bf16 %v2580, %v2346
        %v2958 = vpack.c.bf16 %v2581, %v2347
        %v2959 = vpack.c.bf16 %v2579, %v2348
        %v2960 = vpack.c.bf16 %v2608, %v2594
        %v2961 = vpack.c.bf16 %v2609, %v2595
        %v2962 = vpack.c.bf16 %v2607, %v2593
        %v2963 = vpack.c.bf16 %v2636, %v2622
        %v2964 = vpack.c.bf16 %v2637, %v2623
        %v2965 = vpack.c.bf16 %v2635, %v2621
        %v2966 = vpack.c.bf16 %v2661, %v2650
        %v2967 = vpack.c.bf16 %v2662, %v2651
        %v2968 = vpack.c.bf16 %v2660, %v2649
        %v2969 = vpack.c.bf16 %v2689, %v2675
        %v2970 = vpack.c.bf16 %v2690, %v2676
        %v2971 = vpack.c.bf16 %v2688, %v2674
        %v2972 = vpack.c.bf16 %v2717, %v2703
        %v2973 = vpack.c.bf16 %v2718, %v2704
        %v2974 = vpack.c.bf16 %v2716, %v2702
        %v2975 = vpack.c.bf16 %v2734, %v2723
        %v2976 = vpack.c.bf16 %v2739, %v2726
        %v2977 = vpack.c.bf16 %v2740, %v2725
        %v2978 = vpack.c.bf16 %v2762, %v2748
        %v2979 = vpack.c.bf16 %v2767, %v2753
        %v2980 = vpack.c.bf16 %v2768, %v2754
        %v2981 = vpack.c.bf16 %v2865, %v2859
        %v2982 = vpack.c.bf16 %v2914, %v2912
        %v2983 = vpack.c.bf16 %v2915, %v2913
        %v2984 = vpack.c.bf16 %v2877, %v2871
        %v2985 = vpack.c.bf16 %v2918, %v2916
        %v2986 = vpack.c.bf16 %v2919, %v2917
        %v2987 = vpack.c.bf16 %v2889, %v2883
        %v2988 = vpack.c.bf16 %v2922, %v2920
        %v2989 = vpack.c.bf16 %v2923, %v2921
        %v2990 = vpack.c.bf16 %v2901, %v2895
        %v2991 = vpack.c.bf16 %v2926, %v2924
        %v2992 = vpack.c.bf16 %v2927, %v2925
        %v2993 = vpack.c.bf16 %v2907, %v2907
        %v2994 = vpack.c.bf16 %v2928, %v2928
        %v2995 = vpack.c.bf16 %v2929, %v2929
        %v2996 = vld [vmem:[#allocation3 + $0x70] sm:$0xff]
        %v2997 = vld [vmem:[#allocation3 + $0x78] sm:$0xff]
        %v2998 = vpack.c.bf16 %v2996, %v2996
        %v2999 = vpack.c.bf16 %v2997, %v2997
        %v3000 = vld [vmem:[#allocation3 + $0x80] sm:$0xff]
        %v3001 = vld [vmem:[#allocation3 + $0x88] sm:$0xff]
        %3041 = vrot.lane.b32.xlu0 %v2957, 34
        %v3042 = vpop.permute.xlu0 %3041
        %3043 = vrot.lane.b32.xlu0 %v2958, 34
        %v3044 = vpop.permute.xlu0 %3043
        %3045 = vrot.lane.b32.xlu0 %v2959, 34
        %v3046 = vpop.permute.xlu0 %3045
        %3047 = vrot.lane.b32.xlu0 %v2960, 34
        %v3048 = vpop.permute.xlu0 %3047
        %3049 = vrot.lane.b32.xlu0 %v2961, 34
        %v3050 = vpop.permute.xlu0 %3049
        %3051 = vrot.lane.b32.xlu0 %v2962, 34
        %v3052 = vpop.permute.xlu0 %3051
        %3053 = vrot.lane.b32.xlu0 %v2963, 34
        %v3054 = vpop.permute.xlu0 %3053
        %3055 = vrot.lane.b32.xlu0 %v2964, 34
        %v3056 = vpop.permute.xlu0 %3055
        %3057 = vrot.lane.b32.xlu0 %v2965, 34
        %v3058 = vpop.permute.xlu0 %3057
        %3059 = vrot.lane.b32.xlu0 %v2966, 34
        %v3060 = vpop.permute.xlu0 %3059
        %3061 = vrot.lane.b32.xlu0 %v2967, 34
        %v3062 = vpop.permute.xlu0 %3061
        %3063 = vrot.lane.b32.xlu0 %v2968, 34
        %v3064 = vpop.permute.xlu0 %3063
        %3065 = vrot.lane.b32.xlu0 %v2969, 34
        %v3066 = vpop.permute.xlu0 %3065
        %3067 = vrot.lane.b32.xlu0 %v2970, 34
        %v3068 = vpop.permute.xlu0 %3067
        %3069 = vrot.lane.b32.xlu0 %v2971, 34
        %v3070 = vpop.permute.xlu0 %3069
        %3071 = vrot.lane.b32.xlu0 %v2972, 34
        %v3072 = vpop.permute.xlu0 %3071
        %3073 = vrot.lane.b32.xlu0 %v2973, 34
        %v3074 = vpop.permute.xlu0 %3073
        %3075 = vrot.lane.b32.xlu0 %v2974, 34
        %v3076 = vpop.permute.xlu0 %3075
        %3077 = vrot.lane.b32.xlu0 %v2975, 34
        %v3078 = vpop.permute.xlu0 %3077
        %3079 = vrot.lane.b32.xlu0 %v2976, 34
        %v3080 = vpop.permute.xlu0 %3079
        %3081 = vrot.lane.b32.xlu0 %v2977, 34
        %v3082 = vpop.permute.xlu0 %3081
        %3083 = vrot.lane.b32.xlu0 %v2978, 34
        %v3084 = vpop.permute.xlu0 %3083
        %3085 = vrot.lane.b32.xlu0 %v2979, 34
        %v3086 = vpop.permute.xlu0 %3085
        %3087 = vrot.lane.b32.xlu0 %v2980, 34
        %v3088 = vpop.permute.xlu0 %3087
        %3089 = vrot.lane.b32.xlu0 %v2981, 34
        %v3090 = vpop.permute.xlu0 %3089
        %3091 = vrot.lane.b32.xlu0 %v2982, 34
        %v3092 = vpop.permute.xlu0 %3091
        %3093 = vrot.lane.b32.xlu0 %v2983, 34
        %v3094 = vpop.permute.xlu0 %3093
        %3095 = vrot.lane.b32.xlu0 %v2984, 34
        %v3096 = vpop.permute.xlu0 %3095
        %3097 = vrot.lane.b32.xlu0 %v2985, 34
        %v3098 = vpop.permute.xlu0 %3097
        %3099 = vrot.lane.b32.xlu0 %v2986, 34
        %v3100 = vpop.permute.xlu0 %3099
        %3101 = vrot.lane.b32.xlu0 %v2987, 34
        %v3102 = vpop.permute.xlu0 %3101
        %3103 = vrot.lane.b32.xlu0 %v2988, 34
        %v3104 = vpop.permute.xlu0 %3103
        %3105 = vrot.lane.b32.xlu0 %v2989, 34
        %v3106 = vpop.permute.xlu0 %3105
        %3107 = vrot.lane.b32.xlu0 %v2990, 34
        %v3108 = vpop.permute.xlu0 %3107
        %3109 = vrot.lane.b32.xlu0 %v2991, 34
        %v3110 = vpop.permute.xlu0 %3109
        %3111 = vrot.lane.b32.xlu0 %v2992, 34
        %v3112 = vpop.permute.xlu0 %3111
        %3113 = vrot.lane.b32.xlu0 %v2993, 34
        %v3114 = vpop.permute.xlu0 %3113
        %3115 = vrot.lane.b32.xlu0 %v2994, 34
        %v3116 = vpop.permute.xlu0 %3115
        %3117 = vrot.lane.b32.xlu0 %v2995, 34
        %v3118 = vpop.permute.xlu0 %3117
        %v3119 = vsel %vm1312, %v3042, %v3044
        %v3120 = vsel %vm1312, %v3044, %v3046
        %v3121 = vsel %vm1312, %v3048, %v3050
        %v3122 = vsel %vm1312, %v3050, %v3052
        %v3123 = vsel %vm1312, %v3054, %v3056
        %v3124 = vsel %vm1312, %v3056, %v3058
        %v3125 = vsel %vm1312, %v3060, %v3062
        %v3126 = vsel %vm1312, %v3062, %v3064
        %v3127 = vsel %vm1312, %v3066, %v3068
        %v3128 = vsel %vm1312, %v3068, %v3070
        %v3129 = vsel %vm1312, %v3072, %v3074
        %v3130 = vsel %vm1312, %v3074, %v3076
        %v3131 = vsel %vm1312, %v3078, %v3080
        %v3132 = vsel %vm1312, %v3080, %v3082
        %v3133 = vsel %vm1312, %v3084, %v3086
        %v3134 = vsel %vm1312, %v3086, %v3088
        %v3135 = vsel %vm1312, %v3090, %v3092
        %v3136 = vsel %vm1312, %v3092, %v3094
        %v3137 = vsel %vm1312, %v3096, %v3098
        %v3138 = vsel %vm1312, %v3098, %v3100
        %v3139 = vsel %vm1312, %v3102, %v3104
        %v3140 = vsel %vm1312, %v3104, %v3106
        %v3141 = vsel %vm1312, %v3108, %v3110
        %v3142 = vsel %vm1312, %v3110, %v3112
        %v3143 = vsel %vm1312, %v3114, %v3116
        %v3144 = vsel %vm1312, %v3116, %v3118
        %v3170 = vsel %vm465, %v2999, 0
        %v3173 = vsel %vm469, %v3143, 0
        %v3176 = vsel %vm469, %v3144, 0
        %3178 = vmatpush.bf16.msra.mxu0 %v3133
        %3179 = vmatpush.bf16.msra.mxu0 %v3131
        %3180 = vmatpush.bf16.msra.mxu0 %v3129
        %3181 = vmatpush.bf16.msra.mxu0 %v3127
        %3182 = vmatpush.bf16.msra.mxu0 %v3125
        %3183 = vmatpush.bf16.msra.mxu0 %v3123
        %3184 = vmatpush.bf16.msra.mxu0 %v3121
        %3185 = vmatpush.bf16.msra.mxu0 %v3119
        %3186 = vmatmul.bf16.gmra.mxu0 %v2998
        %v3187 = vpop.f32.mrf.mxu0
        %v3188 = vadd.f32 %v3000, %v3187
        %v3189 = vpop.f32.mrf.mxu0
        %3190 = vdwg.mxu0
        %3191 = vmatpush.bf16.msra.mxu0 0
        %3192 = vmatpush.bf16.msra.mxu0 0
        %3193 = vmatpush.bf16.msra.mxu0 0
        %3194 = vmatpush.bf16.msra.mxu0 %v3173
        %3195 = vmatpush.bf16.msra.mxu0 %v3141
        %3196 = vmatpush.bf16.msra.mxu0 %v3139
        %3197 = vmatpush.bf16.msra.mxu0 %v3137
        %3198 = vmatpush.bf16.msra.mxu0 %v3135
        %3199 = vmatmul.bf16.gmra.mxu0 %v3170
        %v3200 = vpop.f32.mrf.mxu0
        %v3201 = vadd.f32 %v3188, %v3200
        %v3202 = vpop.f32.mrf.mxu0
        %3203 = vdwg.mxu0
        %3204 = vmatpush.bf16.msra.mxu0 %v3134
        %3205 = vmatpush.bf16.msra.mxu0 %v3132
        %3206 = vmatpush.bf16.msra.mxu0 %v3130
        %3207 = vmatpush.bf16.msra.mxu0 %v3128
        %3208 = vmatpush.bf16.msra.mxu0 %v3126
        %3209 = vmatpush.bf16.msra.mxu0 %v3124
        %3210 = vmatpush.bf16.msra.mxu0 %v3122
        %3211 = vmatpush.bf16.msra.mxu0 %v3120
        %3212 = vmatmul.bf16.gmra.mxu0 %v2998
        %v3213 = vpop.f32.mrf.mxu0
        %v3214 = vadd.f32 %v3001, %v3213
        %v3215 = vpop.f32.mrf.mxu0
        %3216 = vdwg.mxu0
        %3217 = vmatpush.bf16.msra.mxu0 0
        %3218 = vmatpush.bf16.msra.mxu0 0
        %3219 = vmatpush.bf16.msra.mxu0 0
        %3220 = vmatpush.bf16.msra.mxu0 %v3176
        %3221 = vmatpush.bf16.msra.mxu0 %v3142
        %3222 = vmatpush.bf16.msra.mxu0 %v3140
        %3223 = vmatpush.bf16.msra.mxu0 %v3138
        %3224 = vmatpush.bf16.msra.mxu0 %v3136
        %3225 = vmatmul.bf16.gmra.mxu0 %v3170
        %v3226 = vpop.f32.mrf.mxu0
        %v3227 = vadd.f32 %v3214, %v3226
        %v3228 = vpop.f32.mrf.mxu0
        %3229 = vdwg.mxu0
        %v3230 = vmax.f32 %v3201, 0.0
        %v3231 = vmax.f32 %v3227, 0.0
        %3232 = vst [vmem:[#allocation2 + $0x8] sm:$0xff] %v3230
        %3233 = vst [vmem:[#allocation2 + $0x10] sm:$0xff] %v3231
        %v3234 = vld [vmem:[#allocation2] sm:$0xff]
        %v3235 = vld [vmem:[#allocation2 + $0x8] sm:$0xff]
        %v3236 = vld [vmem:[#allocation2 + $0x10] sm:$0xff]
        %v3237 = vld [vmem:[%s507] ss:$8 sm:$0x3]
        %v3239 = vperm.slane %v3237, 0
        %v3240 = vperm.slane %v3237, 1
        %3241 = vrot.lane.b32.xlu0 %v3239, 94
        %v3242 = vpop.permute.xlu0 %3241
        %3243 = vrot.lane.b32.xlu0 %v3240, 94
        %v3244 = vpop.permute.xlu0 %3243
        %v3245 = vsel %vm376, %v3242, %v3244
        %v3249 = vmul.f32 %v3234, %v3242
        %v3250 = vmul.f32 %v3235, %v3245
        %v3251 = vmul.f32 %v3236, %v3244
        %v3252 = vld [vmem:[%s189] ss:$8 sm:$0x3]
        %v3254 = vperm.slane %v3252, 0
        %v3255 = vperm.slane %v3252, 1
        %3256 = vrot.lane.b32.xlu0 %v3254, 95
        %v3257 = vpop.permute.xlu0 %3256
        %3258 = vrot.lane.b32.xlu0 %v3255, 95
        %v3259 = vpop.permute.xlu0 %3258
        %v3260 = vsel %vm361, %v3257, %v3259
        %v3264 = vmul.f32 %v3234, %v3257
        %v3265 = vmul.f32 %v3235, %v3260
        %v3266 = vmul.f32 %v3236, %v3259
        %v3267 = vld [vmem:[%s206] ss:$8 sm:$0x3]
        %v3269 = vperm.slane %v3267, 0
        %v3270 = vperm.slane %v3267, 1
        %3271 = vrot.lane.b32.xlu0 %v3269, 97
        %v3272 = vpop.permute.xlu0 %3271
        %3273 = vrot.lane.b32.xlu0 %v3270, 97
        %v3274 = vpop.permute.xlu0 %3273
        %v3275 = vsel %vm546, %v3272, %v3274
        %v3279 = vmul.f32 %v3234, %v3272
        %v3280 = vmul.f32 %v3235, %v3275
        %v3281 = vmul.f32 %v3236, %v3274
        %v3282 = vld [vmem:[%s554] ss:$8 sm:$0x3]
        %v3284 = vperm.slane %v3282, 0
        %v3285 = vperm.slane %v3282, 1
        %3286 = vrot.lane.b32.xlu0 %v3284, 98
        %v3287 = vpop.permute.xlu0 %3286
        %3288 = vrot.lane.b32.xlu0 %v3285, 98
        %v3289 = vpop.permute.xlu0 %3288
        %v3290 = vsel %vm563, %v3287, %v3289
        %v3294 = vmul.f32 %v3234, %v3287
        %v3295 = vmul.f32 %v3235, %v3290
        %v3296 = vmul.f32 %v3236, %v3289
        %3297 = vrot.lane.b32.xlu0 %v3239, 110
        %v3298 = vpop.permute.xlu0 %3297
        %3299 = vrot.lane.b32.xlu0 %v3240, 110
        %v3300 = vpop.permute.xlu0 %3299
        %v3301 = vsel %vm333, %v3298, %v3300
        %v3305 = vmul.f32 %v3234, %v3298
        %v3306 = vmul.f32 %v3235, %v3301
        %v3307 = vmul.f32 %v3236, %v3300
        %3308 = vrot.lane.b32.xlu0 %v3254, 111
        %v3309 = vpop.permute.xlu0 %3308
        %3310 = vrot.lane.b32.xlu0 %v3255, 111
        %v3311 = vpop.permute.xlu0 %3310
        %v3312 = vsel %vm198, %v3309, %v3311
        %v3316 = vmul.f32 %v3234, %v3309
        %v3317 = vmul.f32 %v3235, %v3312
        %v3318 = vmul.f32 %v3236, %v3311
        %3319 = vrot.lane.b32.xlu0 %v3269, 113
        %v3320 = vpop.permute.xlu0 %3319
        %3321 = vrot.lane.b32.xlu0 %v3270, 113
        %v3322 = vpop.permute.xlu0 %3321
        %v3323 = vsel %vm215, %v3320, %v3322
        %v3327 = vmul.f32 %v3234, %v3320
        %v3328 = vmul.f32 %v3235, %v3323
        %v3329 = vmul.f32 %v3236, %v3322
        %3330 = vrot.lane.b32.xlu0 %v3284, 114
        %v3331 = vpop.permute.xlu0 %3330
        %3332 = vrot.lane.b32.xlu0 %v3285, 114
        %v3333 = vpop.permute.xlu0 %3332
        %v3334 = vsel %vm608, %v3331, %v3333
        %v3338 = vmul.f32 %v3234, %v3331
        %v3339 = vmul.f32 %v3235, %v3334
        %v3340 = vmul.f32 %v3236, %v3333
        %3341 = vrot.lane.b32.xlu0 %v3239, 126
        %v3342 = vpop.permute.xlu0 %3341
        %3343 = vrot.lane.b32.xlu0 %v3240, 126
        %v3344 = vpop.permute.xlu0 %3343
        %v3345 = vsel %vm295, %v3342, %v3344
        %v3349 = vmul.f32 %v3234, %v3342
        %v3350 = vmul.f32 %v3235, %v3345
        %v3351 = vmul.f32 %v3236, %v3344
        %3352 = vrot.lane.b32.xlu0 %v3254, 127
        %v3353 = vpop.permute.xlu0 %3352
        %3354 = vrot.lane.b32.xlu0 %v3255, 127
        %v3355 = vpop.permute.xlu0 %3354
        %v3356 = vsel %vm227, %v3353, %v3355
        %v3360 = vmul.f32 %v3234, %v3353
        %v3361 = vmul.f32 %v3235, %v3356
        %v3362 = vmul.f32 %v3236, %v3355
        %v3363 = vld [vmem:[#allocation2 + $0x18] sm:$0xff]
        %3364 = vrot.lane.b32.xlu0 %v3269, 1
        %v3365 = vpop.permute.xlu0 %3364
        %3366 = vrot.lane.b32.xlu0 %v3270, 1
        %v3367 = vpop.permute.xlu0 %3366
        %v3368 = vsel %vm240, %v3365, %v3367
        %v3372 = vmul.f32 %v3235, %v3365
        %v3373 = vmul.f32 %v3236, %v3368
        %v3374 = vmul.f32 %v3363, %v3367
        %3375 = vrot.lane.b32.xlu0 %v3284, 2
        %v3376 = vpop.permute.xlu0 %3375
        %3377 = vrot.lane.b32.xlu0 %v3285, 2
        %v3378 = vpop.permute.xlu0 %3377
        %v3379 = vsel %vm654, %v3376, %v3378
        %v3383 = vmul.f32 %v3235, %v3376
        %v3384 = vmul.f32 %v3236, %v3379
        %v3385 = vmul.f32 %v3363, %v3378
        %3386 = vrot.lane.b32.xlu0 %v3239, 14
        %v3387 = vpop.permute.xlu0 %3386
        %3388 = vrot.lane.b32.xlu0 %v3240, 14
        %v3389 = vpop.permute.xlu0 %3388
        %v3390 = vsel %vm666, %v3387, %v3389
        %v3394 = vmul.f32 %v3235, %v3387
        %v3395 = vmul.f32 %v3236, %v3390
        %v3396 = vmul.f32 %v3363, %v3389
        %3397 = vrot.lane.b32.xlu0 %v3254, 15
        %v3398 = vpop.permute.xlu0 %3397
        %3399 = vrot.lane.b32.xlu0 %v3255, 15
        %v3400 = vpop.permute.xlu0 %3399
        %v3401 = vsel %vm252, %v3398, %v3400
        %v3405 = vmul.f32 %v3235, %v3398
        %v3406 = vmul.f32 %v3236, %v3401
        %v3407 = vmul.f32 %v3363, %v3400
        %3408 = vrot.lane.b32.xlu0 %v3269, 17
        %v3409 = vpop.permute.xlu0 %3408
        %3410 = vrot.lane.b32.xlu0 %v3270, 17
        %v3411 = vpop.permute.xlu0 %3410
        %v3412 = vsel %vm264, %v3409, %v3411
        %v3416 = vmul.f32 %v3235, %v3409
        %v3417 = vmul.f32 %v3236, %v3412
        %v3418 = vmul.f32 %v3363, %v3411
        %3419 = vrot.lane.b32.xlu0 %v3284, 18
        %v3420 = vpop.permute.xlu0 %3419
        %3421 = vrot.lane.b32.xlu0 %v3285, 18
        %v3422 = vpop.permute.xlu0 %3421
        %v3423 = vsel %vm700, %v3420, %v3422
        %v3427 = vmul.f32 %v3235, %v3420
        %v3428 = vmul.f32 %v3236, %v3423
        %v3429 = vmul.f32 %v3363, %v3422
        %3430 = vrot.lane.b32.xlu0 %v3239, 30
        %v3431 = vpop.permute.xlu0 %3430
        %3432 = vrot.lane.b32.xlu0 %v3240, 30
        %v3433 = vpop.permute.xlu0 %3432
        %v3434 = vsel %vm712, %v3431, %v3433
        %v3438 = vmul.f32 %v3235, %v3431
        %v3439 = vmul.f32 %v3236, %v3434
        %v3440 = vmul.f32 %v3363, %v3433
        %3441 = vrot.lane.b32.xlu0 %v3254, 31
        %v3442 = vpop.permute.xlu0 %3441
        %3443 = vrot.lane.b32.xlu0 %v3255, 31
        %v3444 = vpop.permute.xlu0 %3443
        %v3445 = vsel %vm724, %v3442, %v3444
        %v3449 = vmul.f32 %v3235, %v3442
        %v3450 = vmul.f32 %v3236, %v3445
        %v3451 = vmul.f32 %v3363, %v3444
        %3452 = vrot.lane.b32.xlu0 %v3269, 33
        %v3453 = vpop.permute.xlu0 %3452
        %3454 = vrot.lane.b32.xlu0 %v3270, 33
        %v3455 = vpop.permute.xlu0 %3454
        %v3456 = vsel %vm736, %v3453, %v3455
        %v3460 = vmul.f32 %v3235, %v3453
        %v3461 = vmul.f32 %v3236, %v3456
        %v3462 = vmul.f32 %v3363, %v3455
        %3463 = vrot.lane.b32.xlu0 %v3284, 34
        %v3464 = vpop.permute.xlu0 %3463
        %3465 = vrot.lane.b32.xlu0 %v3285, 34
        %v3466 = vpop.permute.xlu0 %3465
        %v3467 = vsel %vm748, %v3464, %v3466
        %v3471 = vmul.f32 %v3235, %v3464
        %v3472 = vmul.f32 %v3236, %v3467
        %v3473 = vmul.f32 %v3363, %v3466
        %3477 = vrot.lane.b32.xlu0 %v3264, 127
        %v3478 = vpop.permute.xlu0 %3477
        %3479 = vrot.lane.b32.xlu0 %v3265, 127
        %v3480 = vpop.permute.xlu0 %3479
        %3481 = vrot.lane.b32.xlu0 %v3266, 127
        %v3482 = vpop.permute.xlu0 %3481
        %v3483 = vsel %vm227, %v3478, %v3480
        %v3484 = vsel %vm227, %v3480, %v3482
        %3491 = vrot.lane.b32.xlu0 %v3234, 126
        %v3492 = vpop.permute.xlu0 %3491
        %3493 = vrot.lane.b32.xlu0 %v3235, 126
        %v3494 = vpop.permute.xlu0 %3493
        %3495 = vrot.lane.b32.xlu0 %v3236, 126
        %v3496 = vpop.permute.xlu0 %3495
        %v3497 = vsel %vm295, %v3492, %v3494
        %v3498 = vsel %vm295, %v3494, %v3496
        %3505 = vrot.lane.b32.xlu0 %v3279, 125
        %v3506 = vpop.permute.xlu0 %3505
        %3507 = vrot.lane.b32.xlu0 %v3280, 125
        %v3508 = vpop.permute.xlu0 %3507
        %3509 = vrot.lane.b32.xlu0 %v3281, 125
        %v3510 = vpop.permute.xlu0 %3509
        %v3511 = vsel %vm793, %v3506, %v3508
        %v3512 = vsel %vm793, %v3508, %v3510
        %3519 = vrot.lane.b32.xlu0 %v3294, 124
        %v3520 = vpop.permute.xlu0 %3519
        %3521 = vrot.lane.b32.xlu0 %v3295, 124
        %v3522 = vpop.permute.xlu0 %3521
        %3523 = vrot.lane.b32.xlu0 %v3296, 124
        %v3524 = vpop.permute.xlu0 %3523
        %v3525 = vsel %vm808, %v3520, %v3522
        %v3526 = vsel %vm808, %v3522, %v3524
        %3533 = vrot.lane.b32.xlu0 %v3305, 112
        %v3534 = vpop.permute.xlu0 %3533
        %3535 = vrot.lane.b32.xlu0 %v3306, 112
        %v3536 = vpop.permute.xlu0 %3535
        %3537 = vrot.lane.b32.xlu0 %v3307, 112
        %v3538 = vpop.permute.xlu0 %3537
        %v3539 = vsel %vm310, %v3534, %v3536
        %v3540 = vsel %vm310, %v3536, %v3538
        %3547 = vrot.lane.b32.xlu0 %v3316, 111
        %v3548 = vpop.permute.xlu0 %3547
        %3549 = vrot.lane.b32.xlu0 %v3317, 111
        %v3550 = vpop.permute.xlu0 %3549
        %3551 = vrot.lane.b32.xlu0 %v3318, 111
        %v3552 = vpop.permute.xlu0 %3551
        %v3553 = vsel %vm198, %v3548, %v3550
        %v3554 = vsel %vm198, %v3550, %v3552
        %3558 = vrot.lane.b32.xlu0 %v3234, 110
        %v3559 = vpop.permute.xlu0 %3558
        %3560 = vrot.lane.b32.xlu0 %v3235, 110
        %v3561 = vpop.permute.xlu0 %3560
        %3562 = vrot.lane.b32.xlu0 %v3236, 110
        %v3563 = vpop.permute.xlu0 %3562
        %v3564 = vsel %vm333, %v3559, %v3561
        %v3565 = vsel %vm333, %v3561, %v3563
        %3572 = vrot.lane.b32.xlu0 %v3327, 109
        %v3573 = vpop.permute.xlu0 %3572
        %3574 = vrot.lane.b32.xlu0 %v3328, 109
        %v3575 = vpop.permute.xlu0 %3574
        %3576 = vrot.lane.b32.xlu0 %v3329, 109
        %v3577 = vpop.permute.xlu0 %3576
        %v3578 = vsel %vm862, %v3573, %v3575
        %v3579 = vsel %vm862, %v3575, %v3577
        %3586 = vrot.lane.b32.xlu0 %v3338, 108
        %v3587 = vpop.permute.xlu0 %3586
        %3588 = vrot.lane.b32.xlu0 %v3339, 108
        %v3589 = vpop.permute.xlu0 %3588
        %3590 = vrot.lane.b32.xlu0 %v3340, 108
        %v3591 = vpop.permute.xlu0 %3590
        %v3592 = vsel %vm877, %v3587, %v3589
        %v3593 = vsel %vm877, %v3589, %v3591
        %3600 = vrot.lane.b32.xlu0 %v3349, 96
        %v3601 = vpop.permute.xlu0 %3600
        %3602 = vrot.lane.b32.xlu0 %v3350, 96
        %v3603 = vpop.permute.xlu0 %3602
        %3604 = vrot.lane.b32.xlu0 %v3351, 96
        %v3605 = vpop.permute.xlu0 %3604
        %v3606 = vsel %vm348, %v3601, %v3603
        %v3607 = vsel %vm348, %v3603, %v3605
        %3614 = vrot.lane.b32.xlu0 %v3360, 95
        %v3615 = vpop.permute.xlu0 %3614
        %3616 = vrot.lane.b32.xlu0 %v3361, 95
        %v3617 = vpop.permute.xlu0 %3616
        %3618 = vrot.lane.b32.xlu0 %v3362, 95
        %v3619 = vpop.permute.xlu0 %3618
        %v3620 = vsel %vm361, %v3615, %v3617
        %v3621 = vsel %vm361, %v3617, %v3619
        %3625 = vrot.lane.b32.xlu0 %v3235, 94
        %v3626 = vpop.permute.xlu0 %3625
        %3627 = vrot.lane.b32.xlu0 %v3236, 94
        %v3628 = vpop.permute.xlu0 %3627
        %v3629 = vsel %vm376, %v3626, %v3628
        %3636 = vrot.lane.b32.xlu0 %v3372, 93
        %v3637 = vpop.permute.xlu0 %3636
        %3638 = vrot.lane.b32.xlu0 %v3373, 93
        %v3639 = vpop.permute.xlu0 %3638
        %3640 = vrot.lane.b32.xlu0 %v3374, 93
        %v3641 = vpop.permute.xlu0 %3640
        %v3642 = vsel %vm928, %v3637, %v3639
        %v3643 = vsel %vm928, %v3639, %v3641
        %3650 = vrot.lane.b32.xlu0 %v3383, 92
        %v3651 = vpop.permute.xlu0 %3650
        %3652 = vrot.lane.b32.xlu0 %v3384, 92
        %v3653 = vpop.permute.xlu0 %3652
        %3654 = vrot.lane.b32.xlu0 %v3385, 92
        %v3655 = vpop.permute.xlu0 %3654
        %v3656 = vsel %vm943, %v3651, %v3653
        %v3657 = vsel %vm943, %v3653, %v3655
        %3664 = vrot.lane.b32.xlu0 %v3394, 80
        %v3665 = vpop.permute.xlu0 %3664
        %3666 = vrot.lane.b32.xlu0 %v3395, 80
        %v3667 = vpop.permute.xlu0 %3666
        %3668 = vrot.lane.b32.xlu0 %v3396, 80
        %v3669 = vpop.permute.xlu0 %3668
        %v3670 = vsel %vm958, %v3665, %v3667
        %v3671 = vsel %vm958, %v3667, %v3669
        %3676 = vrot.lane.b32.xlu0 %v3235, 127
        %v3677 = vpop.permute.xlu0 %3676
        %3678 = vrot.lane.b32.xlu0 %v3236, 127
        %v3679 = vpop.permute.xlu0 %3678
        %3680 = vrot.lane.b32.xlu0 %v3363, 127
        %v3681 = vpop.permute.xlu0 %3680
        %v3682 = vsel %vm227, %v3677, %v3679
        %v3683 = vsel %vm227, %v3679, %v3681
        %3687 = vrot.lane.b32.xlu0 %v3416, 126
        %v3688 = vpop.permute.xlu0 %3687
        %3689 = vrot.lane.b32.xlu0 %v3417, 126
        %v3690 = vpop.permute.xlu0 %3689
        %3691 = vrot.lane.b32.xlu0 %v3418, 126
        %v3692 = vpop.permute.xlu0 %3691
        %v3693 = vsel %vm295, %v3688, %v3690
        %v3694 = vsel %vm295, %v3690, %v3692
        %3698 = vrot.lane.b32.xlu0 %v3427, 125
        %v3699 = vpop.permute.xlu0 %3698
        %3700 = vrot.lane.b32.xlu0 %v3428, 125
        %v3701 = vpop.permute.xlu0 %3700
        %3702 = vrot.lane.b32.xlu0 %v3429, 125
        %v3703 = vpop.permute.xlu0 %3702
        %v3704 = vsel %vm793, %v3699, %v3701
        %v3705 = vsel %vm793, %v3701, %v3703
        %3709 = vrot.lane.b32.xlu0 %v3438, 113
        %v3710 = vpop.permute.xlu0 %3709
        %3711 = vrot.lane.b32.xlu0 %v3439, 113
        %v3712 = vpop.permute.xlu0 %3711
        %3713 = vrot.lane.b32.xlu0 %v3440, 113
        %v3714 = vpop.permute.xlu0 %3713
        %v3715 = vsel %vm215, %v3710, %v3712
        %v3716 = vsel %vm215, %v3712, %v3714
        %3720 = vrot.lane.b32.xlu0 %v3449, 112
        %v3721 = vpop.permute.xlu0 %3720
        %3722 = vrot.lane.b32.xlu0 %v3450, 112
        %v3723 = vpop.permute.xlu0 %3722
        %3724 = vrot.lane.b32.xlu0 %v3451, 112
        %v3725 = vpop.permute.xlu0 %3724
        %v3726 = vsel %vm310, %v3721, %v3723
        %v3727 = vsel %vm310, %v3723, %v3725
        %3728 = vrot.lane.b32.xlu0 %v3235, 111
        %v3729 = vpop.permute.xlu0 %3728
        %3730 = vrot.lane.b32.xlu0 %v3236, 111
        %v3731 = vpop.permute.xlu0 %3730
        %3732 = vrot.lane.b32.xlu0 %v3363, 111
        %v3733 = vpop.permute.xlu0 %3732
        %v3734 = vsel %vm198, %v3729, %v3731
        %v3735 = vsel %vm198, %v3731, %v3733
        %3739 = vrot.lane.b32.xlu0 %v3460, 110
        %v3740 = vpop.permute.xlu0 %3739
        %3741 = vrot.lane.b32.xlu0 %v3461, 110
        %v3742 = vpop.permute.xlu0 %3741
        %3743 = vrot.lane.b32.xlu0 %v3462, 110
        %v3744 = vpop.permute.xlu0 %3743
        %v3745 = vsel %vm333, %v3740, %v3742
        %v3746 = vsel %vm333, %v3742, %v3744
        %3750 = vrot.lane.b32.xlu0 %v3471, 109
        %v3751 = vpop.permute.xlu0 %3750
        %3752 = vrot.lane.b32.xlu0 %v3472, 109
        %v3753 = vpop.permute.xlu0 %3752
        %3754 = vrot.lane.b32.xlu0 %v3473, 109
        %v3755 = vpop.permute.xlu0 %3754
        %v3756 = vsel %vm862, %v3751, %v3753
        %v3757 = vsel %vm862, %v3753, %v3755
        %3761 = vrot.lane.b32.xlu0 %v3405, 79
        %v3762 = vpop.permute.xlu0 %3761
        %3763 = vrot.lane.b32.xlu0 %v3406, 79
        %v3764 = vpop.permute.xlu0 %3763
        %3765 = vrot.lane.b32.xlu0 %v3407, 79
        %v3766 = vpop.permute.xlu0 %3765
        %3767 = vrot.lane.b32.xlu0 %v3682, 79
        %v3768 = vpop.permute.xlu0 %3767
        %3769 = vrot.lane.b32.xlu0 %v3683, 79
        %v3770 = vpop.permute.xlu0 %3769
        %3771 = vrot.lane.b32.xlu0 %v3681, 79
        %v3772 = vpop.permute.xlu0 %3771
        %3773 = vrot.lane.b32.xlu0 %v3693, 79
        %v3774 = vpop.permute.xlu0 %3773
        %3775 = vrot.lane.b32.xlu0 %v3694, 79
        %v3776 = vpop.permute.xlu0 %3775
        %3777 = vrot.lane.b32.xlu0 %v3692, 79
        %v3778 = vpop.permute.xlu0 %3777
        %3779 = vrot.lane.b32.xlu0 %v3704, 79
        %v3780 = vpop.permute.xlu0 %3779
        %3781 = vrot.lane.b32.xlu0 %v3705, 79
        %v3782 = vpop.permute.xlu0 %3781
        %3783 = vrot.lane.b32.xlu0 %v3703, 79
        %v3784 = vpop.permute.xlu0 %3783
        %3785 = vrot.lane.b32.xlu0 %v3715, 79
        %v3786 = vpop.permute.xlu0 %3785
        %3787 = vrot.lane.b32.xlu0 %v3716, 79
        %v3788 = vpop.permute.xlu0 %3787
        %3789 = vrot.lane.b32.xlu0 %v3714, 79
        %v3790 = vpop.permute.xlu0 %3789
        %3791 = vrot.lane.b32.xlu0 %v3726, 79
        %v3792 = vpop.permute.xlu0 %3791
        %3793 = vrot.lane.b32.xlu0 %v3727, 79
        %v3794 = vpop.permute.xlu0 %3793
        %3795 = vrot.lane.b32.xlu0 %v3725, 79
        %v3796 = vpop.permute.xlu0 %3795
        %3797 = vrot.lane.b32.xlu0 %v3734, 79
        %v3798 = vpop.permute.xlu0 %3797
        %3799 = vrot.lane.b32.xlu0 %v3735, 79
        %v3800 = vpop.permute.xlu0 %3799
        %3801 = vrot.lane.b32.xlu0 %v3733, 79
        %v3802 = vpop.permute.xlu0 %3801
        %3803 = vrot.lane.b32.xlu0 %v3745, 79
        %v3804 = vpop.permute.xlu0 %3803
        %3805 = vrot.lane.b32.xlu0 %v3746, 79
        %v3806 = vpop.permute.xlu0 %3805
        %3807 = vrot.lane.b32.xlu0 %v3744, 79
        %v3808 = vpop.permute.xlu0 %3807
        %3809 = vrot.lane.b32.xlu0 %v3756, 79
        %v3810 = vpop.permute.xlu0 %3809
        %3811 = vrot.lane.b32.xlu0 %v3757, 79
        %v3812 = vpop.permute.xlu0 %3811
        %3813 = vrot.lane.b32.xlu0 %v3755, 79
        %v3814 = vpop.permute.xlu0 %3813
        %v3815 = vsel %vm1104, %v3762, %v3764
        %v3816 = vsel %vm1104, %v3764, %v3766
        %v3817 = vsel %vm1104, %v3768, %v3770
        %v3818 = vsel %vm1104, %v3770, %v3772
        %v3819 = vsel %vm1104, %v3774, %v3776
        %v3820 = vsel %vm1104, %v3776, %v3778
        %v3821 = vsel %vm1104, %v3780, %v3782
        %v3822 = vsel %vm1104, %v3782, %v3784
        %v3823 = vsel %vm1104, %v3786, %v3788
        %v3824 = vsel %vm1104, %v3788, %v3790
        %v3825 = vsel %vm1104, %v3792, %v3794
        %v3826 = vsel %vm1104, %v3794, %v3796
        %v3827 = vsel %vm1104, %v3798, %v3800
        %v3828 = vsel %vm1104, %v3800, %v3802
        %v3829 = vsel %vm1104, %v3804, %v3806
        %v3830 = vsel %vm1104, %v3806, %v3808
        %v3831 = vsel %vm1104, %v3810, %v3812
        %v3832 = vsel %vm1104, %v3812, %v3814
        %v3860 = vpack.c.bf16 %v3483, %v3249
        %v3861 = vpack.c.bf16 %v3484, %v3250
        %v3862 = vpack.c.bf16 %v3482, %v3251
        %v3863 = vpack.c.bf16 %v3511, %v3497
        %v3864 = vpack.c.bf16 %v3512, %v3498
        %v3865 = vpack.c.bf16 %v3510, %v3496
        %v3866 = vpack.c.bf16 %v3539, %v3525
        %v3867 = vpack.c.bf16 %v3540, %v3526
        %v3868 = vpack.c.bf16 %v3538, %v3524
        %v3869 = vpack.c.bf16 %v3564, %v3553
        %v3870 = vpack.c.bf16 %v3565, %v3554
        %v3871 = vpack.c.bf16 %v3563, %v3552
        %v3872 = vpack.c.bf16 %v3592, %v3578
        %v3873 = vpack.c.bf16 %v3593, %v3579
        %v3874 = vpack.c.bf16 %v3591, %v3577
        %v3875 = vpack.c.bf16 %v3620, %v3606
        %v3876 = vpack.c.bf16 %v3621, %v3607
        %v3877 = vpack.c.bf16 %v3619, %v3605
        %v3878 = vpack.c.bf16 %v3637, %v3626
        %v3879 = vpack.c.bf16 %v3642, %v3629
        %v3880 = vpack.c.bf16 %v3643, %v3628
        %v3881 = vpack.c.bf16 %v3665, %v3651
        %v3882 = vpack.c.bf16 %v3670, %v3656
        %v3883 = vpack.c.bf16 %v3671, %v3657
        %v3884 = vpack.c.bf16 %v3768, %v3762
        %v3885 = vpack.c.bf16 %v3817, %v3815
        %v3886 = vpack.c.bf16 %v3818, %v3816
        %v3887 = vpack.c.bf16 %v3780, %v3774
        %v3888 = vpack.c.bf16 %v3821, %v3819
        %v3889 = vpack.c.bf16 %v3822, %v3820
        %v3890 = vpack.c.bf16 %v3792, %v3786
        %v3891 = vpack.c.bf16 %v3825, %v3823
        %v3892 = vpack.c.bf16 %v3826, %v3824
        %v3893 = vpack.c.bf16 %v3804, %v3798
        %v3894 = vpack.c.bf16 %v3829, %v3827
        %v3895 = vpack.c.bf16 %v3830, %v3828
        %v3896 = vpack.c.bf16 %v3810, %v3810
        %v3897 = vpack.c.bf16 %v3831, %v3831
        %v3898 = vpack.c.bf16 %v3832, %v3832
        %v3899 = vld [vmem:[#allocation3 + $0x90] sm:$0xff]
        %v3900 = vld [vmem:[#allocation3 + $0x98] sm:$0xff]
        %v3901 = vpack.c.bf16 %v3899, %v3899
        %v3902 = vpack.c.bf16 %v3900, %v3900
        %v3903 = vld [vmem:[#allocation3 + $0xa0] sm:$0xff]
        %v3904 = vld [vmem:[#allocation3 + $0xa8] sm:$0xff]
        %3944 = vrot.lane.b32.xlu0 %v3860, 34
        %v3945 = vpop.permute.xlu0 %3944
        %3946 = vrot.lane.b32.xlu0 %v3861, 34
        %v3947 = vpop.permute.xlu0 %3946
        %3948 = vrot.lane.b32.xlu0 %v3862, 34
        %v3949 = vpop.permute.xlu0 %3948
        %3950 = vrot.lane.b32.xlu0 %v3863, 34
        %v3951 = vpop.permute.xlu0 %3950
        %3952 = vrot.lane.b32.xlu0 %v3864, 34
        %v3953 = vpop.permute.xlu0 %3952
        %3954 = vrot.lane.b32.xlu0 %v3865, 34
        %v3955 = vpop.permute.xlu0 %3954
        %3956 = vrot.lane.b32.xlu0 %v3866, 34
        %v3957 = vpop.permute.xlu0 %3956
        %3958 = vrot.lane.b32.xlu0 %v3867, 34
        %v3959 = vpop.permute.xlu0 %3958
        %3960 = vrot.lane.b32.xlu0 %v3868, 34
        %v3961 = vpop.permute.xlu0 %3960
        %3962 = vrot.lane.b32.xlu0 %v3869, 34
        %v3963 = vpop.permute.xlu0 %3962
        %3964 = vrot.lane.b32.xlu0 %v3870, 34
        %v3965 = vpop.permute.xlu0 %3964
        %3966 = vrot.lane.b32.xlu0 %v3871, 34
        %v3967 = vpop.permute.xlu0 %3966
        %3968 = vrot.lane.b32.xlu0 %v3872, 34
        %v3969 = vpop.permute.xlu0 %3968
        %3970 = vrot.lane.b32.xlu0 %v3873, 34
        %v3971 = vpop.permute.xlu0 %3970
        %3972 = vrot.lane.b32.xlu0 %v3874, 34
        %v3973 = vpop.permute.xlu0 %3972
        %3974 = vrot.lane.b32.xlu0 %v3875, 34
        %v3975 = vpop.permute.xlu0 %3974
        %3976 = vrot.lane.b32.xlu0 %v3876, 34
        %v3977 = vpop.permute.xlu0 %3976
        %3978 = vrot.lane.b32.xlu0 %v3877, 34
        %v3979 = vpop.permute.xlu0 %3978
        %3980 = vrot.lane.b32.xlu0 %v3878, 34
        %v3981 = vpop.permute.xlu0 %3980
        %3982 = vrot.lane.b32.xlu0 %v3879, 34
        %v3983 = vpop.permute.xlu0 %3982
        %3984 = vrot.lane.b32.xlu0 %v3880, 34
        %v3985 = vpop.permute.xlu0 %3984
        %3986 = vrot.lane.b32.xlu0 %v3881, 34
        %v3987 = vpop.permute.xlu0 %3986
        %3988 = vrot.lane.b32.xlu0 %v3882, 34
        %v3989 = vpop.permute.xlu0 %3988
        %3990 = vrot.lane.b32.xlu0 %v3883, 34
        %v3991 = vpop.permute.xlu0 %3990
        %3992 = vrot.lane.b32.xlu0 %v3884, 34
        %v3993 = vpop.permute.xlu0 %3992
        %3994 = vrot.lane.b32.xlu0 %v3885, 34
        %v3995 = vpop.permute.xlu0 %3994
        %3996 = vrot.lane.b32.xlu0 %v3886, 34
        %v3997 = vpop.permute.xlu0 %3996
        %3998 = vrot.lane.b32.xlu0 %v3887, 34
        %v3999 = vpop.permute.xlu0 %3998
        %4000 = vrot.lane.b32.xlu0 %v3888, 34
        %v4001 = vpop.permute.xlu0 %4000
        %4002 = vrot.lane.b32.xlu0 %v3889, 34
        %v4003 = vpop.permute.xlu0 %4002
        %4004 = vrot.lane.b32.xlu0 %v3890, 34
        %v4005 = vpop.permute.xlu0 %4004
        %4006 = vrot.lane.b32.xlu0 %v3891, 34
        %v4007 = vpop.permute.xlu0 %4006
        %4008 = vrot.lane.b32.xlu0 %v3892, 34
        %v4009 = vpop.permute.xlu0 %4008
        %4010 = vrot.lane.b32.xlu0 %v3893, 34
        %v4011 = vpop.permute.xlu0 %4010
        %4012 = vrot.lane.b32.xlu0 %v3894, 34
        %v4013 = vpop.permute.xlu0 %4012
        %4014 = vrot.lane.b32.xlu0 %v3895, 34
        %v4015 = vpop.permute.xlu0 %4014
        %4016 = vrot.lane.b32.xlu0 %v3896, 34
        %v4017 = vpop.permute.xlu0 %4016
        %4018 = vrot.lane.b32.xlu0 %v3897, 34
        %v4019 = vpop.permute.xlu0 %4018
        %4020 = vrot.lane.b32.xlu0 %v3898, 34
        %v4021 = vpop.permute.xlu0 %4020
        %v4022 = vsel %vm1312, %v3945, %v3947
        %v4023 = vsel %vm1312, %v3947, %v3949
        %v4024 = vsel %vm1312, %v3951, %v3953
        %v4025 = vsel %vm1312, %v3953, %v3955
        %v4026 = vsel %vm1312, %v3957, %v3959
        %v4027 = vsel %vm1312, %v3959, %v3961
        %v4028 = vsel %vm1312, %v3963, %v3965
        %v4029 = vsel %vm1312, %v3965, %v3967
        %v4030 = vsel %vm1312, %v3969, %v3971
        %v4031 = vsel %vm1312, %v3971, %v3973
        %v4032 = vsel %vm1312, %v3975, %v3977
        %v4033 = vsel %vm1312, %v3977, %v3979
        %v4034 = vsel %vm1312, %v3981, %v3983
        %v4035 = vsel %vm1312, %v3983, %v3985
        %v4036 = vsel %vm1312, %v3987, %v3989
        %v4037 = vsel %vm1312, %v3989, %v3991
        %v4038 = vsel %vm1312, %v3993, %v3995
        %v4039 = vsel %vm1312, %v3995, %v3997
        %v4040 = vsel %vm1312, %v3999, %v4001
        %v4041 = vsel %vm1312, %v4001, %v4003
        %v4042 = vsel %vm1312, %v4005, %v4007
        %v4043 = vsel %vm1312, %v4007, %v4009
        %v4044 = vsel %vm1312, %v4011, %v4013
        %v4045 = vsel %vm1312, %v4013, %v4015
        %v4046 = vsel %vm1312, %v4017, %v4019
        %v4047 = vsel %vm1312, %v4019, %v4021
        %v4073 = vsel %vm465, %v3902, 0
        %v4076 = vsel %vm469, %v4046, 0
        %v4079 = vsel %vm469, %v4047, 0
        %4081 = vmatpush.bf16.msra.mxu0 %v4036
        %4082 = vmatpush.bf16.msra.mxu0 %v4034
        %4083 = vmatpush.bf16.msra.mxu0 %v4032
        %4084 = vmatpush.bf16.msra.mxu0 %v4030
        %4085 = vmatpush.bf16.msra.mxu0 %v4028
        %4086 = vmatpush.bf16.msra.mxu0 %v4026
        %4087 = vmatpush.bf16.msra.mxu0 %v4024
        %4088 = vmatpush.bf16.msra.mxu0 %v4022
        %4089 = vmatmul.bf16.gmra.mxu0 %v3901
        %v4090 = vpop.f32.mrf.mxu0
        %v4091 = vadd.f32 %v3903, %v4090
        %v4092 = vpop.f32.mrf.mxu0
        %4093 = vdwg.mxu0
        %4094 = vmatpush.bf16.msra.mxu0 0
        %4095 = vmatpush.bf16.msra.mxu0 0
        %4096 = vmatpush.bf16.msra.mxu0 0
        %4097 = vmatpush.bf16.msra.mxu0 %v4076
        %4098 = vmatpush.bf16.msra.mxu0 %v4044
        %4099 = vmatpush.bf16.msra.mxu0 %v4042
        %4100 = vmatpush.bf16.msra.mxu0 %v4040
        %4101 = vmatpush.bf16.msra.mxu0 %v4038
        %4102 = vmatmul.bf16.gmra.mxu0 %v4073
        %v4103 = vpop.f32.mrf.mxu0
        %v4104 = vadd.f32 %v4091, %v4103
        %v4105 = vpop.f32.mrf.mxu0
        %4106 = vdwg.mxu0
        %4107 = vmatpush.bf16.msra.mxu0 %v4037
        %4108 = vmatpush.bf16.msra.mxu0 %v4035
        %4109 = vmatpush.bf16.msra.mxu0 %v4033
        %4110 = vmatpush.bf16.msra.mxu0 %v4031
        %4111 = vmatpush.bf16.msra.mxu0 %v4029
        %4112 = vmatpush.bf16.msra.mxu0 %v4027
        %4113 = vmatpush.bf16.msra.mxu0 %v4025
        %4114 = vmatpush.bf16.msra.mxu0 %v4023
        %4115 = vmatmul.bf16.gmra.mxu0 %v3901
        %v4116 = vpop.f32.mrf.mxu0
        %v4117 = vadd.f32 %v3904, %v4116
        %v4118 = vpop.f32.mrf.mxu0
        %4119 = vdwg.mxu0
        %4120 = vmatpush.bf16.msra.mxu0 0
        %4121 = vmatpush.bf16.msra.mxu0 0
        %4122 = vmatpush.bf16.msra.mxu0 0
        %4123 = vmatpush.bf16.msra.mxu0 %v4079
        %4124 = vmatpush.bf16.msra.mxu0 %v4045
        %4125 = vmatpush.bf16.msra.mxu0 %v4043
        %4126 = vmatpush.bf16.msra.mxu0 %v4041
        %4127 = vmatpush.bf16.msra.mxu0 %v4039
        %4128 = vmatmul.bf16.gmra.mxu0 %v4073
        %v4129 = vpop.f32.mrf.mxu0
        %v4130 = vadd.f32 %v4117, %v4129
        %v4131 = vpop.f32.mrf.mxu0
        %4132 = vdwg.mxu0
        %v4133 = vadd.f32 %v4104, %v2327
        %v4134 = vadd.f32 %v4130, %v2328
        %4135 = vst [vmem:[#allocation2 + $0x8] sm:$0xff] %v4133
        %4136 = vst [vmem:[#allocation2 + $0x10] sm:$0xff] %v4134
        %v4137 = vld [vmem:[#allocation2] sm:$0xff]
        %v4138 = vld [vmem:[#allocation2 + $0x8] sm:$0xff]
        %v4139 = vld [vmem:[#allocation2 + $0x10] sm:$0xff]
        %v4140 = vld [vmem:[%s189] ss:$8 sm:$0x3]
        %v4142 = vperm.slane %v4140, 0
        %v4143 = vperm.slane %v4140, 1
        %4144 = vrot.lane.b32.xlu0 %v4142, 111
        %v4145 = vpop.permute.xlu0 %4144
        %4146 = vrot.lane.b32.xlu0 %v4143, 111
        %v4147 = vpop.permute.xlu0 %4146
        %v4148 = vsel %vm198, %v4145, %v4147
        %v4152 = vmul.f32 %v4137, %v4145
        %v4153 = vmul.f32 %v4138, %v4148
        %v4154 = vmul.f32 %v4139, %v4147
        %v4155 = vld [vmem:[%s206] ss:$8 sm:$0x3]
        %v4157 = vperm.slane %v4155, 0
        %v4158 = vperm.slane %v4155, 1
        %4159 = vrot.lane.b32.xlu0 %v4157, 113
        %v4160 = vpop.permute.xlu0 %4159
        %4161 = vrot.lane.b32.xlu0 %v4158, 113
        %v4162 = vpop.permute.xlu0 %4161
        %v4163 = vsel %vm215, %v4160, %v4162
        %v4167 = vmul.f32 %v4137, %v4160
        %v4168 = vmul.f32 %v4138, %v4163
        %v4169 = vmul.f32 %v4139, %v4162
        %4170 = vrot.lane.b32.xlu0 %v4142, 127
        %v4171 = vpop.permute.xlu0 %4170
        %4172 = vrot.lane.b32.xlu0 %v4143, 127
        %v4173 = vpop.permute.xlu0 %4172
        %v4174 = vsel %vm227, %v4171, %v4173
        %v4178 = vmul.f32 %v4137, %v4171
        %v4179 = vmul.f32 %v4138, %v4174
        %v4180 = vmul.f32 %v4139, %v4173
        %v4181 = vld [vmem:[#allocation2 + $0x18] sm:$0xff]
        %4182 = vrot.lane.b32.xlu0 %v4157, 1
        %v4183 = vpop.permute.xlu0 %4182
        %4184 = vrot.lane.b32.xlu0 %v4158, 1
        %v4185 = vpop.permute.xlu0 %4184
        %v4186 = vsel %vm240, %v4183, %v4185
        %v4190 = vmul.f32 %v4138, %v4183
        %v4191 = vmul.f32 %v4139, %v4186
        %v4192 = vmul.f32 %v4181, %v4185
        %4193 = vrot.lane.b32.xlu0 %v4142, 15
        %v4194 = vpop.permute.xlu0 %4193
        %4195 = vrot.lane.b32.xlu0 %v4143, 15
        %v4196 = vpop.permute.xlu0 %4195
        %v4197 = vsel %vm252, %v4194, %v4196
        %v4201 = vmul.f32 %v4138, %v4194
        %v4202 = vmul.f32 %v4139, %v4197
        %v4203 = vmul.f32 %v4181, %v4196
        %4204 = vrot.lane.b32.xlu0 %v4157, 17
        %v4205 = vpop.permute.xlu0 %4204
        %4206 = vrot.lane.b32.xlu0 %v4158, 17
        %v4207 = vpop.permute.xlu0 %4206
        %v4208 = vsel %vm264, %v4205, %v4207
        %v4212 = vmul.f32 %v4138, %v4205
        %v4213 = vmul.f32 %v4139, %v4208
        %v4214 = vmul.f32 %v4181, %v4207
        %4218 = vrot.lane.b32.xlu0 %v4137, 127
        %v4219 = vpop.permute.xlu0 %4218
        %4220 = vrot.lane.b32.xlu0 %v4138, 127
        %v4221 = vpop.permute.xlu0 %4220
        %4222 = vrot.lane.b32.xlu0 %v4139, 127
        %v4223 = vpop.permute.xlu0 %4222
        %v4224 = vsel %vm227, %v4219, %v4221
        %v4225 = vsel %vm227, %v4221, %v4223
        %4232 = vrot.lane.b32.xlu0 %v4167, 126
        %v4233 = vpop.permute.xlu0 %4232
        %4234 = vrot.lane.b32.xlu0 %v4168, 126
        %v4235 = vpop.permute.xlu0 %4234
        %4236 = vrot.lane.b32.xlu0 %v4169, 126
        %v4237 = vpop.permute.xlu0 %4236
        %v4238 = vsel %vm295, %v4233, %v4235
        %v4239 = vsel %vm295, %v4235, %v4237
        %4246 = vrot.lane.b32.xlu0 %v4178, 112
        %v4247 = vpop.permute.xlu0 %4246
        %4248 = vrot.lane.b32.xlu0 %v4179, 112
        %v4249 = vpop.permute.xlu0 %4248
        %4250 = vrot.lane.b32.xlu0 %v4180, 112
        %v4251 = vpop.permute.xlu0 %4250
        %v4252 = vsel %vm310, %v4247, %v4249
        %v4253 = vsel %vm310, %v4249, %v4251
        %4257 = vrot.lane.b32.xlu0 %v4138, 111
        %v4258 = vpop.permute.xlu0 %4257
        %4259 = vrot.lane.b32.xlu0 %v4139, 111
        %v4260 = vpop.permute.xlu0 %4259
        %v4261 = vsel %vm198, %v4258, %v4260
        %4268 = vrot.lane.b32.xlu0 %v4190, 110
        %v4269 = vpop.permute.xlu0 %4268
        %4270 = vrot.lane.b32.xlu0 %v4191, 110
        %v4271 = vpop.permute.xlu0 %4270
        %4272 = vrot.lane.b32.xlu0 %v4192, 110
        %v4273 = vpop.permute.xlu0 %4272
        %v4274 = vsel %vm333, %v4269, %v4271
        %v4275 = vsel %vm333, %v4271, %v4273
        %4282 = vrot.lane.b32.xlu0 %v4201, 96
        %v4283 = vpop.permute.xlu0 %4282
        %4284 = vrot.lane.b32.xlu0 %v4202, 96
        %v4285 = vpop.permute.xlu0 %4284
        %4286 = vrot.lane.b32.xlu0 %v4203, 96
        %v4287 = vpop.permute.xlu0 %4286
        %v4288 = vsel %vm348, %v4283, %v4285
        %v4289 = vsel %vm348, %v4285, %v4287
        %4294 = vrot.lane.b32.xlu0 %v4138, 95
        %v4295 = vpop.permute.xlu0 %4294
        %4296 = vrot.lane.b32.xlu0 %v4139, 95
        %v4297 = vpop.permute.xlu0 %4296
        %4298 = vrot.lane.b32.xlu0 %v4181, 95
        %v4299 = vpop.permute.xlu0 %4298
        %v4300 = vsel %vm361, %v4295, %v4297
        %v4301 = vsel %vm361, %v4297, %v4299
        %4308 = vrot.lane.b32.xlu0 %v4212, 94
        %v4309 = vpop.permute.xlu0 %4308
        %4310 = vrot.lane.b32.xlu0 %v4213, 94
        %v4311 = vpop.permute.xlu0 %4310
        %4312 = vrot.lane.b32.xlu0 %v4214, 94
        %v4313 = vpop.permute.xlu0 %4312
        %v4314 = vsel %vm376, %v4309, %v4311
        %v4315 = vsel %vm376, %v4311, %v4313
        %v4319 = vpack.c.bf16 %v4224, %v4152
        %v4320 = vpack.c.bf16 %v4225, %v4153
        %v4321 = vpack.c.bf16 %v4223, %v4154
        %v4322 = vpack.c.bf16 %v4252, %v4238
        %v4323 = vpack.c.bf16 %v4253, %v4239
        %v4324 = vpack.c.bf16 %v4251, %v4237
        %v4325 = vpack.c.bf16 %v4269, %v4258
        %v4326 = vpack.c.bf16 %v4274, %v4261
        %v4327 = vpack.c.bf16 %v4275, %v4260
        %v4328 = vpack.c.bf16 %v4295, %v4283
        %v4329 = vpack.c.bf16 %v4300, %v4288
        %v4330 = vpack.c.bf16 %v4301, %v4289
        %v4331 = vpack.c.bf16 %v4309, %v4309
        %v4332 = vpack.c.bf16 %v4314, %v4314
        %v4333 = vpack.c.bf16 %v4315, %v4315
        %v4334 = vld [vmem:[#allocation3 + $0xb0] sm:$0xff]
        %v4335 = vpack.c.bf16 %v4334, %v4334
        %v4336 = vld [vmem:[#allocation3 + $0xc0] sm:$0xff]
        %v4337 = vld [vmem:[#allocation3 + $0xc8] sm:$0xff]
        %4353 = vrot.lane.b32.xlu0 %v4319, 17
        %v4354 = vpop.permute.xlu0 %4353
        %4355 = vrot.lane.b32.xlu0 %v4320, 17
        %v4356 = vpop.permute.xlu0 %4355
        %4357 = vrot.lane.b32.xlu0 %v4321, 17
        %v4358 = vpop.permute.xlu0 %4357
        %4359 = vrot.lane.b32.xlu0 %v4322, 17
        %v4360 = vpop.permute.xlu0 %4359
        %4361 = vrot.lane.b32.xlu0 %v4323, 17
        %v4362 = vpop.permute.xlu0 %4361
        %4363 = vrot.lane.b32.xlu0 %v4324, 17
        %v4364 = vpop.permute.xlu0 %4363
        %4365 = vrot.lane.b32.xlu0 %v4325, 17
        %v4366 = vpop.permute.xlu0 %4365
        %4367 = vrot.lane.b32.xlu0 %v4326, 17
        %v4368 = vpop.permute.xlu0 %4367
        %4369 = vrot.lane.b32.xlu0 %v4327, 17
        %v4370 = vpop.permute.xlu0 %4369
        %4371 = vrot.lane.b32.xlu0 %v4328, 17
        %v4372 = vpop.permute.xlu0 %4371
        %4373 = vrot.lane.b32.xlu0 %v4329, 17
        %v4374 = vpop.permute.xlu0 %4373
        %4375 = vrot.lane.b32.xlu0 %v4330, 17
        %v4376 = vpop.permute.xlu0 %4375
        %4377 = vrot.lane.b32.xlu0 %v4331, 17
        %v4378 = vpop.permute.xlu0 %4377
        %4379 = vrot.lane.b32.xlu0 %v4332, 17
        %v4380 = vpop.permute.xlu0 %4379
        %4381 = vrot.lane.b32.xlu0 %v4333, 17
        %v4382 = vpop.permute.xlu0 %4381
        %v4383 = vsel %vm446, %v4354, %v4356
        %v4384 = vsel %vm446, %v4356, %v4358
        %v4385 = vsel %vm446, %v4360, %v4362
        %v4386 = vsel %vm446, %v4362, %v4364
        %v4387 = vsel %vm446, %v4366, %v4368
        %v4388 = vsel %vm446, %v4368, %v4370
        %v4389 = vsel %vm446, %v4372, %v4374
        %v4390 = vsel %vm446, %v4374, %v4376
        %v4391 = vsel %vm446, %v4378, %v4380
        %v4392 = vsel %vm446, %v4380, %v4382
        %v4402 = vsel %vm465, %v4335, 0
        %v4405 = vsel %vm469, %v4391, 0
        %v4408 = vsel %vm469, %v4392, 0
        %4410 = vmatpush.bf16.msra.mxu0 0
        %4411 = vmatpush.bf16.msra.mxu0 0
        %4412 = vmatpush.bf16.msra.mxu0 0
        %4413 = vmatpush.bf16.msra.mxu0 %v4405
        %4414 = vmatpush.bf16.msra.mxu0 %v4389
        %4415 = vmatpush.bf16.msra.mxu0 %v4387
        %4416 = vmatpush.bf16.msra.mxu0 %v4385
        %4417 = vmatpush.bf16.msra.mxu0 %v4383
        %4418 = vmatmul.bf16.gmra.mxu0 %v4402
        %v4419 = vpop.f32.mrf.mxu0
        %v4420 = vadd.f32 %v4336, %v4419
        %v4421 = vpop.f32.mrf.mxu0
        %4422 = vdwg.mxu0
        %4423 = vmatpush.bf16.msra.mxu0 0
        %4424 = vmatpush.bf16.msra.mxu0 0
        %4425 = vmatpush.bf16.msra.mxu0 0
        %4426 = vmatpush.bf16.msra.mxu0 %v4408
        %4427 = vmatpush.bf16.msra.mxu0 %v4390
        %4428 = vmatpush.bf16.msra.mxu0 %v4388
        %4429 = vmatpush.bf16.msra.mxu0 %v4386
        %4430 = vmatpush.bf16.msra.mxu0 %v4384
        %4431 = vmatmul.bf16.gmra.mxu0 %v4402
        %v4432 = vpop.f32.mrf.mxu0
        %v4433 = vadd.f32 %v4337, %v4432
        %v4434 = vpop.f32.mrf.mxu0
        %4435 = vdwg.mxu0
        %v4436 = vmax.f32 %v4420, 0.0
        %v4437 = vmax.f32 %v4433, 0.0
        %4438 = vst [vmem:[#allocation2 + $0x8] sm:$0xff] %v4436
        %4439 = vst [vmem:[#allocation2 + $0x10] sm:$0xff] %v4437
        %v4440 = vld [vmem:[#allocation2] sm:$0xff]
        %v4441 = vld [vmem:[#allocation2 + $0x8] sm:$0xff]
        %v4442 = vld [vmem:[#allocation2 + $0x10] sm:$0xff]
        %v4443 = vld [vmem:[%s189] ss:$8 sm:$0x3]
        %v4445 = vperm.slane %v4443, 0
        %v4446 = vperm.slane %v4443, 1
        %4447 = vrot.lane.b32.xlu0 %v4445, 111
        %v4448 = vpop.permute.xlu0 %4447
        %4449 = vrot.lane.b32.xlu0 %v4446, 111
        %v4450 = vpop.permute.xlu0 %4449
        %v4451 = vsel %vm198, %v4448, %v4450
        %v4455 = vmul.f32 %v4440, %v4448
        %v4456 = vmul.f32 %v4441, %v4451
        %v4457 = vmul.f32 %v4442, %v4450
        %v4458 = vld [vmem:[%s206] ss:$8 sm:$0x3]
        %v4460 = vperm.slane %v4458, 0
        %v4461 = vperm.slane %v4458, 1
        %4462 = vrot.lane.b32.xlu0 %v4460, 113
        %v4463 = vpop.permute.xlu0 %4462
        %4464 = vrot.lane.b32.xlu0 %v4461, 113
        %v4465 = vpop.permute.xlu0 %4464
        %v4466 = vsel %vm215, %v4463, %v4465
        %v4470 = vmul.f32 %v4440, %v4463
        %v4471 = vmul.f32 %v4441, %v4466
        %v4472 = vmul.f32 %v4442, %v4465
        %4473 = vrot.lane.b32.xlu0 %v4445, 127
        %v4474 = vpop.permute.xlu0 %4473
        %4475 = vrot.lane.b32.xlu0 %v4446, 127
        %v4476 = vpop.permute.xlu0 %4475
        %v4477 = vsel %vm227, %v4474, %v4476
        %v4481 = vmul.f32 %v4440, %v4474
        %v4482 = vmul.f32 %v4441, %v4477
        %v4483 = vmul.f32 %v4442, %v4476
        %v4484 = vld [vmem:[#allocation2 + $0x18] sm:$0xff]
        %4485 = vrot.lane.b32.xlu0 %v4460, 1
        %v4486 = vpop.permute.xlu0 %4485
        %4487 = vrot.lane.b32.xlu0 %v4461, 1
        %v4488 = vpop.permute.xlu0 %4487
        %v4489 = vsel %vm240, %v4486, %v4488
        %v4493 = vmul.f32 %v4441, %v4486
        %v4494 = vmul.f32 %v4442, %v4489
        %v4495 = vmul.f32 %v4484, %v4488
        %4496 = vrot.lane.b32.xlu0 %v4445, 15
        %v4497 = vpop.permute.xlu0 %4496
        %4498 = vrot.lane.b32.xlu0 %v4446, 15
        %v4499 = vpop.permute.xlu0 %4498
        %v4500 = vsel %vm252, %v4497, %v4499
        %v4504 = vmul.f32 %v4441, %v4497
        %v4505 = vmul.f32 %v4442, %v4500
        %v4506 = vmul.f32 %v4484, %v4499
        %4507 = vrot.lane.b32.xlu0 %v4460, 17
        %v4508 = vpop.permute.xlu0 %4507
        %4509 = vrot.lane.b32.xlu0 %v4461, 17
        %v4510 = vpop.permute.xlu0 %4509
        %v4511 = vsel %vm264, %v4508, %v4510
        %v4515 = vmul.f32 %v4441, %v4508
        %v4516 = vmul.f32 %v4442, %v4511
        %v4517 = vmul.f32 %v4484, %v4510
        %4521 = vrot.lane.b32.xlu0 %v4440, 127
        %v4522 = vpop.permute.xlu0 %4521
        %4523 = vrot.lane.b32.xlu0 %v4441, 127
        %v4524 = vpop.permute.xlu0 %4523
        %4525 = vrot.lane.b32.xlu0 %v4442, 127
        %v4526 = vpop.permute.xlu0 %4525
        %v4527 = vsel %vm227, %v4522, %v4524
        %v4528 = vsel %vm227, %v4524, %v4526
        %4535 = vrot.lane.b32.xlu0 %v4470, 126
        %v4536 = vpop.permute.xlu0 %4535
        %4537 = vrot.lane.b32.xlu0 %v4471, 126
        %v4538 = vpop.permute.xlu0 %4537
        %4539 = vrot.lane.b32.xlu0 %v4472, 126
        %v4540 = vpop.permute.xlu0 %4539
        %v4541 = vsel %vm295, %v4536, %v4538
        %v4542 = vsel %vm295, %v4538, %v4540
        %4549 = vrot.lane.b32.xlu0 %v4481, 112
        %v4550 = vpop.permute.xlu0 %4549
        %4551 = vrot.lane.b32.xlu0 %v4482, 112
        %v4552 = vpop.permute.xlu0 %4551
        %4553 = vrot.lane.b32.xlu0 %v4483, 112
        %v4554 = vpop.permute.xlu0 %4553
        %v4555 = vsel %vm310, %v4550, %v4552
        %v4556 = vsel %vm310, %v4552, %v4554
        %4560 = vrot.lane.b32.xlu0 %v4441, 111
        %v4561 = vpop.permute.xlu0 %4560
        %4562 = vrot.lane.b32.xlu0 %v4442, 111
        %v4563 = vpop.permute.xlu0 %4562
        %v4564 = vsel %vm198, %v4561, %v4563
        %4571 = vrot.lane.b32.xlu0 %v4493, 110
        %v4572 = vpop.permute.xlu0 %4571
        %4573 = vrot.lane.b32.xlu0 %v4494, 110
        %v4574 = vpop.permute.xlu0 %4573
        %4575 = vrot.lane.b32.xlu0 %v4495, 110
        %v4576 = vpop.permute.xlu0 %4575
        %v4577 = vsel %vm333, %v4572, %v4574
        %v4578 = vsel %vm333, %v4574, %v4576
        %4585 = vrot.lane.b32.xlu0 %v4504, 96
        %v4586 = vpop.permute.xlu0 %4585
        %4587 = vrot.lane.b32.xlu0 %v4505, 96
        %v4588 = vpop.permute.xlu0 %4587
        %4589 = vrot.lane.b32.xlu0 %v4506, 96
        %v4590 = vpop.permute.xlu0 %4589
        %v4591 = vsel %vm348, %v4586, %v4588
        %v4592 = vsel %vm348, %v4588, %v4590
        %4597 = vrot.lane.b32.xlu0 %v4441, 95
        %v4598 = vpop.permute.xlu0 %4597
        %4599 = vrot.lane.b32.xlu0 %v4442, 95
        %v4600 = vpop.permute.xlu0 %4599
        %4601 = vrot.lane.b32.xlu0 %v4484, 95
        %v4602 = vpop.permute.xlu0 %4601
        %v4603 = vsel %vm361, %v4598, %v4600
        %v4604 = vsel %vm361, %v4600, %v4602
        %4611 = vrot.lane.b32.xlu0 %v4515, 94
        %v4612 = vpop.permute.xlu0 %4611
        %4613 = vrot.lane.b32.xlu0 %v4516, 94
        %v4614 = vpop.permute.xlu0 %4613
        %4615 = vrot.lane.b32.xlu0 %v4517, 94
        %v4616 = vpop.permute.xlu0 %4615
        %v4617 = vsel %vm376, %v4612, %v4614
        %v4618 = vsel %vm376, %v4614, %v4616
        %v4622 = vpack.c.bf16 %v4527, %v4455
        %v4623 = vpack.c.bf16 %v4528, %v4456
        %v4624 = vpack.c.bf16 %v4526, %v4457
        %v4625 = vpack.c.bf16 %v4555, %v4541
        %v4626 = vpack.c.bf16 %v4556, %v4542
        %v4627 = vpack.c.bf16 %v4554, %v4540
        %v4628 = vpack.c.bf16 %v4572, %v4561
        %v4629 = vpack.c.bf16 %v4577, %v4564
        %v4630 = vpack.c.bf16 %v4578, %v4563
        %v4631 = vpack.c.bf16 %v4598, %v4586
        %v4632 = vpack.c.bf16 %v4603, %v4591
        %v4633 = vpack.c.bf16 %v4604, %v4592
        %v4634 = vpack.c.bf16 %v4612, %v4612
        %v4635 = vpack.c.bf16 %v4617, %v4617
        %v4636 = vpack.c.bf16 %v4618, %v4618
        %v4637 = vld [vmem:[#allocation3 + $0xd0] sm:$0xff]
        %v4638 = vpack.c.bf16 %v4637, %v4637
        %v4639 = vld [vmem:[#allocation3 + $0xe0] sm:$0xff]
        %v4640 = vld [vmem:[#allocation3 + $0xe8] sm:$0xff]
        %4656 = vrot.lane.b32.xlu0 %v4622, 17
        %v4657 = vpop.permute.xlu0 %4656
        %4658 = vrot.lane.b32.xlu0 %v4623, 17
        %v4659 = vpop.permute.xlu0 %4658
        %4660 = vrot.lane.b32.xlu0 %v4624, 17
        %v4661 = vpop.permute.xlu0 %4660
        %4662 = vrot.lane.b32.xlu0 %v4625, 17
        %v4663 = vpop.permute.xlu0 %4662
        %4664 = vrot.lane.b32.xlu0 %v4626, 17
        %v4665 = vpop.permute.xlu0 %4664
        %4666 = vrot.lane.b32.xlu0 %v4627, 17
        %v4667 = vpop.permute.xlu0 %4666
        %4668 = vrot.lane.b32.xlu0 %v4628, 17
        %v4669 = vpop.permute.xlu0 %4668
        %4670 = vrot.lane.b32.xlu0 %v4629, 17
        %v4671 = vpop.permute.xlu0 %4670
        %4672 = vrot.lane.b32.xlu0 %v4630, 17
        %v4673 = vpop.permute.xlu0 %4672
        %4674 = vrot.lane.b32.xlu0 %v4631, 17
        %v4675 = vpop.permute.xlu0 %4674
        %4676 = vrot.lane.b32.xlu0 %v4632, 17
        %v4677 = vpop.permute.xlu0 %4676
        %4678 = vrot.lane.b32.xlu0 %v4633, 17
        %v4679 = vpop.permute.xlu0 %4678
        %4680 = vrot.lane.b32.xlu0 %v4634, 17
        %v4681 = vpop.permute.xlu0 %4680
        %4682 = vrot.lane.b32.xlu0 %v4635, 17
        %v4683 = vpop.permute.xlu0 %4682
        %4684 = vrot.lane.b32.xlu0 %v4636, 17
        %v4685 = vpop.permute.xlu0 %4684
        %v4686 = vsel %vm446, %v4657, %v4659
        %v4687 = vsel %vm446, %v4659, %v4661
        %v4688 = vsel %vm446, %v4663, %v4665
        %v4689 = vsel %vm446, %v4665, %v4667
        %v4690 = vsel %vm446, %v4669, %v4671
        %v4691 = vsel %vm446, %v4671, %v4673
        %v4692 = vsel %vm446, %v4675, %v4677
        %v4693 = vsel %vm446, %v4677, %v4679
        %v4694 = vsel %vm446, %v4681, %v4683
        %v4695 = vsel %vm446, %v4683, %v4685
        %v4705 = vsel %vm465, %v4638, 0
        %v4708 = vsel %vm469, %v4694, 0
        %v4711 = vsel %vm469, %v4695, 0
        %4713 = vmatpush.bf16.msra.mxu0 0
        %4714 = vmatpush.bf16.msra.mxu0 0
        %4715 = vmatpush.bf16.msra.mxu0 0
        %4716 = vmatpush.bf16.msra.mxu0 %v4708
        %4717 = vmatpush.bf16.msra.mxu0 %v4692
        %4718 = vmatpush.bf16.msra.mxu0 %v4690
        %4719 = vmatpush.bf16.msra.mxu0 %v4688
        %4720 = vmatpush.bf16.msra.mxu0 %v4686
        %4721 = vmatmul.bf16.gmra.mxu0 %v4705
        %v4722 = vpop.f32.mrf.mxu0
        %v4723 = vadd.f32 %v4639, %v4722
        %v4724 = vpop.f32.mrf.mxu0
        %4725 = vdwg.mxu0
        %4726 = vmatpush.bf16.msra.mxu0 0
        %4727 = vmatpush.bf16.msra.mxu0 0
        %4728 = vmatpush.bf16.msra.mxu0 0
        %4729 = vmatpush.bf16.msra.mxu0 %v4711
        %4730 = vmatpush.bf16.msra.mxu0 %v4693
        %4731 = vmatpush.bf16.msra.mxu0 %v4691
        %4732 = vmatpush.bf16.msra.mxu0 %v4689
        %4733 = vmatpush.bf16.msra.mxu0 %v4687
        %4734 = vmatmul.bf16.gmra.mxu0 %v4705
        %v4735 = vpop.f32.mrf.mxu0
        %v4736 = vadd.f32 %v4640, %v4735
        %v4737 = vpop.f32.mrf.mxu0
        %4738 = vdwg.mxu0
        %v4739 = vadd.f32 %v4723, %v4133
        %v4740 = vadd.f32 %v4736, %v4134
        %4741 = vst [vmem:[#allocation2 + $0x8] sm:$0xff] %v4739
        %4742 = vst [vmem:[#allocation2 + $0x10] sm:$0xff] %v4740
        %v4743 = vld [vmem:[#allocation2] sm:$0xff]
        %v4744 = vld [vmem:[#allocation2 + $0x8] sm:$0xff]
        %v4745 = vld [vmem:[#allocation2 + $0x10] sm:$0xff]
        %v4746 = vld [vmem:[%s189] ss:$8 sm:$0x3]
        %v4748 = vperm.slane %v4746, 0
        %v4749 = vperm.slane %v4746, 1
        %4750 = vrot.lane.b32.xlu0 %v4748, 111
        %v4751 = vpop.permute.xlu0 %4750
        %4752 = vrot.lane.b32.xlu0 %v4749, 111
        %v4753 = vpop.permute.xlu0 %4752
        %v4754 = vsel %vm198, %v4751, %v4753
        %v4758 = vmul.f32 %v4743, %v4751
        %v4759 = vmul.f32 %v4744, %v4754
        %v4760 = vmul.f32 %v4745, %v4753
        %v4761 = vld [vmem:[%s206] ss:$8 sm:$0x3]
        %v4763 = vperm.slane %v4761, 0
        %v4764 = vperm.slane %v4761, 1
        %4765 = vrot.lane.b32.xlu0 %v4763, 113
        %v4766 = vpop.permute.xlu0 %4765
        %4767 = vrot.lane.b32.xlu0 %v4764, 113
        %v4768 = vpop.permute.xlu0 %4767
        %v4769 = vsel %vm215, %v4766, %v4768
        %v4773 = vmul.f32 %v4743, %v4766
        %v4774 = vmul.f32 %v4744, %v4769
        %v4775 = vmul.f32 %v4745, %v4768
        %4776 = vrot.lane.b32.xlu0 %v4748, 127
        %v4777 = vpop.permute.xlu0 %4776
        %4778 = vrot.lane.b32.xlu0 %v4749, 127
        %v4779 = vpop.permute.xlu0 %4778
        %v4780 = vsel %vm227, %v4777, %v4779
        %v4784 = vmul.f32 %v4743, %v4777
        %v4785 = vmul.f32 %v4744, %v4780
        %v4786 = vmul.f32 %v4745, %v4779
        %v4787 = vld [vmem:[#allocation2 + $0x18] sm:$0xff]
        %4788 = vrot.lane.b32.xlu0 %v4763, 1
        %v4789 = vpop.permute.xlu0 %4788
        %4790 = vrot.lane.b32.xlu0 %v4764, 1
        %v4791 = vpop.permute.xlu0 %4790
        %v4792 = vsel %vm240, %v4789, %v4791
        %v4796 = vmul.f32 %v4744, %v4789
        %v4797 = vmul.f32 %v4745, %v4792
        %v4798 = vmul.f32 %v4787, %v4791
        %4799 = vrot.lane.b32.xlu0 %v4748, 15
        %v4800 = vpop.permute.xlu0 %4799
        %4801 = vrot.lane.b32.xlu0 %v4749, 15
        %v4802 = vpop.permute.xlu0 %4801
        %v4803 = vsel %vm252, %v4800, %v4802
        %v4807 = vmul.f32 %v4744, %v4800
        %v4808 = vmul.f32 %v4745, %v4803
        %v4809 = vmul.f32 %v4787, %v4802
        %4810 = vrot.lane.b32.xlu0 %v4763, 17
        %v4811 = vpop.permute.xlu0 %4810
        %4812 = vrot.lane.b32.xlu0 %v4764, 17
        %v4813 = vpop.permute.xlu0 %4812
        %v4814 = vsel %vm264, %v4811, %v4813
        %v4818 = vmul.f32 %v4744, %v4811
        %v4819 = vmul.f32 %v4745, %v4814
        %v4820 = vmul.f32 %v4787, %v4813
        %4824 = vrot.lane.b32.xlu0 %v4743, 127
        %v4825 = vpop.permute.xlu0 %4824
        %4826 = vrot.lane.b32.xlu0 %v4744, 127
        %v4827 = vpop.permute.xlu0 %4826
        %4828 = vrot.lane.b32.xlu0 %v4745, 127
        %v4829 = vpop.permute.xlu0 %4828
        %v4830 = vsel %vm227, %v4825, %v4827
        %v4831 = vsel %vm227, %v4827, %v4829
        %4838 = vrot.lane.b32.xlu0 %v4773, 126
        %v4839 = vpop.permute.xlu0 %4838
        %4840 = vrot.lane.b32.xlu0 %v4774, 126
        %v4841 = vpop.permute.xlu0 %4840
        %4842 = vrot.lane.b32.xlu0 %v4775, 126
        %v4843 = vpop.permute.xlu0 %4842
        %v4844 = vsel %vm295, %v4839, %v4841
        %v4845 = vsel %vm295, %v4841, %v4843
        %4852 = vrot.lane.b32.xlu0 %v4784, 112
        %v4853 = vpop.permute.xlu0 %4852
        %4854 = vrot.lane.b32.xlu0 %v4785, 112
        %v4855 = vpop.permute.xlu0 %4854
        %4856 = vrot.lane.b32.xlu0 %v4786, 112
        %v4857 = vpop.permute.xlu0 %4856
        %v4858 = vsel %vm310, %v4853, %v4855
        %v4859 = vsel %vm310, %v4855, %v4857
        %4863 = vrot.lane.b32.xlu0 %v4744, 111
        %v4864 = vpop.permute.xlu0 %4863
        %4865 = vrot.lane.b32.xlu0 %v4745, 111
        %v4866 = vpop.permute.xlu0 %4865
        %v4867 = vsel %vm198, %v4864, %v4866
        %4874 = vrot.lane.b32.xlu0 %v4796, 110
        %v4875 = vpop.permute.xlu0 %4874
        %4876 = vrot.lane.b32.xlu0 %v4797, 110
        %v4877 = vpop.permute.xlu0 %4876
        %4878 = vrot.lane.b32.xlu0 %v4798, 110
        %v4879 = vpop.permute.xlu0 %4878
        %v4880 = vsel %vm333, %v4875, %v4877
        %v4881 = vsel %vm333, %v4877, %v4879
        %4888 = vrot.lane.b32.xlu0 %v4807, 96
        %v4889 = vpop.permute.xlu0 %4888
        %4890 = vrot.lane.b32.xlu0 %v4808, 96
        %v4891 = vpop.permute.xlu0 %4890
        %4892 = vrot.lane.b32.xlu0 %v4809, 96
        %v4893 = vpop.permute.xlu0 %4892
        %v4894 = vsel %vm348, %v4889, %v4891
        %v4895 = vsel %vm348, %v4891, %v4893
        %4900 = vrot.lane.b32.xlu0 %v4744, 95
        %v4901 = vpop.permute.xlu0 %4900
        %4902 = vrot.lane.b32.xlu0 %v4745, 95
        %v4903 = vpop.permute.xlu0 %4902
        %4904 = vrot.lane.b32.xlu0 %v4787, 95
        %v4905 = vpop.permute.xlu0 %4904
        %v4906 = vsel %vm361, %v4901, %v4903
        %v4907 = vsel %vm361, %v4903, %v4905
        %4914 = vrot.lane.b32.xlu0 %v4818, 94
        %v4915 = vpop.permute.xlu0 %4914
        %4916 = vrot.lane.b32.xlu0 %v4819, 94
        %v4917 = vpop.permute.xlu0 %4916
        %4918 = vrot.lane.b32.xlu0 %v4820, 94
        %v4919 = vpop.permute.xlu0 %4918
        %v4920 = vsel %vm376, %v4915, %v4917
        %v4921 = vsel %vm376, %v4917, %v4919
        %v4925 = vpack.c.bf16 %v4830, %v4758
        %v4926 = vpack.c.bf16 %v4831, %v4759
        %v4927 = vpack.c.bf16 %v4829, %v4760
        %v4928 = vpack.c.bf16 %v4858, %v4844
        %v4929 = vpack.c.bf16 %v4859, %v4845
        %v4930 = vpack.c.bf16 %v4857, %v4843
        %v4931 = vpack.c.bf16 %v4875, %v4864
        %v4932 = vpack.c.bf16 %v4880, %v4867
        %v4933 = vpack.c.bf16 %v4881, %v4866
        %v4934 = vpack.c.bf16 %v4901, %v4889
        %v4935 = vpack.c.bf16 %v4906, %v4894
        %v4936 = vpack.c.bf16 %v4907, %v4895
        %v4937 = vpack.c.bf16 %v4915, %v4915
        %v4938 = vpack.c.bf16 %v4920, %v4920
        %v4939 = vpack.c.bf16 %v4921, %v4921
        %v4940 = vld [vmem:[#allocation3 + $0xf0] sm:$0xff]
        %v4941 = vpack.c.bf16 %v4940, %v4940
        %v4942 = vld [vmem:[#allocation3 + $0x100] sm:$0xff]
        %v4943 = vld [vmem:[#allocation3 + $0x108] sm:$0xff]
        %4959 = vrot.lane.b32.xlu0 %v4925, 17
        %v4960 = vpop.permute.xlu0 %4959
        %4961 = vrot.lane.b32.xlu0 %v4926, 17
        %v4962 = vpop.permute.xlu0 %4961
        %4963 = vrot.lane.b32.xlu0 %v4927, 17
        %v4964 = vpop.permute.xlu0 %4963
        %4965 = vrot.lane.b32.xlu0 %v4928, 17
        %v4966 = vpop.permute.xlu0 %4965
        %4967 = vrot.lane.b32.xlu0 %v4929, 17
        %v4968 = vpop.permute.xlu0 %4967
        %4969 = vrot.lane.b32.xlu0 %v4930, 17
        %v4970 = vpop.permute.xlu0 %4969
        %4971 = vrot.lane.b32.xlu0 %v4931, 17
        %v4972 = vpop.permute.xlu0 %4971
        %4973 = vrot.lane.b32.xlu0 %v4932, 17
        %v4974 = vpop.permute.xlu0 %4973
        %4975 = vrot.lane.b32.xlu0 %v4933, 17
        %v4976 = vpop.permute.xlu0 %4975
        %4977 = vrot.lane.b32.xlu0 %v4934, 17
        %v4978 = vpop.permute.xlu0 %4977
        %4979 = vrot.lane.b32.xlu0 %v4935, 17
        %v4980 = vpop.permute.xlu0 %4979
        %4981 = vrot.lane.b32.xlu0 %v4936, 17
        %v4982 = vpop.permute.xlu0 %4981
        %4983 = vrot.lane.b32.xlu0 %v4937, 17
        %v4984 = vpop.permute.xlu0 %4983
        %4985 = vrot.lane.b32.xlu0 %v4938, 17
        %v4986 = vpop.permute.xlu0 %4985
        %4987 = vrot.lane.b32.xlu0 %v4939, 17
        %v4988 = vpop.permute.xlu0 %4987
        %v4989 = vsel %vm446, %v4960, %v4962
        %v4990 = vsel %vm446, %v4962, %v4964
        %v4991 = vsel %vm446, %v4966, %v4968
        %v4992 = vsel %vm446, %v4968, %v4970
        %v4993 = vsel %vm446, %v4972, %v4974
        %v4994 = vsel %vm446, %v4974, %v4976
        %v4995 = vsel %vm446, %v4978, %v4980
        %v4996 = vsel %vm446, %v4980, %v4982
        %v4997 = vsel %vm446, %v4984, %v4986
        %v4998 = vsel %vm446, %v4986, %v4988
        %v5008 = vsel %vm465, %v4941, 0
        %v5011 = vsel %vm469, %v4997, 0
        %v5014 = vsel %vm469, %v4998, 0
        %5016 = vmatpush.bf16.msra.mxu0 0
        %5017 = vmatpush.bf16.msra.mxu0 0
        %5018 = vmatpush.bf16.msra.mxu0 0
        %5019 = vmatpush.bf16.msra.mxu0 %v5011
        %5020 = vmatpush.bf16.msra.mxu0 %v4995
        %5021 = vmatpush.bf16.msra.mxu0 %v4993
        %5022 = vmatpush.bf16.msra.mxu0 %v4991
        %5023 = vmatpush.bf16.msra.mxu0 %v4989
        %5024 = vmatmul.bf16.gmra.mxu0 %v5008
        %v5025 = vpop.f32.mrf.mxu0
        %v5026 = vadd.f32 %v4942, %v5025
        %v5027 = vpop.f32.mrf.mxu0
        %5028 = vdwg.mxu0
        %5029 = vmatpush.bf16.msra.mxu0 0
        %5030 = vmatpush.bf16.msra.mxu0 0
        %5031 = vmatpush.bf16.msra.mxu0 0
        %5032 = vmatpush.bf16.msra.mxu0 %v5014
        %5033 = vmatpush.bf16.msra.mxu0 %v4996
        %5034 = vmatpush.bf16.msra.mxu0 %v4994
        %5035 = vmatpush.bf16.msra.mxu0 %v4992
        %5036 = vmatpush.bf16.msra.mxu0 %v4990
        %5037 = vmatmul.bf16.gmra.mxu0 %v5008
        %v5038 = vpop.f32.mrf.mxu0
        %v5039 = vadd.f32 %v4943, %v5038
        %v5040 = vpop.f32.mrf.mxu0
        %5041 = vdwg.mxu0
        %v5042 = vmax.f32 %v5026, 0.0
        %v5043 = vmax.f32 %v5039, 0.0
        %5044 = vst [vmem:[#allocation2 + $0x8] sm:$0xff] %v5042
        %5045 = vst [vmem:[#allocation2 + $0x10] sm:$0xff] %v5043
        %v5046 = vld [vmem:[#allocation2] sm:$0xff]
        %v5047 = vld [vmem:[#allocation2 + $0x8] sm:$0xff]
        %v5048 = vld [vmem:[#allocation2 + $0x10] sm:$0xff]
        %v5049 = vld [vmem:[%s189] ss:$8 sm:$0x3]
        %v5051 = vperm.slane %v5049, 0
        %v5052 = vperm.slane %v5049, 1
        %5053 = vrot.lane.b32.xlu0 %v5051, 111
        %v5054 = vpop.permute.xlu0 %5053
        %5055 = vrot.lane.b32.xlu0 %v5052, 111
        %v5056 = vpop.permute.xlu0 %5055
        %v5057 = vsel %vm198, %v5054, %v5056
        %v5061 = vmul.f32 %v5046, %v5054
        %v5062 = vmul.f32 %v5047, %v5057
        %v5063 = vmul.f32 %v5048, %v5056
        %v5064 = vld [vmem:[%s206] ss:$8 sm:$0x3]
        %v5066 = vperm.slane %v5064, 0
        %v5067 = vperm.slane %v5064, 1
        %5068 = vrot.lane.b32.xlu0 %v5066, 113
        %v5069 = vpop.permute.xlu0 %5068
        %5070 = vrot.lane.b32.xlu0 %v5067, 113
        %v5071 = vpop.permute.xlu0 %5070
        %v5072 = vsel %vm215, %v5069, %v5071
        %v5076 = vmul.f32 %v5046, %v5069
        %v5077 = vmul.f32 %v5047, %v5072
        %v5078 = vmul.f32 %v5048, %v5071
        %5079 = vrot.lane.b32.xlu0 %v5051, 127
        %v5080 = vpop.permute.xlu0 %5079
        %5081 = vrot.lane.b32.xlu0 %v5052, 127
        %v5082 = vpop.permute.xlu0 %5081
        %v5083 = vsel %vm227, %v5080, %v5082
        %v5087 = vmul.f32 %v5046, %v5080
        %v5088 = vmul.f32 %v5047, %v5083
        %v5089 = vmul.f32 %v5048, %v5082
        %v5090 = vld [vmem:[#allocation2 + $0x18] sm:$0xff]
        %5091 = vrot.lane.b32.xlu0 %v5066, 1
        %v5092 = vpop.permute.xlu0 %5091
        %5093 = vrot.lane.b32.xlu0 %v5067, 1
        %v5094 = vpop.permute.xlu0 %5093
        %v5095 = vsel %vm240, %v5092, %v5094
        %v5099 = vmul.f32 %v5047, %v5092
        %v5100 = vmul.f32 %v5048, %v5095
        %v5101 = vmul.f32 %v5090, %v5094
        %5102 = vrot.lane.b32.xlu0 %v5051, 15
        %v5103 = vpop.permute.xlu0 %5102
        %5104 = vrot.lane.b32.xlu0 %v5052, 15
        %v5105 = vpop.permute.xlu0 %5104
        %v5106 = vsel %vm252, %v5103, %v5105
        %v5110 = vmul.f32 %v5047, %v5103
        %v5111 = vmul.f32 %v5048, %v5106
        %v5112 = vmul.f32 %v5090, %v5105
        %5113 = vrot.lane.b32.xlu0 %v5066, 17
        %v5114 = vpop.permute.xlu0 %5113
        %5115 = vrot.lane.b32.xlu0 %v5067, 17
        %v5116 = vpop.permute.xlu0 %5115
        %v5117 = vsel %vm264, %v5114, %v5116
        %v5121 = vmul.f32 %v5047, %v5114
        %v5122 = vmul.f32 %v5048, %v5117
        %v5123 = vmul.f32 %v5090, %v5116
        %5127 = vrot.lane.b32.xlu0 %v5046, 127
        %v5128 = vpop.permute.xlu0 %5127
        %5129 = vrot.lane.b32.xlu0 %v5047, 127
        %v5130 = vpop.permute.xlu0 %5129
        %5131 = vrot.lane.b32.xlu0 %v5048, 127
        %v5132 = vpop.permute.xlu0 %5131
        %v5133 = vsel %vm227, %v5128, %v5130
        %v5134 = vsel %vm227, %v5130, %v5132
        %5141 = vrot.lane.b32.xlu0 %v5076, 126
        %v5142 = vpop.permute.xlu0 %5141
        %5143 = vrot.lane.b32.xlu0 %v5077, 126
        %v5144 = vpop.permute.xlu0 %5143
        %5145 = vrot.lane.b32.xlu0 %v5078, 126
        %v5146 = vpop.permute.xlu0 %5145
        %v5147 = vsel %vm295, %v5142, %v5144
        %v5148 = vsel %vm295, %v5144, %v5146
        %5155 = vrot.lane.b32.xlu0 %v5087, 112
        %v5156 = vpop.permute.xlu0 %5155
        %5157 = vrot.lane.b32.xlu0 %v5088, 112
        %v5158 = vpop.permute.xlu0 %5157
        %5159 = vrot.lane.b32.xlu0 %v5089, 112
        %v5160 = vpop.permute.xlu0 %5159
        %v5161 = vsel %vm310, %v5156, %v5158
        %v5162 = vsel %vm310, %v5158, %v5160
        %5166 = vrot.lane.b32.xlu0 %v5047, 111
        %v5167 = vpop.permute.xlu0 %5166
        %5168 = vrot.lane.b32.xlu0 %v5048, 111
        %v5169 = vpop.permute.xlu0 %5168
        %v5170 = vsel %vm198, %v5167, %v5169
        %5177 = vrot.lane.b32.xlu0 %v5099, 110
        %v5178 = vpop.permute.xlu0 %5177
        %5179 = vrot.lane.b32.xlu0 %v5100, 110
        %v5180 = vpop.permute.xlu0 %5179
        %5181 = vrot.lane.b32.xlu0 %v5101, 110
        %v5182 = vpop.permute.xlu0 %5181
        %v5183 = vsel %vm333, %v5178, %v5180
        %v5184 = vsel %vm333, %v5180, %v5182
        %5191 = vrot.lane.b32.xlu0 %v5110, 96
        %v5192 = vpop.permute.xlu0 %5191
        %5193 = vrot.lane.b32.xlu0 %v5111, 96
        %v5194 = vpop.permute.xlu0 %5193
        %5195 = vrot.lane.b32.xlu0 %v5112, 96
        %v5196 = vpop.permute.xlu0 %5195
        %v5197 = vsel %vm348, %v5192, %v5194
        %v5198 = vsel %vm348, %v5194, %v5196
        %5203 = vrot.lane.b32.xlu0 %v5047, 95
        %v5204 = vpop.permute.xlu0 %5203
        %5205 = vrot.lane.b32.xlu0 %v5048, 95
        %v5206 = vpop.permute.xlu0 %5205
        %5207 = vrot.lane.b32.xlu0 %v5090, 95
        %v5208 = vpop.permute.xlu0 %5207
        %v5209 = vsel %vm361, %v5204, %v5206
        %v5210 = vsel %vm361, %v5206, %v5208
        %5217 = vrot.lane.b32.xlu0 %v5121, 94
        %v5218 = vpop.permute.xlu0 %5217
        %5219 = vrot.lane.b32.xlu0 %v5122, 94
        %v5220 = vpop.permute.xlu0 %5219
        %5221 = vrot.lane.b32.xlu0 %v5123, 94
        %v5222 = vpop.permute.xlu0 %5221
        %v5223 = vsel %vm376, %v5218, %v5220
        %v5224 = vsel %vm376, %v5220, %v5222
        %v5228 = vpack.c.bf16 %v5133, %v5061
        %v5229 = vpack.c.bf16 %v5134, %v5062
        %v5230 = vpack.c.bf16 %v5132, %v5063
        %v5231 = vpack.c.bf16 %v5161, %v5147
        %v5232 = vpack.c.bf16 %v5162, %v5148
        %v5233 = vpack.c.bf16 %v5160, %v5146
        %v5234 = vpack.c.bf16 %v5178, %v5167
        %v5235 = vpack.c.bf16 %v5183, %v5170
        %v5236 = vpack.c.bf16 %v5184, %v5169
        %v5237 = vpack.c.bf16 %v5204, %v5192
        %v5238 = vpack.c.bf16 %v5209, %v5197
        %v5239 = vpack.c.bf16 %v5210, %v5198
        %v5240 = vpack.c.bf16 %v5218, %v5218
        %v5241 = vpack.c.bf16 %v5223, %v5223
        %v5242 = vpack.c.bf16 %v5224, %v5224
        %v5243 = vld [vmem:[#allocation3 + $0x110] sm:$0xff]
        %v5244 = vpack.c.bf16 %v5243, %v5243
        %v5245 = vld [vmem:[#allocation3 + $0x120] sm:$0xff]
        %v5246 = vld [vmem:[#allocation3 + $0x128] sm:$0xff]
        %5262 = vrot.lane.b32.xlu0 %v5228, 17
        %v5263 = vpop.permute.xlu0 %5262
        %5264 = vrot.lane.b32.xlu0 %v5229, 17
        %v5265 = vpop.permute.xlu0 %5264
        %5266 = vrot.lane.b32.xlu0 %v5230, 17
        %v5267 = vpop.permute.xlu0 %5266
        %5268 = vrot.lane.b32.xlu0 %v5231, 17
        %v5269 = vpop.permute.xlu0 %5268
        %5270 = vrot.lane.b32.xlu0 %v5232, 17
        %v5271 = vpop.permute.xlu0 %5270
        %5272 = vrot.lane.b32.xlu0 %v5233, 17
        %v5273 = vpop.permute.xlu0 %5272
        %5274 = vrot.lane.b32.xlu0 %v5234, 17
        %v5275 = vpop.permute.xlu0 %5274
        %5276 = vrot.lane.b32.xlu0 %v5235, 17
        %v5277 = vpop.permute.xlu0 %5276
        %5278 = vrot.lane.b32.xlu0 %v5236, 17
        %v5279 = vpop.permute.xlu0 %5278
        %5280 = vrot.lane.b32.xlu0 %v5237, 17
        %v5281 = vpop.permute.xlu0 %5280
        %5282 = vrot.lane.b32.xlu0 %v5238, 17
        %v5283 = vpop.permute.xlu0 %5282
        %5284 = vrot.lane.b32.xlu0 %v5239, 17
        %v5285 = vpop.permute.xlu0 %5284
        %5286 = vrot.lane.b32.xlu0 %v5240, 17
        %v5287 = vpop.permute.xlu0 %5286
        %5288 = vrot.lane.b32.xlu0 %v5241, 17
        %v5289 = vpop.permute.xlu0 %5288
        %5290 = vrot.lane.b32.xlu0 %v5242, 17
        %v5291 = vpop.permute.xlu0 %5290
        %v5292 = vsel %vm446, %v5263, %v5265
        %v5293 = vsel %vm446, %v5265, %v5267
        %v5294 = vsel %vm446, %v5269, %v5271
        %v5295 = vsel %vm446, %v5271, %v5273
        %v5296 = vsel %vm446, %v5275, %v5277
        %v5297 = vsel %vm446, %v5277, %v5279
        %v5298 = vsel %vm446, %v5281, %v5283
        %v5299 = vsel %vm446, %v5283, %v5285
        %v5300 = vsel %vm446, %v5287, %v5289
        %v5301 = vsel %vm446, %v5289, %v5291
        %v5311 = vsel %vm465, %v5244, 0
        %v5314 = vsel %vm469, %v5300, 0
        %v5317 = vsel %vm469, %v5301, 0
        %5319 = vmatpush.bf16.msra.mxu0 0
        %5320 = vmatpush.bf16.msra.mxu0 0
        %5321 = vmatpush.bf16.msra.mxu0 0
        %5322 = vmatpush.bf16.msra.mxu0 %v5314
        %5323 = vmatpush.bf16.msra.mxu0 %v5298
        %5324 = vmatpush.bf16.msra.mxu0 %v5296
        %5325 = vmatpush.bf16.msra.mxu0 %v5294
        %5326 = vmatpush.bf16.msra.mxu0 %v5292
        %5327 = vmatmul.bf16.gmra.mxu0 %v5311
        %v5328 = vpop.f32.mrf.mxu0
        %v5329 = vadd.f32 %v5245, %v5328
        %v5330 = vpop.f32.mrf.mxu0
        %5331 = vdwg.mxu0
        %5332 = vmatpush.bf16.msra.mxu0 0
        %5333 = vmatpush.bf16.msra.mxu0 0
        %5334 = vmatpush.bf16.msra.mxu0 0
        %5335 = vmatpush.bf16.msra.mxu0 %v5317
        %5336 = vmatpush.bf16.msra.mxu0 %v5299
        %5337 = vmatpush.bf16.msra.mxu0 %v5297
        %5338 = vmatpush.bf16.msra.mxu0 %v5295
        %5339 = vmatpush.bf16.msra.mxu0 %v5293
        %5340 = vmatmul.bf16.gmra.mxu0 %v5311
        %v5341 = vpop.f32.mrf.mxu0
        %v5342 = vadd.f32 %v5246, %v5341
        %v5343 = vpop.f32.mrf.mxu0
        %5344 = vdwg.mxu0
        %v5345 = vadd.f32 %v5329, %v4739
        %v5346 = vadd.f32 %v5342, %v4740
        %5347 = vst [vmem:[#allocation2 + $0x8] sm:$0xff] %v5345
        %5348 = vst [vmem:[#allocation2 + $0x10] sm:$0xff] %v5346
        %v5349 = vld [vmem:[#allocation2] sm:$0xff]
        %v5350 = vld [vmem:[#allocation2 + $0x8] sm:$0xff]
        %v5351 = vld [vmem:[#allocation2 + $0x10] sm:$0xff]
        %v5352 = vld [vmem:[%s189] ss:$8 sm:$0x3]
        %v5354 = vperm.slane %v5352, 0
        %v5355 = vperm.slane %v5352, 1
        %5356 = vrot.lane.b32.xlu0 %v5354, 111
        %v5357 = vpop.permute.xlu0 %5356
        %5358 = vrot.lane.b32.xlu0 %v5355, 111
        %v5359 = vpop.permute.xlu0 %5358
        %v5360 = vsel %vm198, %v5357, %v5359
        %v5364 = vmul.f32 %v5349, %v5357
        %v5365 = vmul.f32 %v5350, %v5360
        %v5366 = vmul.f32 %v5351, %v5359
        %v5367 = vld [vmem:[%s206] ss:$8 sm:$0x3]
        %v5369 = vperm.slane %v5367, 0
        %v5370 = vperm.slane %v5367, 1
        %5371 = vrot.lane.b32.xlu0 %v5369, 113
        %v5372 = vpop.permute.xlu0 %5371
        %5373 = vrot.lane.b32.xlu0 %v5370, 113
        %v5374 = vpop.permute.xlu0 %5373
        %v5375 = vsel %vm215, %v5372, %v5374
        %v5379 = vmul.f32 %v5349, %v5372
        %v5380 = vmul.f32 %v5350, %v5375
        %v5381 = vmul.f32 %v5351, %v5374
        %5382 = vrot.lane.b32.xlu0 %v5354, 127
        %v5383 = vpop.permute.xlu0 %5382
        %5384 = vrot.lane.b32.xlu0 %v5355, 127
        %v5385 = vpop.permute.xlu0 %5384
        %v5386 = vsel %vm227, %v5383, %v5385
        %v5390 = vmul.f32 %v5349, %v5383
        %v5391 = vmul.f32 %v5350, %v5386
        %v5392 = vmul.f32 %v5351, %v5385
        %v5393 = vld [vmem:[#allocation2 + $0x18] sm:$0xff]
        %5394 = vrot.lane.b32.xlu0 %v5369, 1
        %v5395 = vpop.permute.xlu0 %5394
        %5396 = vrot.lane.b32.xlu0 %v5370, 1
        %v5397 = vpop.permute.xlu0 %5396
        %v5398 = vsel %vm240, %v5395, %v5397
        %v5402 = vmul.f32 %v5350, %v5395
        %v5403 = vmul.f32 %v5351, %v5398
        %v5404 = vmul.f32 %v5393, %v5397
        %5405 = vrot.lane.b32.xlu0 %v5354, 15
        %v5406 = vpop.permute.xlu0 %5405
        %5407 = vrot.lane.b32.xlu0 %v5355, 15
        %v5408 = vpop.permute.xlu0 %5407
        %v5409 = vsel %vm252, %v5406, %v5408
        %v5413 = vmul.f32 %v5350, %v5406
        %v5414 = vmul.f32 %v5351, %v5409
        %v5415 = vmul.f32 %v5393, %v5408
        %5416 = vrot.lane.b32.xlu0 %v5369, 17
        %v5417 = vpop.permute.xlu0 %5416
        %5418 = vrot.lane.b32.xlu0 %v5370, 17
        %v5419 = vpop.permute.xlu0 %5418
        %v5420 = vsel %vm264, %v5417, %v5419
        %v5424 = vmul.f32 %v5350, %v5417
        %v5425 = vmul.f32 %v5351, %v5420
        %v5426 = vmul.f32 %v5393, %v5419
        %5430 = vrot.lane.b32.xlu0 %v5349, 127
        %v5431 = vpop.permute.xlu0 %5430
        %5432 = vrot.lane.b32.xlu0 %v5350, 127
        %v5433 = vpop.permute.xlu0 %5432
        %5434 = vrot.lane.b32.xlu0 %v5351, 127
        %v5435 = vpop.permute.xlu0 %5434
        %v5436 = vsel %vm227, %v5431, %v5433
        %v5437 = vsel %vm227, %v5433, %v5435
        %5444 = vrot.lane.b32.xlu0 %v5379, 126
        %v5445 = vpop.permute.xlu0 %5444
        %5446 = vrot.lane.b32.xlu0 %v5380, 126
        %v5447 = vpop.permute.xlu0 %5446
        %5448 = vrot.lane.b32.xlu0 %v5381, 126
        %v5449 = vpop.permute.xlu0 %5448
        %v5450 = vsel %vm295, %v5445, %v5447
        %v5451 = vsel %vm295, %v5447, %v5449
        %5458 = vrot.lane.b32.xlu0 %v5390, 112
        %v5459 = vpop.permute.xlu0 %5458
        %5460 = vrot.lane.b32.xlu0 %v5391, 112
        %v5461 = vpop.permute.xlu0 %5460
        %5462 = vrot.lane.b32.xlu0 %v5392, 112
        %v5463 = vpop.permute.xlu0 %5462
        %v5464 = vsel %vm310, %v5459, %v5461
        %v5465 = vsel %vm310, %v5461, %v5463
        %5469 = vrot.lane.b32.xlu0 %v5350, 111
        %v5470 = vpop.permute.xlu0 %5469
        %5471 = vrot.lane.b32.xlu0 %v5351, 111
        %v5472 = vpop.permute.xlu0 %5471
        %v5473 = vsel %vm198, %v5470, %v5472
        %5480 = vrot.lane.b32.xlu0 %v5402, 110
        %v5481 = vpop.permute.xlu0 %5480
        %5482 = vrot.lane.b32.xlu0 %v5403, 110
        %v5483 = vpop.permute.xlu0 %5482
        %5484 = vrot.lane.b32.xlu0 %v5404, 110
        %v5485 = vpop.permute.xlu0 %5484
        %v5486 = vsel %vm333, %v5481, %v5483
        %v5487 = vsel %vm333, %v5483, %v5485
        %5494 = vrot.lane.b32.xlu0 %v5413, 96
        %v5495 = vpop.permute.xlu0 %5494
        %5496 = vrot.lane.b32.xlu0 %v5414, 96
        %v5497 = vpop.permute.xlu0 %5496
        %5498 = vrot.lane.b32.xlu0 %v5415, 96
        %v5499 = vpop.permute.xlu0 %5498
        %v5500 = vsel %vm348, %v5495, %v5497
        %v5501 = vsel %vm348, %v5497, %v5499
        %5506 = vrot.lane.b32.xlu0 %v5350, 95
        %v5507 = vpop.permute.xlu0 %5506
        %5508 = vrot.lane.b32.xlu0 %v5351, 95
        %v5509 = vpop.permute.xlu0 %5508
        %5510 = vrot.lane.b32.xlu0 %v5393, 95
        %v5511 = vpop.permute.xlu0 %5510
        %v5512 = vsel %vm361, %v5507, %v5509
        %v5513 = vsel %vm361, %v5509, %v5511
        %5520 = vrot.lane.b32.xlu0 %v5424, 94
        %v5521 = vpop.permute.xlu0 %5520
        %5522 = vrot.lane.b32.xlu0 %v5425, 94
        %v5523 = vpop.permute.xlu0 %5522
        %5524 = vrot.lane.b32.xlu0 %v5426, 94
        %v5525 = vpop.permute.xlu0 %5524
        %v5526 = vsel %vm376, %v5521, %v5523
        %v5527 = vsel %vm376, %v5523, %v5525
        %v5531 = vpack.c.bf16 %v5436, %v5364
        %v5532 = vpack.c.bf16 %v5437, %v5365
        %v5533 = vpack.c.bf16 %v5435, %v5366
        %v5534 = vpack.c.bf16 %v5464, %v5450
        %v5535 = vpack.c.bf16 %v5465, %v5451
        %v5536 = vpack.c.bf16 %v5463, %v5449
        %v5537 = vpack.c.bf16 %v5481, %v5470
        %v5538 = vpack.c.bf16 %v5486, %v5473
        %v5539 = vpack.c.bf16 %v5487, %v5472
        %v5540 = vpack.c.bf16 %v5507, %v5495
        %v5541 = vpack.c.bf16 %v5512, %v5500
        %v5542 = vpack.c.bf16 %v5513, %v5501
        %v5543 = vpack.c.bf16 %v5521, %v5521
        %v5544 = vpack.c.bf16 %v5526, %v5526
        %v5545 = vpack.c.bf16 %v5527, %v5527
        %v5546 = vld [vmem:[#allocation3 + $0x130] sm:$0xff]
        %v5547 = vpack.c.bf16 %v5546, %v5546
        %v5548 = vld [vmem:[#allocation3 + $0x140] sm:$0xff]
        %v5549 = vld [vmem:[#allocation3 + $0x148] sm:$0xff]
        %5565 = vrot.lane.b32.xlu0 %v5531, 17
        %v5566 = vpop.permute.xlu0 %5565
        %5567 = vrot.lane.b32.xlu0 %v5532, 17
        %v5568 = vpop.permute.xlu0 %5567
        %5569 = vrot.lane.b32.xlu0 %v5533, 17
        %v5570 = vpop.permute.xlu0 %5569
        %5571 = vrot.lane.b32.xlu0 %v5534, 17
        %v5572 = vpop.permute.xlu0 %5571
        %5573 = vrot.lane.b32.xlu0 %v5535, 17
        %v5574 = vpop.permute.xlu0 %5573
        %5575 = vrot.lane.b32.xlu0 %v5536, 17
        %v5576 = vpop.permute.xlu0 %5575
        %5577 = vrot.lane.b32.xlu0 %v5537, 17
        %v5578 = vpop.permute.xlu0 %5577
        %5579 = vrot.lane.b32.xlu0 %v5538, 17
        %v5580 = vpop.permute.xlu0 %5579
        %5581 = vrot.lane.b32.xlu0 %v5539, 17
        %v5582 = vpop.permute.xlu0 %5581
        %5583 = vrot.lane.b32.xlu0 %v5540, 17
        %v5584 = vpop.permute.xlu0 %5583
        %5585 = vrot.lane.b32.xlu0 %v5541, 17
        %v5586 = vpop.permute.xlu0 %5585
        %5587 = vrot.lane.b32.xlu0 %v5542, 17
        %v5588 = vpop.permute.xlu0 %5587
        %5589 = vrot.lane.b32.xlu0 %v5543, 17
        %v5590 = vpop.permute.xlu0 %5589
        %5591 = vrot.lane.b32.xlu0 %v5544, 17
        %v5592 = vpop.permute.xlu0 %5591
        %5593 = vrot.lane.b32.xlu0 %v5545, 17
        %v5594 = vpop.permute.xlu0 %5593
        %v5595 = vsel %vm446, %v5566, %v5568
        %v5596 = vsel %vm446, %v5568, %v5570
        %v5597 = vsel %vm446, %v5572, %v5574
        %v5598 = vsel %vm446, %v5574, %v5576
        %v5599 = vsel %vm446, %v5578, %v5580
        %v5600 = vsel %vm446, %v5580, %v5582
        %v5601 = vsel %vm446, %v5584, %v5586
        %v5602 = vsel %vm446, %v5586, %v5588
        %v5603 = vsel %vm446, %v5590, %v5592
        %v5604 = vsel %vm446, %v5592, %v5594
        %v5614 = vsel %vm465, %v5547, 0
        %v5617 = vsel %vm469, %v5603, 0
        %v5620 = vsel %vm469, %v5604, 0
        %5622 = vmatpush.bf16.msra.mxu0 0
        %5623 = vmatpush.bf16.msra.mxu0 0
        %5624 = vmatpush.bf16.msra.mxu0 0
        %5625 = vmatpush.bf16.msra.mxu0 %v5617
        %5626 = vmatpush.bf16.msra.mxu0 %v5601
        %5627 = vmatpush.bf16.msra.mxu0 %v5599
        %5628 = vmatpush.bf16.msra.mxu0 %v5597
        %5629 = vmatpush.bf16.msra.mxu0 %v5595
        %5630 = vmatmul.bf16.gmra.mxu0 %v5614
        %v5631 = vpop.f32.mrf.mxu0
        %v5632 = vadd.f32 %v5548, %v5631
        %v5633 = vpop.f32.mrf.mxu0
        %5634 = vdwg.mxu0
        %5635 = vmatpush.bf16.msra.mxu0 0
        %5636 = vmatpush.bf16.msra.mxu0 0
        %5637 = vmatpush.bf16.msra.mxu0 0
        %5638 = vmatpush.bf16.msra.mxu0 %v5620
        %5639 = vmatpush.bf16.msra.mxu0 %v5602
        %5640 = vmatpush.bf16.msra.mxu0 %v5600
        %5641 = vmatpush.bf16.msra.mxu0 %v5598
        %5642 = vmatpush.bf16.msra.mxu0 %v5596
        %5643 = vmatmul.bf16.gmra.mxu0 %v5614
        %v5644 = vpop.f32.mrf.mxu0
        %v5645 = vadd.f32 %v5549, %v5644
        %v5646 = vpop.f32.mrf.mxu0
        %5647 = vdwg.mxu0
        %v5648 = vadd.f32 %v5632, %v4133
        %v5649 = vadd.f32 %v5645, %v4134
        %5650 = vst [vmem:[#allocation2 + $0x8] sm:$0xff] %v5648
        %5651 = vst [vmem:[#allocation2 + $0x10] sm:$0xff] %v5649
        %v5652 = vld [vmem:[#allocation2] sm:$0xff]
        %v5653 = vld [vmem:[#allocation2 + $0x8] sm:$0xff]
        %v5654 = vld [vmem:[#allocation2 + $0x10] sm:$0xff]
        %v5655 = vld [vmem:[%s189] ss:$8 sm:$0x3]
        %v5657 = vperm.slane %v5655, 0
        %v5658 = vperm.slane %v5655, 1
        %5659 = vrot.lane.b32.xlu0 %v5657, 111
        %v5660 = vpop.permute.xlu0 %5659
        %5661 = vrot.lane.b32.xlu0 %v5658, 111
        %v5662 = vpop.permute.xlu0 %5661
        %v5663 = vsel %vm198, %v5660, %v5662
        %v5667 = vmul.f32 %v5652, %v5660
        %v5668 = vmul.f32 %v5653, %v5663
        %v5669 = vmul.f32 %v5654, %v5662
        %v5670 = vld [vmem:[%s206] ss:$8 sm:$0x3]
        %v5672 = vperm.slane %v5670, 0
        %v5673 = vperm.slane %v5670, 1
        %5674 = vrot.lane.b32.xlu0 %v5672, 113
        %v5675 = vpop.permute.xlu0 %5674
        %5676 = vrot.lane.b32.xlu0 %v5673, 113
        %v5677 = vpop.permute.xlu0 %5676
        %v5678 = vsel %vm215, %v5675, %v5677
        %v5682 = vmul.f32 %v5652, %v5675
        %v5683 = vmul.f32 %v5653, %v5678
        %v5684 = vmul.f32 %v5654, %v5677
        %5685 = vrot.lane.b32.xlu0 %v5657, 127
        %v5686 = vpop.permute.xlu0 %5685
        %5687 = vrot.lane.b32.xlu0 %v5658, 127
        %v5688 = vpop.permute.xlu0 %5687
        %v5689 = vsel %vm227, %v5686, %v5688
        %v5693 = vmul.f32 %v5652, %v5686
        %v5694 = vmul.f32 %v5653, %v5689
        %v5695 = vmul.f32 %v5654, %v5688
        %v5696 = vld [vmem:[#allocation2 + $0x18] sm:$0xff]
        %5697 = vrot.lane.b32.xlu0 %v5672, 1
        %v5698 = vpop.permute.xlu0 %5697
        %5699 = vrot.lane.b32.xlu0 %v5673, 1
        %v5700 = vpop.permute.xlu0 %5699
        %v5701 = vsel %vm240, %v5698, %v5700
        %v5705 = vmul.f32 %v5653, %v5698
        %v5706 = vmul.f32 %v5654, %v5701
        %v5707 = vmul.f32 %v5696, %v5700
        %5708 = vrot.lane.b32.xlu0 %v5657, 15
        %v5709 = vpop.permute.xlu0 %5708
        %5710 = vrot.lane.b32.xlu0 %v5658, 15
        %v5711 = vpop.permute.xlu0 %5710
        %v5712 = vsel %vm252, %v5709, %v5711
        %v5716 = vmul.f32 %v5653, %v5709
        %v5717 = vmul.f32 %v5654, %v5712
        %v5718 = vmul.f32 %v5696, %v5711
        %5719 = vrot.lane.b32.xlu0 %v5672, 17
        %v5720 = vpop.permute.xlu0 %5719
        %5721 = vrot.lane.b32.xlu0 %v5673, 17
        %v5722 = vpop.permute.xlu0 %5721
        %v5723 = vsel %vm264, %v5720, %v5722
        %v5727 = vmul.f32 %v5653, %v5720
        %v5728 = vmul.f32 %v5654, %v5723
        %v5729 = vmul.f32 %v5696, %v5722
        %5733 = vrot.lane.b32.xlu0 %v5652, 127
        %v5734 = vpop.permute.xlu0 %5733
        %5735 = vrot.lane.b32.xlu0 %v5653, 127
        %v5736 = vpop.permute.xlu0 %5735
        %5737 = vrot.lane.b32.xlu0 %v5654, 127
        %v5738 = vpop.permute.xlu0 %5737
        %v5739 = vsel %vm227, %v5734, %v5736
        %v5740 = vsel %vm227, %v5736, %v5738
        %5747 = vrot.lane.b32.xlu0 %v5682, 126
        %v5748 = vpop.permute.xlu0 %5747
        %5749 = vrot.lane.b32.xlu0 %v5683, 126
        %v5750 = vpop.permute.xlu0 %5749
        %5751 = vrot.lane.b32.xlu0 %v5684, 126
        %v5752 = vpop.permute.xlu0 %5751
        %v5753 = vsel %vm295, %v5748, %v5750
        %v5754 = vsel %vm295, %v5750, %v5752
        %5761 = vrot.lane.b32.xlu0 %v5693, 112
        %v5762 = vpop.permute.xlu0 %5761
        %5763 = vrot.lane.b32.xlu0 %v5694, 112
        %v5764 = vpop.permute.xlu0 %5763
        %5765 = vrot.lane.b32.xlu0 %v5695, 112
        %v5766 = vpop.permute.xlu0 %5765
        %v5767 = vsel %vm310, %v5762, %v5764
        %v5768 = vsel %vm310, %v5764, %v5766
        %5772 = vrot.lane.b32.xlu0 %v5653, 111
        %v5773 = vpop.permute.xlu0 %5772
        %5774 = vrot.lane.b32.xlu0 %v5654, 111
        %v5775 = vpop.permute.xlu0 %5774
        %v5776 = vsel %vm198, %v5773, %v5775
        %5783 = vrot.lane.b32.xlu0 %v5705, 110
        %v5784 = vpop.permute.xlu0 %5783
        %5785 = vrot.lane.b32.xlu0 %v5706, 110
        %v5786 = vpop.permute.xlu0 %5785
        %5787 = vrot.lane.b32.xlu0 %v5707, 110
        %v5788 = vpop.permute.xlu0 %5787
        %v5789 = vsel %vm333, %v5784, %v5786
        %v5790 = vsel %vm333, %v5786, %v5788
        %5797 = vrot.lane.b32.xlu0 %v5716, 96
        %v5798 = vpop.permute.xlu0 %5797
        %5799 = vrot.lane.b32.xlu0 %v5717, 96
        %v5800 = vpop.permute.xlu0 %5799
        %5801 = vrot.lane.b32.xlu0 %v5718, 96
        %v5802 = vpop.permute.xlu0 %5801
        %v5803 = vsel %vm348, %v5798, %v5800
        %v5804 = vsel %vm348, %v5800, %v5802
        %5809 = vrot.lane.b32.xlu0 %v5653, 95
        %v5810 = vpop.permute.xlu0 %5809
        %5811 = vrot.lane.b32.xlu0 %v5654, 95
        %v5812 = vpop.permute.xlu0 %5811
        %5813 = vrot.lane.b32.xlu0 %v5696, 95
        %v5814 = vpop.permute.xlu0 %5813
        %v5815 = vsel %vm361, %v5810, %v5812
        %v5816 = vsel %vm361, %v5812, %v5814
        %5823 = vrot.lane.b32.xlu0 %v5727, 94
        %v5824 = vpop.permute.xlu0 %5823
        %5825 = vrot.lane.b32.xlu0 %v5728, 94
        %v5826 = vpop.permute.xlu0 %5825
        %5827 = vrot.lane.b32.xlu0 %v5729, 94
        %v5828 = vpop.permute.xlu0 %5827
        %v5829 = vsel %vm376, %v5824, %v5826
        %v5830 = vsel %vm376, %v5826, %v5828
        %v5834 = vpack.c.bf16 %v5739, %v5667
        %v5835 = vpack.c.bf16 %v5740, %v5668
        %v5836 = vpack.c.bf16 %v5738, %v5669
        %v5837 = vpack.c.bf16 %v5767, %v5753
        %v5838 = vpack.c.bf16 %v5768, %v5754
        %v5839 = vpack.c.bf16 %v5766, %v5752
        %v5840 = vpack.c.bf16 %v5784, %v5773
        %v5841 = vpack.c.bf16 %v5789, %v5776
        %v5842 = vpack.c.bf16 %v5790, %v5775
        %v5843 = vpack.c.bf16 %v5810, %v5798
        %v5844 = vpack.c.bf16 %v5815, %v5803
        %v5845 = vpack.c.bf16 %v5816, %v5804
        %v5846 = vpack.c.bf16 %v5824, %v5824
        %v5847 = vpack.c.bf16 %v5829, %v5829
        %v5848 = vpack.c.bf16 %v5830, %v5830
        %v5849 = vld [vmem:[#allocation3 + $0x150] sm:$0xff]
        %v5850 = vld [vmem:[#allocation3 + $0x160] sm:$0xff]
        %v5851 = vld [vmem:[#allocation3 + $0x170] sm:$0xff]
        %v5852 = vld [vmem:[#allocation3 + $0x180] sm:$0xff]
        %v5853 = vpack.c.bf16 %v5850, %v5849
        %v5854 = vpack.c.bf16 %v5852, %v5851
        %v5855 = vld [vmem:[#allocation3 + $0x190] sm:$0xff]
        %v5856 = vld [vmem:[#allocation3 + $0x198] sm:$0xff]
        %v5857 = vld [vmem:[#allocation3 + $0x1a0] sm:$0xff]
        %v5858 = vld [vmem:[#allocation3 + $0x1a8] sm:$0xff]
        %v5859 = vld [vmem:[#allocation3 + $0x1b0] sm:$0xff]
        %v5860 = vld [vmem:[#allocation3 + $0x1b8] sm:$0xff]
        %v5861 = vld [vmem:[#allocation3 + $0x1c0] sm:$0xff]
        %v5862 = vld [vmem:[#allocation3 + $0x1c8] sm:$0xff]
        %5878 = vrot.lane.b32.xlu0 %v5834, 17
        %v5879 = vpop.permute.xlu0 %5878
        %5880 = vrot.lane.b32.xlu0 %v5835, 17
        %v5881 = vpop.permute.xlu0 %5880
        %5882 = vrot.lane.b32.xlu0 %v5836, 17
        %v5883 = vpop.permute.xlu0 %5882
        %5884 = vrot.lane.b32.xlu0 %v5837, 17
        %v5885 = vpop.permute.xlu0 %5884
        %5886 = vrot.lane.b32.xlu0 %v5838, 17
        %v5887 = vpop.permute.xlu0 %5886
        %5888 = vrot.lane.b32.xlu0 %v5839, 17
        %v5889 = vpop.permute.xlu0 %5888
        %5890 = vrot.lane.b32.xlu0 %v5840, 17
        %v5891 = vpop.permute.xlu0 %5890
        %5892 = vrot.lane.b32.xlu0 %v5841, 17
        %v5893 = vpop.permute.xlu0 %5892
        %5894 = vrot.lane.b32.xlu0 %v5842, 17
        %v5895 = vpop.permute.xlu0 %5894
        %5896 = vrot.lane.b32.xlu0 %v5843, 17
        %v5897 = vpop.permute.xlu0 %5896
        %5898 = vrot.lane.b32.xlu0 %v5844, 17
        %v5899 = vpop.permute.xlu0 %5898
        %5900 = vrot.lane.b32.xlu0 %v5845, 17
        %v5901 = vpop.permute.xlu0 %5900
        %5902 = vrot.lane.b32.xlu0 %v5846, 17
        %v5903 = vpop.permute.xlu0 %5902
        %5904 = vrot.lane.b32.xlu0 %v5847, 17
        %v5905 = vpop.permute.xlu0 %5904
        %5906 = vrot.lane.b32.xlu0 %v5848, 17
        %v5907 = vpop.permute.xlu0 %5906
        %v5908 = vsel %vm446, %v5879, %v5881
        %v5909 = vsel %vm446, %v5881, %v5883
        %v5910 = vsel %vm446, %v5885, %v5887
        %v5911 = vsel %vm446, %v5887, %v5889
        %v5912 = vsel %vm446, %v5891, %v5893
        %v5913 = vsel %vm446, %v5893, %v5895
        %v5914 = vsel %vm446, %v5897, %v5899
        %v5915 = vsel %vm446, %v5899, %v5901
        %v5916 = vsel %vm446, %v5903, %v5905
        %v5917 = vsel %vm446, %v5905, %v5907
        %v5927 = vsel %vm465, %v5853, 0
        %v5930 = vsel %vm465, %v5854, 0
        %v5933 = vsel %vm469, %v5916, 0
        %v5936 = vsel %vm469, %v5917, 0
        %5938 = vmatpush.bf16.msra.mxu0 0
        %5939 = vmatpush.bf16.msra.mxu0 0
        %5940 = vmatpush.bf16.msra.mxu0 0
        %5941 = vmatpush.bf16.msra.mxu0 %v5933
        %5942 = vmatpush.bf16.msra.mxu0 %v5914
        %5943 = vmatpush.bf16.msra.mxu0 %v5912
        %5944 = vmatpush.bf16.msra.mxu0 %v5910
        %5945 = vmatpush.bf16.msra.mxu0 %v5908
        %5946 = vmatmul.bf16.gmra.mxu0 %v5927
        %v5947 = vpop.f32.mrf.mxu0
        %v5948 = vadd.f32 %v5855, %v5947
        %v5949 = vpop.f32.mrf.mxu0
        %v5950 = vadd.f32 %v5857, %v5949
        %5951 = vmatmul.bf16.gmra.mxu0 %v5930
        %v5952 = vpop.f32.mrf.mxu0
        %v5953 = vadd.f32 %v5859, %v5952
        %v5954 = vpop.f32.mrf.mxu0
        %v5955 = vadd.f32 %v5861, %v5954
        %5956 = vdwg.mxu0
        %5957 = vmatpush.bf16.msra.mxu0 0
        %5958 = vmatpush.bf16.msra.mxu0 0
        %5959 = vmatpush.bf16.msra.mxu0 0
        %5960 = vmatpush.bf16.msra.mxu0 %v5936
        %5961 = vmatpush.bf16.msra.mxu0 %v5915
        %5962 = vmatpush.bf16.msra.mxu0 %v5913
        %5963 = vmatpush.bf16.msra.mxu0 %v5911
        %5964 = vmatpush.bf16.msra.mxu0 %v5909
        %5965 = vmatmul.bf16.gmra.mxu0 %v5927
        %v5966 = vpop.f32.mrf.mxu0
        %v5967 = vadd.f32 %v5856, %v5966
        %v5968 = vpop.f32.mrf.mxu0
        %v5969 = vadd.f32 %v5858, %v5968
        %5970 = vmatmul.bf16.gmra.mxu0 %v5930
        %v5971 = vpop.f32.mrf.mxu0
        %v5972 = vadd.f32 %v5860, %v5971
        %v5973 = vpop.f32.mrf.mxu0
        %v5974 = vadd.f32 %v5862, %v5973
        %5975 = vdwg.mxu0
        %5976 = vst [vmem:[#allocation2 + $0x8] sm:$0xff] %v5948
        %5977 = vst [vmem:[#allocation2 + $0x10] sm:$0xff] %v5967
        %5978 = vst [vmem:[#allocation2 + $0x28] sm:$0xff] %v5950
        %5979 = vst [vmem:[#allocation2 + $0x30] sm:$0xff] %v5969
        %5980 = vst [vmem:[#allocation2 + $0x48] sm:$0xff] %v5953
        %5981 = vst [vmem:[#allocation2 + $0x50] sm:$0xff] %v5972
        %5982 = vst [vmem:[#allocation2 + $0x68] sm:$0xff] %v5955
        %5983 = vst [vmem:[#allocation2 + $0x70] sm:$0xff] %v5974
        %v5984 = vld [vmem:[#allocation2 + $0x8] sm:$0xff]
        %v5985 = vld [vmem:[#allocation2 + $0x10] sm:$0xff]
        %v5986 = vld [vmem:[#allocation2 + $0x18] sm:$0xff]
        %v5987 = vld [vmem:[%s206] ss:$8 sm:$0x3]
        %v5989 = vperm.slane %v5987, 0
        %v5990 = vperm.slane %v5987, 1
        %5991 = vrot.lane.b32.xlu0 %v5989, 1
        %v5992 = vpop.permute.xlu0 %5991
        %5993 = vrot.lane.b32.xlu0 %v5990, 1
        %v5994 = vpop.permute.xlu0 %5993
        %v5995 = vsel %vm240, %v5992, %v5994
        %v5999 = vmul.f32 %v5984, %v5992
        %v6000 = vmul.f32 %v5985, %v5995
        %v6001 = vmul.f32 %v5986, %v5994
        %6002 = vrot.lane.b32.xlu0 %v5989, 17
        %v6003 = vpop.permute.xlu0 %6002
        %6004 = vrot.lane.b32.xlu0 %v5990, 17
        %v6005 = vpop.permute.xlu0 %6004
        %v6006 = vsel %vm264, %v6003, %v6005
        %v6010 = vmul.f32 %v5984, %v6003
        %v6011 = vmul.f32 %v5985, %v6006
        %v6012 = vmul.f32 %v5986, %v6005
        %v6013 = vld [vmem:[#allocation2 + $0x20] sm:$0xff]
        %v6014 = vld [vmem:[#allocation2 + $0x28] sm:$0xff]
        %v6015 = vld [vmem:[#allocation2 + $0x30] sm:$0xff]
        %v6016 = vld [vmem:[%s189] ss:$8 sm:$0x3]
        %v6018 = vperm.slane %v6016, 0
        %v6019 = vperm.slane %v6016, 1
        %6020 = vrot.lane.b32.xlu0 %v6018, 127
        %v6021 = vpop.permute.xlu0 %6020
        %6022 = vrot.lane.b32.xlu0 %v6019, 127
        %v6023 = vpop.permute.xlu0 %6022
        %v6024 = vsel %vm227, %v6021, %v6023
        %v6028 = vmul.f32 %v6013, %v6021
        %v6029 = vmul.f32 %v6014, %v6024
        %v6030 = vmul.f32 %v6015, %v6023
        %v6031 = vld [vmem:[#allocation2 + $0x38] sm:$0xff]
        %6032 = vrot.lane.b32.xlu0 %v6018, 15
        %v6033 = vpop.permute.xlu0 %6032
        %6034 = vrot.lane.b32.xlu0 %v6019, 15
        %v6035 = vpop.permute.xlu0 %6034
        %v6036 = vsel %vm252, %v6033, %v6035
        %v6040 = vmul.f32 %v6014, %v6033
        %v6041 = vmul.f32 %v6015, %v6036
        %v6042 = vmul.f32 %v6031, %v6035
        %v6043 = vld [vmem:[#allocation2 + $0x40] sm:$0xff]
        %v6044 = vld [vmem:[#allocation2 + $0x48] sm:$0xff]
        %v6045 = vld [vmem:[#allocation2 + $0x50] sm:$0xff]
        %6046 = vrot.lane.b32.xlu0 %v5989, 113
        %v6047 = vpop.permute.xlu0 %6046
        %6048 = vrot.lane.b32.xlu0 %v5990, 113
        %v6049 = vpop.permute.xlu0 %6048
        %v6050 = vsel %vm215, %v6047, %v6049
        %v6054 = vmul.f32 %v6043, %v6047
        %v6055 = vmul.f32 %v6044, %v6050
        %v6056 = vmul.f32 %v6045, %v6049
        %v6057 = vld [vmem:[#allocation2 + $0x58] sm:$0xff]
        %v6058 = vmul.f32 %v6044, %v5992
        %v6059 = vmul.f32 %v6045, %v5995
        %v6060 = vmul.f32 %v6057, %v5994
        %v6061 = vld [vmem:[#allocation2 + $0x60] sm:$0xff]
        %v6062 = vld [vmem:[#allocation2 + $0x68] sm:$0xff]
        %v6063 = vld [vmem:[#allocation2 + $0x70] sm:$0xff]
        %6064 = vrot.lane.b32.xlu0 %v6018, 111
        %v6065 = vpop.permute.xlu0 %6064
        %6066 = vrot.lane.b32.xlu0 %v6019, 111
        %v6067 = vpop.permute.xlu0 %6066
        %v6068 = vsel %vm198, %v6065, %v6067
        %v6072 = vmul.f32 %v6061, %v6065
        %v6073 = vmul.f32 %v6062, %v6068
        %v6074 = vmul.f32 %v6063, %v6067
        %v6075 = vmul.f32 %v6061, %v6021
        %v6076 = vmul.f32 %v6062, %v6024
        %v6077 = vmul.f32 %v6063, %v6023
        %6081 = vrot.lane.b32.xlu0 %v5999, 127
        %v6082 = vpop.permute.xlu0 %6081
        %6083 = vrot.lane.b32.xlu0 %v6000, 127
        %v6084 = vpop.permute.xlu0 %6083
        %6085 = vrot.lane.b32.xlu0 %v6001, 127
        %v6086 = vpop.permute.xlu0 %6085
        %v6087 = vsel %vm227, %v6082, %v6084
        %v6088 = vsel %vm227, %v6084, %v6086
        %6094 = vrot.lane.b32.xlu0 %v5984, 112
        %v6095 = vpop.permute.xlu0 %6094
        %6096 = vrot.lane.b32.xlu0 %v5985, 112
        %v6097 = vpop.permute.xlu0 %6096
        %6098 = vrot.lane.b32.xlu0 %v5986, 112
        %v6099 = vpop.permute.xlu0 %6098
        %v6100 = vsel %vm310, %v6095, %v6097
        %v6101 = vsel %vm310, %v6097, %v6099
        %6107 = vrot.lane.b32.xlu0 %v6010, 111
        %v6108 = vpop.permute.xlu0 %6107
        %6109 = vrot.lane.b32.xlu0 %v6011, 111
        %v6110 = vpop.permute.xlu0 %6109
        %6111 = vrot.lane.b32.xlu0 %v6012, 111
        %v6112 = vpop.permute.xlu0 %6111
        %v6113 = vsel %vm198, %v6108, %v6110
        %v6114 = vsel %vm198, %v6110, %v6112
        %6120 = vrot.lane.b32.xlu0 %v6028, 1
        %v6121 = vpop.permute.xlu0 %6120
        %6122 = vrot.lane.b32.xlu0 %v6029, 1
        %v6123 = vpop.permute.xlu0 %6122
        %6124 = vrot.lane.b32.xlu0 %v6030, 1
        %v6125 = vpop.permute.xlu0 %6124
        %v6126 = vsel %vm240, %v6121, %v6123
        %v6127 = vsel %vm240, %v6123, %v6125
        %6133 = vrot.lane.b32.xlu0 %v6040, 113
        %v6134 = vpop.permute.xlu0 %6133
        %6135 = vrot.lane.b32.xlu0 %v6041, 113
        %v6136 = vpop.permute.xlu0 %6135
        %6137 = vrot.lane.b32.xlu0 %v6042, 113
        %v6138 = vpop.permute.xlu0 %6137
        %v6139 = vsel %vm215, %v6134, %v6136
        %v6140 = vsel %vm215, %v6136, %v6138
        %6146 = vrot.lane.b32.xlu0 %v6014, 112
        %v6147 = vpop.permute.xlu0 %6146
        %6148 = vrot.lane.b32.xlu0 %v6015, 112
        %v6149 = vpop.permute.xlu0 %6148
        %6150 = vrot.lane.b32.xlu0 %v6031, 112
        %v6151 = vpop.permute.xlu0 %6150
        %v6152 = vsel %vm310, %v6147, %v6149
        %v6153 = vsel %vm310, %v6149, %v6151
        %6159 = vrot.lane.b32.xlu0 %v6043, 16
        %v6160 = vpop.permute.xlu0 %6159
        %6161 = vrot.lane.b32.xlu0 %v6044, 16
        %v6162 = vpop.permute.xlu0 %6161
        %6163 = vrot.lane.b32.xlu0 %v6045, 16
        %v6164 = vpop.permute.xlu0 %6163
        %vm6165 = vcmask 130048
        %v6166 = vsel %vm6165, %v6160, %v6162
        %v6167 = vsel %vm6165, %v6162, %v6164
        %6173 = vrot.lane.b32.xlu0 %v6054, 15
        %v6174 = vpop.permute.xlu0 %6173
        %6175 = vrot.lane.b32.xlu0 %v6055, 15
        %v6176 = vpop.permute.xlu0 %6175
        %6177 = vrot.lane.b32.xlu0 %v6056, 15
        %v6178 = vpop.permute.xlu0 %6177
        %v6179 = vsel %vm252, %v6174, %v6176
        %v6180 = vsel %vm252, %v6176, %v6178
        %6186 = vrot.lane.b32.xlu0 %v6058, 127
        %v6187 = vpop.permute.xlu0 %6186
        %6188 = vrot.lane.b32.xlu0 %v6059, 127
        %v6189 = vpop.permute.xlu0 %6188
        %6190 = vrot.lane.b32.xlu0 %v6060, 127
        %v6191 = vpop.permute.xlu0 %6190
        %v6192 = vsel %vm227, %v6187, %v6189
        %v6193 = vsel %vm227, %v6189, %v6191
        %6199 = vrot.lane.b32.xlu0 %v6072, 17
        %v6200 = vpop.permute.xlu0 %6199
        %6201 = vrot.lane.b32.xlu0 %v6073, 17
        %v6202 = vpop.permute.xlu0 %6201
        %6203 = vrot.lane.b32.xlu0 %v6074, 17
        %v6204 = vpop.permute.xlu0 %6203
        %v6205 = vsel %vm264, %v6200, %v6202
        %v6206 = vsel %vm264, %v6202, %v6204
        %6212 = vrot.lane.b32.xlu0 %v6061, 16
        %v6213 = vpop.permute.xlu0 %6212
        %6214 = vrot.lane.b32.xlu0 %v6062, 16
        %v6215 = vpop.permute.xlu0 %6214
        %6216 = vrot.lane.b32.xlu0 %v6063, 16
        %v6217 = vpop.permute.xlu0 %6216
        %v6218 = vsel %vm6165, %v6213, %v6215
        %v6219 = vsel %vm6165, %v6215, %v6217
        %6225 = vrot.lane.b32.xlu0 %v6075, 1
        %v6226 = vpop.permute.xlu0 %6225
        %6227 = vrot.lane.b32.xlu0 %v6076, 1
        %v6228 = vpop.permute.xlu0 %6227
        %6229 = vrot.lane.b32.xlu0 %v6077, 1
        %v6230 = vpop.permute.xlu0 %6229
        %v6231 = vsel %vm240, %v6226, %v6228
        %v6232 = vsel %vm240, %v6228, %v6230
        %v6235 = vpack.c.bf16 %v6087, %v5984
        %v6236 = vpack.c.bf16 %v6088, %v5985
        %v6237 = vpack.c.bf16 %v6113, %v6100
        %v6238 = vpack.c.bf16 %v6114, %v6101
        %v6239 = vpack.c.bf16 %v6014, %v6126
        %v6240 = vpack.c.bf16 %v6015, %v6127
        %v6241 = vpack.c.bf16 %v6152, %v6139
        %v6242 = vpack.c.bf16 %v6153, %v6140
        %v6243 = vpack.c.bf16 %v6179, %v6166
        %v6244 = vpack.c.bf16 %v6180, %v6167
        %v6245 = vpack.c.bf16 %v6192, %v6044
        %v6246 = vpack.c.bf16 %v6193, %v6045
        %v6247 = vpack.c.bf16 %v6218, %v6205
        %v6248 = vpack.c.bf16 %v6219, %v6206
        %v6249 = vpack.c.bf16 %v6062, %v6231
        %v6250 = vpack.c.bf16 %v6063, %v6232
        %v6251 = vld [vmem:[#allocation3 + $0x1d0] sm:$0xff]
        %v6252 = vld [vmem:[#allocation3 + $0x1e0] sm:$0xff]
        %v6253 = vpack.c.bf16 %v6252, %v6251
        %v6254 = vld [vmem:[#allocation3 + $0x1f0] sm:$0xff]
        %v6255 = vld [vmem:[#allocation3 + $0x1f8] sm:$0xff]
        %v6256 = vld [vmem:[#allocation3 + $0x200] sm:$0xff]
        %v6257 = vld [vmem:[#allocation3 + $0x208] sm:$0xff]
        %6258 = vmatpush.bf16.msra.mxu0 %v6249
        %6259 = vmatpush.bf16.msra.mxu0 %v6247
        %6260 = vmatpush.bf16.msra.mxu0 %v6245
        %6261 = vmatpush.bf16.msra.mxu0 %v6243
        %6262 = vmatpush.bf16.msra.mxu0 %v6241
        %6263 = vmatpush.bf16.msra.mxu0 %v6239
        %6264 = vmatpush.bf16.msra.mxu0 %v6237
        %6265 = vmatpush.bf16.msra.mxu0 %v6235
        %6266 = vmatmul.bf16.gmra.mxu0 %v6253
        %v6267 = vpop.f32.mrf.mxu0
        %v6268 = vadd.f32 %v6254, %v6267
        %v6269 = vpop.f32.mrf.mxu0
        %v6270 = vadd.f32 %v6256, %v6269
        %6271 = vdwg.mxu0
        %6272 = vmatpush.bf16.msra.mxu0 %v6250
        %6273 = vmatpush.bf16.msra.mxu0 %v6248
        %6274 = vmatpush.bf16.msra.mxu0 %v6246
        %6275 = vmatpush.bf16.msra.mxu0 %v6244
        %6276 = vmatpush.bf16.msra.mxu0 %v6242
        %6277 = vmatpush.bf16.msra.mxu0 %v6240
        %6278 = vmatpush.bf16.msra.mxu0 %v6238
        %6279 = vmatpush.bf16.msra.mxu0 %v6236
        %6280 = vmatmul.bf16.gmra.mxu0 %v6253
        %v6281 = vpop.f32.mrf.mxu0
        %v6282 = vadd.f32 %v6255, %v6281
        %v6283 = vpop.f32.mrf.mxu0
        %v6284 = vadd.f32 %v6257, %v6283
        %6285 = vdwg.mxu0
        %6286 = vst [vmem:[%s160] sm:$0xff] %v6268
        %6287 = vst [vmem:[%s160 + $0x8] sm:$0xff] %v6282
        %6288 = vst [vmem:[%s160 + $0x10] sm:$0xff] %v6270
        %6289 = vst [vmem:[%s160 + $0x18] sm:$0xff] %v6284
        %p6290 = scmp.lt.s32.totalorder %s14, 1
        %s6291 = scalar_select %p6290, %s14, 1
        %s6292 = smul.addr %s6291, 4
        %s6293 = smul.addr %s6292, 8
        %s6294 = scalar_lea.vmem %s2, %s6293
        // Predicated region
        $region33: #{forward.1} parent=27 // pred_check
          %p6295 = pneg %p79
        $region34: #{forward.1} parent=27 // pred_check_branch
          %6297 = sbr.rel (%p6295) target = $region36
        $region35: #{forward.1} parent=27 // pred_region
          _
        $region36: #{forward.1} parent=27 // pred_fallthru
          _
      $region28: #{forward.1} parent=5 // pred_fallthru
        _
      %p6298 = scmp.le.s32.totalorder 2, %s9
      // Predicated region
      $region37: #{forward.1} parent=5 // pred_check
        %p6299 = pneg %p6298
      $region38: #{forward.1} parent=5 // pred_check_branch
        %6301 = sbr.rel (%p6299) target = $region40
      $region39: #{forward.1} parent=5 // pred_region
        %s6302 = ssub.s32 %s9, 2
        // Predicated region
        $region41: #{forward.1} parent=39 // pred_check
          %p6303 = pneg %p85
        $region42: #{forward.1} parent=39 // pred_check_branch
          %6305 = sbr.rel (%p6303) target = $region44
        $region43: #{forward.1} parent=39 // pred_region
          %p6306 = scmp.lt.s32.totalorder %s15, 1
          %s6307 = scalar_select %p6306, %s15, 1
          %s6308 = smul.addr %s6307, 4
          %s6309 = smul.addr %s6308, 8
          %s6310 = scalar_lea.vmem %s2, %s6309
        $region44: #{forward.1} parent=39 // pred_fallthru
          _
      $region40: #{forward.1} parent=5 // pred_fallthru
        _
    $region6: #{forward.1} parent=1 // loop_footer
      %s13 = sadd.s32 1, %s9
    $region7: #{forward.1} parent=1 // loop_footer_branch
      %8 = sbr.rel target = $region3
    $region8: #{forward.1} parent=1 // loop_exit
      _
    %6311 = vsyncpa [#allocation4], 1
    %s6312 = scalar_lea.sflag [#allocation4], 1
    %6313 = vsyncpa %s6312, 1

</llo_original>
